<compile_context>
chip_gen: v7x
topology: tpu7x:2x2x1
jax: 0.10.0
libtpu: 0.0.40
codegen_flags: <defaults>
</compile_context>

<pallas_src>
import math

import jax
import jax.numpy as jnp
from jax import lax
from jax.experimental import pallas as pl
from jax.experimental.pallas import tpu as pltpu

EPS = 1e-5

# Weight ordering shared by the wrapper and the kernel.
_W_KEYS = ("ln1_w", "ln1_b", "w_in", "conv_w", "conv_b", "w_xproj", "w_dt_proj",
           "dt_b", "A", "d_par", "w_out", "ln2_w", "ln2_b",
           "w_fc1", "b_fc1", "w_fc2", "b_fc2")


# ----------------------------- in-kernel math helpers -----------------------------

def _sigmoid(x):
    # stable sigmoid via tanh (single EUP op)
    return 0.5 * (jnp.tanh(0.5 * x) + 1.0)


def _silu(x):
    return x * _sigmoid(x)


def _softplus(x):
    return jnp.maximum(x, 0.0) + jnp.log(1.0 + jnp.exp(-jnp.abs(x)))


def _gelu_tanh(x):
    # matches torch F.gelu(approximate='tanh')
    c = 0.7978845608028654
    return 0.5 * x * (1.0 + jnp.tanh(c * (x + 0.044715 * x * x * x)))


def _layernorm(x, w, b):
    mu = jnp.mean(x, axis=-1, keepdims=True)
    xc = x - mu
    var = jnp.mean(xc * xc, axis=-1, keepdims=True)
    return xc * lax.rsqrt(var + EPS) * w + b


def _mm(x, w):
    # cast activation to the (bf16) weight dtype for the MXU, accumulate in f32
    return jnp.dot(x.astype(w.dtype), w, preferred_element_type=jnp.float32)


# ----------------------------- embedding: batched DMA gather -----------------------------

def _embed_kernel(ids_ref, emb_hbm, out_ref, buf, sem):
    """Gather G embedding rows per grid step via manual HBM->VMEM DMAs."""
    i = pl.program_id(0)
    g_rows = out_ref.shape[0]
    for g in range(g_rows):                       # static, G small
        tok = ids_ref[i * g_rows + g]
        pltpu.make_async_copy(emb_hbm.at[tok], buf.at[g], sem.at[g]).start()
    for g in range(g_rows):
        tok = ids_ref[i * g_rows + g]
        pltpu.make_async_copy(emb_hbm.at[tok], buf.at[g], sem.at[g]).wait()
    out_ref[...] = buf[...]


def _run_embed(input_ids, emb, *, gather_rows=8):
    B, L = input_ids.shape
    V, D = emb.shape
    n_tok = B * L
    G = gather_rows
    n_pad = ((n_tok + G - 1) // G) * G
    ids = jnp.zeros((n_pad,), jnp.int32).at[:n_tok].set(
        input_ids.reshape(-1).astype(jnp.int32))

    out = pl.pallas_call(
        _embed_kernel,
        out_shape=jax.ShapeDtypeStruct((n_pad, D), jnp.float32),
        grid_spec=pltpu.PrefetchScalarGridSpec(
            num_scalar_prefetch=1,
            grid=(n_pad // G,),
            in_specs=[pl.BlockSpec(memory_space=pl.ANY)],      # table stays in HBM
            out_specs=pl.BlockSpec((G, D), lambda i, ids: (i, 0)),
            scratch_shapes=[pltpu.VMEM((G, D), jnp.float32),
                            pltpu.SemaphoreType.DMA((G,))],
        ),
        compiler_params=pltpu.CompilerParams(dimension_semantics=("arbitrary",)),
    )(ids, emb)
    return out[:n_tok].reshape(B, L, D)


# ----------------------------- prenorm Block (Mamba v1 mixer + MLP) -----------------------------

def _make_block_kernel(first):
    def block_kernel(*refs):
        if first:
            hs_ref, res_ref, rest = refs[0], None, refs[1:]
        else:
            hs_ref, res_ref, rest = refs[0], refs[1], refs[2:]
        (ln1w_ref, ln1b_ref, win_ref, cw_ref, cb_ref, wxp_ref, wdtp_ref,
         dtb_ref, nA_ref, dpar_ref, wout_ref, ln2w_ref, ln2b_ref,
         wfc1_ref, bfc1_ref, wfc2_ref, bfc2_ref) = rest[:17]
        hs_out_ref, res_out_ref = rest[17:19]
        tail_scr, hcar_scr, da_scr, dbu_scr, cb_scr, y_scr = rest[19:25]

        c = pl.program_id(1)
        TL = hs_ref.shape[1]
        K, Din = cw_ref.shape
        N = nA_ref.shape[0]
        R = wdtp_ref.shape[0]

        # reset cross-chunk carries (conv tail + SSM state) at the first chunk
        @pl.when(c == 0)
        def _():
            tail_scr[...] = jnp.zeros_like(tail_scr)
            hcar_scr[...] = jnp.zeros_like(hcar_scr)

        # ----- residual add + LN1 (dropout / drop_path identity at eval) -----
        residual = hs_ref[0] if first else hs_ref[0] + res_ref[0]   # (TL, D) f32
        x = _layernorm(residual, ln1w_ref[0], ln1b_ref[0])

        # ----- fused in_proj: one MXU pass -> [x | z] -----
        xz = _mm(x, win_ref[...])                 # (TL, 2*Din)
        xm = xz[:, :Din]
        zz = xz[:, Din:]

        # ----- causal depthwise conv across the chunk boundary -----
        cw = cw_ref[...]                          # (K, Din)
        xcat = jnp.concatenate([tail_scr[...], xm], axis=0)   # (8 + TL, Din)
        base = 8 - (K - 1)                        # tail lives in rows base..7
        acc = cb_ref[...] + cw[K - 1:K, :] * xm   # unshifted tap
        for k in range(K - 1):                    # shifted taps, K=4 static
            acc = acc + cw[k:k + 1, :] * xcat[base + k:base + k + TL, :]
        xc = _silu(acc)                           # (TL, Din)

        # ----- fused x_proj (one padded MXU pass) -> dt | B | C -----
        bcd = _mm(xc, wxp_ref[...])               # (TL, P>=128)
        dt_low = bcd[:, :R]
        B_all = bcd[:, R:R + N]
        C_all = bcd[:, R + N:R + 2 * N]
        dt_all = _softplus(_mm(dt_low, wdtp_ref[...]) + dtb_ref[...])   # (TL, Din)
        dtx = dt_all * xc

        # ----- precompute per-step SSM tensors (A = -exp(A_log) precomputed) -----
        for n in range(N):                        # N=8 static; 2-D ops only
            da_scr[:, n, :] = jnp.exp(dt_all * nA_ref[n])
            dbu_scr[:, n, :] = dtx * B_all[:, n:n + 1]
            cb_scr[:, n, :] = C_all[:, n:n + 1]

        # ----- sequential scan: fused C-reduction, aligned grouped y stores -----
        U = 8 if TL % 8 == 0 else 1

        def group_step(g, h):
            t0 = pl.multiple_of(g * U, U)
            rows = []
            for u in range(U):                    # static unroll
                t = t0 + u
                h = da_scr[t] * h + dbu_scr[t]                       # (N, Din)
                rows.append(jnp.sum(cb_scr[t] * h, axis=0, keepdims=True))
            y_scr[pl.ds(t0, U), :] = (jnp.concatenate(rows, axis=0)
                                      if U > 1 else rows[0])
            return h

        h_fin = lax.fori_loop(0, TL // U, group_step, hcar_scr[...])
        hcar_scr[...] = h_fin                     # carry SSM state to next chunk
        if K > 1:                                 # carry last K-1 conv inputs
            tail_scr[8 - (K - 1):, :] = xm[TL - (K - 1):, :]

        # ----- batched epilogue: D skip, gate, out_proj, LN2, MLP -----
        y = (y_scr[...] + dpar_ref[...] * xc) * _silu(zz)
        mix = _mm(y, wout_ref[...])               # (TL, D)

        residual2 = mix + residual
        x2 = _layernorm(residual2, ln2w_ref[0], ln2b_ref[0])
        h1 = _gelu_tanh(_mm(x2, wfc1_ref[...]) + bfc1_ref[...])
        h2 = _mm(h1, wfc2_ref[...]) + bfc2_ref[...]

        hs_out_ref[0] = h2
        res_out_ref[0] = residual2

    return block_kernel


def _run_block(hs, res, lp, *, first, tl):
    B, L, D = hs.shape
    K, Din = lp["conv_w"].shape
    N = lp["A"].shape[0]
    n_chunks = L // tl

    act_spec = pl.BlockSpec((1, tl, D), lambda b, c: (b, c, 0))
    w_args = [lp[k] for k in _W_KEYS]
    # constant index_maps: weights stay VMEM-resident across grid steps
    w_specs = [pl.BlockSpec(tuple(w.shape), lambda b, c, _nd=w.ndim: (0,) * _nd)
               for w in w_args]

    if first:
        in_specs = [act_spec] + w_specs
        inputs = (hs,) + tuple(w_args)
        aliases = {0: 0}
    else:
        in_specs = [act_spec, act_spec] + w_specs
        inputs = (hs, res) + tuple(w_args)
        aliases = {0: 0, 1: 1}

    grid_spec = pltpu.PrefetchScalarGridSpec(
        num_scalar_prefetch=0,
        grid=(B, n_chunks),                      # batch parallel, chunks sequential
        in_specs=in_specs,
        out_specs=[act_spec, act_spec],
        scratch_shapes=[
            pltpu.VMEM((8, Din), jnp.float32),      # conv tail carry (last K-1 rows)
            pltpu.VMEM((N, Din), jnp.float32),      # SSM state carry
            pltpu.VMEM((tl, N, Din), jnp.float32),  # exp(dt*A) per chunk
            pltpu.VMEM((tl, N, Din), jnp.float32),  # dt*x*B per chunk
            pltpu.VMEM((tl, N, 1), jnp.float32),    # C broadcast source
            pltpu.VMEM((tl, Din), jnp.float32),     # y per chunk (h_scr deleted)
        ])

    return pl.pallas_call(
        _make_block_kernel(first),
        out_shape=(jax.ShapeDtypeStruct((B, L, D), jnp.float32),
                   jax.ShapeDtypeStruct((B, L, D), jnp.float32)),
        grid_spec=grid_spec,
        input_output_aliases=aliases,
        compiler_params=pltpu.CompilerParams(
            dimension_semantics=("parallel", "arbitrary"),
            vmem_limit_bytes=64 * 1024 * 1024),
    )(*inputs)


# ----------------------------- final LN -----------------------------

def _final_kernel(hs_ref, res_ref, w_ref, b_ref, out_ref):
    """drop_f (identity) -> add residual -> ln_f."""
    out_ref[0] = _layernorm(hs_ref[0] + res_ref[0], w_ref[0], b_ref[0])


def _run_final(hs, res, w, b, *, tl):
    B, L, D = hs.shape
    n_chunks = L // tl
    act_spec = pl.BlockSpec((1, tl, D), lambda i, c: (i, c, 0))
    vec_spec = pl.BlockSpec((1, D), lambda i, c: (0, 0))
    return pl.pallas_call(
        _final_kernel,
        out_shape=jax.ShapeDtypeStruct((B, L, D), jnp.float32),
        grid_spec=pltpu.PrefetchScalarGridSpec(
            num_scalar_prefetch=0, grid=(B, n_chunks),
            in_specs=[act_spec, act_spec, vec_spec, vec_spec],
            out_specs=act_spec),
        compiler_params=pltpu.CompilerParams(
            dimension_semantics=("parallel", "arbitrary")),
    )(hs, res, w, b)


# ----------------------------- parameters & forward -----------------------------

def init_params(key, *, d_model, n_layer, d_inner_mlp, vocab_size,
                expand=2, d_state=8, d_conv=4):
    Din = expand * d_model
    R = -(-d_model // 16)                 # dt_rank = ceil(d_model / 16)
    P = max(128, ((R + 2 * d_state + 127) // 128) * 128)   # padded x_proj width
    std = 0.02
    std_resc = std / math.sqrt(2 * n_layer)
    bf16 = jnp.bfloat16

    keys = jax.random.split(key, 1 + n_layer)
    params = {"emb": jax.random.normal(keys[0], (vocab_size, d_model), jnp.float32) * std}

    layers = []
    for i in range(n_layer):
        ks = jax.random.split(keys[1 + i], 7)
        w_in = jax.random.normal(ks[0], (2 * Din, d_model), jnp.float32) * std
        conv_w = jax.random.normal(ks[1], (Din, d_conv), jnp.float32) * (1.0 / d_conv ** 0.5)
        w_xproj = jax.random.normal(ks[2], (R + 2 * d_state, Din), jnp.float32) * std
        w_dt = jax.random.normal(ks[3], (Din, R), jnp.float32) * (R ** -0.5)
        w_out = jax.random.normal(ks[4], (d_model, Din), jnp.float32) * std_resc
        w_fc1 = jax.random.normal(ks[5], (d_inner_mlp, d_model), jnp.float32) * std
        w_fc2 = jax.random.normal(ks[6], (d_model, d_inner_mlp), jnp.float32) * std_resc

        # fused x_proj weight, columns [dt | B | C | zero-pad] -> lane-dense output
        w_xp_f = jnp.zeros((Din, P), jnp.float32).at[:, :R + 2 * d_state].set(w_xproj.T)
        dt_b = jnp.full((1, Din), math.log(math.expm1(0.01)), jnp.float32)
        # A stored as -exp(A_log), laid out (N, Din): Din on lanes for the scan
        negA = -jnp.broadcast_to(
            jnp.arange(1, d_state + 1, dtype=jnp.float32)[:, None], (d_state, Din))

        layers.append(dict(
            ln1_w=jnp.ones((1, d_model), jnp.float32),
            ln1_b=jnp.zeros((1, d_model), jnp.float32),
            w_in=w_in.T.astype(bf16),                      # (D, 2*Din) = [x | z]
            conv_w=jnp.asarray(conv_w.T, jnp.float32),     # (K, Din)
            conv_b=jnp.zeros((1, Din), jnp.float32),
            w_xproj=w_xp_f.astype(bf16),                   # (Din, P)
            w_dt_proj=w_dt.T.astype(bf16),                 # (R, Din)  kept low-rank
            dt_b=dt_b,
            A=jnp.asarray(negA, jnp.float32),              # (N, Din)  = -exp(A_log)
            d_par=jnp.ones((1, Din), jnp.float32),
            w_out=w_out.T.astype(bf16),                    # (Din, D)
            ln2_w=jnp.ones((1, d_model), jnp.float32),
            ln2_b=jnp.zeros((1, d_model), jnp.float32),
            w_fc1=w_fc1.T.astype(bf16),                    # (D, H)
            b_fc1=jnp.zeros((1, d_inner_mlp), jnp.float32),
            w_fc2=w_fc2.T.astype(bf16),                    # (H, D)
            b_fc2=jnp.zeros((1, d_model), jnp.float32),
        ))
    params["layers"] = layers
    params["lnf_w"] = jnp.ones((1, d_model), jnp.float32)
    params["lnf_b"] = jnp.zeros((1, d_model), jnp.float32)
    return params


def _pick_chunk(L):
    for t in (256, 128, 64, 32, 16, 8):
        if L % t == 0:
            return t
    return L


@jax.jit
def lm_backbone_forward(input_ids, params):
    hs = _run_embed(input_ids, params["emb"])
    tl = _pick_chunk(hs.shape[1])
    layers = params["layers"]
    # first block: residual=None in the reference -> no zero-residual HBM traffic
    hs, res = _run_block(hs, None, layers[0], first=True, tl=tl)
    for lp in layers[1:]:
        hs, res = _run_block(hs, res, lp, first=False, tl=tl)
    return _run_final(hs, res, params["lnf_w"], params["lnf_b"], tl=tl)


# TODO(synk): dropout / stochastic-depth are identity (inference mode); no
# in-kernel RNG dropout is implemented.
# TODO(synk): demo dims (D=32, Din=64) are not lane-dense; real deployments
# should pick d_model / Din / d_inner as multiples of 128 (256 on v6e/v7x),
# and ensure an even batch split for v7x's two TensorCores.

if __name__ == "__main__":
    d_model, n_layer, d_inner, vocab = 32, 2, 64, 16
    B, L = 2, 8

    key = jax.random.PRNGKey(0)
    pkey, ikey = jax.random.split(key)
    params = init_params(pkey, d_model=d_model, n_layer=n_layer,
                         d_inner_mlp=d_inner, vocab_size=vocab)
    input_ids = jax.random.randint(ikey, (B, L), 0, vocab, dtype=jnp.int32)

    out = lm_backbone_forward(input_ids, params)
    jax.block_until_ready(out)

    assert out.shape == (B, L, d_model), out.shape
    assert bool(jnp.all(jnp.isfinite(out)))
    print("KERNEL_OK")
</pallas_src>

<mosaic_0001>
module attributes {stable_mosaic.version = 11 : i64} {
  func.func @_embed_kernel(%arg0: i32, %arg1: memref<16xi32, #tpu.memory_space<smem>>, %arg2: memref<16x32xf32, #tpu.memory_space<any>>, %arg3: memref<8x32xf32, #tpu.memory_space<vmem>>, %arg4: memref<8x32xf32, #tpu.memory_space<vmem>>, %arg5: memref<8x!tpu.dma_semaphore, #tpu.memory_space<semaphore_mem>>) attributes {dimension_semantics = [#tpu.dimension_semantics<arbitrary>], iteration_bounds = array<i64: 2>, scalar_prefetch = 1 : i64, scratch_operands = 2 : i64, tpu.core_type = #tpu.core_type<tc>, window_params = [{}, {transform_indices = @transform_1, window_bounds = array<i64: 8, 32>}]} {
    %c8_i32 = arith.constant 8 : i32
    %0 = arith.muli %arg0, %c8_i32 : i32
    %c0_i32 = arith.constant 0 : i32
    %1 = arith.addi %0, %c0_i32 : i32
    %2 = arith.index_cast %1 : i32 to index
    %3 = memref.load %arg1[%2] : memref<16xi32, #tpu.memory_space<smem>>
    %c0_i32_0 = arith.constant 0 : i32
    %c0_i32_1 = arith.constant 0 : i32
    %c0_i32_2 = arith.constant 0 : i32
    %4 = tpu.memref_slice %arg2[%3, %c0_i32_2] : memref<16x32xf32, #tpu.memory_space<any>> -> memref<1x32xf32, #tpu.memory_space<any>>
    %5 = tpu.memref_squeeze %4 : memref<1x32xf32, #tpu.memory_space<any>> -> memref<32xf32, #tpu.memory_space<any>>
    %c0_i32_3 = arith.constant 0 : i32
    %6 = tpu.memref_slice %arg4[%c0_i32_0, %c0_i32_3] : memref<8x32xf32, #tpu.memory_space<vmem>> -> memref<1x32xf32, #tpu.memory_space<vmem>>
    %7 = tpu.memref_squeeze %6 : memref<1x32xf32, #tpu.memory_space<vmem>> -> memref<32xf32, #tpu.memory_space<vmem>>
    %8 = tpu.memref_slice %arg5[%c0_i32_1] : memref<8x!tpu.dma_semaphore, #tpu.memory_space<semaphore_mem>> -> memref<1x!tpu.dma_semaphore, #tpu.memory_space<semaphore_mem>>
    %9 = tpu.memref_squeeze %8 : memref<1x!tpu.dma_semaphore, #tpu.memory_space<semaphore_mem>> -> memref<!tpu.dma_semaphore, #tpu.memory_space<semaphore_mem>>
    tpu.enqueue_dma source(%5 : memref<32xf32, #tpu.memory_space<any>>) target(%7 : memref<32xf32, #tpu.memory_space<vmem>>) target_semaphore(%9 : memref<!tpu.dma_semaphore, #tpu.memory_space<semaphore_mem>>)
    %c8_i32_4 = arith.constant 8 : i32
    %10 = arith.muli %arg0, %c8_i32_4 : i32
    %c1_i32 = arith.constant 1 : i32
    %11 = arith.addi %10, %c1_i32 : i32
    %12 = arith.index_cast %11 : i32 to index
    %13 = memref.load %arg1[%12] : memref<16xi32, #tpu.memory_space<smem>>
    %c1_i32_5 = arith.constant 1 : i32
    %c1_i32_6 = arith.constant 1 : i32
    %c0_i32_7 = arith.constant 0 : i32
    %14 = tpu.memref_slice %arg2[%13, %c0_i32_7] : memref<16x32xf32, #tpu.memory_space<any>> -> memref<1x32xf32, #tpu.memory_space<any>>
    %15 = tpu.memref_squeeze %14 : memref<1x32xf32, #tpu.memory_space<any>> -> memref<32xf32, #tpu.memory_space<any>>
    %c0_i32_8 = arith.constant 0 : i32
    %16 = tpu.memref_slice %arg4[%c1_i32_5, %c0_i32_8] : memref<8x32xf32, #tpu.memory_space<vmem>> -> memref<1x32xf32, #tpu.memory_space<vmem>>
    %17 = tpu.memref_squeeze %16 : memref<1x32xf32, #tpu.memory_space<vmem>> -> memref<32xf32, #tpu.memory_space<vmem>>
    %18 = tpu.memref_slice %arg5[%c1_i32_6] : memref<8x!tpu.dma_semaphore, #tpu.memory_space<semaphore_mem>> -> memref<1x!tpu.dma_semaphore, #tpu.memory_space<semaphore_mem>>
    %19 = tpu.memref_squeeze %18 : memref<1x!tpu.dma_semaphore, #tpu.memory_space<semaphore_mem>> -> memref<!tpu.dma_semaphore, #tpu.memory_space<semaphore_mem>>
    tpu.enqueue_dma source(%15 : memref<32xf32, #tpu.memory_space<any>>) target(%17 : memref<32xf32, #tpu.memory_space<vmem>>) target_semaphore(%19 : memref<!tpu.dma_semaphore, #tpu.memory_space<semaphore_mem>>)
    %c8_i32_9 = arith.constant 8 : i32
    %20 = arith.muli %arg0, %c8_i32_9 : i32
    %c2_i32 = arith.constant 2 : i32
    %21 = arith.addi %20, %c2_i32 : i32
    %22 = arith.index_cast %21 : i32 to index
    %23 = memref.load %arg1[%22] : memref<16xi32, #tpu.memory_space<smem>>
    %c2_i32_10 = arith.constant 2 : i32
    %c2_i32_11 = arith.constant 2 : i32
    %c0_i32_12 = arith.constant 0 : i32
    %24 = tpu.memref_slice %arg2[%23, %c0_i32_12] : memref<16x32xf32, #tpu.memory_space<any>> -> memref<1x32xf32, #tpu.memory_space<any>>
    %25 = tpu.memref_squeeze %24 : memref<1x32xf32, #tpu.memory_space<any>> -> memref<32xf32, #tpu.memory_space<any>>
    %c0_i32_13 = arith.constant 0 : i32
    %26 = tpu.memref_slice %arg4[%c2_i32_10, %c0_i32_13] : memref<8x32xf32, #tpu.memory_space<vmem>> -> memref<1x32xf32, #tpu.memory_space<vmem>>
    %27 = tpu.memref_squeeze %26 : memref<1x32xf32, #tpu.memory_space<vmem>> -> memref<32xf32, #tpu.memory_space<vmem>>
    %28 = tpu.memref_slice %arg5[%c2_i32_11] : memref<8x!tpu.dma_semaphore, #tpu.memory_space<semaphore_mem>> -> memref<1x!tpu.dma_semaphore, #tpu.memory_space<semaphore_mem>>
    %29 = tpu.memref_squeeze %28 : memref<1x!tpu.dma_semaphore, #tpu.memory_space<semaphore_mem>> -> memref<!tpu.dma_semaphore, #tpu.memory_space<semaphore_mem>>
    tpu.enqueue_dma source(%25 : memref<32xf32, #tpu.memory_space<any>>) target(%27 : memref<32xf32, #tpu.memory_space<vmem>>) target_semaphore(%29 : memref<!tpu.dma_semaphore, #tpu.memory_space<semaphore_mem>>)
    %c8_i32_14 = arith.constant 8 : i32
    %30 = arith.muli %arg0, %c8_i32_14 : i32
    %c3_i32 = arith.constant 3 : i32
    %31 = arith.addi %30, %c3_i32 : i32
    %32 = arith.index_cast %31 : i32 to index
    %33 = memref.load %arg1[%32] : memref<16xi32, #tpu.memory_space<smem>>
    %c3_i32_15 = arith.constant 3 : i32
    %c3_i32_16 = arith.constant 3 : i32
    %c0_i32_17 = arith.constant 0 : i32
    %34 = tpu.memref_slice %arg2[%33, %c0_i32_17] : memref<16x32xf32, #tpu.memory_space<any>> -> memref<1x32xf32, #tpu.memory_space<any>>
    %35 = tpu.memref_squeeze %34 : memref<1x32xf32, #tpu.memory_space<any>> -> memref<32xf32, #tpu.memory_space<any>>
    %c0_i32_18 = arith.constant 0 : i32
    %36 = tpu.memref_slice %arg4[%c3_i32_15, %c0_i32_18] : memref<8x32xf32, #tpu.memory_space<vmem>> -> memref<1x32xf32, #tpu.memory_space<vmem>>
    %37 = tpu.memref_squeeze %36 : memref<1x32xf32, #tpu.memory_space<vmem>> -> memref<32xf32, #tpu.memory_space<vmem>>
    %38 = tpu.memref_slice %arg5[%c3_i32_16] : memref<8x!tpu.dma_semaphore, #tpu.memory_space<semaphore_mem>> -> memref<1x!tpu.dma_semaphore, #tpu.memory_space<semaphore_mem>>
    %39 = tpu.memref_squeeze %38 : memref<1x!tpu.dma_semaphore, #tpu.memory_space<semaphore_mem>> -> memref<!tpu.dma_semaphore, #tpu.memory_space<semaphore_mem>>
    tpu.enqueue_dma source(%35 : memref<32xf32, #tpu.memory_space<any>>) target(%37 : memref<32xf32, #tpu.memory_space<vmem>>) target_semaphore(%39 : memref<!tpu.dma_semaphore, #tpu.memory_space<semaphore_mem>>)
    %c8_i32_19 = arith.constant 8 : i32
    %40 = arith.muli %arg0, %c8_i32_19 : i32
    %c4_i32 = arith.constant 4 : i32
    %41 = arith.addi %40, %c4_i32 : i32
    %42 = arith.index_cast %41 : i32 to index
    %43 = memref.load %arg1[%42] : memref<16xi32, #tpu.memory_space<smem>>
    %c4_i32_20 = arith.constant 4 : i32
    %c4_i32_21 = arith.constant 4 : i32
    %c0_i32_22 = arith.constant 0 : i32
    %44 = tpu.memref_slice %arg2[%43, %c0_i32_22] : memref<16x32xf32, #tpu.memory_space<any>> -> memref<1x32xf32, #tpu.memory_space<any>>
    %45 = tpu.memref_squeeze %44 : memref<1x32xf32, #tpu.memory_space<any>> -> memref<32xf32, #tpu.memory_space<any>>
    %c0_i32_23 = arith.constant 0 : i32
    %46 = tpu.memref_slice %arg4[%c4_i32_20, %c0_i32_23] : memref<8x32xf32, #tpu.memory_space<vmem>> -> memref<1x32xf32, #tpu.memory_space<vmem>>
    %47 = tpu.memref_squeeze %46 : memref<1x32xf32, #tpu.memory_space<vmem>> -> memref<32xf32, #tpu.memory_space<vmem>>
    %48 = tpu.memref_slice %arg5[%c4_i32_21] : memref<8x!tpu.dma_semaphore, #tpu.memory_space<semaphore_mem>> -> memref<1x!tpu.dma_semaphore, #tpu.memory_space<semaphore_mem>>
    %49 = tpu.memref_squeeze %48 : memref<1x!tpu.dma_semaphore, #tpu.memory_space<semaphore_mem>> -> memref<!tpu.dma_semaphore, #tpu.memory_space<semaphore_mem>>
    tpu.enqueue_dma source(%45 : memref<32xf32, #tpu.memory_space<any>>) target(%47 : memref<32xf32, #tpu.memory_space<vmem>>) target_semaphore(%49 : memref<!tpu.dma_semaphore, #tpu.memory_space<semaphore_mem>>)
    %c8_i32_24 = arith.constant 8 : i32
    %50 = arith.muli %arg0, %c8_i32_24 : i32
    %c5_i32 = arith.constant 5 : i32
    %51 = arith.addi %50, %c5_i32 : i32
    %52 = arith.index_cast %51 : i32 to index
    %53 = memref.load %arg1[%52] : memref<16xi32, #tpu.memory_space<smem>>
    %c5_i32_25 = arith.constant 5 : i32
    %c5_i32_26 = arith.constant 5 : i32
    %c0_i32_27 = arith.constant 0 : i32
    %54 = tpu.memref_slice %arg2[%53, %c0_i32_27] : memref<16x32xf32, #tpu.memory_space<any>> -> memref<1x32xf32, #tpu.memory_space<any>>
    %55 = tpu.memref_squeeze %54 : memref<1x32xf32, #tpu.memory_space<any>> -> memref<32xf32, #tpu.memory_space<any>>
    %c0_i32_28 = arith.constant 0 : i32
    %56 = tpu.memref_slice %arg4[%c5_i32_25, %c0_i32_28] : memref<8x32xf32, #tpu.memory_space<vmem>> -> memref<1x32xf32, #tpu.memory_space<vmem>>
    %57 = tpu.memref_squeeze %56 : memref<1x32xf32, #tpu.memory_space<vmem>> -> memref<32xf32, #tpu.memory_space<vmem>>
    %58 = tpu.memref_slice %arg5[%c5_i32_26] : memref<8x!tpu.dma_semaphore, #tpu.memory_space<semaphore_mem>> -> memref<1x!tpu.dma_semaphore, #tpu.memory_space<semaphore_mem>>
    %59 = tpu.memref_squeeze %58 : memref<1x!tpu.dma_semaphore, #tpu.memory_space<semaphore_mem>> -> memref<!tpu.dma_semaphore, #tpu.memory_space<semaphore_mem>>
    tpu.enqueue_dma source(%55 : memref<32xf32, #tpu.memory_space<any>>) target(%57 : memref<32xf32, #tpu.memory_space<vmem>>) target_semaphore(%59 : memref<!tpu.dma_semaphore, #tpu.memory_space<semaphore_mem>>)
    %c8_i32_29 = arith.constant 8 : i32
    %60 = arith.muli %arg0, %c8_i32_29 : i32
    %c6_i32 = arith.constant 6 : i32
    %61 = arith.addi %60, %c6_i32 : i32
    %62 = arith.index_cast %61 : i32 to index
    %63 = memref.load %arg1[%62] : memref<16xi32, #tpu.memory_space<smem>>
    %c6_i32_30 = arith.constant 6 : i32
    %c6_i32_31 = arith.constant 6 : i32
    %c0_i32_32 = arith.constant 0 : i32
    %64 = tpu.memref_slice %arg2[%63, %c0_i32_32] : memref<16x32xf32, #tpu.memory_space<any>> -> memref<1x32xf32, #tpu.memory_space<any>>
    %65 = tpu.memref_squeeze %64 : memref<1x32xf32, #tpu.memory_space<any>> -> memref<32xf32, #tpu.memory_space<any>>
    %c0_i32_33 = arith.constant 0 : i32
    %66 = tpu.memref_slice %arg4[%c6_i32_30, %c0_i32_33] : memref<8x32xf32, #tpu.memory_space<vmem>> -> memref<1x32xf32, #tpu.memory_space<vmem>>
    %67 = tpu.memref_squeeze %66 : memref<1x32xf32, #tpu.memory_space<vmem>> -> memref<32xf32, #tpu.memory_space<vmem>>
    %68 = tpu.memref_slice %arg5[%c6_i32_31] : memref<8x!tpu.dma_semaphore, #tpu.memory_space<semaphore_mem>> -> memref<1x!tpu.dma_semaphore, #tpu.memory_space<semaphore_mem>>
    %69 = tpu.memref_squeeze %68 : memref<1x!tpu.dma_semaphore, #tpu.memory_space<semaphore_mem>> -> memref<!tpu.dma_semaphore, #tpu.memory_space<semaphore_mem>>
    tpu.enqueue_dma source(%65 : memref<32xf32, #tpu.memory_space<any>>) target(%67 : memref<32xf32, #tpu.memory_space<vmem>>) target_semaphore(%69 : memref<!tpu.dma_semaphore, #tpu.memory_space<semaphore_mem>>)
    %c8_i32_34 = arith.constant 8 : i32
    %70 = arith.muli %arg0, %c8_i32_34 : i32
    %c7_i32 = arith.constant 7 : i32
    %71 = arith.addi %70, %c7_i32 : i32
    %72 = arith.index_cast %71 : i32 to index
    %73 = memref.load %arg1[%72] : memref<16xi32, #tpu.memory_space<smem>>
    %c7_i32_35 = arith.constant 7 : i32
    %c7_i32_36 = arith.constant 7 : i32
    %c0_i32_37 = arith.constant 0 : i32
    %74 = tpu.memref_slice %arg2[%73, %c0_i32_37] : memref<16x32xf32, #tpu.memory_space<any>> -> memref<1x32xf32, #tpu.memory_space<any>>
    %75 = tpu.memref_squeeze %74 : memref<1x32xf32, #tpu.memory_space<any>> -> memref<32xf32, #tpu.memory_space<any>>
    %c0_i32_38 = arith.constant 0 : i32
    %76 = tpu.memref_slice %arg4[%c7_i32_35, %c0_i32_38] : memref<8x32xf32, #tpu.memory_space<vmem>> -> memref<1x32xf32, #tpu.memory_space<vmem>>
    %77 = tpu.memref_squeeze %76 : memref<1x32xf32, #tpu.memory_space<vmem>> -> memref<32xf32, #tpu.memory_space<vmem>>
    %78 = tpu.memref_slice %arg5[%c7_i32_36] : memref<8x!tpu.dma_semaphore, #tpu.memory_space<semaphore_mem>> -> memref<1x!tpu.dma_semaphore, #tpu.memory_space<semaphore_mem>>
    %79 = tpu.memref_squeeze %78 : memref<1x!tpu.dma_semaphore, #tpu.memory_space<semaphore_mem>> -> memref<!tpu.dma_semaphore, #tpu.memory_space<semaphore_mem>>
    tpu.enqueue_dma source(%75 : memref<32xf32, #tpu.memory_space<any>>) target(%77 : memref<32xf32, #tpu.memory_space<vmem>>) target_semaphore(%79 : memref<!tpu.dma_semaphore, #tpu.memory_space<semaphore_mem>>)
    %c8_i32_39 = arith.constant 8 : i32
    %80 = arith.muli %arg0, %c8_i32_39 : i32
    %c0_i32_40 = arith.constant 0 : i32
    %81 = arith.addi %80, %c0_i32_40 : i32
    %82 = arith.index_cast %81 : i32 to index
    %83 = memref.load %arg1[%82] : memref<16xi32, #tpu.memory_space<smem>>
    %c0_i32_41 = arith.constant 0 : i32
    %c0_i32_42 = arith.constant 0 : i32
    %c0_i32_43 = arith.constant 0 : i32
    %84 = tpu.memref_slice %arg2[%83, %c0_i32_43] : memref<16x32xf32, #tpu.memory_space<any>> -> memref<1x32xf32, #tpu.memory_space<any>>
    %85 = tpu.memref_squeeze %84 : memref<1x32xf32, #tpu.memory_space<any>> -> memref<32xf32, #tpu.memory_space<any>>
    %c0_i32_44 = arith.constant 0 : i32
    %86 = tpu.memref_slice %arg4[%c0_i32_41, %c0_i32_44] : memref<8x32xf32, #tpu.memory_space<vmem>> -> memref<1x32xf32, #tpu.memory_space<vmem>>
    %87 = tpu.memref_squeeze %86 : memref<1x32xf32, #tpu.memory_space<vmem>> -> memref<32xf32, #tpu.memory_space<vmem>>
    %88 = tpu.memref_slice %arg5[%c0_i32_42] : memref<8x!tpu.dma_semaphore, #tpu.memory_space<semaphore_mem>> -> memref<1x!tpu.dma_semaphore, #tpu.memory_space<semaphore_mem>>
    %89 = tpu.memref_squeeze %88 : memref<1x!tpu.dma_semaphore, #tpu.memory_space<semaphore_mem>> -> memref<!tpu.dma_semaphore, #tpu.memory_space<semaphore_mem>>
    tpu.wait_dma2 semaphore(%89 : memref<!tpu.dma_semaphore, #tpu.memory_space<semaphore_mem>>) src(%85 : memref<32xf32, #tpu.memory_space<any>>) dst(%87 : memref<32xf32, #tpu.memory_space<vmem>>)
    %c8_i32_45 = arith.constant 8 : i32
    %90 = arith.muli %arg0, %c8_i32_45 : i32
    %c1_i32_46 = arith.constant 1 : i32
    %91 = arith.addi %90, %c1_i32_46 : i32
    %92 = arith.index_cast %91 : i32 to index
    %93 = memref.load %arg1[%92] : memref<16xi32, #tpu.memory_space<smem>>
    %c1_i32_47 = arith.constant 1 : i32
    %c1_i32_48 = arith.constant 1 : i32
    %c0_i32_49 = arith.constant 0 : i32
    %94 = tpu.memref_slice %arg2[%93, %c0_i32_49] : memref<16x32xf32, #tpu.memory_space<any>> -> memref<1x32xf32, #tpu.memory_space<any>>
    %95 = tpu.memref_squeeze %94 : memref<1x32xf32, #tpu.memory_space<any>> -> memref<32xf32, #tpu.memory_space<any>>
    %c0_i32_50 = arith.constant 0 : i32
    %96 = tpu.memref_slice %arg4[%c1_i32_47, %c0_i32_50] : memref<8x32xf32, #tpu.memory_space<vmem>> -> memref<1x32xf32, #tpu.memory_space<vmem>>
    %97 = tpu.memref_squeeze %96 : memref<1x32xf32, #tpu.memory_space<vmem>> -> memref<32xf32, #tpu.memory_space<vmem>>
    %98 = tpu.memref_slice %arg5[%c1_i32_48] : memref<8x!tpu.dma_semaphore, #tpu.memory_space<semaphore_mem>> -> memref<1x!tpu.dma_semaphore, #tpu.memory_space<semaphore_mem>>
    %99 = tpu.memref_squeeze %98 : memref<1x!tpu.dma_semaphore, #tpu.memory_space<semaphore_mem>> -> memref<!tpu.dma_semaphore, #tpu.memory_space<semaphore_mem>>
    tpu.wait_dma2 semaphore(%99 : memref<!tpu.dma_semaphore, #tpu.memory_space<semaphore_mem>>) src(%95 : memref<32xf32, #tpu.memory_space<any>>) dst(%97 : memref<32xf32, #tpu.memory_space<vmem>>)
    %c8_i32_51 = arith.constant 8 : i32
    %100 = arith.muli %arg0, %c8_i32_51 : i32
    %c2_i32_52 = arith.constant 2 : i32
    %101 = arith.addi %100, %c2_i32_52 : i32
    %102 = arith.index_cast %101 : i32 to index
    %103 = memref.load %arg1[%102] : memref<16xi32, #tpu.memory_space<smem>>
    %c2_i32_53 = arith.constant 2 : i32
    %c2_i32_54 = arith.constant 2 : i32
    %c0_i32_55 = arith.constant 0 : i32
    %104 = tpu.memref_slice %arg2[%103, %c0_i32_55] : memref<16x32xf32, #tpu.memory_space<any>> -> memref<1x32xf32, #tpu.memory_space<any>>
    %105 = tpu.memref_squeeze %104 : memref<1x32xf32, #tpu.memory_space<any>> -> memref<32xf32, #tpu.memory_space<any>>
    %c0_i32_56 = arith.constant 0 : i32
    %106 = tpu.memref_slice %arg4[%c2_i32_53, %c0_i32_56] : memref<8x32xf32, #tpu.memory_space<vmem>> -> memref<1x32xf32, #tpu.memory_space<vmem>>
    %107 = tpu.memref_squeeze %106 : memref<1x32xf32, #tpu.memory_space<vmem>> -> memref<32xf32, #tpu.memory_space<vmem>>
    %108 = tpu.memref_slice %arg5[%c2_i32_54] : memref<8x!tpu.dma_semaphore, #tpu.memory_space<semaphore_mem>> -> memref<1x!tpu.dma_semaphore, #tpu.memory_space<semaphore_mem>>
    %109 = tpu.memref_squeeze %108 : memref<1x!tpu.dma_semaphore, #tpu.memory_space<semaphore_mem>> -> memref<!tpu.dma_semaphore, #tpu.memory_space<semaphore_mem>>
    tpu.wait_dma2 semaphore(%109 : memref<!tpu.dma_semaphore, #tpu.memory_space<semaphore_mem>>) src(%105 : memref<32xf32, #tpu.memory_space<any>>) dst(%107 : memref<32xf32, #tpu.memory_space<vmem>>)
    %c8_i32_57 = arith.constant 8 : i32
    %110 = arith.muli %arg0, %c8_i32_57 : i32
    %c3_i32_58 = arith.constant 3 : i32
    %111 = arith.addi %110, %c3_i32_58 : i32
    %112 = arith.index_cast %111 : i32 to index
    %113 = memref.load %arg1[%112] : memref<16xi32, #tpu.memory_space<smem>>
    %c3_i32_59 = arith.constant 3 : i32
    %c3_i32_60 = arith.constant 3 : i32
    %c0_i32_61 = arith.constant 0 : i32
    %114 = tpu.memref_slice %arg2[%113, %c0_i32_61] : memref<16x32xf32, #tpu.memory_space<any>> -> memref<1x32xf32, #tpu.memory_space<any>>
    %115 = tpu.memref_squeeze %114 : memref<1x32xf32, #tpu.memory_space<any>> -> memref<32xf32, #tpu.memory_space<any>>
    %c0_i32_62 = arith.constant 0 : i32
    %116 = tpu.memref_slice %arg4[%c3_i32_59, %c0_i32_62] : memref<8x32xf32, #tpu.memory_space<vmem>> -> memref<1x32xf32, #tpu.memory_space<vmem>>
    %117 = tpu.memref_squeeze %116 : memref<1x32xf32, #tpu.memory_space<vmem>> -> memref<32xf32, #tpu.memory_space<vmem>>
    %118 = tpu.memref_slice %arg5[%c3_i32_60] : memref<8x!tpu.dma_semaphore, #tpu.memory_space<semaphore_mem>> -> memref<1x!tpu.dma_semaphore, #tpu.memory_space<semaphore_mem>>
    %119 = tpu.memref_squeeze %118 : memref<1x!tpu.dma_semaphore, #tpu.memory_space<semaphore_mem>> -> memref<!tpu.dma_semaphore, #tpu.memory_space<semaphore_mem>>
    tpu.wait_dma2 semaphore(%119 : memref<!tpu.dma_semaphore, #tpu.memory_space<semaphore_mem>>) src(%115 : memref<32xf32, #tpu.memory_space<any>>) dst(%117 : memref<32xf32, #tpu.memory_space<vmem>>)
    %c8_i32_63 = arith.constant 8 : i32
    %120 = arith.muli %arg0, %c8_i32_63 : i32
    %c4_i32_64 = arith.constant 4 : i32
    %121 = arith.addi %120, %c4_i32_64 : i32
    %122 = arith.index_cast %121 : i32 to index
    %123 = memref.load %arg1[%122] : memref<16xi32, #tpu.memory_space<smem>>
    %c4_i32_65 = arith.constant 4 : i32
    %c4_i32_66 = arith.constant 4 : i32
    %c0_i32_67 = arith.constant 0 : i32
    %124 = tpu.memref_slice %arg2[%123, %c0_i32_67] : memref<16x32xf32, #tpu.memory_space<any>> -> memref<1x32xf32, #tpu.memory_space<any>>
    %125 = tpu.memref_squeeze %124 : memref<1x32xf32, #tpu.memory_space<any>> -> memref<32xf32, #tpu.memory_space<any>>
    %c0_i32_68 = arith.constant 0 : i32
    %126 = tpu.memref_slice %arg4[%c4_i32_65, %c0_i32_68] : memref<8x32xf32, #tpu.memory_space<vmem>> -> memref<1x32xf32, #tpu.memory_space<vmem>>
    %127 = tpu.memref_squeeze %126 : memref<1x32xf32, #tpu.memory_space<vmem>> -> memref<32xf32, #tpu.memory_space<vmem>>
    %128 = tpu.memref_slice %arg5[%c4_i32_66] : memref<8x!tpu.dma_semaphore, #tpu.memory_space<semaphore_mem>> -> memref<1x!tpu.dma_semaphore, #tpu.memory_space<semaphore_mem>>
    %129 = tpu.memref_squeeze %128 : memref<1x!tpu.dma_semaphore, #tpu.memory_space<semaphore_mem>> -> memref<!tpu.dma_semaphore, #tpu.memory_space<semaphore_mem>>
    tpu.wait_dma2 semaphore(%129 : memref<!tpu.dma_semaphore, #tpu.memory_space<semaphore_mem>>) src(%125 : memref<32xf32, #tpu.memory_space<any>>) dst(%127 : memref<32xf32, #tpu.memory_space<vmem>>)
    %c8_i32_69 = arith.constant 8 : i32
    %130 = arith.muli %arg0, %c8_i32_69 : i32
    %c5_i32_70 = arith.constant 5 : i32
    %131 = arith.addi %130, %c5_i32_70 : i32
    %132 = arith.index_cast %131 : i32 to index
    %133 = memref.load %arg1[%132] : memref<16xi32, #tpu.memory_space<smem>>
    %c5_i32_71 = arith.constant 5 : i32
    %c5_i32_72 = arith.constant 5 : i32
    %c0_i32_73 = arith.constant 0 : i32
    %134 = tpu.memref_slice %arg2[%133, %c0_i32_73] : memref<16x32xf32, #tpu.memory_space<any>> -> memref<1x32xf32, #tpu.memory_space<any>>
    %135 = tpu.memref_squeeze %134 : memref<1x32xf32, #tpu.memory_space<any>> -> memref<32xf32, #tpu.memory_space<any>>
    %c0_i32_74 = arith.constant 0 : i32
    %136 = tpu.memref_slice %arg4[%c5_i32_71, %c0_i32_74] : memref<8x32xf32, #tpu.memory_space<vmem>> -> memref<1x32xf32, #tpu.memory_space<vmem>>
    %137 = tpu.memref_squeeze %136 : memref<1x32xf32, #tpu.memory_space<vmem>> -> memref<32xf32, #tpu.memory_space<vmem>>
    %138 = tpu.memref_slice %arg5[%c5_i32_72] : memref<8x!tpu.dma_semaphore, #tpu.memory_space<semaphore_mem>> -> memref<1x!tpu.dma_semaphore, #tpu.memory_space<semaphore_mem>>
    %139 = tpu.memref_squeeze %138 : memref<1x!tpu.dma_semaphore, #tpu.memory_space<semaphore_mem>> -> memref<!tpu.dma_semaphore, #tpu.memory_space<semaphore_mem>>
    tpu.wait_dma2 semaphore(%139 : memref<!tpu.dma_semaphore, #tpu.memory_space<semaphore_mem>>) src(%135 : memref<32xf32, #tpu.memory_space<any>>) dst(%137 : memref<32xf32, #tpu.memory_space<vmem>>)
    %c8_i32_75 = arith.constant 8 : i32
    %140 = arith.muli %arg0, %c8_i32_75 : i32
    %c6_i32_76 = arith.constant 6 : i32
    %141 = arith.addi %140, %c6_i32_76 : i32
    %142 = arith.index_cast %141 : i32 to index
    %143 = memref.load %arg1[%142] : memref<16xi32, #tpu.memory_space<smem>>
    %c6_i32_77 = arith.constant 6 : i32
    %c6_i32_78 = arith.constant 6 : i32
    %c0_i32_79 = arith.constant 0 : i32
    %144 = tpu.memref_slice %arg2[%143, %c0_i32_79] : memref<16x32xf32, #tpu.memory_space<any>> -> memref<1x32xf32, #tpu.memory_space<any>>
    %145 = tpu.memref_squeeze %144 : memref<1x32xf32, #tpu.memory_space<any>> -> memref<32xf32, #tpu.memory_space<any>>
    %c0_i32_80 = arith.constant 0 : i32
    %146 = tpu.memref_slice %arg4[%c6_i32_77, %c0_i32_80] : memref<8x32xf32, #tpu.memory_space<vmem>> -> memref<1x32xf32, #tpu.memory_space<vmem>>
    %147 = tpu.memref_squeeze %146 : memref<1x32xf32, #tpu.memory_space<vmem>> -> memref<32xf32, #tpu.memory_space<vmem>>
    %148 = tpu.memref_slice %arg5[%c6_i32_78] : memref<8x!tpu.dma_semaphore, #tpu.memory_space<semaphore_mem>> -> memref<1x!tpu.dma_semaphore, #tpu.memory_space<semaphore_mem>>
    %149 = tpu.memref_squeeze %148 : memref<1x!tpu.dma_semaphore, #tpu.memory_space<semaphore_mem>> -> memref<!tpu.dma_semaphore, #tpu.memory_space<semaphore_mem>>
    tpu.wait_dma2 semaphore(%149 : memref<!tpu.dma_semaphore, #tpu.memory_space<semaphore_mem>>) src(%145 : memref<32xf32, #tpu.memory_space<any>>) dst(%147 : memref<32xf32, #tpu.memory_space<vmem>>)
    %c8_i32_81 = arith.constant 8 : i32
    %150 = arith.muli %arg0, %c8_i32_81 : i32
    %c7_i32_82 = arith.constant 7 : i32
    %151 = arith.addi %150, %c7_i32_82 : i32
    %152 = arith.index_cast %151 : i32 to index
    %153 = memref.load %arg1[%152] : memref<16xi32, #tpu.memory_space<smem>>
    %c7_i32_83 = arith.constant 7 : i32
    %c7_i32_84 = arith.constant 7 : i32
    %c0_i32_85 = arith.constant 0 : i32
    %154 = tpu.memref_slice %arg2[%153, %c0_i32_85] : memref<16x32xf32, #tpu.memory_space<any>> -> memref<1x32xf32, #tpu.memory_space<any>>
    %155 = tpu.memref_squeeze %154 : memref<1x32xf32, #tpu.memory_space<any>> -> memref<32xf32, #tpu.memory_space<any>>
    %c0_i32_86 = arith.constant 0 : i32
    %156 = tpu.memref_slice %arg4[%c7_i32_83, %c0_i32_86] : memref<8x32xf32, #tpu.memory_space<vmem>> -> memref<1x32xf32, #tpu.memory_space<vmem>>
    %157 = tpu.memref_squeeze %156 : memref<1x32xf32, #tpu.memory_space<vmem>> -> memref<32xf32, #tpu.memory_space<vmem>>
    %158 = tpu.memref_slice %arg5[%c7_i32_84] : memref<8x!tpu.dma_semaphore, #tpu.memory_space<semaphore_mem>> -> memref<1x!tpu.dma_semaphore, #tpu.memory_space<semaphore_mem>>
    %159 = tpu.memref_squeeze %158 : memref<1x!tpu.dma_semaphore, #tpu.memory_space<semaphore_mem>> -> memref<!tpu.dma_semaphore, #tpu.memory_space<semaphore_mem>>
    tpu.wait_dma2 semaphore(%159 : memref<!tpu.dma_semaphore, #tpu.memory_space<semaphore_mem>>) src(%155 : memref<32xf32, #tpu.memory_space<any>>) dst(%157 : memref<32xf32, #tpu.memory_space<vmem>>)
    %c0 = arith.constant 0 : index
    %c0_87 = arith.constant 0 : index
    %160 = vector.load %arg4[%c0, %c0_87] : memref<8x32xf32, #tpu.memory_space<vmem>>, vector<8x32xf32>
    %c0_88 = arith.constant 0 : index
    %c0_89 = arith.constant 0 : index
    %161 = vector.load %arg3[%c0_88, %c0_89] : memref<8x32xf32, #tpu.memory_space<vmem>>, vector<8x32xf32>
    tpu.vector_store %arg3[%c0_88, %c0_89], %160 {strides = array<i32>} : memref<8x32xf32, #tpu.memory_space<vmem>>, vector<8x32xf32>,
    return
  }
  func.func @transform_1(%arg0: i32, %arg1: memref<16xi32, #tpu.memory_space<smem>>) -> (i32, i32) {
    %c0_i32 = arith.constant 0 : i32
    %c0_i32_0 = arith.constant 0 : i32
    return %arg0, %c0_i32 : i32, i32
  }
}

module attributes {stable_mosaic.version = 11 : i64} {
  func.func @block_kernel(%arg0: i32, %arg1: i32, %arg2: memref<1x8x32xf32, #tpu.memory_space<vmem>>, %arg3: memref<1x32xf32, #tpu.memory_space<vmem>>, %arg4: memref<1x32xf32, #tpu.memory_space<vmem>>, %arg5: memref<32x128xbf16, #tpu.memory_space<vmem>>, %arg6: memref<4x64xf32, #tpu.memory_space<vmem>>, %arg7: memref<1x64xf32, #tpu.memory_space<vmem>>, %arg8: memref<64x128xbf16, #tpu.memory_space<vmem>>, %arg9: memref<2x64xbf16, #tpu.memory_space<vmem>>, %arg10: memref<1x64xf32, #tpu.memory_space<vmem>>, %arg11: memref<8x64xf32, #tpu.memory_space<vmem>>, %arg12: memref<1x64xf32, #tpu.memory_space<vmem>>, %arg13: memref<64x32xbf16, #tpu.memory_space<vmem>>, %arg14: memref<1x32xf32, #tpu.memory_space<vmem>>, %arg15: memref<1x32xf32, #tpu.memory_space<vmem>>, %arg16: memref<32x64xbf16, #tpu.memory_space<vmem>>, %arg17: memref<1x64xf32, #tpu.memory_space<vmem>>, %arg18: memref<64x32xbf16, #tpu.memory_space<vmem>>, %arg19: memref<1x32xf32, #tpu.memory_space<vmem>>, %arg20: memref<1x8x32xf32, #tpu.memory_space<vmem>>, %arg21: memref<1x8x32xf32, #tpu.memory_space<vmem>>, %arg22: memref<8x64xf32, #tpu.memory_space<vmem>>, %arg23: memref<8x64xf32, #tpu.memory_space<vmem>>, %arg24: memref<8x8x64xf32, #tpu.memory_space<vmem>>, %arg25: memref<8x8x64xf32, #tpu.memory_space<vmem>>, %arg26: memref<8x8x1xf32, #tpu.memory_space<vmem>>, %arg27: memref<8x64xf32, #tpu.memory_space<vmem>>) attributes {dimension_semantics = [#tpu.dimension_semantics<parallel>, #tpu.dimension_semantics<arbitrary>], iteration_bounds = array<i64: 2, 1>, scalar_prefetch = 0 : i64, scratch_operands = 6 : i64, tpu.core_type = #tpu.core_type<tc>, window_params = [{transform_indices = @transform_0, window_bounds = array<i64: 1, 8, 32>}, {pipeline_mode = #tpu.pipeline_mode<synchronous>, transform_indices = @transform_1, window_bounds = array<i64: 1, 32>}, {pipeline_mode = #tpu.pipeline_mode<synchronous>, transform_indices = @transform_2, window_bounds = array<i64: 1, 32>}, {pipeline_mode = #tpu.pipeline_mode<synchronous>, transform_indices = @transform_3, window_bounds = array<i64: 32, 128>}, {pipeline_mode = #tpu.pipeline_mode<synchronous>, transform_indices = @transform_4, window_bounds = array<i64: 4, 64>}, {pipeline_mode = #tpu.pipeline_mode<synchronous>, transform_indices = @transform_5, window_bounds = array<i64: 1, 64>}, {pipeline_mode = #tpu.pipeline_mode<synchronous>, transform_indices = @transform_6, window_bounds = array<i64: 64, 128>}, {pipeline_mode = #tpu.pipeline_mode<synchronous>, transform_indices = @transform_7, window_bounds = array<i64: 2, 64>}, {pipeline_mode = #tpu.pipeline_mode<synchronous>, transform_indices = @transform_8, window_bounds = array<i64: 1, 64>}, {pipeline_mode = #tpu.pipeline_mode<synchronous>, transform_indices = @transform_9, window_bounds = array<i64: 8, 64>}, {pipeline_mode = #tpu.pipeline_mode<synchronous>, transform_indices = @transform_10, window_bounds = array<i64: 1, 64>}, {pipeline_mode = #tpu.pipeline_mode<synchronous>, transform_indices = @transform_11, window_bounds = array<i64: 64, 32>}, {pipeline_mode = #tpu.pipeline_mode<synchronous>, transform_indices = @transform_12, window_bounds = array<i64: 1, 32>}, {pipeline_mode = #tpu.pipeline_mode<synchronous>, transform_indices = @transform_13, window_bounds = array<i64: 1, 32>}, {pipeline_mode = #tpu.pipeline_mode<synchronous>, transform_indices = @transform_14, window_bounds = array<i64: 32, 64>}, {pipeline_mode = #tpu.pipeline_mode<synchronous>, transform_indices = @transform_15, window_bounds = array<i64: 1, 64>}, {pipeline_mode = #tpu.pipeline_mode<synchronous>, transform_indices = @transform_16, window_bounds = array<i64: 64, 32>}, {pipeline_mode = #tpu.pipeline_mode<synchronous>, transform_indices = @transform_17, window_bounds = array<i64: 1, 32>}, {transform_indices = @transform_18, window_bounds = array<i64: 1, 8, 32>}, {transform_indices = @transform_19, window_bounds = array<i64: 1, 8, 32>}]} {
    %c0_i32 = arith.constant 0 : i32
    %0 = arith.cmpi eq, %arg1, %c0_i32 : i32
    %1 = arith.extui %0 : i1 to i32
    %c0_i32_0 = arith.constant 0 : i32
    %2 = arith.cmpi ne, %1, %c0_i32_0 : i32
    scf.if %2 {
      %cst_220 = arith.constant 0.000000e+00 : f32
      %455 = vector.broadcast %cst_220 : f32 to vector<8x64xf32>
      %c0_221 = arith.constant 0 : index
      %c0_222 = arith.constant 0 : index
      %456 = vector.load %arg22[%c0_221, %c0_222] : memref<8x64xf32, #tpu.memory_space<vmem>>, vector<8x64xf32>
      tpu.vector_store %arg22[%c0_221, %c0_222], %455 {strides = array<i32>} : memref<8x64xf32, #tpu.memory_space<vmem>>, vector<8x64xf32>,
      %cst_223 = arith.constant 0.000000e+00 : f32
      %457 = vector.broadcast %cst_223 : f32 to vector<8x64xf32>
      %c0_224 = arith.constant 0 : index
      %c0_225 = arith.constant 0 : index
      %458 = vector.load %arg23[%c0_224, %c0_225] : memref<8x64xf32, #tpu.memory_space<vmem>>, vector<8x64xf32>
      tpu.vector_store %arg23[%c0_224, %c0_225], %457 {strides = array<i32>} : memref<8x64xf32, #tpu.memory_space<vmem>>, vector<8x64xf32>,
    } else {
    }
    %c0 = arith.constant 0 : index
    %c0_1 = arith.constant 0 : index
    %c0_2 = arith.constant 0 : index
    %3 = vector.load %arg2[%c0, %c0_1, %c0_2] : memref<1x8x32xf32, #tpu.memory_space<vmem>>, vector<1x8x32xf32>
    %4 = vector.shape_cast %3 : vector<1x8x32xf32> to vector<8x32xf32>
    %c0_3 = arith.constant 0 : index
    %c0_4 = arith.constant 0 : index
    %5 = vector.load %arg3[%c0_3, %c0_4] : memref<1x32xf32, #tpu.memory_space<vmem>>, vector<1x32xf32>
    %6 = vector.shape_cast %5 : vector<1x32xf32> to vector<32xf32>
    %c0_5 = arith.constant 0 : index
    %c0_6 = arith.constant 0 : index
    %7 = vector.load %arg4[%c0_5, %c0_6] : memref<1x32xf32, #tpu.memory_space<vmem>>, vector<1x32xf32>
    %8 = vector.shape_cast %7 : vector<1x32xf32> to vector<32xf32>
    %cst = arith.constant dense<0.000000e+00> : vector<8xf32>
    %9 = vector.multi_reduction <add>, %4, %cst [1] : vector<8x32xf32> to vector<8xf32>
    %10 = vector.shape_cast %9 : vector<8xf32> to vector<8x1xf32>
    %cst_7 = arith.constant 3.200000e+01 : f32
    %11 = vector.broadcast %cst_7 : f32 to vector<8x1xf32>
    %12 = arith.divf %10, %11 : vector<8x1xf32>
    %13 = vector.broadcast %12 : vector<8x1xf32> to vector<8x32xf32>
    %14 = arith.subf %4, %13 : vector<8x32xf32>
    %15 = arith.mulf %14, %14 : vector<8x32xf32>
    %cst_8 = arith.constant dense<0.000000e+00> : vector<8xf32>
    %16 = vector.multi_reduction <add>, %15, %cst_8 [1] : vector<8x32xf32> to vector<8xf32>
    %17 = vector.shape_cast %16 : vector<8xf32> to vector<8x1xf32>
    %cst_9 = arith.constant 3.200000e+01 : f32
    %18 = vector.broadcast %cst_9 : f32 to vector<8x1xf32>
    %19 = arith.divf %17, %18 : vector<8x1xf32>
    %cst_10 = arith.constant 9.99999974E-6 : f32
    %20 = vector.broadcast %cst_10 : f32 to vector<8x1xf32>
    %21 = arith.addf %19, %20 : vector<8x1xf32>
    %22 = math.rsqrt %21 : vector<8x1xf32>
    %23 = vector.broadcast %22 : vector<8x1xf32> to vector<8x32xf32>
    %24 = arith.mulf %14, %23 : vector<8x32xf32>
    %25 = vector.shape_cast %6 : vector<32xf32> to vector<1x32xf32>
    %26 = vector.broadcast %25 : vector<1x32xf32> to vector<8x32xf32>
    %27 = arith.mulf %24, %26 : vector<8x32xf32>
    %28 = vector.shape_cast %8 : vector<32xf32> to vector<1x32xf32>
    %29 = vector.broadcast %28 : vector<1x32xf32> to vector<8x32xf32>
    %30 = arith.addf %27, %29 : vector<8x32xf32>
    %c0_11 = arith.constant 0 : index
    %c0_12 = arith.constant 0 : index
    %31 = vector.load %arg5[%c0_11, %c0_12] : memref<32x128xbf16, #tpu.memory_space<vmem>>, vector<32x128xbf16>
    %32 = arith.truncf %30 : vector<8x32xf32> to vector<8x32xbf16>
    %cst_13 = arith.constant dense<0.000000e+00> : vector<8x128xf32>
    %33 = tpu.matmul %32, %31, %cst_13 {dimension_numbers = #tpu.dot_dimension_numbers<[1], [0], [0], [1], [0, 0, 1, 1], [], []>} : vector<8x32xbf16>, vector<32x128xbf16>, vector<8x128xf32> -> vector<8x128xf32>
    %34 = vector.extract_strided_slice %33 {offsets = [0, 0], sizes = [8, 64], strides = [1, 1]} : vector<8x128xf32> to vector<8x64xf32>
    %35 = vector.extract_strided_slice %33 {offsets = [0, 64], sizes = [8, 64], strides = [1, 1]} : vector<8x128xf32> to vector<8x64xf32>
    %c0_14 = arith.constant 0 : index
    %c0_15 = arith.constant 0 : index
    %36 = vector.load %arg6[%c0_14, %c0_15] : memref<4x64xf32, #tpu.memory_space<vmem>>, vector<4x64xf32>
    %c0_16 = arith.constant 0 : index
    %c0_17 = arith.constant 0 : index
    %37 = vector.load %arg22[%c0_16, %c0_17] : memref<8x64xf32, #tpu.memory_space<vmem>>, vector<8x64xf32>
    %38 = tpu.concatenate %37, %34 in 0 : vector<8x64xf32>, vector<8x64xf32> -> vector<16x64xf32>
    %c0_18 = arith.constant 0 : index
    %c0_19 = arith.constant 0 : index
    %39 = vector.load %arg7[%c0_18, %c0_19] : memref<1x64xf32, #tpu.memory_space<vmem>>, vector<1x64xf32>
    %40 = vector.extract_strided_slice %36 {offsets = [3, 0], sizes = [1, 64], strides = [1, 1]} : vector<4x64xf32> to vector<1x64xf32>
    %41 = vector.broadcast %40 : vector<1x64xf32> to vector<8x64xf32>
    %42 = arith.mulf %41, %34 : vector<8x64xf32>
    %43 = vector.broadcast %39 : vector<1x64xf32> to vector<8x64xf32>
    %44 = arith.addf %43, %42 : vector<8x64xf32>
    %45 = vector.extract_strided_slice %36 {offsets = [0, 0], sizes = [1, 64], strides = [1, 1]} : vector<4x64xf32> to vector<1x64xf32>
    %46 = vector.extract_strided_slice %38 {offsets = [5, 0], sizes = [8, 64], strides = [1, 1]} : vector<16x64xf32> to vector<8x64xf32>
    %47 = vector.broadcast %45 : vector<1x64xf32> to vector<8x64xf32>
    %48 = arith.mulf %47, %46 : vector<8x64xf32>
    %49 = arith.addf %44, %48 : vector<8x64xf32>
    %50 = vector.extract_strided_slice %36 {offsets = [1, 0], sizes = [1, 64], strides = [1, 1]} : vector<4x64xf32> to vector<1x64xf32>
    %51 = vector.extract_strided_slice %38 {offsets = [6, 0], sizes = [8, 64], strides = [1, 1]} : vector<16x64xf32> to vector<8x64xf32>
    %52 = vector.broadcast %50 : vector<1x64xf32> to vector<8x64xf32>
    %53 = arith.mulf %52, %51 : vector<8x64xf32>
    %54 = arith.addf %49, %53 : vector<8x64xf32>
    %55 = vector.extract_strided_slice %36 {offsets = [2, 0], sizes = [1, 64], strides = [1, 1]} : vector<4x64xf32> to vector<1x64xf32>
    %56 = vector.extract_strided_slice %38 {offsets = [7, 0], sizes = [8, 64], strides = [1, 1]} : vector<16x64xf32> to vector<8x64xf32>
    %57 = vector.broadcast %55 : vector<1x64xf32> to vector<8x64xf32>
    %58 = arith.mulf %57, %56 : vector<8x64xf32>
    %59 = arith.addf %54, %58 : vector<8x64xf32>
    %cst_20 = arith.constant 5.000000e-01 : f32
    %60 = vector.broadcast %cst_20 : f32 to vector<8x64xf32>
    %61 = arith.mulf %60, %59 : vector<8x64xf32>
    %62 = math.tanh %61 : vector<8x64xf32>
    %cst_21 = arith.constant 1.000000e+00 : f32
    %63 = vector.broadcast %cst_21 : f32 to vector<8x64xf32>
    %64 = arith.addf %62, %63 : vector<8x64xf32>
    %cst_22 = arith.constant 5.000000e-01 : f32
    %65 = vector.broadcast %cst_22 : f32 to vector<8x64xf32>
    %66 = arith.mulf %65, %64 : vector<8x64xf32>
    %67 = arith.mulf %59, %66 : vector<8x64xf32>
    %c0_23 = arith.constant 0 : index
    %c0_24 = arith.constant 0 : index
    %68 = vector.load %arg8[%c0_23, %c0_24] : memref<64x128xbf16, #tpu.memory_space<vmem>>, vector<64x128xbf16>
    %69 = arith.truncf %67 : vector<8x64xf32> to vector<8x64xbf16>
    %cst_25 = arith.constant dense<0.000000e+00> : vector<8x128xf32>
    %70 = tpu.matmul %69, %68, %cst_25 {dimension_numbers = #tpu.dot_dimension_numbers<[1], [0], [0], [1], [0, 0, 1, 1], [], []>} : vector<8x64xbf16>, vector<64x128xbf16>, vector<8x128xf32> -> vector<8x128xf32>
    %71 = vector.extract_strided_slice %70 {offsets = [0, 0], sizes = [8, 2], strides = [1, 1]} : vector<8x128xf32> to vector<8x2xf32>
    %72 = vector.extract_strided_slice %70 {offsets = [0, 2], sizes = [8, 8], strides = [1, 1]} : vector<8x128xf32> to vector<8x8xf32>
    %73 = vector.extract_strided_slice %70 {offsets = [0, 10], sizes = [8, 8], strides = [1, 1]} : vector<8x128xf32> to vector<8x8xf32>
    %c0_26 = arith.constant 0 : index
    %c0_27 = arith.constant 0 : index
    %74 = vector.load %arg9[%c0_26, %c0_27] : memref<2x64xbf16, #tpu.memory_space<vmem>>, vector<2x64xbf16>
    %75 = arith.truncf %71 : vector<8x2xf32> to vector<8x2xbf16>
    %cst_28 = arith.constant dense<0.000000e+00> : vector<8x64xf32>
    %76 = tpu.matmul %75, %74, %cst_28 {dimension_numbers = #tpu.dot_dimension_numbers<[1], [0], [0], [1], [0, 0, 1, 1], [], []>} : vector<8x2xbf16>, vector<2x64xbf16>, vector<8x64xf32> -> vector<8x64xf32>
    %c0_29 = arith.constant 0 : index
    %c0_30 = arith.constant 0 : index
    %77 = vector.load %arg10[%c0_29, %c0_30] : memref<1x64xf32, #tpu.memory_space<vmem>>, vector<1x64xf32>
    %78 = vector.broadcast %77 : vector<1x64xf32> to vector<8x64xf32>
    %79 = arith.addf %76, %78 : vector<8x64xf32>
    %cst_31 = arith.constant 0.000000e+00 : f32
    %80 = vector.broadcast %cst_31 : f32 to vector<8x64xf32>
    %81 = arith.maximumf %79, %80 : vector<8x64xf32>
    %82 = math.absf %79 : vector<8x64xf32>
    %cst_32 = arith.constant 0.000000e+00 : f32
    %83 = vector.broadcast %cst_32 : f32 to vector<8x64xf32>
    %84 = arith.subf %83, %82 : vector<8x64xf32>
    %85 = math.exp %84 : vector<8x64xf32>
    %cst_33 = arith.constant 1.000000e+00 : f32
    %86 = vector.broadcast %cst_33 : f32 to vector<8x64xf32>
    %87 = arith.addf %86, %85 : vector<8x64xf32>
    %88 = math.log %87 : vector<8x64xf32>
    %89 = arith.addf %81, %88 : vector<8x64xf32>
    %90 = arith.mulf %89, %67 : vector<8x64xf32>
    %c0_34 = arith.constant 0 : index
    %c0_35 = arith.constant 0 : index
    %91 = vector.load %arg11[%c0_34, %c0_35] : memref<8x64xf32, #tpu.memory_space<vmem>>, vector<1x64xf32>
    %92 = vector.shape_cast %91 : vector<1x64xf32> to vector<64xf32>
    %93 = vector.shape_cast %92 : vector<64xf32> to vector<1x64xf32>
    %94 = vector.broadcast %93 : vector<1x64xf32> to vector<8x64xf32>
    %95 = arith.mulf %89, %94 : vector<8x64xf32>
    %96 = math.exp %95 : vector<8x64xf32>
    %c0_36 = arith.constant 0 : index
    %c0_37 = arith.constant 0 : index
    %c0_38 = arith.constant 0 : index
    %97 = vector.load %arg24[%c0_36, %c0_37, %c0_38] : memref<8x8x64xf32, #tpu.memory_space<vmem>>, vector<8x1x64xf32>
    %98 = vector.shape_cast %97 : vector<8x1x64xf32> to vector<8x64xf32>
    %99 = vector.shape_cast %96 : vector<8x64xf32> to vector<8x1x64xf32>
    tpu.vector_store %arg24[%c0_36, %c0_37, %c0_38], %99 {strides = array<i32>} : memref<8x8x64xf32, #tpu.memory_space<vmem>>, vector<8x1x64xf32>,
    %100 = vector.extract_strided_slice %72 {offsets = [0, 0], sizes = [8, 1], strides = [1, 1]} : vector<8x8xf32> to vector<8x1xf32>
    %101 = vector.broadcast %100 : vector<8x1xf32> to vector<8x64xf32>
    %102 = arith.mulf %90, %101 : vector<8x64xf32>
    %c0_39 = arith.constant 0 : index
    %c0_40 = arith.constant 0 : index
    %c0_41 = arith.constant 0 : index
    %103 = vector.load %arg25[%c0_39, %c0_40, %c0_41] : memref<8x8x64xf32, #tpu.memory_space<vmem>>, vector<8x1x64xf32>
    %104 = vector.shape_cast %103 : vector<8x1x64xf32> to vector<8x64xf32>
    %105 = vector.shape_cast %102 : vector<8x64xf32> to vector<8x1x64xf32>
    tpu.vector_store %arg25[%c0_39, %c0_40, %c0_41], %105 {strides = array<i32>} : memref<8x8x64xf32, #tpu.memory_space<vmem>>, vector<8x1x64xf32>,
    %106 = vector.extract_strided_slice %73 {offsets = [0, 0], sizes = [8, 1], strides = [1, 1]} : vector<8x8xf32> to vector<8x1xf32>
    %c0_42 = arith.constant 0 : index
    %c0_43 = arith.constant 0 : index
    %c0_44 = arith.constant 0 : index
    %107 = vector.load %arg26[%c0_42, %c0_43, %c0_44] : memref<8x8x1xf32, #tpu.memory_space<vmem>>, vector<8x1x1xf32>
    %108 = vector.shape_cast %107 : vector<8x1x1xf32> to vector<8x1xf32>
    %109 = vector.shape_cast %106 : vector<8x1xf32> to vector<8x1x1xf32>
    tpu.vector_store %arg26[%c0_42, %c0_43, %c0_44], %109 {strides = array<i32>} : memref<8x8x1xf32, #tpu.memory_space<vmem>>, vector<8x1x1xf32>,
    %c1 = arith.constant 1 : index
    %c0_45 = arith.constant 0 : index
    %110 = vector.load %arg11[%c1, %c0_45] : memref<8x64xf32, #tpu.memory_space<vmem>>, vector<1x64xf32>
    %111 = vector.shape_cast %110 : vector<1x64xf32> to vector<64xf32>
    %112 = vector.shape_cast %111 : vector<64xf32> to vector<1x64xf32>
    %113 = vector.broadcast %112 : vector<1x64xf32> to vector<8x64xf32>
    %114 = arith.mulf %89, %113 : vector<8x64xf32>
    %115 = math.exp %114 : vector<8x64xf32>
    %c0_46 = arith.constant 0 : index
    %c1_47 = arith.constant 1 : index
    %c0_48 = arith.constant 0 : index
    %116 = vector.load %arg24[%c0_46, %c1_47, %c0_48] : memref<8x8x64xf32, #tpu.memory_space<vmem>>, vector<8x1x64xf32>
    %117 = vector.shape_cast %116 : vector<8x1x64xf32> to vector<8x64xf32>
    %118 = vector.shape_cast %115 : vector<8x64xf32> to vector<8x1x64xf32>
    tpu.vector_store %arg24[%c0_46, %c1_47, %c0_48], %118 {strides = array<i32>} : memref<8x8x64xf32, #tpu.memory_space<vmem>>, vector<8x1x64xf32>,
    %119 = vector.extract_strided_slice %72 {offsets = [0, 1], sizes = [8, 1], strides = [1, 1]} : vector<8x8xf32> to vector<8x1xf32>
    %120 = vector.broadcast %119 : vector<8x1xf32> to vector<8x64xf32>
    %121 = arith.mulf %90, %120 : vector<8x64xf32>
    %c0_49 = arith.constant 0 : index
    %c1_50 = arith.constant 1 : index
    %c0_51 = arith.constant 0 : index
    %122 = vector.load %arg25[%c0_49, %c1_50, %c0_51] : memref<8x8x64xf32, #tpu.memory_space<vmem>>, vector<8x1x64xf32>
    %123 = vector.shape_cast %122 : vector<8x1x64xf32> to vector<8x64xf32>
    %124 = vector.shape_cast %121 : vector<8x64xf32> to vector<8x1x64xf32>
    tpu.vector_store %arg25[%c0_49, %c1_50, %c0_51], %124 {strides = array<i32>} : memref<8x8x64xf32, #tpu.memory_space<vmem>>, vector<8x1x64xf32>,
    %125 = vector.extract_strided_slice %73 {offsets = [0, 1], sizes = [8, 1], strides = [1, 1]} : vector<8x8xf32> to vector<8x1xf32>
    %c0_52 = arith.constant 0 : index
    %c1_53 = arith.constant 1 : index
    %c0_54 = arith.constant 0 : index
    %126 = vector.load %arg26[%c0_52, %c1_53, %c0_54] : memref<8x8x1xf32, #tpu.memory_space<vmem>>, vector<8x1x1xf32>
    %127 = vector.shape_cast %126 : vector<8x1x1xf32> to vector<8x1xf32>
    %128 = vector.shape_cast %125 : vector<8x1xf32> to vector<8x1x1xf32>
    tpu.vector_store %arg26[%c0_52, %c1_53, %c0_54], %128 {strides = array<i32>} : memref<8x8x1xf32, #tpu.memory_space<vmem>>, vector<8x1x1xf32>,
    %c2 = arith.constant 2 : index
    %c0_55 = arith.constant 0 : index
    %129 = vector.load %arg11[%c2, %c0_55] : memref<8x64xf32, #tpu.memory_space<vmem>>, vector<1x64xf32>
    %130 = vector.shape_cast %129 : vector<1x64xf32> to vector<64xf32>
    %131 = vector.shape_cast %130 : vector<64xf32> to vector<1x64xf32>
    %132 = vector.broadcast %131 : vector<1x64xf32> to vector<8x64xf32>
    %133 = arith.mulf %89, %132 : vector<8x64xf32>
    %134 = math.exp %133 : vector<8x64xf32>
    %c0_56 = arith.constant 0 : index
    %c2_57 = arith.constant 2 : index
    %c0_58 = arith.constant 0 : index
    %135 = vector.load %arg24[%c0_56, %c2_57, %c0_58] : memref<8x8x64xf32, #tpu.memory_space<vmem>>, vector<8x1x64xf32>
    %136 = vector.shape_cast %135 : vector<8x1x64xf32> to vector<8x64xf32>
    %137 = vector.shape_cast %134 : vector<8x64xf32> to vector<8x1x64xf32>
    tpu.vector_store %arg24[%c0_56, %c2_57, %c0_58], %137 {strides = array<i32>} : memref<8x8x64xf32, #tpu.memory_space<vmem>>, vector<8x1x64xf32>,
    %138 = vector.extract_strided_slice %72 {offsets = [0, 2], sizes = [8, 1], strides = [1, 1]} : vector<8x8xf32> to vector<8x1xf32>
    %139 = vector.broadcast %138 : vector<8x1xf32> to vector<8x64xf32>
    %140 = arith.mulf %90, %139 : vector<8x64xf32>
    %c0_59 = arith.constant 0 : index
    %c2_60 = arith.constant 2 : index
    %c0_61 = arith.constant 0 : index
    %141 = vector.load %arg25[%c0_59, %c2_60, %c0_61] : memref<8x8x64xf32, #tpu.memory_space<vmem>>, vector<8x1x64xf32>
    %142 = vector.shape_cast %141 : vector<8x1x64xf32> to vector<8x64xf32>
    %143 = vector.shape_cast %140 : vector<8x64xf32> to vector<8x1x64xf32>
    tpu.vector_store %arg25[%c0_59, %c2_60, %c0_61], %143 {strides = array<i32>} : memref<8x8x64xf32, #tpu.memory_space<vmem>>, vector<8x1x64xf32>,
    %144 = vector.extract_strided_slice %73 {offsets = [0, 2], sizes = [8, 1], strides = [1, 1]} : vector<8x8xf32> to vector<8x1xf32>
    %c0_62 = arith.constant 0 : index
    %c2_63 = arith.constant 2 : index
    %c0_64 = arith.constant 0 : index
    %145 = vector.load %arg26[%c0_62, %c2_63, %c0_64] : memref<8x8x1xf32, #tpu.memory_space<vmem>>, vector<8x1x1xf32>
    %146 = vector.shape_cast %145 : vector<8x1x1xf32> to vector<8x1xf32>
    %147 = vector.shape_cast %144 : vector<8x1xf32> to vector<8x1x1xf32>
    tpu.vector_store %arg26[%c0_62, %c2_63, %c0_64], %147 {strides = array<i32>} : memref<8x8x1xf32, #tpu.memory_space<vmem>>, vector<8x1x1xf32>,
    %c3 = arith.constant 3 : index
    %c0_65 = arith.constant 0 : index
    %148 = vector.load %arg11[%c3, %c0_65] : memref<8x64xf32, #tpu.memory_space<vmem>>, vector<1x64xf32>
    %149 = vector.shape_cast %148 : vector<1x64xf32> to vector<64xf32>
    %150 = vector.shape_cast %149 : vector<64xf32> to vector<1x64xf32>
    %151 = vector.broadcast %150 : vector<1x64xf32> to vector<8x64xf32>
    %152 = arith.mulf %89, %151 : vector<8x64xf32>
    %153 = math.exp %152 : vector<8x64xf32>
    %c0_66 = arith.constant 0 : index
    %c3_67 = arith.constant 3 : index
    %c0_68 = arith.constant 0 : index
    %154 = vector.load %arg24[%c0_66, %c3_67, %c0_68] : memref<8x8x64xf32, #tpu.memory_space<vmem>>, vector<8x1x64xf32>
    %155 = vector.shape_cast %154 : vector<8x1x64xf32> to vector<8x64xf32>
    %156 = vector.shape_cast %153 : vector<8x64xf32> to vector<8x1x64xf32>
    tpu.vector_store %arg24[%c0_66, %c3_67, %c0_68], %156 {strides = array<i32>} : memref<8x8x64xf32, #tpu.memory_space<vmem>>, vector<8x1x64xf32>,
    %157 = vector.extract_strided_slice %72 {offsets = [0, 3], sizes = [8, 1], strides = [1, 1]} : vector<8x8xf32> to vector<8x1xf32>
    %158 = vector.broadcast %157 : vector<8x1xf32> to vector<8x64xf32>
    %159 = arith.mulf %90, %158 : vector<8x64xf32>
    %c0_69 = arith.constant 0 : index
    %c3_70 = arith.constant 3 : index
    %c0_71 = arith.constant 0 : index
    %160 = vector.load %arg25[%c0_69, %c3_70, %c0_71] : memref<8x8x64xf32, #tpu.memory_space<vmem>>, vector<8x1x64xf32>
    %161 = vector.shape_cast %160 : vector<8x1x64xf32> to vector<8x64xf32>
    %162 = vector.shape_cast %159 : vector<8x64xf32> to vector<8x1x64xf32>
    tpu.vector_store %arg25[%c0_69, %c3_70, %c0_71], %162 {strides = array<i32>} : memref<8x8x64xf32, #tpu.memory_space<vmem>>, vector<8x1x64xf32>,
    %163 = vector.extract_strided_slice %73 {offsets = [0, 3], sizes = [8, 1], strides = [1, 1]} : vector<8x8xf32> to vector<8x1xf32>
    %c0_72 = arith.constant 0 : index
    %c3_73 = arith.constant 3 : index
    %c0_74 = arith.constant 0 : index
    %164 = vector.load %arg26[%c0_72, %c3_73, %c0_74] : memref<8x8x1xf32, #tpu.memory_space<vmem>>, vector<8x1x1xf32>
    %165 = vector.shape_cast %164 : vector<8x1x1xf32> to vector<8x1xf32>
    %166 = vector.shape_cast %163 : vector<8x1xf32> to vector<8x1x1xf32>
    tpu.vector_store %arg26[%c0_72, %c3_73, %c0_74], %166 {strides = array<i32>} : memref<8x8x1xf32, #tpu.memory_space<vmem>>, vector<8x1x1xf32>,
    %c4 = arith.constant 4 : index
    %c0_75 = arith.constant 0 : index
    %167 = vector.load %arg11[%c4, %c0_75] : memref<8x64xf32, #tpu.memory_space<vmem>>, vector<1x64xf32>
    %168 = vector.shape_cast %167 : vector<1x64xf32> to vector<64xf32>
    %169 = vector.shape_cast %168 : vector<64xf32> to vector<1x64xf32>
    %170 = vector.broadcast %169 : vector<1x64xf32> to vector<8x64xf32>
    %171 = arith.mulf %89, %170 : vector<8x64xf32>
    %172 = math.exp %171 : vector<8x64xf32>
    %c0_76 = arith.constant 0 : index
    %c4_77 = arith.constant 4 : index
    %c0_78 = arith.constant 0 : index
    %173 = vector.load %arg24[%c0_76, %c4_77, %c0_78] : memref<8x8x64xf32, #tpu.memory_space<vmem>>, vector<8x1x64xf32>
    %174 = vector.shape_cast %173 : vector<8x1x64xf32> to vector<8x64xf32>
    %175 = vector.shape_cast %172 : vector<8x64xf32> to vector<8x1x64xf32>
    tpu.vector_store %arg24[%c0_76, %c4_77, %c0_78], %175 {strides = array<i32>} : memref<8x8x64xf32, #tpu.memory_space<vmem>>, vector<8x1x64xf32>,
    %176 = vector.extract_strided_slice %72 {offsets = [0, 4], sizes = [8, 1], strides = [1, 1]} : vector<8x8xf32> to vector<8x1xf32>
    %177 = vector.broadcast %176 : vector<8x1xf32> to vector<8x64xf32>
    %178 = arith.mulf %90, %177 : vector<8x64xf32>
    %c0_79 = arith.constant 0 : index
    %c4_80 = arith.constant 4 : index
    %c0_81 = arith.constant 0 : index
    %179 = vector.load %arg25[%c0_79, %c4_80, %c0_81] : memref<8x8x64xf32, #tpu.memory_space<vmem>>, vector<8x1x64xf32>
    %180 = vector.shape_cast %179 : vector<8x1x64xf32> to vector<8x64xf32>
    %181 = vector.shape_cast %178 : vector<8x64xf32> to vector<8x1x64xf32>
    tpu.vector_store %arg25[%c0_79, %c4_80, %c0_81], %181 {strides = array<i32>} : memref<8x8x64xf32, #tpu.memory_space<vmem>>, vector<8x1x64xf32>,
    %182 = vector.extract_strided_slice %73 {offsets = [0, 4], sizes = [8, 1], strides = [1, 1]} : vector<8x8xf32> to vector<8x1xf32>
    %c0_82 = arith.constant 0 : index
    %c4_83 = arith.constant 4 : index
    %c0_84 = arith.constant 0 : index
    %183 = vector.load %arg26[%c0_82, %c4_83, %c0_84] : memref<8x8x1xf32, #tpu.memory_space<vmem>>, vector<8x1x1xf32>
    %184 = vector.shape_cast %183 : vector<8x1x1xf32> to vector<8x1xf32>
    %185 = vector.shape_cast %182 : vector<8x1xf32> to vector<8x1x1xf32>
    tpu.vector_store %arg26[%c0_82, %c4_83, %c0_84], %185 {strides = array<i32>} : memref<8x8x1xf32, #tpu.memory_space<vmem>>, vector<8x1x1xf32>,
    %c5 = arith.constant 5 : index
    %c0_85 = arith.constant 0 : index
    %186 = vector.load %arg11[%c5, %c0_85] : memref<8x64xf32, #tpu.memory_space<vmem>>, vector<1x64xf32>
    %187 = vector.shape_cast %186 : vector<1x64xf32> to vector<64xf32>
    %188 = vector.shape_cast %187 : vector<64xf32> to vector<1x64xf32>
    %189 = vector.broadcast %188 : vector<1x64xf32> to vector<8x64xf32>
    %190 = arith.mulf %89, %189 : vector<8x64xf32>
    %191 = math.exp %190 : vector<8x64xf32>
    %c0_86 = arith.constant 0 : index
    %c5_87 = arith.constant 5 : index
    %c0_88 = arith.constant 0 : index
    %192 = vector.load %arg24[%c0_86, %c5_87, %c0_88] : memref<8x8x64xf32, #tpu.memory_space<vmem>>, vector<8x1x64xf32>
    %193 = vector.shape_cast %192 : vector<8x1x64xf32> to vector<8x64xf32>
    %194 = vector.shape_cast %191 : vector<8x64xf32> to vector<8x1x64xf32>
    tpu.vector_store %arg24[%c0_86, %c5_87, %c0_88], %194 {strides = array<i32>} : memref<8x8x64xf32, #tpu.memory_space<vmem>>, vector<8x1x64xf32>,
    %195 = vector.extract_strided_slice %72 {offsets = [0, 5], sizes = [8, 1], strides = [1, 1]} : vector<8x8xf32> to vector<8x1xf32>
    %196 = vector.broadcast %195 : vector<8x1xf32> to vector<8x64xf32>
    %197 = arith.mulf %90, %196 : vector<8x64xf32>
    %c0_89 = arith.constant 0 : index
    %c5_90 = arith.constant 5 : index
    %c0_91 = arith.constant 0 : index
    %198 = vector.load %arg25[%c0_89, %c5_90, %c0_91] : memref<8x8x64xf32, #tpu.memory_space<vmem>>, vector<8x1x64xf32>
    %199 = vector.shape_cast %198 : vector<8x1x64xf32> to vector<8x64xf32>
    %200 = vector.shape_cast %197 : vector<8x64xf32> to vector<8x1x64xf32>
    tpu.vector_store %arg25[%c0_89, %c5_90, %c0_91], %200 {strides = array<i32>} : memref<8x8x64xf32, #tpu.memory_space<vmem>>, vector<8x1x64xf32>,
    %201 = vector.extract_strided_slice %73 {offsets = [0, 5], sizes = [8, 1], strides = [1, 1]} : vector<8x8xf32> to vector<8x1xf32>
    %c0_92 = arith.constant 0 : index
    %c5_93 = arith.constant 5 : index
    %c0_94 = arith.constant 0 : index
    %202 = vector.load %arg26[%c0_92, %c5_93, %c0_94] : memref<8x8x1xf32, #tpu.memory_space<vmem>>, vector<8x1x1xf32>
    %203 = vector.shape_cast %202 : vector<8x1x1xf32> to vector<8x1xf32>
    %204 = vector.shape_cast %201 : vector<8x1xf32> to vector<8x1x1xf32>
    tpu.vector_store %arg26[%c0_92, %c5_93, %c0_94], %204 {strides = array<i32>} : memref<8x8x1xf32, #tpu.memory_space<vmem>>, vector<8x1x1xf32>,
    %c6 = arith.constant 6 : index
    %c0_95 = arith.constant 0 : index
    %205 = vector.load %arg11[%c6, %c0_95] : memref<8x64xf32, #tpu.memory_space<vmem>>, vector<1x64xf32>
    %206 = vector.shape_cast %205 : vector<1x64xf32> to vector<64xf32>
    %207 = vector.shape_cast %206 : vector<64xf32> to vector<1x64xf32>
    %208 = vector.broadcast %207 : vector<1x64xf32> to vector<8x64xf32>
    %209 = arith.mulf %89, %208 : vector<8x64xf32>
    %210 = math.exp %209 : vector<8x64xf32>
    %c0_96 = arith.constant 0 : index
    %c6_97 = arith.constant 6 : index
    %c0_98 = arith.constant 0 : index
    %211 = vector.load %arg24[%c0_96, %c6_97, %c0_98] : memref<8x8x64xf32, #tpu.memory_space<vmem>>, vector<8x1x64xf32>
    %212 = vector.shape_cast %211 : vector<8x1x64xf32> to vector<8x64xf32>
    %213 = vector.shape_cast %210 : vector<8x64xf32> to vector<8x1x64xf32>
    tpu.vector_store %arg24[%c0_96, %c6_97, %c0_98], %213 {strides = array<i32>} : memref<8x8x64xf32, #tpu.memory_space<vmem>>, vector<8x1x64xf32>,
    %214 = vector.extract_strided_slice %72 {offsets = [0, 6], sizes = [8, 1], strides = [1, 1]} : vector<8x8xf32> to vector<8x1xf32>
    %215 = vector.broadcast %214 : vector<8x1xf32> to vector<8x64xf32>
    %216 = arith.mulf %90, %215 : vector<8x64xf32>
    %c0_99 = arith.constant 0 : index
    %c6_100 = arith.constant 6 : index
    %c0_101 = arith.constant 0 : index
    %217 = vector.load %arg25[%c0_99, %c6_100, %c0_101] : memref<8x8x64xf32, #tpu.memory_space<vmem>>, vector<8x1x64xf32>
    %218 = vector.shape_cast %217 : vector<8x1x64xf32> to vector<8x64xf32>
    %219 = vector.shape_cast %216 : vector<8x64xf32> to vector<8x1x64xf32>
    tpu.vector_store %arg25[%c0_99, %c6_100, %c0_101], %219 {strides = array<i32>} : memref<8x8x64xf32, #tpu.memory_space<vmem>>, vector<8x1x64xf32>,
    %220 = vector.extract_strided_slice %73 {offsets = [0, 6], sizes = [8, 1], strides = [1, 1]} : vector<8x8xf32> to vector<8x1xf32>
    %c0_102 = arith.constant 0 : index
    %c6_103 = arith.constant 6 : index
    %c0_104 = arith.constant 0 : index
    %221 = vector.load %arg26[%c0_102, %c6_103, %c0_104] : memref<8x8x1xf32, #tpu.memory_space<vmem>>, vector<8x1x1xf32>
    %222 = vector.shape_cast %221 : vector<8x1x1xf32> to vector<8x1xf32>
    %223 = vector.shape_cast %220 : vector<8x1xf32> to vector<8x1x1xf32>
    tpu.vector_store %arg26[%c0_102, %c6_103, %c0_104], %223 {strides = array<i32>} : memref<8x8x1xf32, #tpu.memory_space<vmem>>, vector<8x1x1xf32>,
    %c7 = arith.constant 7 : index
    %c0_105 = arith.constant 0 : index
    %224 = vector.load %arg11[%c7, %c0_105] : memref<8x64xf32, #tpu.memory_space<vmem>>, vector<1x64xf32>
    %225 = vector.shape_cast %224 : vector<1x64xf32> to vector<64xf32>
    %226 = vector.shape_cast %225 : vector<64xf32> to vector<1x64xf32>
    %227 = vector.broadcast %226 : vector<1x64xf32> to vector<8x64xf32>
    %228 = arith.mulf %89, %227 : vector<8x64xf32>
    %229 = math.exp %228 : vector<8x64xf32>
    %c0_106 = arith.constant 0 : index
    %c7_107 = arith.constant 7 : index
    %c0_108 = arith.constant 0 : index
    %230 = vector.load %arg24[%c0_106, %c7_107, %c0_108] : memref<8x8x64xf32, #tpu.memory_space<vmem>>, vector<8x1x64xf32>
    %231 = vector.shape_cast %230 : vector<8x1x64xf32> to vector<8x64xf32>
    %232 = vector.shape_cast %229 : vector<8x64xf32> to vector<8x1x64xf32>
    tpu.vector_store %arg24[%c0_106, %c7_107, %c0_108], %232 {strides = array<i32>} : memref<8x8x64xf32, #tpu.memory_space<vmem>>, vector<8x1x64xf32>,
    %233 = vector.extract_strided_slice %72 {offsets = [0, 7], sizes = [8, 1], strides = [1, 1]} : vector<8x8xf32> to vector<8x1xf32>
    %234 = vector.broadcast %233 : vector<8x1xf32> to vector<8x64xf32>
    %235 = arith.mulf %90, %234 : vector<8x64xf32>
    %c0_109 = arith.constant 0 : index
    %c7_110 = arith.constant 7 : index
    %c0_111 = arith.constant 0 : index
    %236 = vector.load %arg25[%c0_109, %c7_110, %c0_111] : memref<8x8x64xf32, #tpu.memory_space<vmem>>, vector<8x1x64xf32>
    %237 = vector.shape_cast %236 : vector<8x1x64xf32> to vector<8x64xf32>
    %238 = vector.shape_cast %235 : vector<8x64xf32> to vector<8x1x64xf32>
    tpu.vector_store %arg25[%c0_109, %c7_110, %c0_111], %238 {strides = array<i32>} : memref<8x8x64xf32, #tpu.memory_space<vmem>>, vector<8x1x64xf32>,
    %239 = vector.extract_strided_slice %73 {offsets = [0, 7], sizes = [8, 1], strides = [1, 1]} : vector<8x8xf32> to vector<8x1xf32>
    %c0_112 = arith.constant 0 : index
    %c7_113 = arith.constant 7 : index
    %c0_114 = arith.constant 0 : index
    %240 = vector.load %arg26[%c0_112, %c7_113, %c0_114] : memref<8x8x1xf32, #tpu.memory_space<vmem>>, vector<8x1x1xf32>
    %241 = vector.shape_cast %240 : vector<8x1x1xf32> to vector<8x1xf32>
    %242 = vector.shape_cast %239 : vector<8x1xf32> to vector<8x1x1xf32>
    tpu.vector_store %arg26[%c0_112, %c7_113, %c0_114], %242 {strides = array<i32>} : memref<8x8x1xf32, #tpu.memory_space<vmem>>, vector<8x1x1xf32>,
    %c0_115 = arith.constant 0 : index
    %c0_116 = arith.constant 0 : index
    %243 = vector.load %arg23[%c0_115, %c0_116] : memref<8x64xf32, #tpu.memory_space<vmem>>, vector<8x64xf32>
    %c0_i32_117 = arith.constant 0 : i32
    %c8_i32 = arith.constant 8 : i32
    %244 = arith.muli %c0_i32_117, %c8_i32 : i32
    %245 = tpu.assume_multiple %244, 8 : i32
    %c0_i32_118 = arith.constant 0 : i32
    %246 = arith.addi %245, %c0_i32_118 : i32
    %247 = arith.index_cast %246 : i32 to index
    %c0_119 = arith.constant 0 : index
    %c0_120 = arith.constant 0 : index
    %248 = vector.load %arg24[%247, %c0_119, %c0_120] : memref<8x8x64xf32, #tpu.memory_space<vmem>>, vector<1x8x64xf32>
    %249 = vector.shape_cast %248 : vector<1x8x64xf32> to vector<8x64xf32>
    %250 = arith.mulf %249, %243 : vector<8x64xf32>
    %251 = arith.index_cast %246 : i32 to index
    %c0_121 = arith.constant 0 : index
    %c0_122 = arith.constant 0 : index
    %252 = vector.load %arg25[%251, %c0_121, %c0_122] : memref<8x8x64xf32, #tpu.memory_space<vmem>>, vector<1x8x64xf32>
    %253 = vector.shape_cast %252 : vector<1x8x64xf32> to vector<8x64xf32>
    %254 = arith.addf %250, %253 : vector<8x64xf32>
    %255 = arith.index_cast %246 : i32 to index
    %c0_123 = arith.constant 0 : index
    %c0_124 = arith.constant 0 : index
    %256 = vector.load %arg26[%255, %c0_123, %c0_124] : memref<8x8x1xf32, #tpu.memory_space<vmem>>, vector<1x8x1xf32>
    %257 = vector.shape_cast %256 : vector<1x8x1xf32> to vector<8x1xf32>
    %258 = vector.broadcast %257 : vector<8x1xf32> to vector<8x64xf32>
    %259 = arith.mulf %258, %254 : vector<8x64xf32>
    %cst_125 = arith.constant dense<0.000000e+00> : vector<64xf32>
    %260 = vector.multi_reduction <add>, %259, %cst_125 [0] : vector<8x64xf32> to vector<64xf32>
    %261 = vector.shape_cast %260 : vector<64xf32> to vector<1x64xf32>
    %c1_i32 = arith.constant 1 : i32
    %262 = arith.addi %245, %c1_i32 : i32
    %263 = arith.index_cast %262 : i32 to index
    %c0_126 = arith.constant 0 : index
    %c0_127 = arith.constant 0 : index
    %264 = vector.load %arg24[%263, %c0_126, %c0_127] : memref<8x8x64xf32, #tpu.memory_space<vmem>>, vector<1x8x64xf32>
    %265 = vector.shape_cast %264 : vector<1x8x64xf32> to vector<8x64xf32>
    %266 = arith.mulf %265, %254 : vector<8x64xf32>
    %267 = arith.index_cast %262 : i32 to index
    %c0_128 = arith.constant 0 : index
    %c0_129 = arith.constant 0 : index
    %268 = vector.load %arg25[%267, %c0_128, %c0_129] : memref<8x8x64xf32, #tpu.memory_space<vmem>>, vector<1x8x64xf32>
    %269 = vector.shape_cast %268 : vector<1x8x64xf32> to vector<8x64xf32>
    %270 = arith.addf %266, %269 : vector<8x64xf32>
    %271 = arith.index_cast %262 : i32 to index
    %c0_130 = arith.constant 0 : index
    %c0_131 = arith.constant 0 : index
    %272 = vector.load %arg26[%271, %c0_130, %c0_131] : memref<8x8x1xf32, #tpu.memory_space<vmem>>, vector<1x8x1xf32>
    %273 = vector.shape_cast %272 : vector<1x8x1xf32> to vector<8x1xf32>
    %274 = vector.broadcast %273 : vector<8x1xf32> to vector<8x64xf32>
    %275 = arith.mulf %274, %270 : vector<8x64xf32>
    %cst_132 = arith.constant dense<0.000000e+00> : vector<64xf32>
    %276 = vector.multi_reduction <add>, %275, %cst_132 [0] : vector<8x64xf32> to vector<64xf32>
    %277 = vector.shape_cast %276 : vector<64xf32> to vector<1x64xf32>
    %c2_i32 = arith.constant 2 : i32
    %278 = arith.addi %245, %c2_i32 : i32
    %279 = arith.index_cast %278 : i32 to index
    %c0_133 = arith.constant 0 : index
    %c0_134 = arith.constant 0 : index
    %280 = vector.load %arg24[%279, %c0_133, %c0_134] : memref<8x8x64xf32, #tpu.memory_space<vmem>>, vector<1x8x64xf32>
    %281 = vector.shape_cast %280 : vector<1x8x64xf32> to vector<8x64xf32>
    %282 = arith.mulf %281, %270 : vector<8x64xf32>
    %283 = arith.index_cast %278 : i32 to index
    %c0_135 = arith.constant 0 : index
    %c0_136 = arith.constant 0 : index
    %284 = vector.load %arg25[%283, %c0_135, %c0_136] : memref<8x8x64xf32, #tpu.memory_space<vmem>>, vector<1x8x64xf32>
    %285 = vector.shape_cast %284 : vector<1x8x64xf32> to vector<8x64xf32>
    %286 = arith.addf %282, %285 : vector<8x64xf32>
    %287 = arith.index_cast %278 : i32 to index
    %c0_137 = arith.constant 0 : index
    %c0_138 = arith.constant 0 : index
    %288 = vector.load %arg26[%287, %c0_137, %c0_138] : memref<8x8x1xf32, #tpu.memory_space<vmem>>, vector<1x8x1xf32>
    %289 = vector.shape_cast %288 : vector<1x8x1xf32> to vector<8x1xf32>
    %290 = vector.broadcast %289 : vector<8x1xf32> to vector<8x64xf32>
    %291 = arith.mulf %290, %286 : vector<8x64xf32>
    %cst_139 = arith.constant dense<0.000000e+00> : vector<64xf32>
    %292 = vector.multi_reduction <add>, %291, %cst_139 [0] : vector<8x64xf32> to vector<64xf32>
    %293 = vector.shape_cast %292 : vector<64xf32> to vector<1x64xf32>
    %c3_i32 = arith.constant 3 : i32
    %294 = arith.addi %245, %c3_i32 : i32
    %295 = arith.index_cast %294 : i32 to index
    %c0_140 = arith.constant 0 : index
    %c0_141 = arith.constant 0 : index
    %296 = vector.load %arg24[%295, %c0_140, %c0_141] : memref<8x8x64xf32, #tpu.memory_space<vmem>>, vector<1x8x64xf32>
    %297 = vector.shape_cast %296 : vector<1x8x64xf32> to vector<8x64xf32>
    %298 = arith.mulf %297, %286 : vector<8x64xf32>
    %299 = arith.index_cast %294 : i32 to index
    %c0_142 = arith.constant 0 : index
    %c0_143 = arith.constant 0 : index
    %300 = vector.load %arg25[%299, %c0_142, %c0_143] : memref<8x8x64xf32, #tpu.memory_space<vmem>>, vector<1x8x64xf32>
    %301 = vector.shape_cast %300 : vector<1x8x64xf32> to vector<8x64xf32>
    %302 = arith.addf %298, %301 : vector<8x64xf32>
    %303 = arith.index_cast %294 : i32 to index
    %c0_144 = arith.constant 0 : index
    %c0_145 = arith.constant 0 : index
    %304 = vector.load %arg26[%303, %c0_144, %c0_145] : memref<8x8x1xf32, #tpu.memory_space<vmem>>, vector<1x8x1xf32>
    %305 = vector.shape_cast %304 : vector<1x8x1xf32> to vector<8x1xf32>
    %306 = vector.broadcast %305 : vector<8x1xf32> to vector<8x64xf32>
    %307 = arith.mulf %306, %302 : vector<8x64xf32>
    %cst_146 = arith.constant dense<0.000000e+00> : vector<64xf32>
    %308 = vector.multi_reduction <add>, %307, %cst_146 [0] : vector<8x64xf32> to vector<64xf32>
    %309 = vector.shape_cast %308 : vector<64xf32> to vector<1x64xf32>
    %c4_i32 = arith.constant 4 : i32
    %310 = arith.addi %245, %c4_i32 : i32
    %311 = arith.index_cast %310 : i32 to index
    %c0_147 = arith.constant 0 : index
    %c0_148 = arith.constant 0 : index
    %312 = vector.load %arg24[%311, %c0_147, %c0_148] : memref<8x8x64xf32, #tpu.memory_space<vmem>>, vector<1x8x64xf32>
    %313 = vector.shape_cast %312 : vector<1x8x64xf32> to vector<8x64xf32>
    %314 = arith.mulf %313, %302 : vector<8x64xf32>
    %315 = arith.index_cast %310 : i32 to index
    %c0_149 = arith.constant 0 : index
    %c0_150 = arith.constant 0 : index
    %316 = vector.load %arg25[%315, %c0_149, %c0_150] : memref<8x8x64xf32, #tpu.memory_space<vmem>>, vector<1x8x64xf32>
    %317 = vector.shape_cast %316 : vector<1x8x64xf32> to vector<8x64xf32>
    %318 = arith.addf %314, %317 : vector<8x64xf32>
    %319 = arith.index_cast %310 : i32 to index
    %c0_151 = arith.constant 0 : index
    %c0_152 = arith.constant 0 : index
    %320 = vector.load %arg26[%319, %c0_151, %c0_152] : memref<8x8x1xf32, #tpu.memory_space<vmem>>, vector<1x8x1xf32>
    %321 = vector.shape_cast %320 : vector<1x8x1xf32> to vector<8x1xf32>
    %322 = vector.broadcast %321 : vector<8x1xf32> to vector<8x64xf32>
    %323 = arith.mulf %322, %318 : vector<8x64xf32>
    %cst_153 = arith.constant dense<0.000000e+00> : vector<64xf32>
    %324 = vector.multi_reduction <add>, %323, %cst_153 [0] : vector<8x64xf32> to vector<64xf32>
    %325 = vector.shape_cast %324 : vector<64xf32> to vector<1x64xf32>
    %c5_i32 = arith.constant 5 : i32
    %326 = arith.addi %245, %c5_i32 : i32
    %327 = arith.index_cast %326 : i32 to index
    %c0_154 = arith.constant 0 : index
    %c0_155 = arith.constant 0 : index
    %328 = vector.load %arg24[%327, %c0_154, %c0_155] : memref<8x8x64xf32, #tpu.memory_space<vmem>>, vector<1x8x64xf32>
    %329 = vector.shape_cast %328 : vector<1x8x64xf32> to vector<8x64xf32>
    %330 = arith.mulf %329, %318 : vector<8x64xf32>
    %331 = arith.index_cast %326 : i32 to index
    %c0_156 = arith.constant 0 : index
    %c0_157 = arith.constant 0 : index
    %332 = vector.load %arg25[%331, %c0_156, %c0_157] : memref<8x8x64xf32, #tpu.memory_space<vmem>>, vector<1x8x64xf32>
    %333 = vector.shape_cast %332 : vector<1x8x64xf32> to vector<8x64xf32>
    %334 = arith.addf %330, %333 : vector<8x64xf32>
    %335 = arith.index_cast %326 : i32 to index
    %c0_158 = arith.constant 0 : index
    %c0_159 = arith.constant 0 : index
    %336 = vector.load %arg26[%335, %c0_158, %c0_159] : memref<8x8x1xf32, #tpu.memory_space<vmem>>, vector<1x8x1xf32>
    %337 = vector.shape_cast %336 : vector<1x8x1xf32> to vector<8x1xf32>
    %338 = vector.broadcast %337 : vector<8x1xf32> to vector<8x64xf32>
    %339 = arith.mulf %338, %334 : vector<8x64xf32>
    %cst_160 = arith.constant dense<0.000000e+00> : vector<64xf32>
    %340 = vector.multi_reduction <add>, %339, %cst_160 [0] : vector<8x64xf32> to vector<64xf32>
    %341 = vector.shape_cast %340 : vector<64xf32> to vector<1x64xf32>
    %c6_i32 = arith.constant 6 : i32
    %342 = arith.addi %245, %c6_i32 : i32
    %343 = arith.index_cast %342 : i32 to index
    %c0_161 = arith.constant 0 : index
    %c0_162 = arith.constant 0 : index
    %344 = vector.load %arg24[%343, %c0_161, %c0_162] : memref<8x8x64xf32, #tpu.memory_space<vmem>>, vector<1x8x64xf32>
    %345 = vector.shape_cast %344 : vector<1x8x64xf32> to vector<8x64xf32>
    %346 = arith.mulf %345, %334 : vector<8x64xf32>
    %347 = arith.index_cast %342 : i32 to index
    %c0_163 = arith.constant 0 : index
    %c0_164 = arith.constant 0 : index
    %348 = vector.load %arg25[%347, %c0_163, %c0_164] : memref<8x8x64xf32, #tpu.memory_space<vmem>>, vector<1x8x64xf32>
    %349 = vector.shape_cast %348 : vector<1x8x64xf32> to vector<8x64xf32>
    %350 = arith.addf %346, %349 : vector<8x64xf32>
    %351 = arith.index_cast %342 : i32 to index
    %c0_165 = arith.constant 0 : index
    %c0_166 = arith.constant 0 : index
    %352 = vector.load %arg26[%351, %c0_165, %c0_166] : memref<8x8x1xf32, #tpu.memory_space<vmem>>, vector<1x8x1xf32>
    %353 = vector.shape_cast %352 : vector<1x8x1xf32> to vector<8x1xf32>
    %354 = vector.broadcast %353 : vector<8x1xf32> to vector<8x64xf32>
    %355 = arith.mulf %354, %350 : vector<8x64xf32>
    %cst_167 = arith.constant dense<0.000000e+00> : vector<64xf32>
    %356 = vector.multi_reduction <add>, %355, %cst_167 [0] : vector<8x64xf32> to vector<64xf32>
    %357 = vector.shape_cast %356 : vector<64xf32> to vector<1x64xf32>
    %c7_i32 = arith.constant 7 : i32
    %358 = arith.addi %245, %c7_i32 : i32
    %359 = arith.index_cast %358 : i32 to index
    %c0_168 = arith.constant 0 : index
    %c0_169 = arith.constant 0 : index
    %360 = vector.load %arg24[%359, %c0_168, %c0_169] : memref<8x8x64xf32, #tpu.memory_space<vmem>>, vector<1x8x64xf32>
    %361 = vector.shape_cast %360 : vector<1x8x64xf32> to vector<8x64xf32>
    %362 = arith.mulf %361, %350 : vector<8x64xf32>
    %363 = arith.index_cast %358 : i32 to index
    %c0_170 = arith.constant 0 : index
    %c0_171 = arith.constant 0 : index
    %364 = vector.load %arg25[%363, %c0_170, %c0_171] : memref<8x8x64xf32, #tpu.memory_space<vmem>>, vector<1x8x64xf32>
    %365 = vector.shape_cast %364 : vector<1x8x64xf32> to vector<8x64xf32>
    %366 = arith.addf %362, %365 : vector<8x64xf32>
    %367 = arith.index_cast %358 : i32 to index
    %c0_172 = arith.constant 0 : index
    %c0_173 = arith.constant 0 : index
    %368 = vector.load %arg26[%367, %c0_172, %c0_173] : memref<8x8x1xf32, #tpu.memory_space<vmem>>, vector<1x8x1xf32>
    %369 = vector.shape_cast %368 : vector<1x8x1xf32> to vector<8x1xf32>
    %370 = vector.broadcast %369 : vector<8x1xf32> to vector<8x64xf32>
    %371 = arith.mulf %370, %366 : vector<8x64xf32>
    %cst_174 = arith.constant dense<0.000000e+00> : vector<64xf32>
    %372 = vector.multi_reduction <add>, %371, %cst_174 [0] : vector<8x64xf32> to vector<64xf32>
    %373 = vector.shape_cast %372 : vector<64xf32> to vector<1x64xf32>
    %374 = tpu.concatenate %261, %277, %293, %309, %325, %341, %357, %373 in 0 : vector<1x64xf32>, vector<1x64xf32>, vector<1x64xf32>, vector<1x64xf32>, vector<1x64xf32>, vector<1x64xf32>, vector<1x64xf32>, vector<1x64xf32> -> vector<8x64xf32>
    %375 = arith.index_cast %245 : i32 to index
    %c0_175 = arith.constant 0 : index
    %376 = vector.load %arg27[%375, %c0_175] : memref<8x64xf32, #tpu.memory_space<vmem>>, vector<8x64xf32>
    tpu.vector_store %arg27[%375, %c0_175], %374 {strides = array<i32>} : memref<8x64xf32, #tpu.memory_space<vmem>>, vector<8x64xf32>,
    %c1_i32_176 = arith.constant 1 : i32
    %c0_177 = arith.constant 0 : index
    %c0_178 = arith.constant 0 : index
    %377 = vector.load %arg23[%c0_177, %c0_178] : memref<8x64xf32, #tpu.memory_space<vmem>>, vector<8x64xf32>
    tpu.vector_store %arg23[%c0_177, %c0_178], %366 {strides = array<i32>} : memref<8x64xf32, #tpu.memory_space<vmem>>, vector<8x64xf32>,
    %378 = vector.extract_strided_slice %34 {offsets = [5, 0], sizes = [3, 64], strides = [1, 1]} : vector<8x64xf32> to vector<3x64xf32>
    %c5_179 = arith.constant 5 : index
    %c0_180 = arith.constant 0 : index
    %379 = vector.load %arg22[%c5_179, %c0_180] : memref<8x64xf32, #tpu.memory_space<vmem>>, vector<3x64xf32>
    tpu.vector_store %arg22[%c5_179, %c0_180], %378 {strides = array<i32>} : memref<8x64xf32, #tpu.memory_space<vmem>>, vector<3x64xf32>,
    %c0_181 = arith.constant 0 : index
    %c0_182 = arith.constant 0 : index
    %380 = vector.load %arg27[%c0_181, %c0_182] : memref<8x64xf32, #tpu.memory_space<vmem>>, vector<8x64xf32>
    %c0_183 = arith.constant 0 : index
    %c0_184 = arith.constant 0 : index
    %381 = vector.load %arg12[%c0_183, %c0_184] : memref<1x64xf32, #tpu.memory_space<vmem>>, vector<1x64xf32>
    %382 = vector.broadcast %381 : vector<1x64xf32> to vector<8x64xf32>
    %383 = arith.mulf %382, %67 : vector<8x64xf32>
    %384 = arith.addf %380, %383 : vector<8x64xf32>
    %cst_185 = arith.constant 5.000000e-01 : f32
    %385 = vector.broadcast %cst_185 : f32 to vector<8x64xf32>
    %386 = arith.mulf %385, %35 : vector<8x64xf32>
    %387 = math.tanh %386 : vector<8x64xf32>
    %cst_186 = arith.constant 1.000000e+00 : f32
    %388 = vector.broadcast %cst_186 : f32 to vector<8x64xf32>
    %389 = arith.addf %387, %388 : vector<8x64xf32>
    %cst_187 = arith.constant 5.000000e-01 : f32
    %390 = vector.broadcast %cst_187 : f32 to vector<8x64xf32>
    %391 = arith.mulf %390, %389 : vector<8x64xf32>
    %392 = arith.mulf %35, %391 : vector<8x64xf32>
    %393 = arith.mulf %384, %392 : vector<8x64xf32>
    %c0_188 = arith.constant 0 : index
    %c0_189 = arith.constant 0 : index
    %394 = vector.load %arg13[%c0_188, %c0_189] : memref<64x32xbf16, #tpu.memory_space<vmem>>, vector<64x32xbf16>
    %395 = arith.truncf %393 : vector<8x64xf32> to vector<8x64xbf16>
    %cst_190 = arith.constant dense<0.000000e+00> : vector<8x32xf32>
    %396 = tpu.matmul %395, %394, %cst_190 {dimension_numbers = #tpu.dot_dimension_numbers<[1], [0], [0], [1], [0, 0, 1, 1], [], []>} : vector<8x64xbf16>, vector<64x32xbf16>, vector<8x32xf32> -> vector<8x32xf32>
    %397 = arith.addf %396, %4 : vector<8x32xf32>
    %c0_191 = arith.constant 0 : index
    %c0_192 = arith.constant 0 : index
    %398 = vector.load %arg14[%c0_191, %c0_192] : memref<1x32xf32, #tpu.memory_space<vmem>>, vector<1x32xf32>
    %399 = vector.shape_cast %398 : vector<1x32xf32> to vector<32xf32>
    %c0_193 = arith.constant 0 : index
    %c0_194 = arith.constant 0 : index
    %400 = vector.load %arg15[%c0_193, %c0_194] : memref<1x32xf32, #tpu.memory_space<vmem>>, vector<1x32xf32>
    %401 = vector.shape_cast %400 : vector<1x32xf32> to vector<32xf32>
    %cst_195 = arith.constant dense<0.000000e+00> : vector<8xf32>
    %402 = vector.multi_reduction <add>, %397, %cst_195 [1] : vector<8x32xf32> to vector<8xf32>
    %403 = vector.shape_cast %402 : vector<8xf32> to vector<8x1xf32>
    %cst_196 = arith.constant 3.200000e+01 : f32
    %404 = vector.broadcast %cst_196 : f32 to vector<8x1xf32>
    %405 = arith.divf %403, %404 : vector<8x1xf32>
    %406 = vector.broadcast %405 : vector<8x1xf32> to vector<8x32xf32>
    %407 = arith.subf %397, %406 : vector<8x32xf32>
    %408 = arith.mulf %407, %407 : vector<8x32xf32>
    %cst_197 = arith.constant dense<0.000000e+00> : vector<8xf32>
    %409 = vector.multi_reduction <add>, %408, %cst_197 [1] : vector<8x32xf32> to vector<8xf32>
    %410 = vector.shape_cast %409 : vector<8xf32> to vector<8x1xf32>
    %cst_198 = arith.constant 3.200000e+01 : f32
    %411 = vector.broadcast %cst_198 : f32 to vector<8x1xf32>
    %412 = arith.divf %410, %411 : vector<8x1xf32>
    %cst_199 = arith.constant 9.99999974E-6 : f32
    %413 = vector.broadcast %cst_199 : f32 to vector<8x1xf32>
    %414 = arith.addf %412, %413 : vector<8x1xf32>
    %415 = math.rsqrt %414 : vector<8x1xf32>
    %416 = vector.broadcast %415 : vector<8x1xf32> to vector<8x32xf32>
    %417 = arith.mulf %407, %416 : vector<8x32xf32>
    %418 = vector.shape_cast %399 : vector<32xf32> to vector<1x32xf32>
    %419 = vector.broadcast %418 : vector<1x32xf32> to vector<8x32xf32>
    %420 = arith.mulf %417, %419 : vector<8x32xf32>
    %421 = vector.shape_cast %401 : vector<32xf32> to vector<1x32xf32>
    %422 = vector.broadcast %421 : vector<1x32xf32> to vector<8x32xf32>
    %423 = arith.addf %420, %422 : vector<8x32xf32>
    %c0_200 = arith.constant 0 : index
    %c0_201 = arith.constant 0 : index
    %424 = vector.load %arg16[%c0_200, %c0_201] : memref<32x64xbf16, #tpu.memory_space<vmem>>, vector<32x64xbf16>
    %425 = arith.truncf %423 : vector<8x32xf32> to vector<8x32xbf16>
    %cst_202 = arith.constant dense<0.000000e+00> : vector<8x64xf32>
    %426 = tpu.matmul %425, %424, %cst_202 {dimension_numbers = #tpu.dot_dimension_numbers<[1], [0], [0], [1], [0, 0, 1, 1], [], []>} : vector<8x32xbf16>, vector<32x64xbf16>, vector<8x64xf32> -> vector<8x64xf32>
    %c0_203 = arith.constant 0 : index
    %c0_204 = arith.constant 0 : index
    %427 = vector.load %arg17[%c0_203, %c0_204] : memref<1x64xf32, #tpu.memory_space<vmem>>, vector<1x64xf32>
    %428 = vector.broadcast %427 : vector<1x64xf32> to vector<8x64xf32>
    %429 = arith.addf %426, %428 : vector<8x64xf32>
    %cst_205 = arith.constant 5.000000e-01 : f32
    %430 = vector.broadcast %cst_205 : f32 to vector<8x64xf32>
    %431 = arith.mulf %430, %429 : vector<8x64xf32>
    %cst_206 = arith.constant 4.471500e-02 : f32
    %432 = vector.broadcast %cst_206 : f32 to vector<8x64xf32>
    %433 = arith.mulf %432, %429 : vector<8x64xf32>
    %434 = arith.mulf %433, %429 : vector<8x64xf32>
    %435 = arith.mulf %434, %429 : vector<8x64xf32>
    %436 = arith.addf %429, %435 : vector<8x64xf32>
    %cst_207 = arith.constant 0.797884583 : f32
    %437 = vector.broadcast %cst_207 : f32 to vector<8x64xf32>
    %438 = arith.mulf %437, %436 : vector<8x64xf32>
    %439 = math.tanh %438 : vector<8x64xf32>
    %cst_208 = arith.constant 1.000000e+00 : f32
    %440 = vector.broadcast %cst_208 : f32 to vector<8x64xf32>
    %441 = arith.addf %440, %439 : vector<8x64xf32>
    %442 = arith.mulf %431, %441 : vector<8x64xf32>
    %c0_209 = arith.constant 0 : index
    %c0_210 = arith.constant 0 : index
    %443 = vector.load %arg18[%c0_209, %c0_210] : memref<64x32xbf16, #tpu.memory_space<vmem>>, vector<64x32xbf16>
    %444 = arith.truncf %442 : vector<8x64xf32> to vector<8x64xbf16>
    %cst_211 = arith.constant dense<0.000000e+00> : vector<8x32xf32>
    %445 = tpu.matmul %444, %443, %cst_211 {dimension_numbers = #tpu.dot_dimension_numbers<[1], [0], [0], [1], [0, 0, 1, 1], [], []>} : vector<8x64xbf16>, vector<64x32xbf16>, vector<8x32xf32> -> vector<8x32xf32>
    %c0_212 = arith.constant 0 : index
    %c0_213 = arith.constant 0 : index
    %446 = vector.load %arg19[%c0_212, %c0_213] : memref<1x32xf32, #tpu.memory_space<vmem>>, vector<1x32xf32>
    %447 = vector.broadcast %446 : vector<1x32xf32> to vector<8x32xf32>
    %448 = arith.addf %445, %447 : vector<8x32xf32>
    %c0_214 = arith.constant 0 : index
    %c0_215 = arith.constant 0 : index
    %c0_216 = arith.constant 0 : index
    %449 = vector.load %arg20[%c0_214, %c0_215, %c0_216] : memref<1x8x32xf32, #tpu.memory_space<vmem>>, vector<1x8x32xf32>
    %450 = vector.shape_cast %449 : vector<1x8x32xf32> to vector<8x32xf32>
    %451 = vector.shape_cast %448 : vector<8x32xf32> to vector<1x8x32xf32>
    tpu.vector_store %arg20[%c0_214, %c0_215, %c0_216], %451 {strides = array<i32>} : memref<1x8x32xf32, #tpu.memory_space<vmem>>, vector<1x8x32xf32>,
    %c0_217 = arith.constant 0 : index
    %c0_218 = arith.constant 0 : index
    %c0_219 = arith.constant 0 : index
    %452 = vector.load %arg21[%c0_217, %c0_218, %c0_219] : memref<1x8x32xf32, #tpu.memory_space<vmem>>, vector<1x8x32xf32>
    %453 = vector.shape_cast %452 : vector<1x8x32xf32> to vector<8x32xf32>
    %454 = vector.shape_cast %397 : vector<8x32xf32> to vector<1x8x32xf32>
    tpu.vector_store %arg21[%c0_217, %c0_218, %c0_219], %454 {strides = array<i32>} : memref<1x8x32xf32, #tpu.memory_space<vmem>>, vector<1x8x32xf32>,
    return
  }
  func.func @transform_0(%arg0: i32, %arg1: i32) -> (i32, i32, i32) {
    %c0_i32 = arith.constant 0 : i32
    %c0_i32_0 = arith.constant 0 : i32
    return %arg0, %arg1, %c0_i32 : i32, i32, i32
  }
  func.func @transform_1(%arg0: i32, %arg1: i32) -> (i32, i32) {
    %c0_i32 = arith.constant 0 : i32
    %c0_i32_0 = arith.constant 0 : i32
    %c0_i32_1 = arith.constant 0 : i32
    return %c0_i32, %c0_i32_0 : i32, i32
  }
  func.func @transform_2(%arg0: i32, %arg1: i32) -> (i32, i32) {
    %c0_i32 = arith.constant 0 : i32
    %c0_i32_0 = arith.constant 0 : i32
    %c0_i32_1 = arith.constant 0 : i32
    return %c0_i32, %c0_i32_0 : i32, i32
  }
  func.func @transform_3(%arg0: i32, %arg1: i32) -> (i32, i32) {
    %c0_i32 = arith.constant 0 : i32
    %c0_i32_0 = arith.constant 0 : i32
    %c0_i32_1 = arith.constant 0 : i32
    return %c0_i32, %c0_i32_0 : i32, i32
  }
  func.func @transform_4(%arg0: i32, %arg1: i32) -> (i32, i32) {
    %c0_i32 = arith.constant 0 : i32
    %c0_i32_0 = arith.constant 0 : i32
    %c0_i32_1 = arith.constant 0 : i32
    return %c0_i32, %c0_i32_0 : i32, i32
  }
  func.func @transform_5(%arg0: i32, %arg1: i32) -> (i32, i32) {
    %c0_i32 = arith.constant 0 : i32
    %c0_i32_0 = arith.constant 0 : i32
    %c0_i32_1 = arith.constant 0 : i32
    return %c0_i32, %c0_i32_0 : i32, i32
  }
  func.func @transform_6(%arg0: i32, %arg1: i32) -> (i32, i32) {
    %c0_i32 = arith.constant 0 : i32
    %c0_i32_0 = arith.constant 0 : i32
    %c0_i32_1 = arith.constant 0 : i32
    return %c0_i32, %c0_i32_0 : i32, i32
  }
  func.func @transform_7(%arg0: i32, %arg1: i32) -> (i32, i32) {
    %c0_i32 = arith.constant 0 : i32
    %c0_i32_0 = arith.constant 0 : i32
    %c0_i32_1 = arith.constant 0 : i32
    return %c0_i32, %c0_i32_0 : i32, i32
  }
  func.func @transform_8(%arg0: i32, %arg1: i32) -> (i32, i32) {
    %c0_i32 = arith.constant 0 : i32
    %c0_i32_0 = arith.constant 0 : i32
    %c0_i32_1 = arith.constant 0 : i32
    return %c0_i32, %c0_i32_0 : i32, i32
  }
  func.func @transform_9(%arg0: i32, %arg1: i32) -> (i32, i32) {
    %c0_i32 = arith.constant 0 : i32
    %c0_i32_0 = arith.constant 0 : i32
    %c0_i32_1 = arith.constant 0 : i32
    return %c0_i32, %c0_i32_0 : i32, i32
  }
  func.func @transform_10(%arg0: i32, %arg1: i32) -> (i32, i32) {
    %c0_i32 = arith.constant 0 : i32
    %c0_i32_0 = arith.constant 0 : i32
    %c0_i32_1 = arith.constant 0 : i32
    return %c0_i32, %c0_i32_0 : i32, i32
  }
  func.func @transform_11(%arg0: i32, %arg1: i32) -> (i32, i32) {
    %c0_i32 = arith.constant 0 : i32
    %c0_i32_0 = arith.constant 0 : i32
    %c0_i32_1 = arith.constant 0 : i32
    return %c0_i32, %c0_i32_0 : i32, i32
  }
  func.func @transform_12(%arg0: i32, %arg1: i32) -> (i32, i32) {
    %c0_i32 = arith.constant 0 : i32
    %c0_i32_0 = arith.constant 0 : i32
    %c0_i32_1 = arith.constant 0 : i32
    return %c0_i32, %c0_i32_0 : i32, i32
  }
  func.func @transform_13(%arg0: i32, %arg1: i32) -> (i32, i32) {
    %c0_i32 = arith.constant 0 : i32
    %c0_i32_0 = arith.constant 0 : i32
    %c0_i32_1 = arith.constant 0 : i32
    return %c0_i32, %c0_i32_0 : i32, i32
  }
  func.func @transform_14(%arg0: i32, %arg1: i32) -> (i32, i32) {
    %c0_i32 = arith.constant 0 : i32
    %c0_i32_0 = arith.constant 0 : i32
    %c0_i32_1 = arith.constant 0 : i32
    return %c0_i32, %c0_i32_0 : i32, i32
  }
  func.func @transform_15(%arg0: i32, %arg1: i32) -> (i32, i32) {
    %c0_i32 = arith.constant 0 : i32
    %c0_i32_0 = arith.constant 0 : i32
    %c0_i32_1 = arith.constant 0 : i32
    return %c0_i32, %c0_i32_0 : i32, i32
  }
  func.func @transform_16(%arg0: i32, %arg1: i32) -> (i32, i32) {
    %c0_i32 = arith.constant 0 : i32
    %c0_i32_0 = arith.constant 0 : i32
    %c0_i32_1 = arith.constant 0 : i32
    return %c0_i32, %c0_i32_0 : i32, i32
  }
  func.func @transform_17(%arg0: i32, %arg1: i32) -> (i32, i32) {
    %c0_i32 = arith.constant 0 : i32
    %c0_i32_0 = arith.constant 0 : i32
    %c0_i32_1 = arith.constant 0 : i32
    return %c0_i32, %c0_i32_0 : i32, i32
  }
  func.func @transform_18(%arg0: i32, %arg1: i32) -> (i32, i32, i32) {
    %c0_i32 = arith.constant 0 : i32
    %c0_i32_0 = arith.constant 0 : i32
    return %arg0, %arg1, %c0_i32 : i32, i32, i32
  }
  func.func @transform_19(%arg0: i32, %arg1: i32) -> (i32, i32, i32) {
    %c0_i32 = arith.constant 0 : i32
    %c0_i32_0 = arith.constant 0 : i32
    return %arg0, %arg1, %c0_i32 : i32, i32, i32
  }
}

module attributes {stable_mosaic.version = 11 : i64} {
  func.func @_final_kernel(%arg0: i32, %arg1: i32, %arg2: memref<1x8x32xf32, #tpu.memory_space<vmem>>, %arg3: memref<1x8x32xf32, #tpu.memory_space<vmem>>, %arg4: memref<1x32xf32, #tpu.memory_space<vmem>>, %arg5: memref<1x32xf32, #tpu.memory_space<vmem>>, %arg6: memref<1x8x32xf32, #tpu.memory_space<vmem>>) attributes {dimension_semantics = [#tpu.dimension_semantics<parallel>, #tpu.dimension_semantics<arbitrary>], iteration_bounds = array<i64: 2, 1>, scalar_prefetch = 0 : i64, scratch_operands = 0 : i64, tpu.core_type = #tpu.core_type<tc>, window_params = [{transform_indices = @transform_0, window_bounds = array<i64: 1, 8, 32>}, {transform_indices = @transform_1, window_bounds = array<i64: 1, 8, 32>}, {pipeline_mode = #tpu.pipeline_mode<synchronous>, transform_indices = @transform_2, window_bounds = array<i64: 1, 32>}, {pipeline_mode = #tpu.pipeline_mode<synchronous>, transform_indices = @transform_3, window_bounds = array<i64: 1, 32>}, {transform_indices = @transform_4, window_bounds = array<i64: 1, 8, 32>}]} {
    %c0 = arith.constant 0 : index
    %c0_0 = arith.constant 0 : index
    %c0_1 = arith.constant 0 : index
    %0 = vector.load %arg2[%c0, %c0_0, %c0_1] : memref<1x8x32xf32, #tpu.memory_space<vmem>>, vector<1x8x32xf32>
    %1 = vector.shape_cast %0 : vector<1x8x32xf32> to vector<8x32xf32>
    %c0_2 = arith.constant 0 : index
    %c0_3 = arith.constant 0 : index
    %c0_4 = arith.constant 0 : index
    %2 = vector.load %arg3[%c0_2, %c0_3, %c0_4] : memref<1x8x32xf32, #tpu.memory_space<vmem>>, vector<1x8x32xf32>
    %3 = vector.shape_cast %2 : vector<1x8x32xf32> to vector<8x32xf32>
    %4 = arith.addf %1, %3 : vector<8x32xf32>
    %c0_5 = arith.constant 0 : index
    %c0_6 = arith.constant 0 : index
    %5 = vector.load %arg4[%c0_5, %c0_6] : memref<1x32xf32, #tpu.memory_space<vmem>>, vector<1x32xf32>
    %6 = vector.shape_cast %5 : vector<1x32xf32> to vector<32xf32>
    %c0_7 = arith.constant 0 : index
    %c0_8 = arith.constant 0 : index
    %7 = vector.load %arg5[%c0_7, %c0_8] : memref<1x32xf32, #tpu.memory_space<vmem>>, vector<1x32xf32>
    %8 = vector.shape_cast %7 : vector<1x32xf32> to vector<32xf32>
    %cst = arith.constant dense<0.000000e+00> : vector<8xf32>
    %9 = vector.multi_reduction <add>, %4, %cst [1] : vector<8x32xf32> to vector<8xf32>
    %10 = vector.shape_cast %9 : vector<8xf32> to vector<8x1xf32>
    %cst_9 = arith.constant 3.200000e+01 : f32
    %11 = vector.broadcast %cst_9 : f32 to vector<8x1xf32>
    %12 = arith.divf %10, %11 : vector<8x1xf32>
    %13 = vector.broadcast %12 : vector<8x1xf32> to vector<8x32xf32>
    %14 = arith.subf %4, %13 : vector<8x32xf32>
    %15 = arith.mulf %14, %14 : vector<8x32xf32>
    %cst_10 = arith.constant dense<0.000000e+00> : vector<8xf32>
    %16 = vector.multi_reduction <add>, %15, %cst_10 [1] : vector<8x32xf32> to vector<8xf32>
    %17 = vector.shape_cast %16 : vector<8xf32> to vector<8x1xf32>
    %cst_11 = arith.constant 3.200000e+01 : f32
    %18 = vector.broadcast %cst_11 : f32 to vector<8x1xf32>
    %19 = arith.divf %17, %18 : vector<8x1xf32>
    %cst_12 = arith.constant 9.99999974E-6 : f32
    %20 = vector.broadcast %cst_12 : f32 to vector<8x1xf32>
    %21 = arith.addf %19, %20 : vector<8x1xf32>
    %22 = math.rsqrt %21 : vector<8x1xf32>
    %23 = vector.broadcast %22 : vector<8x1xf32> to vector<8x32xf32>
    %24 = arith.mulf %14, %23 : vector<8x32xf32>
    %25 = vector.shape_cast %6 : vector<32xf32> to vector<1x32xf32>
    %26 = vector.broadcast %25 : vector<1x32xf32> to vector<8x32xf32>
    %27 = arith.mulf %24, %26 : vector<8x32xf32>
    %28 = vector.shape_cast %8 : vector<32xf32> to vector<1x32xf32>
    %29 = vector.broadcast %28 : vector<1x32xf32> to vector<8x32xf32>
    %30 = arith.addf %27, %29 : vector<8x32xf32>
    %c0_13 = arith.constant 0 : index
    %c0_14 = arith.constant 0 : index
    %c0_15 = arith.constant 0 : index
    %31 = vector.load %arg6[%c0_13, %c0_14, %c0_15] : memref<1x8x32xf32, #tpu.memory_space<vmem>>, vector<1x8x32xf32>
    %32 = vector.shape_cast %31 : vector<1x8x32xf32> to vector<8x32xf32>
    %33 = vector.shape_cast %30 : vector<8x32xf32> to vector<1x8x32xf32>
    tpu.vector_store %arg6[%c0_13, %c0_14, %c0_15], %33 {strides = array<i32>} : memref<1x8x32xf32, #tpu.memory_space<vmem>>, vector<1x8x32xf32>,
    return
  }
  func.func @transform_0(%arg0: i32, %arg1: i32) -> (i32, i32, i32) {
    %c0_i32 = arith.constant 0 : i32
    %c0_i32_0 = arith.constant 0 : i32
    return %arg0, %arg1, %c0_i32 : i32, i32, i32
  }
  func.func @transform_1(%arg0: i32, %arg1: i32) -> (i32, i32, i32) {
    %c0_i32 = arith.constant 0 : i32
    %c0_i32_0 = arith.constant 0 : i32
    return %arg0, %arg1, %c0_i32 : i32, i32, i32
  }
  func.func @transform_2(%arg0: i32, %arg1: i32) -> (i32, i32) {
    %c0_i32 = arith.constant 0 : i32
    %c0_i32_0 = arith.constant 0 : i32
    %c0_i32_1 = arith.constant 0 : i32
    return %c0_i32, %c0_i32_0 : i32, i32
  }
  func.func @transform_3(%arg0: i32, %arg1: i32) -> (i32, i32) {
    %c0_i32 = arith.constant 0 : i32
    %c0_i32_0 = arith.constant 0 : i32
    %c0_i32_1 = arith.constant 0 : i32
    return %c0_i32, %c0_i32_0 : i32, i32
  }
  func.func @transform_4(%arg0: i32, %arg1: i32) -> (i32, i32, i32) {
    %c0_i32 = arith.constant 0 : i32
    %c0_i32_0 = arith.constant 0 : i32
    return %arg0, %arg1, %c0_i32 : i32, i32, i32
  }
}

module attributes {stable_mosaic.version = 11 : i64} {
  func.func @block_kernel(%arg0: i32, %arg1: i32, %arg2: memref<1x8x32xf32, #tpu.memory_space<vmem>>, %arg3: memref<1x8x32xf32, #tpu.memory_space<vmem>>, %arg4: memref<1x32xf32, #tpu.memory_space<vmem>>, %arg5: memref<1x32xf32, #tpu.memory_space<vmem>>, %arg6: memref<32x128xbf16, #tpu.memory_space<vmem>>, %arg7: memref<4x64xf32, #tpu.memory_space<vmem>>, %arg8: memref<1x64xf32, #tpu.memory_space<vmem>>, %arg9: memref<64x128xbf16, #tpu.memory_space<vmem>>, %arg10: memref<2x64xbf16, #tpu.memory_space<vmem>>, %arg11: memref<1x64xf32, #tpu.memory_space<vmem>>, %arg12: memref<8x64xf32, #tpu.memory_space<vmem>>, %arg13: memref<1x64xf32, #tpu.memory_space<vmem>>, %arg14: memref<64x32xbf16, #tpu.memory_space<vmem>>, %arg15: memref<1x32xf32, #tpu.memory_space<vmem>>, %arg16: memref<1x32xf32, #tpu.memory_space<vmem>>, %arg17: memref<32x64xbf16, #tpu.memory_space<vmem>>, %arg18: memref<1x64xf32, #tpu.memory_space<vmem>>, %arg19: memref<64x32xbf16, #tpu.memory_space<vmem>>, %arg20: memref<1x32xf32, #tpu.memory_space<vmem>>, %arg21: memref<1x8x32xf32, #tpu.memory_space<vmem>>, %arg22: memref<1x8x32xf32, #tpu.memory_space<vmem>>, %arg23: memref<8x64xf32, #tpu.memory_space<vmem>>, %arg24: memref<8x64xf32, #tpu.memory_space<vmem>>, %arg25: memref<8x8x64xf32, #tpu.memory_space<vmem>>, %arg26: memref<8x8x64xf32, #tpu.memory_space<vmem>>, %arg27: memref<8x8x1xf32, #tpu.memory_space<vmem>>, %arg28: memref<8x64xf32, #tpu.memory_space<vmem>>) attributes {dimension_semantics = [#tpu.dimension_semantics<parallel>, #tpu.dimension_semantics<arbitrary>], iteration_bounds = array<i64: 2, 1>, scalar_prefetch = 0 : i64, scratch_operands = 6 : i64, tpu.core_type = #tpu.core_type<tc>, window_params = [{transform_indices = @transform_0, window_bounds = array<i64: 1, 8, 32>}, {transform_indices = @transform_1, window_bounds = array<i64: 1, 8, 32>}, {pipeline_mode = #tpu.pipeline_mode<synchronous>, transform_indices = @transform_2, window_bounds = array<i64: 1, 32>}, {pipeline_mode = #tpu.pipeline_mode<synchronous>, transform_indices = @transform_3, window_bounds = array<i64: 1, 32>}, {pipeline_mode = #tpu.pipeline_mode<synchronous>, transform_indices = @transform_4, window_bounds = array<i64: 32, 128>}, {pipeline_mode = #tpu.pipeline_mode<synchronous>, transform_indices = @transform_5, window_bounds = array<i64: 4, 64>}, {pipeline_mode = #tpu.pipeline_mode<synchronous>, transform_indices = @transform_6, window_bounds = array<i64: 1, 64>}, {pipeline_mode = #tpu.pipeline_mode<synchronous>, transform_indices = @transform_7, window_bounds = array<i64: 64, 128>}, {pipeline_mode = #tpu.pipeline_mode<synchronous>, transform_indices = @transform_8, window_bounds = array<i64: 2, 64>}, {pipeline_mode = #tpu.pipeline_mode<synchronous>, transform_indices = @transform_9, window_bounds = array<i64: 1, 64>}, {pipeline_mode = #tpu.pipeline_mode<synchronous>, transform_indices = @transform_10, window_bounds = array<i64: 8, 64>}, {pipeline_mode = #tpu.pipeline_mode<synchronous>, transform_indices = @transform_11, window_bounds = array<i64: 1, 64>}, {pipeline_mode = #tpu.pipeline_mode<synchronous>, transform_indices = @transform_12, window_bounds = array<i64: 64, 32>}, {pipeline_mode = #tpu.pipeline_mode<synchronous>, transform_indices = @transform_13, window_bounds = array<i64: 1, 32>}, {pipeline_mode = #tpu.pipeline_mode<synchronous>, transform_indices = @transform_14, window_bounds = array<i64: 1, 32>}, {pipeline_mode = #tpu.pipeline_mode<synchronous>, transform_indices = @transform_15, window_bounds = array<i64: 32, 64>}, {pipeline_mode = #tpu.pipeline_mode<synchronous>, transform_indices = @transform_16, window_bounds = array<i64: 1, 64>}, {pipeline_mode = #tpu.pipeline_mode<synchronous>, transform_indices = @transform_17, window_bounds = array<i64: 64, 32>}, {pipeline_mode = #tpu.pipeline_mode<synchronous>, transform_indices = @transform_18, window_bounds = array<i64: 1, 32>}, {transform_indices = @transform_19, window_bounds = array<i64: 1, 8, 32>}, {transform_indices = @transform_20, window_bounds = array<i64: 1, 8, 32>}]} {
    %c0_i32 = arith.constant 0 : i32
    %0 = arith.cmpi eq, %arg1, %c0_i32 : i32
    %1 = arith.extui %0 : i1 to i32
    %c0_i32_0 = arith.constant 0 : i32
    %2 = arith.cmpi ne, %1, %c0_i32_0 : i32
    scf.if %2 {
      %cst_223 = arith.constant 0.000000e+00 : f32
      %458 = vector.broadcast %cst_223 : f32 to vector<8x64xf32>
      %c0_224 = arith.constant 0 : index
      %c0_225 = arith.constant 0 : index
      %459 = vector.load %arg23[%c0_224, %c0_225] : memref<8x64xf32, #tpu.memory_space<vmem>>, vector<8x64xf32>
      tpu.vector_store %arg23[%c0_224, %c0_225], %458 {strides = array<i32>} : memref<8x64xf32, #tpu.memory_space<vmem>>, vector<8x64xf32>,
      %cst_226 = arith.constant 0.000000e+00 : f32
      %460 = vector.broadcast %cst_226 : f32 to vector<8x64xf32>
      %c0_227 = arith.constant 0 : index
      %c0_228 = arith.constant 0 : index
      %461 = vector.load %arg24[%c0_227, %c0_228] : memref<8x64xf32, #tpu.memory_space<vmem>>, vector<8x64xf32>
      tpu.vector_store %arg24[%c0_227, %c0_228], %460 {strides = array<i32>} : memref<8x64xf32, #tpu.memory_space<vmem>>, vector<8x64xf32>,
    } else {
    }
    %c0 = arith.constant 0 : index
    %c0_1 = arith.constant 0 : index
    %c0_2 = arith.constant 0 : index
    %3 = vector.load %arg2[%c0, %c0_1, %c0_2] : memref<1x8x32xf32, #tpu.memory_space<vmem>>, vector<1x8x32xf32>
    %4 = vector.shape_cast %3 : vector<1x8x32xf32> to vector<8x32xf32>
    %c0_3 = arith.constant 0 : index
    %c0_4 = arith.constant 0 : index
    %c0_5 = arith.constant 0 : index
    %5 = vector.load %arg3[%c0_3, %c0_4, %c0_5] : memref<1x8x32xf32, #tpu.memory_space<vmem>>, vector<1x8x32xf32>
    %6 = vector.shape_cast %5 : vector<1x8x32xf32> to vector<8x32xf32>
    %7 = arith.addf %4, %6 : vector<8x32xf32>
    %c0_6 = arith.constant 0 : index
    %c0_7 = arith.constant 0 : index
    %8 = vector.load %arg4[%c0_6, %c0_7] : memref<1x32xf32, #tpu.memory_space<vmem>>, vector<1x32xf32>
    %9 = vector.shape_cast %8 : vector<1x32xf32> to vector<32xf32>
    %c0_8 = arith.constant 0 : index
    %c0_9 = arith.constant 0 : index
    %10 = vector.load %arg5[%c0_8, %c0_9] : memref<1x32xf32, #tpu.memory_space<vmem>>, vector<1x32xf32>
    %11 = vector.shape_cast %10 : vector<1x32xf32> to vector<32xf32>
    %cst = arith.constant dense<0.000000e+00> : vector<8xf32>
    %12 = vector.multi_reduction <add>, %7, %cst [1] : vector<8x32xf32> to vector<8xf32>
    %13 = vector.shape_cast %12 : vector<8xf32> to vector<8x1xf32>
    %cst_10 = arith.constant 3.200000e+01 : f32
    %14 = vector.broadcast %cst_10 : f32 to vector<8x1xf32>
    %15 = arith.divf %13, %14 : vector<8x1xf32>
    %16 = vector.broadcast %15 : vector<8x1xf32> to vector<8x32xf32>
    %17 = arith.subf %7, %16 : vector<8x32xf32>
    %18 = arith.mulf %17, %17 : vector<8x32xf32>
    %cst_11 = arith.constant dense<0.000000e+00> : vector<8xf32>
    %19 = vector.multi_reduction <add>, %18, %cst_11 [1] : vector<8x32xf32> to vector<8xf32>
    %20 = vector.shape_cast %19 : vector<8xf32> to vector<8x1xf32>
    %cst_12 = arith.constant 3.200000e+01 : f32
    %21 = vector.broadcast %cst_12 : f32 to vector<8x1xf32>
    %22 = arith.divf %20, %21 : vector<8x1xf32>
    %cst_13 = arith.constant 9.99999974E-6 : f32
    %23 = vector.broadcast %cst_13 : f32 to vector<8x1xf32>
    %24 = arith.addf %22, %23 : vector<8x1xf32>
    %25 = math.rsqrt %24 : vector<8x1xf32>
    %26 = vector.broadcast %25 : vector<8x1xf32> to vector<8x32xf32>
    %27 = arith.mulf %17, %26 : vector<8x32xf32>
    %28 = vector.shape_cast %9 : vector<32xf32> to vector<1x32xf32>
    %29 = vector.broadcast %28 : vector<1x32xf32> to vector<8x32xf32>
    %30 = arith.mulf %27, %29 : vector<8x32xf32>
    %31 = vector.shape_cast %11 : vector<32xf32> to vector<1x32xf32>
    %32 = vector.broadcast %31 : vector<1x32xf32> to vector<8x32xf32>
    %33 = arith.addf %30, %32 : vector<8x32xf32>
    %c0_14 = arith.constant 0 : index
    %c0_15 = arith.constant 0 : index
    %34 = vector.load %arg6[%c0_14, %c0_15] : memref<32x128xbf16, #tpu.memory_space<vmem>>, vector<32x128xbf16>
    %35 = arith.truncf %33 : vector<8x32xf32> to vector<8x32xbf16>
    %cst_16 = arith.constant dense<0.000000e+00> : vector<8x128xf32>
    %36 = tpu.matmul %35, %34, %cst_16 {dimension_numbers = #tpu.dot_dimension_numbers<[1], [0], [0], [1], [0, 0, 1, 1], [], []>} : vector<8x32xbf16>, vector<32x128xbf16>, vector<8x128xf32> -> vector<8x128xf32>
    %37 = vector.extract_strided_slice %36 {offsets = [0, 0], sizes = [8, 64], strides = [1, 1]} : vector<8x128xf32> to vector<8x64xf32>
    %38 = vector.extract_strided_slice %36 {offsets = [0, 64], sizes = [8, 64], strides = [1, 1]} : vector<8x128xf32> to vector<8x64xf32>
    %c0_17 = arith.constant 0 : index
    %c0_18 = arith.constant 0 : index
    %39 = vector.load %arg7[%c0_17, %c0_18] : memref<4x64xf32, #tpu.memory_space<vmem>>, vector<4x64xf32>
    %c0_19 = arith.constant 0 : index
    %c0_20 = arith.constant 0 : index
    %40 = vector.load %arg23[%c0_19, %c0_20] : memref<8x64xf32, #tpu.memory_space<vmem>>, vector<8x64xf32>
    %41 = tpu.concatenate %40, %37 in 0 : vector<8x64xf32>, vector<8x64xf32> -> vector<16x64xf32>
    %c0_21 = arith.constant 0 : index
    %c0_22 = arith.constant 0 : index
    %42 = vector.load %arg8[%c0_21, %c0_22] : memref<1x64xf32, #tpu.memory_space<vmem>>, vector<1x64xf32>
    %43 = vector.extract_strided_slice %39 {offsets = [3, 0], sizes = [1, 64], strides = [1, 1]} : vector<4x64xf32> to vector<1x64xf32>
    %44 = vector.broadcast %43 : vector<1x64xf32> to vector<8x64xf32>
    %45 = arith.mulf %44, %37 : vector<8x64xf32>
    %46 = vector.broadcast %42 : vector<1x64xf32> to vector<8x64xf32>
    %47 = arith.addf %46, %45 : vector<8x64xf32>
    %48 = vector.extract_strided_slice %39 {offsets = [0, 0], sizes = [1, 64], strides = [1, 1]} : vector<4x64xf32> to vector<1x64xf32>
    %49 = vector.extract_strided_slice %41 {offsets = [5, 0], sizes = [8, 64], strides = [1, 1]} : vector<16x64xf32> to vector<8x64xf32>
    %50 = vector.broadcast %48 : vector<1x64xf32> to vector<8x64xf32>
    %51 = arith.mulf %50, %49 : vector<8x64xf32>
    %52 = arith.addf %47, %51 : vector<8x64xf32>
    %53 = vector.extract_strided_slice %39 {offsets = [1, 0], sizes = [1, 64], strides = [1, 1]} : vector<4x64xf32> to vector<1x64xf32>
    %54 = vector.extract_strided_slice %41 {offsets = [6, 0], sizes = [8, 64], strides = [1, 1]} : vector<16x64xf32> to vector<8x64xf32>
    %55 = vector.broadcast %53 : vector<1x64xf32> to vector<8x64xf32>
    %56 = arith.mulf %55, %54 : vector<8x64xf32>
    %57 = arith.addf %52, %56 : vector<8x64xf32>
    %58 = vector.extract_strided_slice %39 {offsets = [2, 0], sizes = [1, 64], strides = [1, 1]} : vector<4x64xf32> to vector<1x64xf32>
    %59 = vector.extract_strided_slice %41 {offsets = [7, 0], sizes = [8, 64], strides = [1, 1]} : vector<16x64xf32> to vector<8x64xf32>
    %60 = vector.broadcast %58 : vector<1x64xf32> to vector<8x64xf32>
    %61 = arith.mulf %60, %59 : vector<8x64xf32>
    %62 = arith.addf %57, %61 : vector<8x64xf32>
    %cst_23 = arith.constant 5.000000e-01 : f32
    %63 = vector.broadcast %cst_23 : f32 to vector<8x64xf32>
    %64 = arith.mulf %63, %62 : vector<8x64xf32>
    %65 = math.tanh %64 : vector<8x64xf32>
    %cst_24 = arith.constant 1.000000e+00 : f32
    %66 = vector.broadcast %cst_24 : f32 to vector<8x64xf32>
    %67 = arith.addf %65, %66 : vector<8x64xf32>
    %cst_25 = arith.constant 5.000000e-01 : f32
    %68 = vector.broadcast %cst_25 : f32 to vector<8x64xf32>
    %69 = arith.mulf %68, %67 : vector<8x64xf32>
    %70 = arith.mulf %62, %69 : vector<8x64xf32>
    %c0_26 = arith.constant 0 : index
    %c0_27 = arith.constant 0 : index
    %71 = vector.load %arg9[%c0_26, %c0_27] : memref<64x128xbf16, #tpu.memory_space<vmem>>, vector<64x128xbf16>
    %72 = arith.truncf %70 : vector<8x64xf32> to vector<8x64xbf16>
    %cst_28 = arith.constant dense<0.000000e+00> : vector<8x128xf32>
    %73 = tpu.matmul %72, %71, %cst_28 {dimension_numbers = #tpu.dot_dimension_numbers<[1], [0], [0], [1], [0, 0, 1, 1], [], []>} : vector<8x64xbf16>, vector<64x128xbf16>, vector<8x128xf32> -> vector<8x128xf32>
    %74 = vector.extract_strided_slice %73 {offsets = [0, 0], sizes = [8, 2], strides = [1, 1]} : vector<8x128xf32> to vector<8x2xf32>
    %75 = vector.extract_strided_slice %73 {offsets = [0, 2], sizes = [8, 8], strides = [1, 1]} : vector<8x128xf32> to vector<8x8xf32>
    %76 = vector.extract_strided_slice %73 {offsets = [0, 10], sizes = [8, 8], strides = [1, 1]} : vector<8x128xf32> to vector<8x8xf32>
    %c0_29 = arith.constant 0 : index
    %c0_30 = arith.constant 0 : index
    %77 = vector.load %arg10[%c0_29, %c0_30] : memref<2x64xbf16, #tpu.memory_space<vmem>>, vector<2x64xbf16>
    %78 = arith.truncf %74 : vector<8x2xf32> to vector<8x2xbf16>
    %cst_31 = arith.constant dense<0.000000e+00> : vector<8x64xf32>
    %79 = tpu.matmul %78, %77, %cst_31 {dimension_numbers = #tpu.dot_dimension_numbers<[1], [0], [0], [1], [0, 0, 1, 1], [], []>} : vector<8x2xbf16>, vector<2x64xbf16>, vector<8x64xf32> -> vector<8x64xf32>
    %c0_32 = arith.constant 0 : index
    %c0_33 = arith.constant 0 : index
    %80 = vector.load %arg11[%c0_32, %c0_33] : memref<1x64xf32, #tpu.memory_space<vmem>>, vector<1x64xf32>
    %81 = vector.broadcast %80 : vector<1x64xf32> to vector<8x64xf32>
    %82 = arith.addf %79, %81 : vector<8x64xf32>
    %cst_34 = arith.constant 0.000000e+00 : f32
    %83 = vector.broadcast %cst_34 : f32 to vector<8x64xf32>
    %84 = arith.maximumf %82, %83 : vector<8x64xf32>
    %85 = math.absf %82 : vector<8x64xf32>
    %cst_35 = arith.constant 0.000000e+00 : f32
    %86 = vector.broadcast %cst_35 : f32 to vector<8x64xf32>
    %87 = arith.subf %86, %85 : vector<8x64xf32>
    %88 = math.exp %87 : vector<8x64xf32>
    %cst_36 = arith.constant 1.000000e+00 : f32
    %89 = vector.broadcast %cst_36 : f32 to vector<8x64xf32>
    %90 = arith.addf %89, %88 : vector<8x64xf32>
    %91 = math.log %90 : vector<8x64xf32>
    %92 = arith.addf %84, %91 : vector<8x64xf32>
    %93 = arith.mulf %92, %70 : vector<8x64xf32>
    %c0_37 = arith.constant 0 : index
    %c0_38 = arith.constant 0 : index
    %94 = vector.load %arg12[%c0_37, %c0_38] : memref<8x64xf32, #tpu.memory_space<vmem>>, vector<1x64xf32>
    %95 = vector.shape_cast %94 : vector<1x64xf32> to vector<64xf32>
    %96 = vector.shape_cast %95 : vector<64xf32> to vector<1x64xf32>
    %97 = vector.broadcast %96 : vector<1x64xf32> to vector<8x64xf32>
    %98 = arith.mulf %92, %97 : vector<8x64xf32>
    %99 = math.exp %98 : vector<8x64xf32>
    %c0_39 = arith.constant 0 : index
    %c0_40 = arith.constant 0 : index
    %c0_41 = arith.constant 0 : index
    %100 = vector.load %arg25[%c0_39, %c0_40, %c0_41] : memref<8x8x64xf32, #tpu.memory_space<vmem>>, vector<8x1x64xf32>
    %101 = vector.shape_cast %100 : vector<8x1x64xf32> to vector<8x64xf32>
    %102 = vector.shape_cast %99 : vector<8x64xf32> to vector<8x1x64xf32>
    tpu.vector_store %arg25[%c0_39, %c0_40, %c0_41], %102 {strides = array<i32>} : memref<8x8x64xf32, #tpu.memory_space<vmem>>, vector<8x1x64xf32>,
    %103 = vector.extract_strided_slice %75 {offsets = [0, 0], sizes = [8, 1], strides = [1, 1]} : vector<8x8xf32> to vector<8x1xf32>
    %104 = vector.broadcast %103 : vector<8x1xf32> to vector<8x64xf32>
    %105 = arith.mulf %93, %104 : vector<8x64xf32>
    %c0_42 = arith.constant 0 : index
    %c0_43 = arith.constant 0 : index
    %c0_44 = arith.constant 0 : index
    %106 = vector.load %arg26[%c0_42, %c0_43, %c0_44] : memref<8x8x64xf32, #tpu.memory_space<vmem>>, vector<8x1x64xf32>
    %107 = vector.shape_cast %106 : vector<8x1x64xf32> to vector<8x64xf32>
    %108 = vector.shape_cast %105 : vector<8x64xf32> to vector<8x1x64xf32>
    tpu.vector_store %arg26[%c0_42, %c0_43, %c0_44], %108 {strides = array<i32>} : memref<8x8x64xf32, #tpu.memory_space<vmem>>, vector<8x1x64xf32>,
    %109 = vector.extract_strided_slice %76 {offsets = [0, 0], sizes = [8, 1], strides = [1, 1]} : vector<8x8xf32> to vector<8x1xf32>
    %c0_45 = arith.constant 0 : index
    %c0_46 = arith.constant 0 : index
    %c0_47 = arith.constant 0 : index
    %110 = vector.load %arg27[%c0_45, %c0_46, %c0_47] : memref<8x8x1xf32, #tpu.memory_space<vmem>>, vector<8x1x1xf32>
    %111 = vector.shape_cast %110 : vector<8x1x1xf32> to vector<8x1xf32>
    %112 = vector.shape_cast %109 : vector<8x1xf32> to vector<8x1x1xf32>
    tpu.vector_store %arg27[%c0_45, %c0_46, %c0_47], %112 {strides = array<i32>} : memref<8x8x1xf32, #tpu.memory_space<vmem>>, vector<8x1x1xf32>,
    %c1 = arith.constant 1 : index
    %c0_48 = arith.constant 0 : index
    %113 = vector.load %arg12[%c1, %c0_48] : memref<8x64xf32, #tpu.memory_space<vmem>>, vector<1x64xf32>
    %114 = vector.shape_cast %113 : vector<1x64xf32> to vector<64xf32>
    %115 = vector.shape_cast %114 : vector<64xf32> to vector<1x64xf32>
    %116 = vector.broadcast %115 : vector<1x64xf32> to vector<8x64xf32>
    %117 = arith.mulf %92, %116 : vector<8x64xf32>
    %118 = math.exp %117 : vector<8x64xf32>
    %c0_49 = arith.constant 0 : index
    %c1_50 = arith.constant 1 : index
    %c0_51 = arith.constant 0 : index
    %119 = vector.load %arg25[%c0_49, %c1_50, %c0_51] : memref<8x8x64xf32, #tpu.memory_space<vmem>>, vector<8x1x64xf32>
    %120 = vector.shape_cast %119 : vector<8x1x64xf32> to vector<8x64xf32>
    %121 = vector.shape_cast %118 : vector<8x64xf32> to vector<8x1x64xf32>
    tpu.vector_store %arg25[%c0_49, %c1_50, %c0_51], %121 {strides = array<i32>} : memref<8x8x64xf32, #tpu.memory_space<vmem>>, vector<8x1x64xf32>,
    %122 = vector.extract_strided_slice %75 {offsets = [0, 1], sizes = [8, 1], strides = [1, 1]} : vector<8x8xf32> to vector<8x1xf32>
    %123 = vector.broadcast %122 : vector<8x1xf32> to vector<8x64xf32>
    %124 = arith.mulf %93, %123 : vector<8x64xf32>
    %c0_52 = arith.constant 0 : index
    %c1_53 = arith.constant 1 : index
    %c0_54 = arith.constant 0 : index
    %125 = vector.load %arg26[%c0_52, %c1_53, %c0_54] : memref<8x8x64xf32, #tpu.memory_space<vmem>>, vector<8x1x64xf32>
    %126 = vector.shape_cast %125 : vector<8x1x64xf32> to vector<8x64xf32>
    %127 = vector.shape_cast %124 : vector<8x64xf32> to vector<8x1x64xf32>
    tpu.vector_store %arg26[%c0_52, %c1_53, %c0_54], %127 {strides = array<i32>} : memref<8x8x64xf32, #tpu.memory_space<vmem>>, vector<8x1x64xf32>,
    %128 = vector.extract_strided_slice %76 {offsets = [0, 1], sizes = [8, 1], strides = [1, 1]} : vector<8x8xf32> to vector<8x1xf32>
    %c0_55 = arith.constant 0 : index
    %c1_56 = arith.constant 1 : index
    %c0_57 = arith.constant 0 : index
    %129 = vector.load %arg27[%c0_55, %c1_56, %c0_57] : memref<8x8x1xf32, #tpu.memory_space<vmem>>, vector<8x1x1xf32>
    %130 = vector.shape_cast %129 : vector<8x1x1xf32> to vector<8x1xf32>
    %131 = vector.shape_cast %128 : vector<8x1xf32> to vector<8x1x1xf32>
    tpu.vector_store %arg27[%c0_55, %c1_56, %c0_57], %131 {strides = array<i32>} : memref<8x8x1xf32, #tpu.memory_space<vmem>>, vector<8x1x1xf32>,
    %c2 = arith.constant 2 : index
    %c0_58 = arith.constant 0 : index
    %132 = vector.load %arg12[%c2, %c0_58] : memref<8x64xf32, #tpu.memory_space<vmem>>, vector<1x64xf32>
    %133 = vector.shape_cast %132 : vector<1x64xf32> to vector<64xf32>
    %134 = vector.shape_cast %133 : vector<64xf32> to vector<1x64xf32>
    %135 = vector.broadcast %134 : vector<1x64xf32> to vector<8x64xf32>
    %136 = arith.mulf %92, %135 : vector<8x64xf32>
    %137 = math.exp %136 : vector<8x64xf32>
    %c0_59 = arith.constant 0 : index
    %c2_60 = arith.constant 2 : index
    %c0_61 = arith.constant 0 : index
    %138 = vector.load %arg25[%c0_59, %c2_60, %c0_61] : memref<8x8x64xf32, #tpu.memory_space<vmem>>, vector<8x1x64xf32>
    %139 = vector.shape_cast %138 : vector<8x1x64xf32> to vector<8x64xf32>
    %140 = vector.shape_cast %137 : vector<8x64xf32> to vector<8x1x64xf32>
    tpu.vector_store %arg25[%c0_59, %c2_60, %c0_61], %140 {strides = array<i32>} : memref<8x8x64xf32, #tpu.memory_space<vmem>>, vector<8x1x64xf32>,
    %141 = vector.extract_strided_slice %75 {offsets = [0, 2], sizes = [8, 1], strides = [1, 1]} : vector<8x8xf32> to vector<8x1xf32>
    %142 = vector.broadcast %141 : vector<8x1xf32> to vector<8x64xf32>
    %143 = arith.mulf %93, %142 : vector<8x64xf32>
    %c0_62 = arith.constant 0 : index
    %c2_63 = arith.constant 2 : index
    %c0_64 = arith.constant 0 : index
    %144 = vector.load %arg26[%c0_62, %c2_63, %c0_64] : memref<8x8x64xf32, #tpu.memory_space<vmem>>, vector<8x1x64xf32>
    %145 = vector.shape_cast %144 : vector<8x1x64xf32> to vector<8x64xf32>
    %146 = vector.shape_cast %143 : vector<8x64xf32> to vector<8x1x64xf32>
    tpu.vector_store %arg26[%c0_62, %c2_63, %c0_64], %146 {strides = array<i32>} : memref<8x8x64xf32, #tpu.memory_space<vmem>>, vector<8x1x64xf32>,
    %147 = vector.extract_strided_slice %76 {offsets = [0, 2], sizes = [8, 1], strides = [1, 1]} : vector<8x8xf32> to vector<8x1xf32>
    %c0_65 = arith.constant 0 : index
    %c2_66 = arith.constant 2 : index
    %c0_67 = arith.constant 0 : index
    %148 = vector.load %arg27[%c0_65, %c2_66, %c0_67] : memref<8x8x1xf32, #tpu.memory_space<vmem>>, vector<8x1x1xf32>
    %149 = vector.shape_cast %148 : vector<8x1x1xf32> to vector<8x1xf32>
    %150 = vector.shape_cast %147 : vector<8x1xf32> to vector<8x1x1xf32>
    tpu.vector_store %arg27[%c0_65, %c2_66, %c0_67], %150 {strides = array<i32>} : memref<8x8x1xf32, #tpu.memory_space<vmem>>, vector<8x1x1xf32>,
    %c3 = arith.constant 3 : index
    %c0_68 = arith.constant 0 : index
    %151 = vector.load %arg12[%c3, %c0_68] : memref<8x64xf32, #tpu.memory_space<vmem>>, vector<1x64xf32>
    %152 = vector.shape_cast %151 : vector<1x64xf32> to vector<64xf32>
    %153 = vector.shape_cast %152 : vector<64xf32> to vector<1x64xf32>
    %154 = vector.broadcast %153 : vector<1x64xf32> to vector<8x64xf32>
    %155 = arith.mulf %92, %154 : vector<8x64xf32>
    %156 = math.exp %155 : vector<8x64xf32>
    %c0_69 = arith.constant 0 : index
    %c3_70 = arith.constant 3 : index
    %c0_71 = arith.constant 0 : index
    %157 = vector.load %arg25[%c0_69, %c3_70, %c0_71] : memref<8x8x64xf32, #tpu.memory_space<vmem>>, vector<8x1x64xf32>
    %158 = vector.shape_cast %157 : vector<8x1x64xf32> to vector<8x64xf32>
    %159 = vector.shape_cast %156 : vector<8x64xf32> to vector<8x1x64xf32>
    tpu.vector_store %arg25[%c0_69, %c3_70, %c0_71], %159 {strides = array<i32>} : memref<8x8x64xf32, #tpu.memory_space<vmem>>, vector<8x1x64xf32>,
    %160 = vector.extract_strided_slice %75 {offsets = [0, 3], sizes = [8, 1], strides = [1, 1]} : vector<8x8xf32> to vector<8x1xf32>
    %161 = vector.broadcast %160 : vector<8x1xf32> to vector<8x64xf32>
    %162 = arith.mulf %93, %161 : vector<8x64xf32>
    %c0_72 = arith.constant 0 : index
    %c3_73 = arith.constant 3 : index
    %c0_74 = arith.constant 0 : index
    %163 = vector.load %arg26[%c0_72, %c3_73, %c0_74] : memref<8x8x64xf32, #tpu.memory_space<vmem>>, vector<8x1x64xf32>
    %164 = vector.shape_cast %163 : vector<8x1x64xf32> to vector<8x64xf32>
    %165 = vector.shape_cast %162 : vector<8x64xf32> to vector<8x1x64xf32>
    tpu.vector_store %arg26[%c0_72, %c3_73, %c0_74], %165 {strides = array<i32>} : memref<8x8x64xf32, #tpu.memory_space<vmem>>, vector<8x1x64xf32>,
    %166 = vector.extract_strided_slice %76 {offsets = [0, 3], sizes = [8, 1], strides = [1, 1]} : vector<8x8xf32> to vector<8x1xf32>
    %c0_75 = arith.constant 0 : index
    %c3_76 = arith.constant 3 : index
    %c0_77 = arith.constant 0 : index
    %167 = vector.load %arg27[%c0_75, %c3_76, %c0_77] : memref<8x8x1xf32, #tpu.memory_space<vmem>>, vector<8x1x1xf32>
    %168 = vector.shape_cast %167 : vector<8x1x1xf32> to vector<8x1xf32>
    %169 = vector.shape_cast %166 : vector<8x1xf32> to vector<8x1x1xf32>
    tpu.vector_store %arg27[%c0_75, %c3_76, %c0_77], %169 {strides = array<i32>} : memref<8x8x1xf32, #tpu.memory_space<vmem>>, vector<8x1x1xf32>,
    %c4 = arith.constant 4 : index
    %c0_78 = arith.constant 0 : index
    %170 = vector.load %arg12[%c4, %c0_78] : memref<8x64xf32, #tpu.memory_space<vmem>>, vector<1x64xf32>
    %171 = vector.shape_cast %170 : vector<1x64xf32> to vector<64xf32>
    %172 = vector.shape_cast %171 : vector<64xf32> to vector<1x64xf32>
    %173 = vector.broadcast %172 : vector<1x64xf32> to vector<8x64xf32>
    %174 = arith.mulf %92, %173 : vector<8x64xf32>
    %175 = math.exp %174 : vector<8x64xf32>
    %c0_79 = arith.constant 0 : index
    %c4_80 = arith.constant 4 : index
    %c0_81 = arith.constant 0 : index
    %176 = vector.load %arg25[%c0_79, %c4_80, %c0_81] : memref<8x8x64xf32, #tpu.memory_space<vmem>>, vector<8x1x64xf32>
    %177 = vector.shape_cast %176 : vector<8x1x64xf32> to vector<8x64xf32>
    %178 = vector.shape_cast %175 : vector<8x64xf32> to vector<8x1x64xf32>
    tpu.vector_store %arg25[%c0_79, %c4_80, %c0_81], %178 {strides = array<i32>} : memref<8x8x64xf32, #tpu.memory_space<vmem>>, vector<8x1x64xf32>,
    %179 = vector.extract_strided_slice %75 {offsets = [0, 4], sizes = [8, 1], strides = [1, 1]} : vector<8x8xf32> to vector<8x1xf32>
    %180 = vector.broadcast %179 : vector<8x1xf32> to vector<8x64xf32>
    %181 = arith.mulf %93, %180 : vector<8x64xf32>
    %c0_82 = arith.constant 0 : index
    %c4_83 = arith.constant 4 : index
    %c0_84 = arith.constant 0 : index
    %182 = vector.load %arg26[%c0_82, %c4_83, %c0_84] : memref<8x8x64xf32, #tpu.memory_space<vmem>>, vector<8x1x64xf32>
    %183 = vector.shape_cast %182 : vector<8x1x64xf32> to vector<8x64xf32>
    %184 = vector.shape_cast %181 : vector<8x64xf32> to vector<8x1x64xf32>
    tpu.vector_store %arg26[%c0_82, %c4_83, %c0_84], %184 {strides = array<i32>} : memref<8x8x64xf32, #tpu.memory_space<vmem>>, vector<8x1x64xf32>,
    %185 = vector.extract_strided_slice %76 {offsets = [0, 4], sizes = [8, 1], strides = [1, 1]} : vector<8x8xf32> to vector<8x1xf32>
    %c0_85 = arith.constant 0 : index
    %c4_86 = arith.constant 4 : index
    %c0_87 = arith.constant 0 : index
    %186 = vector.load %arg27[%c0_85, %c4_86, %c0_87] : memref<8x8x1xf32, #tpu.memory_space<vmem>>, vector<8x1x1xf32>
    %187 = vector.shape_cast %186 : vector<8x1x1xf32> to vector<8x1xf32>
    %188 = vector.shape_cast %185 : vector<8x1xf32> to vector<8x1x1xf32>
    tpu.vector_store %arg27[%c0_85, %c4_86, %c0_87], %188 {strides = array<i32>} : memref<8x8x1xf32, #tpu.memory_space<vmem>>, vector<8x1x1xf32>,
    %c5 = arith.constant 5 : index
    %c0_88 = arith.constant 0 : index
    %189 = vector.load %arg12[%c5, %c0_88] : memref<8x64xf32, #tpu.memory_space<vmem>>, vector<1x64xf32>
    %190 = vector.shape_cast %189 : vector<1x64xf32> to vector<64xf32>
    %191 = vector.shape_cast %190 : vector<64xf32> to vector<1x64xf32>
    %192 = vector.broadcast %191 : vector<1x64xf32> to vector<8x64xf32>
    %193 = arith.mulf %92, %192 : vector<8x64xf32>
    %194 = math.exp %193 : vector<8x64xf32>
    %c0_89 = arith.constant 0 : index
    %c5_90 = arith.constant 5 : index
    %c0_91 = arith.constant 0 : index
    %195 = vector.load %arg25[%c0_89, %c5_90, %c0_91] : memref<8x8x64xf32, #tpu.memory_space<vmem>>, vector<8x1x64xf32>
    %196 = vector.shape_cast %195 : vector<8x1x64xf32> to vector<8x64xf32>
    %197 = vector.shape_cast %194 : vector<8x64xf32> to vector<8x1x64xf32>
    tpu.vector_store %arg25[%c0_89, %c5_90, %c0_91], %197 {strides = array<i32>} : memref<8x8x64xf32, #tpu.memory_space<vmem>>, vector<8x1x64xf32>,
    %198 = vector.extract_strided_slice %75 {offsets = [0, 5], sizes = [8, 1], strides = [1, 1]} : vector<8x8xf32> to vector<8x1xf32>
    %199 = vector.broadcast %198 : vector<8x1xf32> to vector<8x64xf32>
    %200 = arith.mulf %93, %199 : vector<8x64xf32>
    %c0_92 = arith.constant 0 : index
    %c5_93 = arith.constant 5 : index
    %c0_94 = arith.constant 0 : index
    %201 = vector.load %arg26[%c0_92, %c5_93, %c0_94] : memref<8x8x64xf32, #tpu.memory_space<vmem>>, vector<8x1x64xf32>
    %202 = vector.shape_cast %201 : vector<8x1x64xf32> to vector<8x64xf32>
    %203 = vector.shape_cast %200 : vector<8x64xf32> to vector<8x1x64xf32>
    tpu.vector_store %arg26[%c0_92, %c5_93, %c0_94], %203 {strides = array<i32>} : memref<8x8x64xf32, #tpu.memory_space<vmem>>, vector<8x1x64xf32>,
    %204 = vector.extract_strided_slice %76 {offsets = [0, 5], sizes = [8, 1], strides = [1, 1]} : vector<8x8xf32> to vector<8x1xf32>
    %c0_95 = arith.constant 0 : index
    %c5_96 = arith.constant 5 : index
    %c0_97 = arith.constant 0 : index
    %205 = vector.load %arg27[%c0_95, %c5_96, %c0_97] : memref<8x8x1xf32, #tpu.memory_space<vmem>>, vector<8x1x1xf32>
    %206 = vector.shape_cast %205 : vector<8x1x1xf32> to vector<8x1xf32>
    %207 = vector.shape_cast %204 : vector<8x1xf32> to vector<8x1x1xf32>
    tpu.vector_store %arg27[%c0_95, %c5_96, %c0_97], %207 {strides = array<i32>} : memref<8x8x1xf32, #tpu.memory_space<vmem>>, vector<8x1x1xf32>,
    %c6 = arith.constant 6 : index
    %c0_98 = arith.constant 0 : index
    %208 = vector.load %arg12[%c6, %c0_98] : memref<8x64xf32, #tpu.memory_space<vmem>>, vector<1x64xf32>
    %209 = vector.shape_cast %208 : vector<1x64xf32> to vector<64xf32>
    %210 = vector.shape_cast %209 : vector<64xf32> to vector<1x64xf32>
    %211 = vector.broadcast %210 : vector<1x64xf32> to vector<8x64xf32>
    %212 = arith.mulf %92, %211 : vector<8x64xf32>
    %213 = math.exp %212 : vector<8x64xf32>
    %c0_99 = arith.constant 0 : index
    %c6_100 = arith.constant 6 : index
    %c0_101 = arith.constant 0 : index
    %214 = vector.load %arg25[%c0_99, %c6_100, %c0_101] : memref<8x8x64xf32, #tpu.memory_space<vmem>>, vector<8x1x64xf32>
    %215 = vector.shape_cast %214 : vector<8x1x64xf32> to vector<8x64xf32>
    %216 = vector.shape_cast %213 : vector<8x64xf32> to vector<8x1x64xf32>
    tpu.vector_store %arg25[%c0_99, %c6_100, %c0_101], %216 {strides = array<i32>} : memref<8x8x64xf32, #tpu.memory_space<vmem>>, vector<8x1x64xf32>,
    %217 = vector.extract_strided_slice %75 {offsets = [0, 6], sizes = [8, 1], strides = [1, 1]} : vector<8x8xf32> to vector<8x1xf32>
    %218 = vector.broadcast %217 : vector<8x1xf32> to vector<8x64xf32>
    %219 = arith.mulf %93, %218 : vector<8x64xf32>
    %c0_102 = arith.constant 0 : index
    %c6_103 = arith.constant 6 : index
    %c0_104 = arith.constant 0 : index
    %220 = vector.load %arg26[%c0_102, %c6_103, %c0_104] : memref<8x8x64xf32, #tpu.memory_space<vmem>>, vector<8x1x64xf32>
    %221 = vector.shape_cast %220 : vector<8x1x64xf32> to vector<8x64xf32>
    %222 = vector.shape_cast %219 : vector<8x64xf32> to vector<8x1x64xf32>
    tpu.vector_store %arg26[%c0_102, %c6_103, %c0_104], %222 {strides = array<i32>} : memref<8x8x64xf32, #tpu.memory_space<vmem>>, vector<8x1x64xf32>,
    %223 = vector.extract_strided_slice %76 {offsets = [0, 6], sizes = [8, 1], strides = [1, 1]} : vector<8x8xf32> to vector<8x1xf32>
    %c0_105 = arith.constant 0 : index
    %c6_106 = arith.constant 6 : index
    %c0_107 = arith.constant 0 : index
    %224 = vector.load %arg27[%c0_105, %c6_106, %c0_107] : memref<8x8x1xf32, #tpu.memory_space<vmem>>, vector<8x1x1xf32>
    %225 = vector.shape_cast %224 : vector<8x1x1xf32> to vector<8x1xf32>
    %226 = vector.shape_cast %223 : vector<8x1xf32> to vector<8x1x1xf32>
    tpu.vector_store %arg27[%c0_105, %c6_106, %c0_107], %226 {strides = array<i32>} : memref<8x8x1xf32, #tpu.memory_space<vmem>>, vector<8x1x1xf32>,
    %c7 = arith.constant 7 : index
    %c0_108 = arith.constant 0 : index
    %227 = vector.load %arg12[%c7, %c0_108] : memref<8x64xf32, #tpu.memory_space<vmem>>, vector<1x64xf32>
    %228 = vector.shape_cast %227 : vector<1x64xf32> to vector<64xf32>
    %229 = vector.shape_cast %228 : vector<64xf32> to vector<1x64xf32>
    %230 = vector.broadcast %229 : vector<1x64xf32> to vector<8x64xf32>
    %231 = arith.mulf %92, %230 : vector<8x64xf32>
    %232 = math.exp %231 : vector<8x64xf32>
    %c0_109 = arith.constant 0 : index
    %c7_110 = arith.constant 7 : index
    %c0_111 = arith.constant 0 : index
    %233 = vector.load %arg25[%c0_109, %c7_110, %c0_111] : memref<8x8x64xf32, #tpu.memory_space<vmem>>, vector<8x1x64xf32>
    %234 = vector.shape_cast %233 : vector<8x1x64xf32> to vector<8x64xf32>
    %235 = vector.shape_cast %232 : vector<8x64xf32> to vector<8x1x64xf32>
    tpu.vector_store %arg25[%c0_109, %c7_110, %c0_111], %235 {strides = array<i32>} : memref<8x8x64xf32, #tpu.memory_space<vmem>>, vector<8x1x64xf32>,
    %236 = vector.extract_strided_slice %75 {offsets = [0, 7], sizes = [8, 1], strides = [1, 1]} : vector<8x8xf32> to vector<8x1xf32>
    %237 = vector.broadcast %236 : vector<8x1xf32> to vector<8x64xf32>
    %238 = arith.mulf %93, %237 : vector<8x64xf32>
    %c0_112 = arith.constant 0 : index
    %c7_113 = arith.constant 7 : index
    %c0_114 = arith.constant 0 : index
    %239 = vector.load %arg26[%c0_112, %c7_113, %c0_114] : memref<8x8x64xf32, #tpu.memory_space<vmem>>, vector<8x1x64xf32>
    %240 = vector.shape_cast %239 : vector<8x1x64xf32> to vector<8x64xf32>
    %241 = vector.shape_cast %238 : vector<8x64xf32> to vector<8x1x64xf32>
    tpu.vector_store %arg26[%c0_112, %c7_113, %c0_114], %241 {strides = array<i32>} : memref<8x8x64xf32, #tpu.memory_space<vmem>>, vector<8x1x64xf32>,
    %242 = vector.extract_strided_slice %76 {offsets = [0, 7], sizes = [8, 1], strides = [1, 1]} : vector<8x8xf32> to vector<8x1xf32>
    %c0_115 = arith.constant 0 : index
    %c7_116 = arith.constant 7 : index
    %c0_117 = arith.constant 0 : index
    %243 = vector.load %arg27[%c0_115, %c7_116, %c0_117] : memref<8x8x1xf32, #tpu.memory_space<vmem>>, vector<8x1x1xf32>
    %244 = vector.shape_cast %243 : vector<8x1x1xf32> to vector<8x1xf32>
    %245 = vector.shape_cast %242 : vector<8x1xf32> to vector<8x1x1xf32>
    tpu.vector_store %arg27[%c0_115, %c7_116, %c0_117], %245 {strides = array<i32>} : memref<8x8x1xf32, #tpu.memory_space<vmem>>, vector<8x1x1xf32>,
    %c0_118 = arith.constant 0 : index
    %c0_119 = arith.constant 0 : index
    %246 = vector.load %arg24[%c0_118, %c0_119] : memref<8x64xf32, #tpu.memory_space<vmem>>, vector<8x64xf32>
    %c0_i32_120 = arith.constant 0 : i32
    %c8_i32 = arith.constant 8 : i32
    %247 = arith.muli %c0_i32_120, %c8_i32 : i32
    %248 = tpu.assume_multiple %247, 8 : i32
    %c0_i32_121 = arith.constant 0 : i32
    %249 = arith.addi %248, %c0_i32_121 : i32
    %250 = arith.index_cast %249 : i32 to index
    %c0_122 = arith.constant 0 : index
    %c0_123 = arith.constant 0 : index
    %251 = vector.load %arg25[%250, %c0_122, %c0_123] : memref<8x8x64xf32, #tpu.memory_space<vmem>>, vector<1x8x64xf32>
    %252 = vector.shape_cast %251 : vector<1x8x64xf32> to vector<8x64xf32>
    %253 = arith.mulf %252, %246 : vector<8x64xf32>
    %254 = arith.index_cast %249 : i32 to index
    %c0_124 = arith.constant 0 : index
    %c0_125 = arith.constant 0 : index
    %255 = vector.load %arg26[%254, %c0_124, %c0_125] : memref<8x8x64xf32, #tpu.memory_space<vmem>>, vector<1x8x64xf32>
    %256 = vector.shape_cast %255 : vector<1x8x64xf32> to vector<8x64xf32>
    %257 = arith.addf %253, %256 : vector<8x64xf32>
    %258 = arith.index_cast %249 : i32 to index
    %c0_126 = arith.constant 0 : index
    %c0_127 = arith.constant 0 : index
    %259 = vector.load %arg27[%258, %c0_126, %c0_127] : memref<8x8x1xf32, #tpu.memory_space<vmem>>, vector<1x8x1xf32>
    %260 = vector.shape_cast %259 : vector<1x8x1xf32> to vector<8x1xf32>
    %261 = vector.broadcast %260 : vector<8x1xf32> to vector<8x64xf32>
    %262 = arith.mulf %261, %257 : vector<8x64xf32>
    %cst_128 = arith.constant dense<0.000000e+00> : vector<64xf32>
    %263 = vector.multi_reduction <add>, %262, %cst_128 [0] : vector<8x64xf32> to vector<64xf32>
    %264 = vector.shape_cast %263 : vector<64xf32> to vector<1x64xf32>
    %c1_i32 = arith.constant 1 : i32
    %265 = arith.addi %248, %c1_i32 : i32
    %266 = arith.index_cast %265 : i32 to index
    %c0_129 = arith.constant 0 : index
    %c0_130 = arith.constant 0 : index
    %267 = vector.load %arg25[%266, %c0_129, %c0_130] : memref<8x8x64xf32, #tpu.memory_space<vmem>>, vector<1x8x64xf32>
    %268 = vector.shape_cast %267 : vector<1x8x64xf32> to vector<8x64xf32>
    %269 = arith.mulf %268, %257 : vector<8x64xf32>
    %270 = arith.index_cast %265 : i32 to index
    %c0_131 = arith.constant 0 : index
    %c0_132 = arith.constant 0 : index
    %271 = vector.load %arg26[%270, %c0_131, %c0_132] : memref<8x8x64xf32, #tpu.memory_space<vmem>>, vector<1x8x64xf32>
    %272 = vector.shape_cast %271 : vector<1x8x64xf32> to vector<8x64xf32>
    %273 = arith.addf %269, %272 : vector<8x64xf32>
    %274 = arith.index_cast %265 : i32 to index
    %c0_133 = arith.constant 0 : index
    %c0_134 = arith.constant 0 : index
    %275 = vector.load %arg27[%274, %c0_133, %c0_134] : memref<8x8x1xf32, #tpu.memory_space<vmem>>, vector<1x8x1xf32>
    %276 = vector.shape_cast %275 : vector<1x8x1xf32> to vector<8x1xf32>
    %277 = vector.broadcast %276 : vector<8x1xf32> to vector<8x64xf32>
    %278 = arith.mulf %277, %273 : vector<8x64xf32>
    %cst_135 = arith.constant dense<0.000000e+00> : vector<64xf32>
    %279 = vector.multi_reduction <add>, %278, %cst_135 [0] : vector<8x64xf32> to vector<64xf32>
    %280 = vector.shape_cast %279 : vector<64xf32> to vector<1x64xf32>
    %c2_i32 = arith.constant 2 : i32
    %281 = arith.addi %248, %c2_i32 : i32
    %282 = arith.index_cast %281 : i32 to index
    %c0_136 = arith.constant 0 : index
    %c0_137 = arith.constant 0 : index
    %283 = vector.load %arg25[%282, %c0_136, %c0_137] : memref<8x8x64xf32, #tpu.memory_space<vmem>>, vector<1x8x64xf32>
    %284 = vector.shape_cast %283 : vector<1x8x64xf32> to vector<8x64xf32>
    %285 = arith.mulf %284, %273 : vector<8x64xf32>
    %286 = arith.index_cast %281 : i32 to index
    %c0_138 = arith.constant 0 : index
    %c0_139 = arith.constant 0 : index
    %287 = vector.load %arg26[%286, %c0_138, %c0_139] : memref<8x8x64xf32, #tpu.memory_space<vmem>>, vector<1x8x64xf32>
    %288 = vector.shape_cast %287 : vector<1x8x64xf32> to vector<8x64xf32>
    %289 = arith.addf %285, %288 : vector<8x64xf32>
    %290 = arith.index_cast %281 : i32 to index
    %c0_140 = arith.constant 0 : index
    %c0_141 = arith.constant 0 : index
    %291 = vector.load %arg27[%290, %c0_140, %c0_141] : memref<8x8x1xf32, #tpu.memory_space<vmem>>, vector<1x8x1xf32>
    %292 = vector.shape_cast %291 : vector<1x8x1xf32> to vector<8x1xf32>
    %293 = vector.broadcast %292 : vector<8x1xf32> to vector<8x64xf32>
    %294 = arith.mulf %293, %289 : vector<8x64xf32>
    %cst_142 = arith.constant dense<0.000000e+00> : vector<64xf32>
    %295 = vector.multi_reduction <add>, %294, %cst_142 [0] : vector<8x64xf32> to vector<64xf32>
    %296 = vector.shape_cast %295 : vector<64xf32> to vector<1x64xf32>
    %c3_i32 = arith.constant 3 : i32
    %297 = arith.addi %248, %c3_i32 : i32
    %298 = arith.index_cast %297 : i32 to index
    %c0_143 = arith.constant 0 : index
    %c0_144 = arith.constant 0 : index
    %299 = vector.load %arg25[%298, %c0_143, %c0_144] : memref<8x8x64xf32, #tpu.memory_space<vmem>>, vector<1x8x64xf32>
    %300 = vector.shape_cast %299 : vector<1x8x64xf32> to vector<8x64xf32>
    %301 = arith.mulf %300, %289 : vector<8x64xf32>
    %302 = arith.index_cast %297 : i32 to index
    %c0_145 = arith.constant 0 : index
    %c0_146 = arith.constant 0 : index
    %303 = vector.load %arg26[%302, %c0_145, %c0_146] : memref<8x8x64xf32, #tpu.memory_space<vmem>>, vector<1x8x64xf32>
    %304 = vector.shape_cast %303 : vector<1x8x64xf32> to vector<8x64xf32>
    %305 = arith.addf %301, %304 : vector<8x64xf32>
    %306 = arith.index_cast %297 : i32 to index
    %c0_147 = arith.constant 0 : index
    %c0_148 = arith.constant 0 : index
    %307 = vector.load %arg27[%306, %c0_147, %c0_148] : memref<8x8x1xf32, #tpu.memory_space<vmem>>, vector<1x8x1xf32>
    %308 = vector.shape_cast %307 : vector<1x8x1xf32> to vector<8x1xf32>
    %309 = vector.broadcast %308 : vector<8x1xf32> to vector<8x64xf32>
    %310 = arith.mulf %309, %305 : vector<8x64xf32>
    %cst_149 = arith.constant dense<0.000000e+00> : vector<64xf32>
    %311 = vector.multi_reduction <add>, %310, %cst_149 [0] : vector<8x64xf32> to vector<64xf32>
    %312 = vector.shape_cast %311 : vector<64xf32> to vector<1x64xf32>
    %c4_i32 = arith.constant 4 : i32
    %313 = arith.addi %248, %c4_i32 : i32
    %314 = arith.index_cast %313 : i32 to index
    %c0_150 = arith.constant 0 : index
    %c0_151 = arith.constant 0 : index
    %315 = vector.load %arg25[%314, %c0_150, %c0_151] : memref<8x8x64xf32, #tpu.memory_space<vmem>>, vector<1x8x64xf32>
    %316 = vector.shape_cast %315 : vector<1x8x64xf32> to vector<8x64xf32>
    %317 = arith.mulf %316, %305 : vector<8x64xf32>
    %318 = arith.index_cast %313 : i32 to index
    %c0_152 = arith.constant 0 : index
    %c0_153 = arith.constant 0 : index
    %319 = vector.load %arg26[%318, %c0_152, %c0_153] : memref<8x8x64xf32, #tpu.memory_space<vmem>>, vector<1x8x64xf32>
    %320 = vector.shape_cast %319 : vector<1x8x64xf32> to vector<8x64xf32>
    %321 = arith.addf %317, %320 : vector<8x64xf32>
    %322 = arith.index_cast %313 : i32 to index
    %c0_154 = arith.constant 0 : index
    %c0_155 = arith.constant 0 : index
    %323 = vector.load %arg27[%322, %c0_154, %c0_155] : memref<8x8x1xf32, #tpu.memory_space<vmem>>, vector<1x8x1xf32>
    %324 = vector.shape_cast %323 : vector<1x8x1xf32> to vector<8x1xf32>
    %325 = vector.broadcast %324 : vector<8x1xf32> to vector<8x64xf32>
    %326 = arith.mulf %325, %321 : vector<8x64xf32>
    %cst_156 = arith.constant dense<0.000000e+00> : vector<64xf32>
    %327 = vector.multi_reduction <add>, %326, %cst_156 [0] : vector<8x64xf32> to vector<64xf32>
    %328 = vector.shape_cast %327 : vector<64xf32> to vector<1x64xf32>
    %c5_i32 = arith.constant 5 : i32
    %329 = arith.addi %248, %c5_i32 : i32
    %330 = arith.index_cast %329 : i32 to index
    %c0_157 = arith.constant 0 : index
    %c0_158 = arith.constant 0 : index
    %331 = vector.load %arg25[%330, %c0_157, %c0_158] : memref<8x8x64xf32, #tpu.memory_space<vmem>>, vector<1x8x64xf32>
    %332 = vector.shape_cast %331 : vector<1x8x64xf32> to vector<8x64xf32>
    %333 = arith.mulf %332, %321 : vector<8x64xf32>
    %334 = arith.index_cast %329 : i32 to index
    %c0_159 = arith.constant 0 : index
    %c0_160 = arith.constant 0 : index
    %335 = vector.load %arg26[%334, %c0_159, %c0_160] : memref<8x8x64xf32, #tpu.memory_space<vmem>>, vector<1x8x64xf32>
    %336 = vector.shape_cast %335 : vector<1x8x64xf32> to vector<8x64xf32>
    %337 = arith.addf %333, %336 : vector<8x64xf32>
    %338 = arith.index_cast %329 : i32 to index
    %c0_161 = arith.constant 0 : index
    %c0_162 = arith.constant 0 : index
    %339 = vector.load %arg27[%338, %c0_161, %c0_162] : memref<8x8x1xf32, #tpu.memory_space<vmem>>, vector<1x8x1xf32>
    %340 = vector.shape_cast %339 : vector<1x8x1xf32> to vector<8x1xf32>
    %341 = vector.broadcast %340 : vector<8x1xf32> to vector<8x64xf32>
    %342 = arith.mulf %341, %337 : vector<8x64xf32>
    %cst_163 = arith.constant dense<0.000000e+00> : vector<64xf32>
    %343 = vector.multi_reduction <add>, %342, %cst_163 [0] : vector<8x64xf32> to vector<64xf32>
    %344 = vector.shape_cast %343 : vector<64xf32> to vector<1x64xf32>
    %c6_i32 = arith.constant 6 : i32
    %345 = arith.addi %248, %c6_i32 : i32
    %346 = arith.index_cast %345 : i32 to index
    %c0_164 = arith.constant 0 : index
    %c0_165 = arith.constant 0 : index
    %347 = vector.load %arg25[%346, %c0_164, %c0_165] : memref<8x8x64xf32, #tpu.memory_space<vmem>>, vector<1x8x64xf32>
    %348 = vector.shape_cast %347 : vector<1x8x64xf32> to vector<8x64xf32>
    %349 = arith.mulf %348, %337 : vector<8x64xf32>
    %350 = arith.index_cast %345 : i32 to index
    %c0_166 = arith.constant 0 : index
    %c0_167 = arith.constant 0 : index
    %351 = vector.load %arg26[%350, %c0_166, %c0_167] : memref<8x8x64xf32, #tpu.memory_space<vmem>>, vector<1x8x64xf32>
    %352 = vector.shape_cast %351 : vector<1x8x64xf32> to vector<8x64xf32>
    %353 = arith.addf %349, %352 : vector<8x64xf32>
    %354 = arith.index_cast %345 : i32 to index
    %c0_168 = arith.constant 0 : index
    %c0_169 = arith.constant 0 : index
    %355 = vector.load %arg27[%354, %c0_168, %c0_169] : memref<8x8x1xf32, #tpu.memory_space<vmem>>, vector<1x8x1xf32>
    %356 = vector.shape_cast %355 : vector<1x8x1xf32> to vector<8x1xf32>
    %357 = vector.broadcast %356 : vector<8x1xf32> to vector<8x64xf32>
    %358 = arith.mulf %357, %353 : vector<8x64xf32>
    %cst_170 = arith.constant dense<0.000000e+00> : vector<64xf32>
    %359 = vector.multi_reduction <add>, %358, %cst_170 [0] : vector<8x64xf32> to vector<64xf32>
    %360 = vector.shape_cast %359 : vector<64xf32> to vector<1x64xf32>
    %c7_i32 = arith.constant 7 : i32
    %361 = arith.addi %248, %c7_i32 : i32
    %362 = arith.index_cast %361 : i32 to index
    %c0_171 = arith.constant 0 : index
    %c0_172 = arith.constant 0 : index
    %363 = vector.load %arg25[%362, %c0_171, %c0_172] : memref<8x8x64xf32, #tpu.memory_space<vmem>>, vector<1x8x64xf32>
    %364 = vector.shape_cast %363 : vector<1x8x64xf32> to vector<8x64xf32>
    %365 = arith.mulf %364, %353 : vector<8x64xf32>
    %366 = arith.index_cast %361 : i32 to index
    %c0_173 = arith.constant 0 : index
    %c0_174 = arith.constant 0 : index
    %367 = vector.load %arg26[%366, %c0_173, %c0_174] : memref<8x8x64xf32, #tpu.memory_space<vmem>>, vector<1x8x64xf32>
    %368 = vector.shape_cast %367 : vector<1x8x64xf32> to vector<8x64xf32>
    %369 = arith.addf %365, %368 : vector<8x64xf32>
    %370 = arith.index_cast %361 : i32 to index
    %c0_175 = arith.constant 0 : index
    %c0_176 = arith.constant 0 : index
    %371 = vector.load %arg27[%370, %c0_175, %c0_176] : memref<8x8x1xf32, #tpu.memory_space<vmem>>, vector<1x8x1xf32>
    %372 = vector.shape_cast %371 : vector<1x8x1xf32> to vector<8x1xf32>
    %373 = vector.broadcast %372 : vector<8x1xf32> to vector<8x64xf32>
    %374 = arith.mulf %373, %369 : vector<8x64xf32>
    %cst_177 = arith.constant dense<0.000000e+00> : vector<64xf32>
    %375 = vector.multi_reduction <add>, %374, %cst_177 [0] : vector<8x64xf32> to vector<64xf32>
    %376 = vector.shape_cast %375 : vector<64xf32> to vector<1x64xf32>
    %377 = tpu.concatenate %264, %280, %296, %312, %328, %344, %360, %376 in 0 : vector<1x64xf32>, vector<1x64xf32>, vector<1x64xf32>, vector<1x64xf32>, vector<1x64xf32>, vector<1x64xf32>, vector<1x64xf32>, vector<1x64xf32> -> vector<8x64xf32>
    %378 = arith.index_cast %248 : i32 to index
    %c0_178 = arith.constant 0 : index
    %379 = vector.load %arg28[%378, %c0_178] : memref<8x64xf32, #tpu.memory_space<vmem>>, vector<8x64xf32>
    tpu.vector_store %arg28[%378, %c0_178], %377 {strides = array<i32>} : memref<8x64xf32, #tpu.memory_space<vmem>>, vector<8x64xf32>,
    %c1_i32_179 = arith.constant 1 : i32
    %c0_180 = arith.constant 0 : index
    %c0_181 = arith.constant 0 : index
    %380 = vector.load %arg24[%c0_180, %c0_181] : memref<8x64xf32, #tpu.memory_space<vmem>>, vector<8x64xf32>
    tpu.vector_store %arg24[%c0_180, %c0_181], %369 {strides = array<i32>} : memref<8x64xf32, #tpu.memory_space<vmem>>, vector<8x64xf32>,
    %381 = vector.extract_strided_slice %37 {offsets = [5, 0], sizes = [3, 64], strides = [1, 1]} : vector<8x64xf32> to vector<3x64xf32>
    %c5_182 = arith.constant 5 : index
    %c0_183 = arith.constant 0 : index
    %382 = vector.load %arg23[%c5_182, %c0_183] : memref<8x64xf32, #tpu.memory_space<vmem>>, vector<3x64xf32>
    tpu.vector_store %arg23[%c5_182, %c0_183], %381 {strides = array<i32>} : memref<8x64xf32, #tpu.memory_space<vmem>>, vector<3x64xf32>,
    %c0_184 = arith.constant 0 : index
    %c0_185 = arith.constant 0 : index
    %383 = vector.load %arg28[%c0_184, %c0_185] : memref<8x64xf32, #tpu.memory_space<vmem>>, vector<8x64xf32>
    %c0_186 = arith.constant 0 : index
    %c0_187 = arith.constant 0 : index
    %384 = vector.load %arg13[%c0_186, %c0_187] : memref<1x64xf32, #tpu.memory_space<vmem>>, vector<1x64xf32>
    %385 = vector.broadcast %384 : vector<1x64xf32> to vector<8x64xf32>
    %386 = arith.mulf %385, %70 : vector<8x64xf32>
    %387 = arith.addf %383, %386 : vector<8x64xf32>
    %cst_188 = arith.constant 5.000000e-01 : f32
    %388 = vector.broadcast %cst_188 : f32 to vector<8x64xf32>
    %389 = arith.mulf %388, %38 : vector<8x64xf32>
    %390 = math.tanh %389 : vector<8x64xf32>
    %cst_189 = arith.constant 1.000000e+00 : f32
    %391 = vector.broadcast %cst_189 : f32 to vector<8x64xf32>
    %392 = arith.addf %390, %391 : vector<8x64xf32>
    %cst_190 = arith.constant 5.000000e-01 : f32
    %393 = vector.broadcast %cst_190 : f32 to vector<8x64xf32>
    %394 = arith.mulf %393, %392 : vector<8x64xf32>
    %395 = arith.mulf %38, %394 : vector<8x64xf32>
    %396 = arith.mulf %387, %395 : vector<8x64xf32>
    %c0_191 = arith.constant 0 : index
    %c0_192 = arith.constant 0 : index
    %397 = vector.load %arg14[%c0_191, %c0_192] : memref<64x32xbf16, #tpu.memory_space<vmem>>, vector<64x32xbf16>
    %398 = arith.truncf %396 : vector<8x64xf32> to vector<8x64xbf16>
    %cst_193 = arith.constant dense<0.000000e+00> : vector<8x32xf32>
    %399 = tpu.matmul %398, %397, %cst_193 {dimension_numbers = #tpu.dot_dimension_numbers<[1], [0], [0], [1], [0, 0, 1, 1], [], []>} : vector<8x64xbf16>, vector<64x32xbf16>, vector<8x32xf32> -> vector<8x32xf32>
    %400 = arith.addf %399, %7 : vector<8x32xf32>
    %c0_194 = arith.constant 0 : index
    %c0_195 = arith.constant 0 : index
    %401 = vector.load %arg15[%c0_194, %c0_195] : memref<1x32xf32, #tpu.memory_space<vmem>>, vector<1x32xf32>
    %402 = vector.shape_cast %401 : vector<1x32xf32> to vector<32xf32>
    %c0_196 = arith.constant 0 : index
    %c0_197 = arith.constant 0 : index
    %403 = vector.load %arg16[%c0_196, %c0_197] : memref<1x32xf32, #tpu.memory_space<vmem>>, vector<1x32xf32>
    %404 = vector.shape_cast %403 : vector<1x32xf32> to vector<32xf32>
    %cst_198 = arith.constant dense<0.000000e+00> : vector<8xf32>
    %405 = vector.multi_reduction <add>, %400, %cst_198 [1] : vector<8x32xf32> to vector<8xf32>
    %406 = vector.shape_cast %405 : vector<8xf32> to vector<8x1xf32>
    %cst_199 = arith.constant 3.200000e+01 : f32
    %407 = vector.broadcast %cst_199 : f32 to vector<8x1xf32>
    %408 = arith.divf %406, %407 : vector<8x1xf32>
    %409 = vector.broadcast %408 : vector<8x1xf32> to vector<8x32xf32>
    %410 = arith.subf %400, %409 : vector<8x32xf32>
    %411 = arith.mulf %410, %410 : vector<8x32xf32>
    %cst_200 = arith.constant dense<0.000000e+00> : vector<8xf32>
    %412 = vector.multi_reduction <add>, %411, %cst_200 [1] : vector<8x32xf32> to vector<8xf32>
    %413 = vector.shape_cast %412 : vector<8xf32> to vector<8x1xf32>
    %cst_201 = arith.constant 3.200000e+01 : f32
    %414 = vector.broadcast %cst_201 : f32 to vector<8x1xf32>
    %415 = arith.divf %413, %414 : vector<8x1xf32>
    %cst_202 = arith.constant 9.99999974E-6 : f32
    %416 = vector.broadcast %cst_202 : f32 to vector<8x1xf32>
    %417 = arith.addf %415, %416 : vector<8x1xf32>
    %418 = math.rsqrt %417 : vector<8x1xf32>
    %419 = vector.broadcast %418 : vector<8x1xf32> to vector<8x32xf32>
    %420 = arith.mulf %410, %419 : vector<8x32xf32>
    %421 = vector.shape_cast %402 : vector<32xf32> to vector<1x32xf32>
    %422 = vector.broadcast %421 : vector<1x32xf32> to vector<8x32xf32>
    %423 = arith.mulf %420, %422 : vector<8x32xf32>
    %424 = vector.shape_cast %404 : vector<32xf32> to vector<1x32xf32>
    %425 = vector.broadcast %424 : vector<1x32xf32> to vector<8x32xf32>
    %426 = arith.addf %423, %425 : vector<8x32xf32>
    %c0_203 = arith.constant 0 : index
    %c0_204 = arith.constant 0 : index
    %427 = vector.load %arg17[%c0_203, %c0_204] : memref<32x64xbf16, #tpu.memory_space<vmem>>, vector<32x64xbf16>
    %428 = arith.truncf %426 : vector<8x32xf32> to vector<8x32xbf16>
    %cst_205 = arith.constant dense<0.000000e+00> : vector<8x64xf32>
    %429 = tpu.matmul %428, %427, %cst_205 {dimension_numbers = #tpu.dot_dimension_numbers<[1], [0], [0], [1], [0, 0, 1, 1], [], []>} : vector<8x32xbf16>, vector<32x64xbf16>, vector<8x64xf32> -> vector<8x64xf32>
    %c0_206 = arith.constant 0 : index
    %c0_207 = arith.constant 0 : index
    %430 = vector.load %arg18[%c0_206, %c0_207] : memref<1x64xf32, #tpu.memory_space<vmem>>, vector<1x64xf32>
    %431 = vector.broadcast %430 : vector<1x64xf32> to vector<8x64xf32>
    %432 = arith.addf %429, %431 : vector<8x64xf32>
    %cst_208 = arith.constant 5.000000e-01 : f32
    %433 = vector.broadcast %cst_208 : f32 to vector<8x64xf32>
    %434 = arith.mulf %433, %432 : vector<8x64xf32>
    %cst_209 = arith.constant 4.471500e-02 : f32
    %435 = vector.broadcast %cst_209 : f32 to vector<8x64xf32>
    %436 = arith.mulf %435, %432 : vector<8x64xf32>
    %437 = arith.mulf %436, %432 : vector<8x64xf32>
    %438 = arith.mulf %437, %432 : vector<8x64xf32>
    %439 = arith.addf %432, %438 : vector<8x64xf32>
    %cst_210 = arith.constant 0.797884583 : f32
    %440 = vector.broadcast %cst_210 : f32 to vector<8x64xf32>
    %441 = arith.mulf %440, %439 : vector<8x64xf32>
    %442 = math.tanh %441 : vector<8x64xf32>
    %cst_211 = arith.constant 1.000000e+00 : f32
    %443 = vector.broadcast %cst_211 : f32 to vector<8x64xf32>
    %444 = arith.addf %443, %442 : vector<8x64xf32>
    %445 = arith.mulf %434, %444 : vector<8x64xf32>
    %c0_212 = arith.constant 0 : index
    %c0_213 = arith.constant 0 : index
    %446 = vector.load %arg19[%c0_212, %c0_213] : memref<64x32xbf16, #tpu.memory_space<vmem>>, vector<64x32xbf16>
    %447 = arith.truncf %445 : vector<8x64xf32> to vector<8x64xbf16>
    %cst_214 = arith.constant dense<0.000000e+00> : vector<8x32xf32>
    %448 = tpu.matmul %447, %446, %cst_214 {dimension_numbers = #tpu.dot_dimension_numbers<[1], [0], [0], [1], [0, 0, 1, 1], [], []>} : vector<8x64xbf16>, vector<64x32xbf16>, vector<8x32xf32> -> vector<8x32xf32>
    %c0_215 = arith.constant 0 : index
    %c0_216 = arith.constant 0 : index
    %449 = vector.load %arg20[%c0_215, %c0_216] : memref<1x32xf32, #tpu.memory_space<vmem>>, vector<1x32xf32>
    %450 = vector.broadcast %449 : vector<1x32xf32> to vector<8x32xf32>
    %451 = arith.addf %448, %450 : vector<8x32xf32>
    %c0_217 = arith.constant 0 : index
    %c0_218 = arith.constant 0 : index
    %c0_219 = arith.constant 0 : index
    %452 = vector.load %arg21[%c0_217, %c0_218, %c0_219] : memref<1x8x32xf32, #tpu.memory_space<vmem>>, vector<1x8x32xf32>
    %453 = vector.shape_cast %452 : vector<1x8x32xf32> to vector<8x32xf32>
    %454 = vector.shape_cast %451 : vector<8x32xf32> to vector<1x8x32xf32>
    tpu.vector_store %arg21[%c0_217, %c0_218, %c0_219], %454 {strides = array<i32>} : memref<1x8x32xf32, #tpu.memory_space<vmem>>, vector<1x8x32xf32>,
    %c0_220 = arith.constant 0 : index
    %c0_221 = arith.constant 0 : index
    %c0_222 = arith.constant 0 : index
    %455 = vector.load %arg22[%c0_220, %c0_221, %c0_222] : memref<1x8x32xf32, #tpu.memory_space<vmem>>, vector<1x8x32xf32>
    %456 = vector.shape_cast %455 : vector<1x8x32xf32> to vector<8x32xf32>
    %457 = vector.shape_cast %400 : vector<8x32xf32> to vector<1x8x32xf32>
    tpu.vector_store %arg22[%c0_220, %c0_221, %c0_222], %457 {strides = array<i32>} : memref<1x8x32xf32, #tpu.memory_space<vmem>>, vector<1x8x32xf32>,
    return
  }
  func.func @transform_0(%arg0: i32, %arg1: i32) -> (i32, i32, i32) {
    %c0_i32 = arith.constant 0 : i32
    %c0_i32_0 = arith.constant 0 : i32
    return %arg0, %arg1, %c0_i32 : i32, i32, i32
  }
  func.func @transform_1(%arg0: i32, %arg1: i32) -> (i32, i32, i32) {
    %c0_i32 = arith.constant 0 : i32
    %c0_i32_0 = arith.constant 0 : i32
    return %arg0, %arg1, %c0_i32 : i32, i32, i32
  }
  func.func @transform_2(%arg0: i32, %arg1: i32) -> (i32, i32) {
    %c0_i32 = arith.constant 0 : i32
    %c0_i32_0 = arith.constant 0 : i32
    %c0_i32_1 = arith.constant 0 : i32
    return %c0_i32, %c0_i32_0 : i32, i32
  }
  func.func @transform_3(%arg0: i32, %arg1: i32) -> (i32, i32) {
    %c0_i32 = arith.constant 0 : i32
    %c0_i32_0 = arith.constant 0 : i32
    %c0_i32_1 = arith.constant 0 : i32
    return %c0_i32, %c0_i32_0 : i32, i32
  }
  func.func @transform_4(%arg0: i32, %arg1: i32) -> (i32, i32) {
    %c0_i32 = arith.constant 0 : i32
    %c0_i32_0 = arith.constant 0 : i32
    %c0_i32_1 = arith.constant 0 : i32
    return %c0_i32, %c0_i32_0 : i32, i32
  }
  func.func @transform_5(%arg0: i32, %arg1: i32) -> (i32, i32) {
    %c0_i32 = arith.constant 0 : i32
    %c0_i32_0 = arith.constant 0 : i32
    %c0_i32_1 = arith.constant 0 : i32
    return %c0_i32, %c0_i32_0 : i32, i32
  }
  func.func @transform_6(%arg0: i32, %arg1: i32) -> (i32, i32) {
    %c0_i32 = arith.constant 0 : i32
    %c0_i32_0 = arith.constant 0 : i32
    %c0_i32_1 = arith.constant 0 : i32
    return %c0_i32, %c0_i32_0 : i32, i32
  }
  func.func @transform_7(%arg0: i32, %arg1: i32) -> (i32, i32) {
    %c0_i32 = arith.constant 0 : i32
    %c0_i32_0 = arith.constant 0 : i32
    %c0_i32_1 = arith.constant 0 : i32
    return %c0_i32, %c0_i32_0 : i32, i32
  }
  func.func @transform_8(%arg0: i32, %arg1: i32) -> (i32, i32) {
    %c0_i32 = arith.constant 0 : i32
    %c0_i32_0 = arith.constant 0 : i32
    %c0_i32_1 = arith.constant 0 : i32
    return %c0_i32, %c0_i32_0 : i32, i32
  }
  func.func @transform_9(%arg0: i32, %arg1: i32) -> (i32, i32) {
    %c0_i32 = arith.constant 0 : i32
    %c0_i32_0 = arith.constant 0 : i32
    %c0_i32_1 = arith.constant 0 : i32
    return %c0_i32, %c0_i32_0 : i32, i32
  }
  func.func @transform_10(%arg0: i32, %arg1: i32) -> (i32, i32) {
    %c0_i32 = arith.constant 0 : i32
    %c0_i32_0 = arith.constant 0 : i32
    %c0_i32_1 = arith.constant 0 : i32
    return %c0_i32, %c0_i32_0 : i32, i32
  }
  func.func @transform_11(%arg0: i32, %arg1: i32) -> (i32, i32) {
    %c0_i32 = arith.constant 0 : i32
    %c0_i32_0 = arith.constant 0 : i32
    %c0_i32_1 = arith.constant 0 : i32
    return %c0_i32, %c0_i32_0 : i32, i32
  }
  func.func @transform_12(%arg0: i32, %arg1: i32) -> (i32, i32) {
    %c0_i32 = arith.constant 0 : i32
    %c0_i32_0 = arith.constant 0 : i32
    %c0_i32_1 = arith.constant 0 : i32
    return %c0_i32, %c0_i32_0 : i32, i32
  }
  func.func @transform_13(%arg0: i32, %arg1: i32) -> (i32, i32) {
    %c0_i32 = arith.constant 0 : i32
    %c0_i32_0 = arith.constant 0 : i32
    %c0_i32_1 = arith.constant 0 : i32
    return %c0_i32, %c0_i32_0 : i32, i32
  }
  func.func @transform_14(%arg0: i32, %arg1: i32) -> (i32, i32) {
    %c0_i32 = arith.constant 0 : i32
    %c0_i32_0 = arith.constant 0 : i32
    %c0_i32_1 = arith.constant 0 : i32
    return %c0_i32, %c0_i32_0 : i32, i32
  }
  func.func @transform_15(%arg0: i32, %arg1: i32) -> (i32, i32) {
    %c0_i32 = arith.constant 0 : i32
    %c0_i32_0 = arith.constant 0 : i32
    %c0_i32_1 = arith.constant 0 : i32
    return %c0_i32, %c0_i32_0 : i32, i32
  }
  func.func @transform_16(%arg0: i32, %arg1: i32) -> (i32, i32) {
    %c0_i32 = arith.constant 0 : i32
    %c0_i32_0 = arith.constant 0 : i32
    %c0_i32_1 = arith.constant 0 : i32
    return %c0_i32, %c0_i32_0 : i32, i32
  }
  func.func @transform_17(%arg0: i32, %arg1: i32) -> (i32, i32) {
    %c0_i32 = arith.constant 0 : i32
    %c0_i32_0 = arith.constant 0 : i32
    %c0_i32_1 = arith.constant 0 : i32
    return %c0_i32, %c0_i32_0 : i32, i32
  }
  func.func @transform_18(%arg0: i32, %arg1: i32) -> (i32, i32) {
    %c0_i32 = arith.constant 0 : i32
    %c0_i32_0 = arith.constant 0 : i32
    %c0_i32_1 = arith.constant 0 : i32
    return %c0_i32, %c0_i32_0 : i32, i32
  }
  func.func @transform_19(%arg0: i32, %arg1: i32) -> (i32, i32, i32) {
    %c0_i32 = arith.constant 0 : i32
    %c0_i32_0 = arith.constant 0 : i32
    return %arg0, %arg1, %c0_i32 : i32, i32, i32
  }
  func.func @transform_20(%arg0: i32, %arg1: i32) -> (i32, i32, i32) {
    %c0_i32 = arith.constant 0 : i32
    %c0_i32_0 = arith.constant 0 : i32
    return %arg0, %arg1, %c0_i32 : i32, i32, i32
  }
}

</mosaic_0001>

<llo_original>
// kernel: lm_backbone_forward.4
$region0: #{lm_backbone_forward.4}
  #allocation0 [shape = 'u32[]', space=smem, size = 0x4, offset = 0x4, fixed_abs, tag = 'smem constant byte address 0x4 - core index']
  #allocation1 [shape = 'u32[144,128]{1,0:T(1,128)}', space=vmem, size = 0x12000, scoped, tag = 'internal scratch']
  #allocation2 [shape = 'f32[8,32]{1,0:T(8,128)}', space=vmem, size = 0x1000, scoped, tag = 'scratch operand']
  #allocation3 [shape = 's32[8]{0}', space=sflag, size = 0x20, scoped, tag = 'scratch operand']
  #allocation4 [shape = 's32[1]{0}', space=sflag, size = 0x4, scoped, tag = 'scoped memory for lm_backbone_forward.4']
  #allocation5 [shape = 'u8[512]{0}', space=smem, size = 0x200, scoped, tag = 'prefetched SMEM operand 0']
  #allocation8 [shape = 's32[]', space=sflag, size = 0x4, offset = 0, fixed_abs, tag = 'sflag constant byte address 0x0 - dummy sync flag']
  #allocation9 [shape = 's32[]', space=sflag, size = 0x4, offset = 0, fixed_abs, tag = 'sflag constant byte address 0x0 - dummy sync flag']
  #allocation10 [shape = 'u32[]', space=smem, size = 0x4, offset = 0x44, fixed_abs, tag = 'smem constant byte address 0x44 - assertion arg 0']
  #allocation11 [shape = 'u32[]', space=smem, size = 0x4, offset = 0x48, fixed_abs, tag = 'smem constant byte address 0x48 - assertion arg 1']
  #allocation12 [shape = 's32[]', space=sflag, size = 0x4, offset = 0, fixed_abs, tag = 'sflag constant byte address 0x0 - dummy sync flag']
  #allocation13 [shape = 's32[]', space=sflag, size = 0x4, offset = 0, fixed_abs, tag = 'sflag constant byte address 0x0 - dummy sync flag']
  #allocation14 [shape = 's32[]', space=sflag, size = 0x4, offset = 0, fixed_abs, tag = 'sflag constant byte address 0x0 - dummy sync flag']
  #allocation15 [shape = 's32[]', space=sflag, size = 0x4, offset = 0, fixed_abs, tag = 'sflag constant byte address 0x0 - dummy sync flag']
  #allocation16 [shape = 's32[]', space=sflag, size = 0x4, offset = 0, fixed_abs, tag = 'sflag constant byte address 0x0 - dummy sync flag']
  #allocation17 [shape = 's32[]', space=sflag, size = 0x4, offset = 0, fixed_abs, tag = 'sflag constant byte address 0x0 - dummy sync flag']
  #allocation18 [shape = 's32[]', space=sflag, size = 0x4, offset = 0, fixed_abs, tag = 'sflag constant byte address 0x0 - dummy sync flag']
  #allocation19 [shape = 's32[]', space=sflag, size = 0x4, offset = 0, fixed_abs, tag = 'sflag constant byte address 0x0 - dummy sync flag']
  #allocation20 [shape = 's32[]', space=sflag, size = 0x4, offset = 0, fixed_abs, tag = 'sflag constant byte address 0x0 - dummy sync flag']
  #allocation21 [shape = 's32[]', space=sflag, size = 0x4, offset = 0, fixed_abs, tag = 'sflag constant byte address 0x0 - dummy sync flag']
  #allocation22 [shape = 's32[]', space=sflag, size = 0x4, offset = 0, fixed_abs, tag = 'sflag constant byte address 0x0 - dummy sync flag']
  #allocation23 [shape = 's32[]', space=sflag, size = 0x4, offset = 0, fixed_abs, tag = 'sflag constant byte address 0x0 - dummy sync flag']
  #allocation24 [shape = 's32[]', space=sflag, size = 0x4, offset = 0, fixed_abs, tag = 'sflag constant byte address 0x0 - dummy sync flag']
  #allocation25 [shape = 's32[]', space=sflag, size = 0x4, offset = 0, fixed_abs, tag = 'sflag constant byte address 0x0 - dummy sync flag']
  %s0 = inlined_call_operand.vmem [shape: s32[16], index: 0, kind: input, shape index: {}]
  %s1 = inlined_call_operand.hbm [shape: f32[16,32], index: 1, kind: input, shape index: {}]
  %s2 = inlined_call_operand.hbm [shape: f32[16,32], index: 2, kind: output, shape index: {}]
  %s3 = sld [smem:[#allocation0]]
  $region57: #{lm_backbone_forward.4} parent=0
    _
  %s5 = ssub.s32 1, %s3
  %s6 = scalar_select 0, %s5, %s3
  %s7 = sshll.u32 %s0, 4
  %s8 = int_to_ptr.vmem [resolvable:$true] %s7
  %10 = dma.vmem_to_smem %s8, 16, [#allocation5], [#allocation4]
  %11 = dma.done [#allocation4], 16
  %12 = sfence
  $region1: #{lm_backbone_forward.4} parent=0
    #allocation6 [shape = 'u8[8192]{0}', space=vmem, size = 0x2000, scoped, tag = 'output window, operand 0']
    #allocation7 [shape = 's32[2]{0}', space=sflag, size = 0x8, scoped, tag = 'scoped memory for lm_backbone_forward.4']
    %13 = vsyncpa [#allocation7], 0
    %s14 = scalar_lea.sflag [#allocation7], 1
    %15 = vsyncpa %s14, 0
    loop: start=0, step=1, limit=3
    $region2: #{lm_backbone_forward.4} parent=1 // loop_pre_header
      _
    $region3: #{lm_backbone_forward.4} parent=1 // loop_header
      %s17 = sphi 0, %s21
      %p18 = scmp.ge.s32.totalorder %s17, 3
      %s26 = sphi 0, %s28
      %s29 = sphi 0, %s26
      %s39 = sphi 0, %s29
    $region4: #{lm_backbone_forward.4} parent=1 // loop_header_branch
      %20 = sbr.rel (%p18) target = $region8
    $region5: #{lm_backbone_forward.4} parent=1 // loop_body
      %s22 = ssub.s32 %s17, 1
      %s23 = sadd.s32 %s17, 1
      %s24 = ssub.s32 %s17, %s23
      %p25 = scmp.eq.s32.totalorder %s24, 0
      %s27 = sadd.s32 %s26, 1
      %s28 = scalar_select %p25, %s26, %s27
      %p30 = pneg %p25
      %p31 = scmp.eq.s32.totalorder %s17, 1
      %p32 = por %p30, %p31
      %p33 = scmp.ne.s32.totalorder %s26, %s29
      %p34 = scmp.eq.s32.totalorder %s17, 0
      %p35 = por %p33, %p34
      %p36 = scmp.ne.s32.totalorder %s26, %s29
      %p37 = scmp.eq.s32.totalorder %s22, 1
      %p38 = por %p36, %p37
      %p40 = scmp.ne.s32.totalorder %s29, %s39
      %p41 = scmp.eq.s32.totalorder %s22, 0
      %p42 = por %p40, %p41
      %p43 = scmp.lt.s32.totalorder %s17, 2
      // Predicated region
      $region9: #{lm_backbone_forward.4} parent=5 // pred_check
        %p44 = pneg %p43
      $region10: #{lm_backbone_forward.4} parent=5 // pred_check_branch
        %46 = sbr.rel (%p44) target = $region12
      $region11: #{lm_backbone_forward.4} parent=5 // pred_region
        %p47 = pneg %p35
        %p48 = pneg %p32
        %s49 = sand.u32 %s26, 1
        %s50 = scalar_lea.sflag [#allocation7], %s49
        %s51 = sand.u32 %s26, 1
        %s52 = smul.addr %s51, 8
        %s53 = scalar_lea.vmem [#allocation6], %s52
        %s54 = smul.u32 %s17, 8
        %s55 = sld [smem:[#allocation5 + %s54]]
        %s56 = smul.addr %s55, 16
        %s57 = scalar_lea.hbm %s1, %s56
        // Predicated region
        $region13: #{lm_backbone_forward.4} parent=11 // pred_check
          _
        $region14: #{lm_backbone_forward.4} parent=11 // pred_check_branch
          %59 = sbr.rel target = $region16
        $region15: #{lm_backbone_forward.4} parent=11 // pred_region
          %60 = sst [smem:[#allocation10]] [#allocation9]
          %61 = sst [smem:[#allocation11]] [#allocation8]
        $region16: #{lm_backbone_forward.4} parent=11 // pred_fallthru
          _
        %63 = shalt.err (0)
        %s65 = sshll.u32 [#allocation2], 4
        %s66 = int_to_ptr.vmem [resolvable:$true] %s65
        %68 = dma.hbm_to_vmem [thread:$0]  %s57, 16, %s66, [#allocation3]
        %s69 = sadd.s32 %s54, 1
        %s70 = sld [smem:[#allocation5 + %s69]]
        %s71 = smul.addr %s70, 16
        %s72 = scalar_lea.hbm %s1, %s71
        %s73 = scalar_lea.vmem [#allocation2], 1
        %s74 = scalar_lea.sflag [#allocation3], 1
        // Predicated region
        $region17: #{lm_backbone_forward.4} parent=11 // pred_check
          _
        $region18: #{lm_backbone_forward.4} parent=11 // pred_check_branch
          %76 = sbr.rel target = $region20
        $region19: #{lm_backbone_forward.4} parent=11 // pred_region
          %77 = sst [smem:[#allocation10]] [#allocation13]
          %78 = sst [smem:[#allocation11]] [#allocation12]
        $region20: #{lm_backbone_forward.4} parent=11 // pred_fallthru
          _
        %80 = shalt.err (0)
        %s82 = sshll.u32 %s73, 4
        %s83 = int_to_ptr.vmem [resolvable:$true] %s82
        %85 = dma.hbm_to_vmem [thread:$0]  %s72, 16, %s83, %s74
        %s86 = sadd.s32 %s54, 2
        %s87 = sld [smem:[#allocation5 + %s86]]
        %s88 = smul.addr %s87, 16
        %s89 = scalar_lea.hbm %s1, %s88
        %s90 = scalar_lea.vmem [#allocation2], 2
        %s91 = scalar_lea.sflag [#allocation3], 2
        // Predicated region
        $region21: #{lm_backbone_forward.4} parent=11 // pred_check
          _
        $region22: #{lm_backbone_forward.4} parent=11 // pred_check_branch
          %93 = sbr.rel target = $region24
        $region23: #{lm_backbone_forward.4} parent=11 // pred_region
          %94 = sst [smem:[#allocation10]] [#allocation15]
          %95 = sst [smem:[#allocation11]] [#allocation14]
        $region24: #{lm_backbone_forward.4} parent=11 // pred_fallthru
          _
        %97 = shalt.err (0)
        %s99 = sshll.u32 %s90, 4
        %s100 = int_to_ptr.vmem [resolvable:$true] %s99
        %102 = dma.hbm_to_vmem [thread:$0]  %s89, 16, %s100, %s91
        %s103 = sadd.s32 %s54, 3
        %s104 = sld [smem:[#allocation5 + %s103]]
        %s105 = smul.addr %s104, 16
        %s106 = scalar_lea.hbm %s1, %s105
        %s107 = scalar_lea.vmem [#allocation2], 3
        %s108 = scalar_lea.sflag [#allocation3], 3
        // Predicated region
        $region25: #{lm_backbone_forward.4} parent=11 // pred_check
          _
        $region26: #{lm_backbone_forward.4} parent=11 // pred_check_branch
          %110 = sbr.rel target = $region28
        $region27: #{lm_backbone_forward.4} parent=11 // pred_region
          %111 = sst [smem:[#allocation10]] [#allocation17]
          %112 = sst [smem:[#allocation11]] [#allocation16]
        $region28: #{lm_backbone_forward.4} parent=11 // pred_fallthru
          _
        %114 = shalt.err (0)
        %s116 = sshll.u32 %s107, 4
        %s117 = int_to_ptr.vmem [resolvable:$true] %s116
        %119 = dma.hbm_to_vmem [thread:$0]  %s106, 16, %s117, %s108
        %s120 = sadd.s32 %s54, 4
        %s121 = sld [smem:[#allocation5 + %s120]]
        %s122 = smul.addr %s121, 16
        %s123 = scalar_lea.hbm %s1, %s122
        %s124 = scalar_lea.vmem [#allocation2], 4
        %s125 = scalar_lea.sflag [#allocation3], 4
        // Predicated region
        $region29: #{lm_backbone_forward.4} parent=11 // pred_check
          _
        $region30: #{lm_backbone_forward.4} parent=11 // pred_check_branch
          %127 = sbr.rel target = $region32
        $region31: #{lm_backbone_forward.4} parent=11 // pred_region
          %128 = sst [smem:[#allocation10]] [#allocation19]
          %129 = sst [smem:[#allocation11]] [#allocation18]
        $region32: #{lm_backbone_forward.4} parent=11 // pred_fallthru
          _
        %131 = shalt.err (0)
        %s133 = sshll.u32 %s124, 4
        %s134 = int_to_ptr.vmem [resolvable:$true] %s133
        %136 = dma.hbm_to_vmem [thread:$0]  %s123, 16, %s134, %s125
        %s137 = sadd.s32 %s54, 5
        %s138 = sld [smem:[#allocation5 + %s137]]
        %s139 = smul.addr %s138, 16
        %s140 = scalar_lea.hbm %s1, %s139
        %s141 = scalar_lea.vmem [#allocation2], 5
        %s142 = scalar_lea.sflag [#allocation3], 5
        // Predicated region
        $region33: #{lm_backbone_forward.4} parent=11 // pred_check
          _
        $region34: #{lm_backbone_forward.4} parent=11 // pred_check_branch
          %144 = sbr.rel target = $region36
        $region35: #{lm_backbone_forward.4} parent=11 // pred_region
          %145 = sst [smem:[#allocation10]] [#allocation21]
          %146 = sst [smem:[#allocation11]] [#allocation20]
        $region36: #{lm_backbone_forward.4} parent=11 // pred_fallthru
          _
        %148 = shalt.err (0)
        %s150 = sshll.u32 %s141, 4
        %s151 = int_to_ptr.vmem [resolvable:$true] %s150
        %153 = dma.hbm_to_vmem [thread:$0]  %s140, 16, %s151, %s142
        %s154 = sadd.s32 %s54, 6
        %s155 = sld [smem:[#allocation5 + %s154]]
        %s156 = smul.addr %s155, 16
        %s157 = scalar_lea.hbm %s1, %s156
        %s158 = scalar_lea.vmem [#allocation2], 6
        %s159 = scalar_lea.sflag [#allocation3], 6
        // Predicated region
        $region37: #{lm_backbone_forward.4} parent=11 // pred_check
          _
        $region38: #{lm_backbone_forward.4} parent=11 // pred_check_branch
          %161 = sbr.rel target = $region40
        $region39: #{lm_backbone_forward.4} parent=11 // pred_region
          %162 = sst [smem:[#allocation10]] [#allocation23]
          %163 = sst [smem:[#allocation11]] [#allocation22]
        $region40: #{lm_backbone_forward.4} parent=11 // pred_fallthru
          _
        %165 = shalt.err (0)
        %s167 = sshll.u32 %s158, 4
        %s168 = int_to_ptr.vmem [resolvable:$true] %s167
        %170 = dma.hbm_to_vmem [thread:$0]  %s157, 16, %s168, %s159
        %s171 = sadd.s32 %s54, 7
        %s172 = sld [smem:[#allocation5 + %s171]]
        %s173 = smul.addr %s172, 16
        %s174 = scalar_lea.hbm %s1, %s173
        %s175 = scalar_lea.vmem [#allocation2], 7
        %s176 = scalar_lea.sflag [#allocation3], 7
        // Predicated region
        $region41: #{lm_backbone_forward.4} parent=11 // pred_check
          _
        $region42: #{lm_backbone_forward.4} parent=11 // pred_check_branch
          %178 = sbr.rel target = $region44
        $region43: #{lm_backbone_forward.4} parent=11 // pred_region
          %179 = sst [smem:[#allocation10]] [#allocation25]
          %180 = sst [smem:[#allocation11]] [#allocation24]
        $region44: #{lm_backbone_forward.4} parent=11 // pred_fallthru
          _
        %182 = shalt.err (0)
        %s184 = sshll.u32 %s175, 4
        %s185 = int_to_ptr.vmem [resolvable:$true] %s184
        %187 = dma.hbm_to_vmem [thread:$0]  %s174, 16, %s185, %s176
        %s188 = sld [smem:[#allocation5 + %s54]]
        %190 = dma.done [#allocation3], 16
        %s191 = sld [smem:[#allocation5 + %s69]]
        %193 = dma.done %s74, 16
        %s194 = sld [smem:[#allocation5 + %s86]]
        %196 = dma.done %s91, 16
        %s197 = sld [smem:[#allocation5 + %s103]]
        %199 = dma.done %s108, 16
        %s200 = sld [smem:[#allocation5 + %s120]]
        %202 = dma.done %s125, 16
        %s203 = sld [smem:[#allocation5 + %s137]]
        %205 = dma.done %s142, 16
        %s206 = sld [smem:[#allocation5 + %s154]]
        %208 = dma.done %s159, 16
        %s209 = sld [smem:[#allocation5 + %s171]]
        %211 = dma.done %s176, 16
        %v212 = vld [vmem:[#allocation2] sm:$0xff]
        %vm213 = vcmask 261120
        %214 = vst.msk [vmem:[%s53] sm:$0xff] %vm213, %v212
        %s215 = sand.u32 %s26, 1
        %s216 = scalar_lea.sflag [#allocation7], %s215
        %s217 = sand.u32 %s26, 1
        %s218 = smul.addr %s217, 8
        %s219 = scalar_lea.vmem [#allocation6], %s218
        // Predicated region
        $region45: #{lm_backbone_forward.4} parent=11 // pred_check
          %p220 = pneg %p32
        $region46: #{lm_backbone_forward.4} parent=11 // pred_check_branch
          %222 = sbr.rel (%p220) target = $region48
        $region47: #{lm_backbone_forward.4} parent=11 // pred_region
          %s224 = ssub.s32 128, 128
          %225 = vsyncadd %s216, %s224
          %s226 = smul.addr %s17, 128
          %s227 = scalar_lea.hbm %s2, %s226
          %s229 = sshll.u32 %s219, 4
          %s230 = int_to_ptr.vmem [resolvable:$true] %s229
          %232 = dma.vmem_to_hbm [thread:$0]  %s230, 128, %s227, %s216
        $region48: #{lm_backbone_forward.4} parent=11 // pred_fallthru
          _
      $region12: #{lm_backbone_forward.4} parent=5 // pred_fallthru
        _
      %p233 = scmp.le.s32.totalorder 1, %s17
      // Predicated region
      $region49: #{lm_backbone_forward.4} parent=5 // pred_check
        %p234 = pneg %p233
      $region50: #{lm_backbone_forward.4} parent=5 // pred_check_branch
        %236 = sbr.rel (%p234) target = $region52
      $region51: #{lm_backbone_forward.4} parent=5 // pred_region
        %s237 = ssub.s32 %s17, 1
        // Predicated region
        $region53: #{lm_backbone_forward.4} parent=51 // pred_check
          %p238 = pneg %p38
        $region54: #{lm_backbone_forward.4} parent=51 // pred_check_branch
          %240 = sbr.rel (%p238) target = $region56
        $region55: #{lm_backbone_forward.4} parent=51 // pred_region
          %s241 = sand.u32 %s29, 1
          %s242 = scalar_lea.sflag [#allocation7], %s241
          %s243 = sand.u32 %s29, 1
          %s244 = smul.addr %s243, 8
          %s245 = scalar_lea.vmem [#allocation6], %s244
          %246 = dma.done %s242, 128
        $region56: #{lm_backbone_forward.4} parent=51 // pred_fallthru
          _
      $region52: #{lm_backbone_forward.4} parent=5 // pred_fallthru
        _
    $region6: #{lm_backbone_forward.4} parent=1 // loop_footer
      %s21 = sadd.s32 1, %s17
    $region7: #{lm_backbone_forward.4} parent=1 // loop_footer_branch
      %16 = sbr.rel target = $region3
    $region8: #{lm_backbone_forward.4} parent=1 // loop_exit
      _
    %247 = vsyncpa [#allocation7], 1
    %s248 = scalar_lea.sflag [#allocation7], 1
    %249 = vsyncpa %s248, 1
  %250 = vsyncmov [#allocation3]
  %s251 = vpop.sfrf %250
  %p252 = scmp.eq.s32.totalorder %s251, 0
  %p253 = pneg %p252
  %255 = shalt.err (%p253)
  %s256 = scalar_lea.sflag [#allocation3], 1
  %257 = vsyncmov %s256
  %s258 = vpop.sfrf %257
  %p259 = scmp.eq.s32.totalorder %s258, 0
  %p260 = pneg %p259
  %262 = shalt.err (%p260)
  %s263 = scalar_lea.sflag [#allocation3], 2
  %264 = vsyncmov %s263
  %s265 = vpop.sfrf %264
  %p266 = scmp.eq.s32.totalorder %s265, 0
  %p267 = pneg %p266
  %269 = shalt.err (%p267)
  %s270 = scalar_lea.sflag [#allocation3], 3
  %271 = vsyncmov %s270
  %s272 = vpop.sfrf %271
  %p273 = scmp.eq.s32.totalorder %s272, 0
  %p274 = pneg %p273
  %276 = shalt.err (%p274)
  %s277 = scalar_lea.sflag [#allocation3], 4
  %278 = vsyncmov %s277
  %s279 = vpop.sfrf %278
  %p280 = scmp.eq.s32.totalorder %s279, 0
  %p281 = pneg %p280
  %283 = shalt.err (%p281)
  %s284 = scalar_lea.sflag [#allocation3], 5
  %285 = vsyncmov %s284
  %s286 = vpop.sfrf %285
  %p287 = scmp.eq.s32.totalorder %s286, 0
  %p288 = pneg %p287
  %290 = shalt.err (%p288)
  %s291 = scalar_lea.sflag [#allocation3], 6
  %292 = vsyncmov %s291
  %s293 = vpop.sfrf %292
  %p294 = scmp.eq.s32.totalorder %s293, 0
  %p295 = pneg %p294
  %297 = shalt.err (%p295)
  %s298 = scalar_lea.sflag [#allocation3], 7
  %299 = vsyncmov %s298
  %s300 = vpop.sfrf %299
  %p301 = scmp.eq.s32.totalorder %s300, 0
  %p302 = pneg %p301
  %304 = shalt.err (%p302)

// kernel: lm_backbone_forward.7
$region0: #{lm_backbone_forward.7}
  #allocation0 [shape = 'u32[]', space=smem, size = 0x4, offset = 0x4, fixed_abs, tag = 'smem constant byte address 0x4 - core index']
  #allocation1 [shape = 'u32[144,128]{1,0:T(1,128)}', space=vmem, size = 0x12000, scoped, tag = 'internal scratch']
  %s0 = inlined_call_operand.hbm [shape: f32[2,8,32], index: 0, kind: input, shape index: {}]
  %s1 = inlined_call_operand.hbm [shape: f32[2,8,32], index: 1, kind: input, shape index: {}]
  %s2 = inlined_call_operand.vmem [shape: f32[1,32], index: 2, kind: input, shape index: {}]
  %s3 = inlined_call_operand.vmem [shape: f32[1,32], index: 3, kind: input, shape index: {}]
  %s4 = inlined_call_operand.hbm [shape: f32[2,8,32], index: 4, kind: output, shape index: {}]
  %s5 = sld [smem:[#allocation0]]
  $region57: #{lm_backbone_forward.7} parent=0
    _
  %s7 = ssub.s32 1, %s5
  %s8 = scalar_select 0, %s7, %s5
  $region1: #{lm_backbone_forward.7} parent=0
    #allocation2 [shape = 'u8[8192]{0}', space=vmem, size = 0x2000, scoped, tag = 'input window, operand 0']
    #allocation3 [shape = 's32[2]{0}', space=sflag, size = 0x8, scoped, tag = 'scoped memory for lm_backbone_forward.7']
    #allocation4 [shape = 's32[2]{0}', space=sflag, size = 0x8, scoped, tag = 'scoped memory for lm_backbone_forward.7']
    #allocation5 [shape = 'u8[8192]{0}', space=vmem, size = 0x2000, scoped, tag = 'input window, operand 1']
    #allocation6 [shape = 's32[2]{0}', space=sflag, size = 0x8, scoped, tag = 'scoped memory for lm_backbone_forward.7']
    #allocation7 [shape = 'u8[8192]{0}', space=vmem, size = 0x2000, scoped, tag = 'output window, operand 0']
    %9 = vsyncpa [#allocation3], 0
    %s10 = scalar_lea.sflag [#allocation3], 1
    %11 = vsyncpa %s10, 0
    %12 = vsyncpa [#allocation6], 0
    %s13 = scalar_lea.sflag [#allocation6], 1
    %14 = vsyncpa %s13, 0
    %15 = vsyncpa [#allocation4], 0
    %s16 = scalar_lea.sflag [#allocation4], 1
    %17 = vsyncpa %s16, 0
    loop: start=0, step=1, limit=4
    $region2: #{lm_backbone_forward.7} parent=1 // loop_pre_header
      _
    $region3: #{lm_backbone_forward.7} parent=1 // loop_header
      %s19 = sphi 0, %s23
      %p20 = scmp.ge.s32.totalorder %s19, 4
      %s26 = sphi 0, %s38
      %s27 = sphi 0, %s34
      %s28 = sphi 0, %s26
      %s29 = sphi 0, %s27
      %s30 = sphi 0, %s28
      %s31 = sphi 0, %s29
      %s43 = sphi 0, %s45
      %s46 = sphi 0, %s43
      %s47 = sphi 0, %s46
      %s63 = sphi 0, %s47
      %s71 = sphi 0, %s73
      %s74 = sphi 0, %s71
      %s75 = sphi 0, %s74
      %s91 = sphi 0, %s75
      %s95 = sphi 0, %s95
      %s97 = sphi 0, %s95
      %s98 = sphi 0, %s97
      %s112 = sphi 0, %s98
      %s116 = sphi 0, %s116
      %s118 = sphi 0, %s116
      %s119 = sphi 0, %s118
      %s133 = sphi 0, %s119
      %s141 = sphi 0, %s143
      %s144 = sphi 0, %s141
      %s145 = sphi 0, %s144
      %s161 = sphi 0, %s145
    $region4: #{lm_backbone_forward.7} parent=1 // loop_header_branch
      %22 = sbr.rel (%p20) target = $region8
    $region5: #{lm_backbone_forward.7} parent=1 // loop_body
      %s24 = ssub.s32 %s19, 1
      %s25 = ssub.s32 %s19, 2
      %s32 = sadd.s32 1, %s27
      %p33 = scmp.ge.s32.totalorder %s32, 1
      %s34 = scalar_select %p33, 0, %s32
      %s35 = sadd.s32 1, %s26
      %s36 = scalar_select %p33, %s35, %s26
      %p37 = scmp.ge.s32.totalorder %s36, 2
      %s38 = scalar_select %p37, 0, %s36
      %s39 = ssub.s32 %s26, %s38
      %s40 = ssub.s32 %s27, %s34
      %s41 = sor.u32 %s39, %s40
      %p42 = scmp.eq.s32.totalorder %s41, 0
      %s44 = sadd.s32 %s43, 1
      %s45 = scalar_select %p42, %s43, %s44
      %p48 = pneg %p42
      %p49 = scmp.eq.s32.totalorder %s19, 1
      %p50 = por %p48, %p49
      %p51 = scmp.ne.s32.totalorder %s43, %s46
      %p52 = scmp.eq.s32.totalorder %s19, 0
      %p53 = por %p51, %p52
      %p54 = scmp.ne.s32.totalorder %s43, %s46
      %p55 = scmp.eq.s32.totalorder %s24, 1
      %p56 = por %p54, %p55
      %p57 = scmp.ne.s32.totalorder %s46, %s47
      %p58 = scmp.eq.s32.totalorder %s24, 0
      %p59 = por %p57, %p58
      %p60 = scmp.ne.s32.totalorder %s46, %s47
      %p61 = scmp.eq.s32.totalorder %s25, 1
      %p62 = por %p60, %p61
      %p64 = scmp.ne.s32.totalorder %s47, %s63
      %p65 = scmp.eq.s32.totalorder %s25, 0
      %p66 = por %p64, %p65
      %s67 = ssub.s32 %s26, %s38
      %s68 = ssub.s32 %s27, %s34
      %s69 = sor.u32 %s67, %s68
      %p70 = scmp.eq.s32.totalorder %s69, 0
      %s72 = sadd.s32 %s71, 1
      %s73 = scalar_select %p70, %s71, %s72
      %p76 = pneg %p70
      %p77 = scmp.eq.s32.totalorder %s19, 1
      %p78 = por %p76, %p77
      %p79 = scmp.ne.s32.totalorder %s71, %s74
      %p80 = scmp.eq.s32.totalorder %s19, 0
      %p81 = por %p79, %p80
      %p82 = scmp.ne.s32.totalorder %s71, %s74
      %p83 = scmp.eq.s32.totalorder %s24, 1
      %p84 = por %p82, %p83
      %p85 = scmp.ne.s32.totalorder %s74, %s75
      %p86 = scmp.eq.s32.totalorder %s24, 0
      %p87 = por %p85, %p86
      %p88 = scmp.ne.s32.totalorder %s74, %s75
      %p89 = scmp.eq.s32.totalorder %s25, 1
      %p90 = por %p88, %p89
      %p92 = scmp.ne.s32.totalorder %s75, %s91
      %p93 = scmp.eq.s32.totalorder %s25, 0
      %p94 = por %p92, %p93
      %s96 = sadd.s32 %s95, 1
      %p99 = scmp.eq.s32.totalorder %s19, 1
      %p100 = scmp.ne.s32.totalorder %s95, %s97
      %p101 = scmp.eq.s32.totalorder %s19, 0
      %p102 = por %p100, %p101
      %p103 = scmp.ne.s32.totalorder %s95, %s97
      %p104 = scmp.eq.s32.totalorder %s24, 1
      %p105 = por %p103, %p104
      %p106 = scmp.ne.s32.totalorder %s97, %s98
      %p107 = scmp.eq.s32.totalorder %s24, 0
      %p108 = por %p106, %p107
      %p109 = scmp.ne.s32.totalorder %s97, %s98
      %p110 = scmp.eq.s32.totalorder %s25, 1
      %p111 = por %p109, %p110
      %p113 = scmp.ne.s32.totalorder %s98, %s112
      %p114 = scmp.eq.s32.totalorder %s25, 0
      %p115 = por %p113, %p114
      %s117 = sadd.s32 %s116, 1
      %p120 = scmp.eq.s32.totalorder %s19, 1
      %p121 = scmp.ne.s32.totalorder %s116, %s118
      %p122 = scmp.eq.s32.totalorder %s19, 0
      %p123 = por %p121, %p122
      %p124 = scmp.ne.s32.totalorder %s116, %s118
      %p125 = scmp.eq.s32.totalorder %s24, 1
      %p126 = por %p124, %p125
      %p127 = scmp.ne.s32.totalorder %s118, %s119
      %p128 = scmp.eq.s32.totalorder %s24, 0
      %p129 = por %p127, %p128
      %p130 = scmp.ne.s32.totalorder %s118, %s119
      %p131 = scmp.eq.s32.totalorder %s25, 1
      %p132 = por %p130, %p131
      %p134 = scmp.ne.s32.totalorder %s119, %s133
      %p135 = scmp.eq.s32.totalorder %s25, 0
      %p136 = por %p134, %p135
      %s137 = ssub.s32 %s26, %s38
      %s138 = ssub.s32 %s27, %s34
      %s139 = sor.u32 %s137, %s138
      %p140 = scmp.eq.s32.totalorder %s139, 0
      %s142 = sadd.s32 %s141, 1
      %s143 = scalar_select %p140, %s141, %s142
      %p146 = pneg %p140
      %p147 = scmp.eq.s32.totalorder %s19, 1
      %p148 = por %p146, %p147
      %p149 = scmp.ne.s32.totalorder %s141, %s144
      %p150 = scmp.eq.s32.totalorder %s19, 0
      %p151 = por %p149, %p150
      %p152 = scmp.ne.s32.totalorder %s141, %s144
      %p153 = scmp.eq.s32.totalorder %s24, 1
      %p154 = por %p152, %p153
      %p155 = scmp.ne.s32.totalorder %s144, %s145
      %p156 = scmp.eq.s32.totalorder %s24, 0
      %p157 = por %p155, %p156
      %p158 = scmp.ne.s32.totalorder %s144, %s145
      %p159 = scmp.eq.s32.totalorder %s25, 1
      %p160 = por %p158, %p159
      %p162 = scmp.ne.s32.totalorder %s145, %s161
      %p163 = scmp.eq.s32.totalorder %s25, 0
      %p164 = por %p162, %p163
      %p165 = scmp.le.s32.totalorder 1, %s19
      %p166 = scmp.lt.s32.totalorder %s19, 3
      %p167 = pnand %p165, %p166
      %p168 = pneg %p167
      // Predicated region
      $region9: #{lm_backbone_forward.7} parent=5 // pred_check
        _
      $region10: #{lm_backbone_forward.7} parent=5 // pred_check_branch
        %170 = sbr.rel (%p167) target = $region12
      $region11: #{lm_backbone_forward.7} parent=5 // pred_region
        %s171 = ssub.s32 %s19, 1
        // Predicated region
        $region13: #{lm_backbone_forward.7} parent=11 // pred_check
          %p172 = pneg %p108
        $region14: #{lm_backbone_forward.7} parent=11 // pred_check_branch
          %174 = sbr.rel (%p172) target = $region16
        $region15: #{lm_backbone_forward.7} parent=11 // pred_region
          _
        $region16: #{lm_backbone_forward.7} parent=11 // pred_fallthru
          _
        // Predicated region
        $region17: #{lm_backbone_forward.7} parent=11 // pred_check
          %p175 = pneg %p129
        $region18: #{lm_backbone_forward.7} parent=11 // pred_check_branch
          %177 = sbr.rel (%p175) target = $region20
        $region19: #{lm_backbone_forward.7} parent=11 // pred_region
          _
        $region20: #{lm_backbone_forward.7} parent=11 // pred_fallthru
          _
      $region12: #{lm_backbone_forward.7} parent=5 // pred_fallthru
        _
      %p178 = scmp.lt.s32.totalorder %s19, 2
      // Predicated region
      $region21: #{lm_backbone_forward.7} parent=5 // pred_check
        %p179 = pneg %p178
      $region22: #{lm_backbone_forward.7} parent=5 // pred_check_branch
        %181 = sbr.rel (%p179) target = $region24
      $region23: #{lm_backbone_forward.7} parent=5 // pred_region
        // Predicated region
        $region25: #{lm_backbone_forward.7} parent=23 // pred_check
          %p182 = pneg %p53
        $region26: #{lm_backbone_forward.7} parent=23 // pred_check_branch
          %184 = sbr.rel (%p182) target = $region28
        $region27: #{lm_backbone_forward.7} parent=23 // pred_region
          %s185 = sand.u32 %s43, 1
          %s186 = scalar_lea.sflag [#allocation3], %s185
          %s187 = sand.u32 %s43, 1
          %s188 = smul.addr %s187, 8
          %s189 = scalar_lea.vmem [#allocation2], %s188
          %s191 = ssub.s32 128, 128
          %192 = vsyncadd %s186, %s191
          %s193 = sadd.s32 %s27, %s26
          %s194 = smul.addr %s193, 128
          %s195 = scalar_lea.hbm %s0, %s194
          %s197 = sshll.u32 %s189, 4
          %s198 = int_to_ptr.vmem [resolvable:$true] %s197
          %200 = dma.hbm_to_vmem [thread:$0]  %s195, 128, %s198, %s186
        $region28: #{lm_backbone_forward.7} parent=23 // pred_fallthru
          _
        // Predicated region
        $region29: #{lm_backbone_forward.7} parent=23 // pred_check
          %p201 = pneg %p81
        $region30: #{lm_backbone_forward.7} parent=23 // pred_check_branch
          %203 = sbr.rel (%p201) target = $region32
        $region31: #{lm_backbone_forward.7} parent=23 // pred_region
          %s204 = sand.u32 %s71, 1
          %s205 = scalar_lea.sflag [#allocation6], %s204
          %s206 = sand.u32 %s71, 1
          %s207 = smul.addr %s206, 8
          %s208 = scalar_lea.vmem [#allocation5], %s207
          %s210 = ssub.s32 128, 128
          %211 = vsyncadd %s205, %s210
          %s212 = sadd.s32 %s27, %s26
          %s213 = smul.addr %s212, 128
          %s214 = scalar_lea.hbm %s1, %s213
          %s216 = sshll.u32 %s208, 4
          %s217 = int_to_ptr.vmem [resolvable:$true] %s216
          %219 = dma.hbm_to_vmem [thread:$0]  %s214, 128, %s217, %s205
        $region32: #{lm_backbone_forward.7} parent=23 // pred_fallthru
          _
      $region24: #{lm_backbone_forward.7} parent=5 // pred_fallthru
        _
      %p220 = scmp.le.s32.totalorder 1, %s19
      %p221 = scmp.lt.s32.totalorder %s19, 3
      %p222 = pnand %p220, %p221
      %p223 = pneg %p222
      // Predicated region
      $region33: #{lm_backbone_forward.7} parent=5 // pred_check
        _
      $region34: #{lm_backbone_forward.7} parent=5 // pred_check_branch
        %225 = sbr.rel (%p222) target = $region36
      $region35: #{lm_backbone_forward.7} parent=5 // pred_region
        %s226 = ssub.s32 %s19, 1
        %s227 = sand.u32 %s46, 1
        %s228 = scalar_lea.sflag [#allocation3], %s227
        %s229 = sand.u32 %s46, 1
        %s230 = smul.addr %s229, 8
        %s231 = scalar_lea.vmem [#allocation2], %s230
        // Predicated region
        $region37: #{lm_backbone_forward.7} parent=35 // pred_check
          %p232 = pneg %p59
        $region38: #{lm_backbone_forward.7} parent=35 // pred_check_branch
          %234 = sbr.rel (%p232) target = $region40
        $region39: #{lm_backbone_forward.7} parent=35 // pred_region
          %235 = dma.done %s228, 128
        $region40: #{lm_backbone_forward.7} parent=35 // pred_fallthru
          _
        %s236 = sand.u32 %s74, 1
        %s237 = scalar_lea.sflag [#allocation6], %s236
        %s238 = sand.u32 %s74, 1
        %s239 = smul.addr %s238, 8
        %s240 = scalar_lea.vmem [#allocation5], %s239
        // Predicated region
        $region41: #{lm_backbone_forward.7} parent=35 // pred_check
          %p241 = pneg %p87
        $region42: #{lm_backbone_forward.7} parent=35 // pred_check_branch
          %243 = sbr.rel (%p241) target = $region44
        $region43: #{lm_backbone_forward.7} parent=35 // pred_region
          %244 = dma.done %s237, 128
        $region44: #{lm_backbone_forward.7} parent=35 // pred_fallthru
          _
        %s245 = sand.u32 %s46, 1
        %s246 = scalar_lea.sflag [#allocation3], %s245
        %s247 = sand.u32 %s46, 1
        %s248 = smul.addr %s247, 8
        %s249 = scalar_lea.vmem [#allocation2], %s248
        %p250 = pneg %p59
        %p251 = pneg %p56
        %s252 = sand.u32 %s74, 1
        %s253 = scalar_lea.sflag [#allocation6], %s252
        %s254 = sand.u32 %s74, 1
        %s255 = smul.addr %s254, 8
        %s256 = scalar_lea.vmem [#allocation5], %s255
        %p257 = pneg %p87
        %p258 = pneg %p84
        %p259 = pneg %p108
        %p260 = pneg %p105
        %p261 = pneg %p129
        %p262 = pneg %p126
        %p263 = pneg %p157
        %p264 = pneg %p154
        %s265 = sand.u32 %s144, 1
        %s266 = scalar_lea.sflag [#allocation4], %s265
        %s267 = sand.u32 %s144, 1
        %s268 = smul.addr %s267, 8
        %s269 = scalar_lea.vmem [#allocation7], %s268
        %v270 = vld [vmem:[%s231] sm:$0xff]
        %v271 = vld [vmem:[%s240] sm:$0xff]
        %v272 = vadd.f32 %v270, %v271
        %v273 = vld [vmem:[%s2] sm:$0x1]
        %v274 = vld [vmem:[%s3] sm:$0x1]
        %vm275 = vcmask 261120
        %v276 = vsel %vm275, %v272, 0.0
        %277 = vadd.xlane.f32.xlu0 %v276
        %v278 = vpop.xlane.xlu0 %277
        %v279 = vrcp.pop 32.0
        %v280 = vmul.f32 %v278, %v279
        %v281 = vsub.f32 %v272, %v280
        %v282 = vmul.f32 %v281, %v281
        %v283 = vsel %vm275, %v282, 0.0
        %284 = vadd.xlane.f32.xlu0 %v283
        %v285 = vpop.xlane.xlu0 %284
        %v286 = vmul.f32 %v285, %v279
        %v287 = vadd.f32 %v286, 1e-05
        %v288 = vrsqrt.pop %v287
        %v289 = vmul.f32 %v281, %v288
        %v291 = vlaneseq
        %v292 = vshrl.u32 %v291, 7
        %v293 = vsub.s32 0, %v292
        %v294 = vrot.slane %v273, %v293
        %v296 = vmul.f32 %v289, %v294
        %v298 = vlaneseq
        %v299 = vshrl.u32 %v298, 7
        %v300 = vsub.s32 0, %v299
        %v301 = vrot.slane %v274, %v300
        %v303 = vadd.f32 %v296, %v301
        %304 = vst.msk [vmem:[%s269] sm:$0xff] %vm275, %v303
        %s305 = sand.u32 %s144, 1
        %s306 = scalar_lea.sflag [#allocation4], %s305
        %s307 = sand.u32 %s144, 1
        %s308 = smul.addr %s307, 8
        %s309 = scalar_lea.vmem [#allocation7], %s308
        // Predicated region
        $region45: #{lm_backbone_forward.7} parent=35 // pred_check
          %p310 = pneg %p154
        $region46: #{lm_backbone_forward.7} parent=35 // pred_check_branch
          %312 = sbr.rel (%p310) target = $region48
        $region47: #{lm_backbone_forward.7} parent=35 // pred_region
          %s314 = ssub.s32 128, 128
          %315 = vsyncadd %s306, %s314
          %s316 = sadd.s32 %s29, %s28
          %s317 = smul.addr %s316, 128
          %s318 = scalar_lea.hbm %s4, %s317
          %s320 = sshll.u32 %s309, 4
          %s321 = int_to_ptr.vmem [resolvable:$true] %s320
          %323 = dma.vmem_to_hbm [thread:$0]  %s321, 128, %s318, %s306
        $region48: #{lm_backbone_forward.7} parent=35 // pred_fallthru
          _
      $region36: #{lm_backbone_forward.7} parent=5 // pred_fallthru
        _
      %p324 = scmp.le.s32.totalorder 2, %s19
      // Predicated region
      $region49: #{lm_backbone_forward.7} parent=5 // pred_check
        %p325 = pneg %p324
      $region50: #{lm_backbone_forward.7} parent=5 // pred_check_branch
        %327 = sbr.rel (%p325) target = $region52
      $region51: #{lm_backbone_forward.7} parent=5 // pred_region
        %s328 = ssub.s32 %s19, 2
        // Predicated region
        $region53: #{lm_backbone_forward.7} parent=51 // pred_check
          %p329 = pneg %p160
        $region54: #{lm_backbone_forward.7} parent=51 // pred_check_branch
          %331 = sbr.rel (%p329) target = $region56
        $region55: #{lm_backbone_forward.7} parent=51 // pred_region
          %s332 = sand.u32 %s145, 1
          %s333 = scalar_lea.sflag [#allocation4], %s332
          %s334 = sand.u32 %s145, 1
          %s335 = smul.addr %s334, 8
          %s336 = scalar_lea.vmem [#allocation7], %s335
          %337 = dma.done %s333, 128
        $region56: #{lm_backbone_forward.7} parent=51 // pred_fallthru
          _
      $region52: #{lm_backbone_forward.7} parent=5 // pred_fallthru
        _
    $region6: #{lm_backbone_forward.7} parent=1 // loop_footer
      %s23 = sadd.s32 1, %s19
    $region7: #{lm_backbone_forward.7} parent=1 // loop_footer_branch
      %18 = sbr.rel target = $region3
    $region8: #{lm_backbone_forward.7} parent=1 // loop_exit
      _
    %338 = vsyncpa [#allocation3], 1
    %s339 = scalar_lea.sflag [#allocation3], 1
    %340 = vsyncpa %s339, 1
    %341 = vsyncpa [#allocation6], 1
    %s342 = scalar_lea.sflag [#allocation6], 1
    %343 = vsyncpa %s342, 1
    %344 = vsyncpa [#allocation4], 1
    %s345 = scalar_lea.sflag [#allocation4], 1
    %346 = vsyncpa %s345, 1

// kernel: lm_backbone_forward.5
$region0: #{lm_backbone_forward.5}
  #allocation0 [shape = 'u32[]', space=smem, size = 0x4, offset = 0x4, fixed_abs, tag = 'smem constant byte address 0x4 - core index']
  #allocation1 [shape = 'u32[144,128]{1,0:T(1,128)}', space=vmem, size = 0x12000, scoped, tag = 'internal scratch']
  #allocation2 [shape = 'f32[8,64]{1,0:T(8,128)}', space=vmem, size = 0x1000, scoped, tag = 'scratch operand']
  #allocation3 [shape = 'f32[8,64]{1,0:T(8,128)}', space=vmem, size = 0x1000, scoped, tag = 'scratch operand']
  #allocation4 [shape = 'f32[8,8,64]{2,1,0:T(8,128)}', space=vmem, size = 0x8000, scoped, tag = 'scratch operand']
  #allocation5 [shape = 'f32[8,8,64]{2,1,0:T(8,128)}', space=vmem, size = 0x8000, scoped, tag = 'scratch operand']
  #allocation6 [shape = 'f32[8,8,1]{2,1,0:T(8,128)}', space=vmem, size = 0x8000, scoped, tag = 'scratch operand']
  #allocation7 [shape = 'f32[8,64]{1,0:T(8,128)}', space=vmem, size = 0x1000, scoped, tag = 'scratch operand']
  %s0 = inlined_call_operand.hbm [shape: f32[2,8,32], index: 0, kind: input, shape index: {}, may-alias: {0,18}]
  %s1 = inlined_call_operand.hbm [shape: f32[1,32], index: 1, kind: input, shape index: {}]
  %s2 = inlined_call_operand.hbm [shape: f32[1,32], index: 2, kind: input, shape index: {}]
  %s3 = inlined_call_operand.hbm [shape: bf16[32,128], index: 3, kind: input, shape index: {}]
  %s4 = inlined_call_operand.hbm [shape: f32[4,64], index: 4, kind: input, shape index: {}]
  %s5 = inlined_call_operand.hbm [shape: f32[1,64], index: 5, kind: input, shape index: {}]
  %s6 = inlined_call_operand.hbm [shape: bf16[64,128], index: 6, kind: input, shape index: {}]
  %s7 = inlined_call_operand.hbm [shape: bf16[2,64], index: 7, kind: input, shape index: {}]
  %s8 = inlined_call_operand.hbm [shape: f32[1,64], index: 8, kind: input, shape index: {}]
  %s9 = inlined_call_operand.hbm [shape: f32[8,64], index: 9, kind: input, shape index: {}]
  %s10 = inlined_call_operand.hbm [shape: f32[1,64], index: 10, kind: input, shape index: {}]
  %s11 = inlined_call_operand.hbm [shape: bf16[64,32], index: 11, kind: input, shape index: {}]
  %s12 = inlined_call_operand.hbm [shape: f32[1,32], index: 12, kind: input, shape index: {}]
  %s13 = inlined_call_operand.hbm [shape: f32[1,32], index: 13, kind: input, shape index: {}]
  %s14 = inlined_call_operand.hbm [shape: bf16[32,64], index: 14, kind: input, shape index: {}]
  %s15 = inlined_call_operand.hbm [shape: f32[1,64], index: 15, kind: input, shape index: {}]
  %s16 = inlined_call_operand.hbm [shape: bf16[64,32], index: 16, kind: input, shape index: {}]
  %s17 = inlined_call_operand.hbm [shape: f32[1,32], index: 17, kind: input, shape index: {}]
  %s18 = inlined_call_operand.hbm [shape: f32[2,8,32], index: 18, kind: output, shape index: {0}, may-alias: {0,18}]
  %s19 = inlined_call_operand.hbm [shape: f32[2,8,32], index: 19, kind: output, shape index: {1}]
  %20 = xla_tuple %s18, %s19
  %s21 = sld [smem:[#allocation0]]
  $region189: #{lm_backbone_forward.5} parent=0
    _
  %s23 = ssub.s32 1, %s21
  %s24 = scalar_select 0, %s23, %s21
  $region1: #{lm_backbone_forward.5} parent=0
    #allocation8 [shape = 'u8[8192]{0}', space=vmem, size = 0x2000, scoped, tag = 'input window, operand 0']
    #allocation9 [shape = 's32[2]{0}', space=sflag, size = 0x8, scoped, tag = 'scoped memory for lm_backbone_forward.5']
    #allocation10 [shape = 's32[2]{0}', space=sflag, size = 0x8, scoped, tag = 'scoped memory for lm_backbone_forward.5']
    #allocation11 [shape = 'u8[512]{0}', space=vmem, size = 0x400, scoped, tag = 'input window, operand 1, single buffered']
    #allocation12 [shape = 's32[1]{0}', space=sflag, size = 0x4, scoped, tag = 'scoped memory for lm_backbone_forward.5']
    #allocation13 [shape = 'u8[512]{0}', space=vmem, size = 0x400, scoped, tag = 'input window, operand 2, single buffered']
    #allocation14 [shape = 'u8[8192]{0}', space=vmem, size = 0x2000, scoped, tag = 'input window, operand 3, single buffered']
    #allocation15 [shape = 's32[1]{0}', space=sflag, size = 0x4, scoped, tag = 'scoped memory for lm_backbone_forward.5']
    #allocation16 [shape = 'u8[2048]{0}', space=vmem, size = 0x800, scoped, tag = 'input window, operand 4, single buffered']
    #allocation17 [shape = 'u8[512]{0}', space=vmem, size = 0x400, scoped, tag = 'input window, operand 5, single buffered']
    #allocation18 [shape = 's32[1]{0}', space=sflag, size = 0x4, scoped, tag = 'scoped memory for lm_backbone_forward.5']
    #allocation19 [shape = 'u8[16384]{0}', space=vmem, size = 0x4000, scoped, tag = 'input window, operand 6, single buffered']
    #allocation20 [shape = 'u8[512]{0}', space=vmem, size = 0x400, scoped, tag = 'input window, operand 7, single buffered']
    #allocation21 [shape = 's32[1]{0}', space=sflag, size = 0x4, scoped, tag = 'scoped memory for lm_backbone_forward.5']
    #allocation22 [shape = 'u8[512]{0}', space=vmem, size = 0x400, scoped, tag = 'input window, operand 8, single buffered']
    #allocation23 [shape = 'u8[4096]{0}', space=vmem, size = 0x1000, scoped, tag = 'input window, operand 9, single buffered']
    #allocation24 [shape = 's32[1]{0}', space=sflag, size = 0x4, scoped, tag = 'scoped memory for lm_backbone_forward.5']
    #allocation25 [shape = 'u8[512]{0}', space=vmem, size = 0x400, scoped, tag = 'input window, operand 10, single buffered']
    #allocation26 [shape = 'u8[16384]{0}', space=vmem, size = 0x4000, scoped, tag = 'input window, operand 11, single buffered']
    #allocation27 [shape = 's32[1]{0}', space=sflag, size = 0x4, scoped, tag = 'scoped memory for lm_backbone_forward.5']
    #allocation28 [shape = 'u8[512]{0}', space=vmem, size = 0x400, scoped, tag = 'input window, operand 12, single buffered']
    #allocation29 [shape = 'u8[512]{0}', space=vmem, size = 0x400, scoped, tag = 'input window, operand 13, single buffered']
    #allocation30 [shape = 's32[1]{0}', space=sflag, size = 0x4, scoped, tag = 'scoped memory for lm_backbone_forward.5']
    #allocation31 [shape = 'u8[8192]{0}', space=vmem, size = 0x2000, scoped, tag = 'input window, operand 14, single buffered']
    #allocation32 [shape = 'u8[512]{0}', space=vmem, size = 0x400, scoped, tag = 'input window, operand 15, single buffered']
    #allocation33 [shape = 's32[1]{0}', space=sflag, size = 0x4, scoped, tag = 'scoped memory for lm_backbone_forward.5']
    #allocation34 [shape = 'u8[16384]{0}', space=vmem, size = 0x4000, scoped, tag = 'input window, operand 16, single buffered']
    #allocation35 [shape = 'u8[512]{0}', space=vmem, size = 0x400, scoped, tag = 'input window, operand 17, single buffered']
    #allocation36 [shape = 's32[1]{0}', space=sflag, size = 0x4, scoped, tag = 'scoped memory for lm_backbone_forward.5']
    #allocation37 [shape = 'u8[8192]{0}', space=vmem, size = 0x2000, scoped, tag = 'output window, operand 0']
    #allocation38 [shape = 'u8[8192]{0}', space=vmem, size = 0x2000, scoped, tag = 'output window, operand 1']
    #allocation39 [shape = 's32[2]{0}', space=sflag, size = 0x8, scoped, tag = 'scoped memory for lm_backbone_forward.5']
    %25 = vsyncpa [#allocation9], 0
    %s26 = scalar_lea.sflag [#allocation9], 1
    %27 = vsyncpa %s26, 0
    %28 = vsyncpa [#allocation12], 0
    %29 = vsyncpa [#allocation15], 0
    %30 = vsyncpa [#allocation18], 0
    %31 = vsyncpa [#allocation21], 0
    %32 = vsyncpa [#allocation24], 0
    %33 = vsyncpa [#allocation27], 0
    %34 = vsyncpa [#allocation30], 0
    %35 = vsyncpa [#allocation33], 0
    %36 = vsyncpa [#allocation36], 0
    %37 = vsyncpa [#allocation10], 0
    %s38 = scalar_lea.sflag [#allocation10], 1
    %39 = vsyncpa %s38, 0
    %40 = vsyncpa [#allocation39], 0
    %s41 = scalar_lea.sflag [#allocation39], 1
    %42 = vsyncpa %s41, 0
    loop: start=0, step=1, limit=4
    $region2: #{lm_backbone_forward.5} parent=1 // loop_pre_header
      _
    $region3: #{lm_backbone_forward.5} parent=1 // loop_header
      %s44 = sphi 0, %s48
      %p45 = scmp.ge.s32.totalorder %s44, 4
      %s51 = sphi 0, %s63
      %s52 = sphi 0, %s59
      %s53 = sphi 0, %s51
      %s54 = sphi 0, %s52
      %s55 = sphi 0, %s53
      %s56 = sphi 0, %s54
      %s68 = sphi 0, %s70
      %s71 = sphi 0, %s68
      %s72 = sphi 0, %s71
      %s88 = sphi 0, %s72
      %s92 = sphi 0, %s92
      %s94 = sphi 0, %s92
      %s95 = sphi 0, %s94
      %s109 = sphi 0, %s95
      %s113 = sphi 0, %s113
      %s115 = sphi 0, %s113
      %s116 = sphi 0, %s115
      %s130 = sphi 0, %s116
      %s134 = sphi 0, %s134
      %s136 = sphi 0, %s134
      %s137 = sphi 0, %s136
      %s151 = sphi 0, %s137
      %s155 = sphi 0, %s155
      %s157 = sphi 0, %s155
      %s158 = sphi 0, %s157
      %s172 = sphi 0, %s158
      %s176 = sphi 0, %s176
      %s178 = sphi 0, %s176
      %s179 = sphi 0, %s178
      %s193 = sphi 0, %s179
      %s197 = sphi 0, %s197
      %s199 = sphi 0, %s197
      %s200 = sphi 0, %s199
      %s214 = sphi 0, %s200
      %s218 = sphi 0, %s218
      %s220 = sphi 0, %s218
      %s221 = sphi 0, %s220
      %s235 = sphi 0, %s221
      %s239 = sphi 0, %s239
      %s241 = sphi 0, %s239
      %s242 = sphi 0, %s241
      %s256 = sphi 0, %s242
      %s260 = sphi 0, %s260
      %s262 = sphi 0, %s260
      %s263 = sphi 0, %s262
      %s277 = sphi 0, %s263
      %s281 = sphi 0, %s281
      %s283 = sphi 0, %s281
      %s284 = sphi 0, %s283
      %s298 = sphi 0, %s284
      %s302 = sphi 0, %s302
      %s304 = sphi 0, %s302
      %s305 = sphi 0, %s304
      %s319 = sphi 0, %s305
      %s323 = sphi 0, %s323
      %s325 = sphi 0, %s323
      %s326 = sphi 0, %s325
      %s340 = sphi 0, %s326
      %s344 = sphi 0, %s344
      %s346 = sphi 0, %s344
      %s347 = sphi 0, %s346
      %s361 = sphi 0, %s347
      %s365 = sphi 0, %s365
      %s367 = sphi 0, %s365
      %s368 = sphi 0, %s367
      %s382 = sphi 0, %s368
      %s386 = sphi 0, %s386
      %s388 = sphi 0, %s386
      %s389 = sphi 0, %s388
      %s403 = sphi 0, %s389
      %s407 = sphi 0, %s407
      %s409 = sphi 0, %s407
      %s410 = sphi 0, %s409
      %s424 = sphi 0, %s410
      %s428 = sphi 0, %s428
      %s430 = sphi 0, %s428
      %s431 = sphi 0, %s430
      %s445 = sphi 0, %s431
      %s453 = sphi 0, %s455
      %s456 = sphi 0, %s453
      %s457 = sphi 0, %s456
      %s473 = sphi 0, %s457
      %s481 = sphi 0, %s483
      %s484 = sphi 0, %s481
      %s485 = sphi 0, %s484
      %s501 = sphi 0, %s485
    $region4: #{lm_backbone_forward.5} parent=1 // loop_header_branch
      %47 = sbr.rel (%p45) target = $region8
    $region5: #{lm_backbone_forward.5} parent=1 // loop_body
      %s49 = ssub.s32 %s44, 1
      %s50 = ssub.s32 %s44, 2
      %s57 = sadd.s32 1, %s52
      %p58 = scmp.ge.s32.totalorder %s57, 1
      %s59 = scalar_select %p58, 0, %s57
      %s60 = sadd.s32 1, %s51
      %s61 = scalar_select %p58, %s60, %s51
      %p62 = scmp.ge.s32.totalorder %s61, 2
      %s63 = scalar_select %p62, 0, %s61
      %s64 = ssub.s32 %s51, %s63
      %s65 = ssub.s32 %s52, %s59
      %s66 = sor.u32 %s64, %s65
      %p67 = scmp.eq.s32.totalorder %s66, 0
      %s69 = sadd.s32 %s68, 1
      %s70 = scalar_select %p67, %s68, %s69
      %p73 = pneg %p67
      %p74 = scmp.eq.s32.totalorder %s44, 1
      %p75 = por %p73, %p74
      %p76 = scmp.ne.s32.totalorder %s68, %s71
      %p77 = scmp.eq.s32.totalorder %s44, 0
      %p78 = por %p76, %p77
      %p79 = scmp.ne.s32.totalorder %s68, %s71
      %p80 = scmp.eq.s32.totalorder %s49, 1
      %p81 = por %p79, %p80
      %p82 = scmp.ne.s32.totalorder %s71, %s72
      %p83 = scmp.eq.s32.totalorder %s49, 0
      %p84 = por %p82, %p83
      %p85 = scmp.ne.s32.totalorder %s71, %s72
      %p86 = scmp.eq.s32.totalorder %s50, 1
      %p87 = por %p85, %p86
      %p89 = scmp.ne.s32.totalorder %s72, %s88
      %p90 = scmp.eq.s32.totalorder %s50, 0
      %p91 = por %p89, %p90
      %s93 = sadd.s32 %s92, 1
      %p96 = scmp.eq.s32.totalorder %s44, 1
      %p97 = scmp.ne.s32.totalorder %s92, %s94
      %p98 = scmp.eq.s32.totalorder %s44, 0
      %p99 = por %p97, %p98
      %p100 = scmp.ne.s32.totalorder %s92, %s94
      %p101 = scmp.eq.s32.totalorder %s49, 1
      %p102 = por %p100, %p101
      %p103 = scmp.ne.s32.totalorder %s94, %s95
      %p104 = scmp.eq.s32.totalorder %s49, 0
      %p105 = por %p103, %p104
      %p106 = scmp.ne.s32.totalorder %s94, %s95
      %p107 = scmp.eq.s32.totalorder %s50, 1
      %p108 = por %p106, %p107
      %p110 = scmp.ne.s32.totalorder %s95, %s109
      %p111 = scmp.eq.s32.totalorder %s50, 0
      %p112 = por %p110, %p111
      %s114 = sadd.s32 %s113, 1
      %p117 = scmp.eq.s32.totalorder %s44, 1
      %p118 = scmp.ne.s32.totalorder %s113, %s115
      %p119 = scmp.eq.s32.totalorder %s44, 0
      %p120 = por %p118, %p119
      %p121 = scmp.ne.s32.totalorder %s113, %s115
      %p122 = scmp.eq.s32.totalorder %s49, 1
      %p123 = por %p121, %p122
      %p124 = scmp.ne.s32.totalorder %s115, %s116
      %p125 = scmp.eq.s32.totalorder %s49, 0
      %p126 = por %p124, %p125
      %p127 = scmp.ne.s32.totalorder %s115, %s116
      %p128 = scmp.eq.s32.totalorder %s50, 1
      %p129 = por %p127, %p128
      %p131 = scmp.ne.s32.totalorder %s116, %s130
      %p132 = scmp.eq.s32.totalorder %s50, 0
      %p133 = por %p131, %p132
      %s135 = sadd.s32 %s134, 1
      %p138 = scmp.eq.s32.totalorder %s44, 1
      %p139 = scmp.ne.s32.totalorder %s134, %s136
      %p140 = scmp.eq.s32.totalorder %s44, 0
      %p141 = por %p139, %p140
      %p142 = scmp.ne.s32.totalorder %s134, %s136
      %p143 = scmp.eq.s32.totalorder %s49, 1
      %p144 = por %p142, %p143
      %p145 = scmp.ne.s32.totalorder %s136, %s137
      %p146 = scmp.eq.s32.totalorder %s49, 0
      %p147 = por %p145, %p146
      %p148 = scmp.ne.s32.totalorder %s136, %s137
      %p149 = scmp.eq.s32.totalorder %s50, 1
      %p150 = por %p148, %p149
      %p152 = scmp.ne.s32.totalorder %s137, %s151
      %p153 = scmp.eq.s32.totalorder %s50, 0
      %p154 = por %p152, %p153
      %s156 = sadd.s32 %s155, 1
      %p159 = scmp.eq.s32.totalorder %s44, 1
      %p160 = scmp.ne.s32.totalorder %s155, %s157
      %p161 = scmp.eq.s32.totalorder %s44, 0
      %p162 = por %p160, %p161
      %p163 = scmp.ne.s32.totalorder %s155, %s157
      %p164 = scmp.eq.s32.totalorder %s49, 1
      %p165 = por %p163, %p164
      %p166 = scmp.ne.s32.totalorder %s157, %s158
      %p167 = scmp.eq.s32.totalorder %s49, 0
      %p168 = por %p166, %p167
      %p169 = scmp.ne.s32.totalorder %s157, %s158
      %p170 = scmp.eq.s32.totalorder %s50, 1
      %p171 = por %p169, %p170
      %p173 = scmp.ne.s32.totalorder %s158, %s172
      %p174 = scmp.eq.s32.totalorder %s50, 0
      %p175 = por %p173, %p174
      %s177 = sadd.s32 %s176, 1
      %p180 = scmp.eq.s32.totalorder %s44, 1
      %p181 = scmp.ne.s32.totalorder %s176, %s178
      %p182 = scmp.eq.s32.totalorder %s44, 0
      %p183 = por %p181, %p182
      %p184 = scmp.ne.s32.totalorder %s176, %s178
      %p185 = scmp.eq.s32.totalorder %s49, 1
      %p186 = por %p184, %p185
      %p187 = scmp.ne.s32.totalorder %s178, %s179
      %p188 = scmp.eq.s32.totalorder %s49, 0
      %p189 = por %p187, %p188
      %p190 = scmp.ne.s32.totalorder %s178, %s179
      %p191 = scmp.eq.s32.totalorder %s50, 1
      %p192 = por %p190, %p191
      %p194 = scmp.ne.s32.totalorder %s179, %s193
      %p195 = scmp.eq.s32.totalorder %s50, 0
      %p196 = por %p194, %p195
      %s198 = sadd.s32 %s197, 1
      %p201 = scmp.eq.s32.totalorder %s44, 1
      %p202 = scmp.ne.s32.totalorder %s197, %s199
      %p203 = scmp.eq.s32.totalorder %s44, 0
      %p204 = por %p202, %p203
      %p205 = scmp.ne.s32.totalorder %s197, %s199
      %p206 = scmp.eq.s32.totalorder %s49, 1
      %p207 = por %p205, %p206
      %p208 = scmp.ne.s32.totalorder %s199, %s200
      %p209 = scmp.eq.s32.totalorder %s49, 0
      %p210 = por %p208, %p209
      %p211 = scmp.ne.s32.totalorder %s199, %s200
      %p212 = scmp.eq.s32.totalorder %s50, 1
      %p213 = por %p211, %p212
      %p215 = scmp.ne.s32.totalorder %s200, %s214
      %p216 = scmp.eq.s32.totalorder %s50, 0
      %p217 = por %p215, %p216
      %s219 = sadd.s32 %s218, 1
      %p222 = scmp.eq.s32.totalorder %s44, 1
      %p223 = scmp.ne.s32.totalorder %s218, %s220
      %p224 = scmp.eq.s32.totalorder %s44, 0
      %p225 = por %p223, %p224
      %p226 = scmp.ne.s32.totalorder %s218, %s220
      %p227 = scmp.eq.s32.totalorder %s49, 1
      %p228 = por %p226, %p227
      %p229 = scmp.ne.s32.totalorder %s220, %s221
      %p230 = scmp.eq.s32.totalorder %s49, 0
      %p231 = por %p229, %p230
      %p232 = scmp.ne.s32.totalorder %s220, %s221
      %p233 = scmp.eq.s32.totalorder %s50, 1
      %p234 = por %p232, %p233
      %p236 = scmp.ne.s32.totalorder %s221, %s235
      %p237 = scmp.eq.s32.totalorder %s50, 0
      %p238 = por %p236, %p237
      %s240 = sadd.s32 %s239, 1
      %p243 = scmp.eq.s32.totalorder %s44, 1
      %p244 = scmp.ne.s32.totalorder %s239, %s241
      %p245 = scmp.eq.s32.totalorder %s44, 0
      %p246 = por %p244, %p245
      %p247 = scmp.ne.s32.totalorder %s239, %s241
      %p248 = scmp.eq.s32.totalorder %s49, 1
      %p249 = por %p247, %p248
      %p250 = scmp.ne.s32.totalorder %s241, %s242
      %p251 = scmp.eq.s32.totalorder %s49, 0
      %p252 = por %p250, %p251
      %p253 = scmp.ne.s32.totalorder %s241, %s242
      %p254 = scmp.eq.s32.totalorder %s50, 1
      %p255 = por %p253, %p254
      %p257 = scmp.ne.s32.totalorder %s242, %s256
      %p258 = scmp.eq.s32.totalorder %s50, 0
      %p259 = por %p257, %p258
      %s261 = sadd.s32 %s260, 1
      %p264 = scmp.eq.s32.totalorder %s44, 1
      %p265 = scmp.ne.s32.totalorder %s260, %s262
      %p266 = scmp.eq.s32.totalorder %s44, 0
      %p267 = por %p265, %p266
      %p268 = scmp.ne.s32.totalorder %s260, %s262
      %p269 = scmp.eq.s32.totalorder %s49, 1
      %p270 = por %p268, %p269
      %p271 = scmp.ne.s32.totalorder %s262, %s263
      %p272 = scmp.eq.s32.totalorder %s49, 0
      %p273 = por %p271, %p272
      %p274 = scmp.ne.s32.totalorder %s262, %s263
      %p275 = scmp.eq.s32.totalorder %s50, 1
      %p276 = por %p274, %p275
      %p278 = scmp.ne.s32.totalorder %s263, %s277
      %p279 = scmp.eq.s32.totalorder %s50, 0
      %p280 = por %p278, %p279
      %s282 = sadd.s32 %s281, 1
      %p285 = scmp.eq.s32.totalorder %s44, 1
      %p286 = scmp.ne.s32.totalorder %s281, %s283
      %p287 = scmp.eq.s32.totalorder %s44, 0
      %p288 = por %p286, %p287
      %p289 = scmp.ne.s32.totalorder %s281, %s283
      %p290 = scmp.eq.s32.totalorder %s49, 1
      %p291 = por %p289, %p290
      %p292 = scmp.ne.s32.totalorder %s283, %s284
      %p293 = scmp.eq.s32.totalorder %s49, 0
      %p294 = por %p292, %p293
      %p295 = scmp.ne.s32.totalorder %s283, %s284
      %p296 = scmp.eq.s32.totalorder %s50, 1
      %p297 = por %p295, %p296
      %p299 = scmp.ne.s32.totalorder %s284, %s298
      %p300 = scmp.eq.s32.totalorder %s50, 0
      %p301 = por %p299, %p300
      %s303 = sadd.s32 %s302, 1
      %p306 = scmp.eq.s32.totalorder %s44, 1
      %p307 = scmp.ne.s32.totalorder %s302, %s304
      %p308 = scmp.eq.s32.totalorder %s44, 0
      %p309 = por %p307, %p308
      %p310 = scmp.ne.s32.totalorder %s302, %s304
      %p311 = scmp.eq.s32.totalorder %s49, 1
      %p312 = por %p310, %p311
      %p313 = scmp.ne.s32.totalorder %s304, %s305
      %p314 = scmp.eq.s32.totalorder %s49, 0
      %p315 = por %p313, %p314
      %p316 = scmp.ne.s32.totalorder %s304, %s305
      %p317 = scmp.eq.s32.totalorder %s50, 1
      %p318 = por %p316, %p317
      %p320 = scmp.ne.s32.totalorder %s305, %s319
      %p321 = scmp.eq.s32.totalorder %s50, 0
      %p322 = por %p320, %p321
      %s324 = sadd.s32 %s323, 1
      %p327 = scmp.eq.s32.totalorder %s44, 1
      %p328 = scmp.ne.s32.totalorder %s323, %s325
      %p329 = scmp.eq.s32.totalorder %s44, 0
      %p330 = por %p328, %p329
      %p331 = scmp.ne.s32.totalorder %s323, %s325
      %p332 = scmp.eq.s32.totalorder %s49, 1
      %p333 = por %p331, %p332
      %p334 = scmp.ne.s32.totalorder %s325, %s326
      %p335 = scmp.eq.s32.totalorder %s49, 0
      %p336 = por %p334, %p335
      %p337 = scmp.ne.s32.totalorder %s325, %s326
      %p338 = scmp.eq.s32.totalorder %s50, 1
      %p339 = por %p337, %p338
      %p341 = scmp.ne.s32.totalorder %s326, %s340
      %p342 = scmp.eq.s32.totalorder %s50, 0
      %p343 = por %p341, %p342
      %s345 = sadd.s32 %s344, 1
      %p348 = scmp.eq.s32.totalorder %s44, 1
      %p349 = scmp.ne.s32.totalorder %s344, %s346
      %p350 = scmp.eq.s32.totalorder %s44, 0
      %p351 = por %p349, %p350
      %p352 = scmp.ne.s32.totalorder %s344, %s346
      %p353 = scmp.eq.s32.totalorder %s49, 1
      %p354 = por %p352, %p353
      %p355 = scmp.ne.s32.totalorder %s346, %s347
      %p356 = scmp.eq.s32.totalorder %s49, 0
      %p357 = por %p355, %p356
      %p358 = scmp.ne.s32.totalorder %s346, %s347
      %p359 = scmp.eq.s32.totalorder %s50, 1
      %p360 = por %p358, %p359
      %p362 = scmp.ne.s32.totalorder %s347, %s361
      %p363 = scmp.eq.s32.totalorder %s50, 0
      %p364 = por %p362, %p363
      %s366 = sadd.s32 %s365, 1
      %p369 = scmp.eq.s32.totalorder %s44, 1
      %p370 = scmp.ne.s32.totalorder %s365, %s367
      %p371 = scmp.eq.s32.totalorder %s44, 0
      %p372 = por %p370, %p371
      %p373 = scmp.ne.s32.totalorder %s365, %s367
      %p374 = scmp.eq.s32.totalorder %s49, 1
      %p375 = por %p373, %p374
      %p376 = scmp.ne.s32.totalorder %s367, %s368
      %p377 = scmp.eq.s32.totalorder %s49, 0
      %p378 = por %p376, %p377
      %p379 = scmp.ne.s32.totalorder %s367, %s368
      %p380 = scmp.eq.s32.totalorder %s50, 1
      %p381 = por %p379, %p380
      %p383 = scmp.ne.s32.totalorder %s368, %s382
      %p384 = scmp.eq.s32.totalorder %s50, 0
      %p385 = por %p383, %p384
      %s387 = sadd.s32 %s386, 1
      %p390 = scmp.eq.s32.totalorder %s44, 1
      %p391 = scmp.ne.s32.totalorder %s386, %s388
      %p392 = scmp.eq.s32.totalorder %s44, 0
      %p393 = por %p391, %p392
      %p394 = scmp.ne.s32.totalorder %s386, %s388
      %p395 = scmp.eq.s32.totalorder %s49, 1
      %p396 = por %p394, %p395
      %p397 = scmp.ne.s32.totalorder %s388, %s389
      %p398 = scmp.eq.s32.totalorder %s49, 0
      %p399 = por %p397, %p398
      %p400 = scmp.ne.s32.totalorder %s388, %s389
      %p401 = scmp.eq.s32.totalorder %s50, 1
      %p402 = por %p400, %p401
      %p404 = scmp.ne.s32.totalorder %s389, %s403
      %p405 = scmp.eq.s32.totalorder %s50, 0
      %p406 = por %p404, %p405
      %s408 = sadd.s32 %s407, 1
      %p411 = scmp.eq.s32.totalorder %s44, 1
      %p412 = scmp.ne.s32.totalorder %s407, %s409
      %p413 = scmp.eq.s32.totalorder %s44, 0
      %p414 = por %p412, %p413
      %p415 = scmp.ne.s32.totalorder %s407, %s409
      %p416 = scmp.eq.s32.totalorder %s49, 1
      %p417 = por %p415, %p416
      %p418 = scmp.ne.s32.totalorder %s409, %s410
      %p419 = scmp.eq.s32.totalorder %s49, 0
      %p420 = por %p418, %p419
      %p421 = scmp.ne.s32.totalorder %s409, %s410
      %p422 = scmp.eq.s32.totalorder %s50, 1
      %p423 = por %p421, %p422
      %p425 = scmp.ne.s32.totalorder %s410, %s424
      %p426 = scmp.eq.s32.totalorder %s50, 0
      %p427 = por %p425, %p426
      %s429 = sadd.s32 %s428, 1
      %p432 = scmp.eq.s32.totalorder %s44, 1
      %p433 = scmp.ne.s32.totalorder %s428, %s430
      %p434 = scmp.eq.s32.totalorder %s44, 0
      %p435 = por %p433, %p434
      %p436 = scmp.ne.s32.totalorder %s428, %s430
      %p437 = scmp.eq.s32.totalorder %s49, 1
      %p438 = por %p436, %p437
      %p439 = scmp.ne.s32.totalorder %s430, %s431
      %p440 = scmp.eq.s32.totalorder %s49, 0
      %p441 = por %p439, %p440
      %p442 = scmp.ne.s32.totalorder %s430, %s431
      %p443 = scmp.eq.s32.totalorder %s50, 1
      %p444 = por %p442, %p443
      %p446 = scmp.ne.s32.totalorder %s431, %s445
      %p447 = scmp.eq.s32.totalorder %s50, 0
      %p448 = por %p446, %p447
      %s449 = ssub.s32 %s51, %s63
      %s450 = ssub.s32 %s52, %s59
      %s451 = sor.u32 %s449, %s450
      %p452 = scmp.eq.s32.totalorder %s451, 0
      %s454 = sadd.s32 %s453, 1
      %s455 = scalar_select %p452, %s453, %s454
      %p458 = pneg %p452
      %p459 = scmp.eq.s32.totalorder %s44, 1
      %p460 = por %p458, %p459
      %p461 = scmp.ne.s32.totalorder %s453, %s456
      %p462 = scmp.eq.s32.totalorder %s44, 0
      %p463 = por %p461, %p462
      %p464 = scmp.ne.s32.totalorder %s453, %s456
      %p465 = scmp.eq.s32.totalorder %s49, 1
      %p466 = por %p464, %p465
      %p467 = scmp.ne.s32.totalorder %s456, %s457
      %p468 = scmp.eq.s32.totalorder %s49, 0
      %p469 = por %p467, %p468
      %p470 = scmp.ne.s32.totalorder %s456, %s457
      %p471 = scmp.eq.s32.totalorder %s50, 1
      %p472 = por %p470, %p471
      %p474 = scmp.ne.s32.totalorder %s457, %s473
      %p475 = scmp.eq.s32.totalorder %s50, 0
      %p476 = por %p474, %p475
      %s477 = ssub.s32 %s51, %s63
      %s478 = ssub.s32 %s52, %s59
      %s479 = sor.u32 %s477, %s478
      %p480 = scmp.eq.s32.totalorder %s479, 0
      %s482 = sadd.s32 %s481, 1
      %s483 = scalar_select %p480, %s481, %s482
      %p486 = pneg %p480
      %p487 = scmp.eq.s32.totalorder %s44, 1
      %p488 = por %p486, %p487
      %p489 = scmp.ne.s32.totalorder %s481, %s484
      %p490 = scmp.eq.s32.totalorder %s44, 0
      %p491 = por %p489, %p490
      %p492 = scmp.ne.s32.totalorder %s481, %s484
      %p493 = scmp.eq.s32.totalorder %s49, 1
      %p494 = por %p492, %p493
      %p495 = scmp.ne.s32.totalorder %s484, %s485
      %p496 = scmp.eq.s32.totalorder %s49, 0
      %p497 = por %p495, %p496
      %p498 = scmp.ne.s32.totalorder %s484, %s485
      %p499 = scmp.eq.s32.totalorder %s50, 1
      %p500 = por %p498, %p499
      %p502 = scmp.ne.s32.totalorder %s485, %s501
      %p503 = scmp.eq.s32.totalorder %s50, 0
      %p504 = por %p502, %p503
      %p505 = scmp.le.s32.totalorder 1, %s44
      %p506 = scmp.lt.s32.totalorder %s44, 3
      %p507 = pnand %p505, %p506
      %p508 = pneg %p507
      // Predicated region
      $region9: #{lm_backbone_forward.5} parent=5 // pred_check
        _
      $region10: #{lm_backbone_forward.5} parent=5 // pred_check_branch
        %510 = sbr.rel (%p507) target = $region12
      $region11: #{lm_backbone_forward.5} parent=5 // pred_region
        %s511 = ssub.s32 %s44, 1
        // Predicated region
        $region13: #{lm_backbone_forward.5} parent=11 // pred_check
          %p512 = pneg %p105
        $region14: #{lm_backbone_forward.5} parent=11 // pred_check_branch
          %514 = sbr.rel (%p512) target = $region16
        $region15: #{lm_backbone_forward.5} parent=11 // pred_region
          %s516 = ssub.s32 16, 16
          %517 = vsyncadd [#allocation12], %s516
          %s519 = sshll.u32 [#allocation11], 4
          %s520 = int_to_ptr.vmem [resolvable:$true] %s519
          %522 = dma.hbm_to_vmem [thread:$0]  %s1, 16, %s520, [#allocation12]
        $region16: #{lm_backbone_forward.5} parent=11 // pred_fallthru
          _
        // Predicated region
        $region17: #{lm_backbone_forward.5} parent=11 // pred_check
          %p523 = pneg %p126
        $region18: #{lm_backbone_forward.5} parent=11 // pred_check_branch
          %525 = sbr.rel (%p523) target = $region20
        $region19: #{lm_backbone_forward.5} parent=11 // pred_region
          %s527 = ssub.s32 16, 16
          %528 = vsyncadd [#allocation12], %s527
          %s530 = sshll.u32 [#allocation13], 4
          %s531 = int_to_ptr.vmem [resolvable:$true] %s530
          %533 = dma.hbm_to_vmem [thread:$0]  %s2, 16, %s531, [#allocation12]
        $region20: #{lm_backbone_forward.5} parent=11 // pred_fallthru
          _
        // Predicated region
        $region21: #{lm_backbone_forward.5} parent=11 // pred_check
          %p534 = pneg %p147
        $region22: #{lm_backbone_forward.5} parent=11 // pred_check_branch
          %536 = sbr.rel (%p534) target = $region24
        $region23: #{lm_backbone_forward.5} parent=11 // pred_region
          %s538 = ssub.s32 256, 256
          %539 = vsyncadd [#allocation15], %s538
          %s540 = sshll.u32 [#allocation14], 4
          %s541 = int_to_ptr.vmem [resolvable:$true] %s540
          %546 = dma.hbm_to_vmem [thread:$0]  %s3, 256, %s541, [#allocation15], 64, 64, 4
        $region24: #{lm_backbone_forward.5} parent=11 // pred_fallthru
          _
        // Predicated region
        $region25: #{lm_backbone_forward.5} parent=11 // pred_check
          %p547 = pneg %p168
        $region26: #{lm_backbone_forward.5} parent=11 // pred_check_branch
          %549 = sbr.rel (%p547) target = $region28
        $region27: #{lm_backbone_forward.5} parent=11 // pred_region
          %s551 = ssub.s32 64, 64
          %552 = vsyncadd [#allocation15], %s551
          %s554 = sshll.u32 [#allocation16], 4
          %s555 = int_to_ptr.vmem [resolvable:$true] %s554
          %557 = dma.hbm_to_vmem [thread:$0]  %s4, 64, %s555, [#allocation15]
        $region28: #{lm_backbone_forward.5} parent=11 // pred_fallthru
          _
        // Predicated region
        $region29: #{lm_backbone_forward.5} parent=11 // pred_check
          %p558 = pneg %p189
        $region30: #{lm_backbone_forward.5} parent=11 // pred_check_branch
          %560 = sbr.rel (%p558) target = $region32
        $region31: #{lm_backbone_forward.5} parent=11 // pred_region
          %s562 = ssub.s32 16, 16
          %563 = vsyncadd [#allocation18], %s562
          %s565 = sshll.u32 [#allocation17], 4
          %s566 = int_to_ptr.vmem [resolvable:$true] %s565
          %568 = dma.hbm_to_vmem [thread:$0]  %s5, 16, %s566, [#allocation18]
        $region32: #{lm_backbone_forward.5} parent=11 // pred_fallthru
          _
        // Predicated region
        $region33: #{lm_backbone_forward.5} parent=11 // pred_check
          %p569 = pneg %p210
        $region34: #{lm_backbone_forward.5} parent=11 // pred_check_branch
          %571 = sbr.rel (%p569) target = $region36
        $region35: #{lm_backbone_forward.5} parent=11 // pred_region
          %s573 = ssub.s32 512, 512
          %574 = vsyncadd [#allocation18], %s573
          %s575 = sshll.u32 [#allocation19], 4
          %s576 = int_to_ptr.vmem [resolvable:$true] %s575
          %581 = dma.hbm_to_vmem [thread:$0]  %s6, 512, %s576, [#allocation18], 64, 64, 4
        $region36: #{lm_backbone_forward.5} parent=11 // pred_fallthru
          _
        // Predicated region
        $region37: #{lm_backbone_forward.5} parent=11 // pred_check
          %p582 = pneg %p231
        $region38: #{lm_backbone_forward.5} parent=11 // pred_check_branch
          %584 = sbr.rel (%p582) target = $region40
        $region39: #{lm_backbone_forward.5} parent=11 // pred_region
          %s586 = ssub.s32 16, 16
          %587 = vsyncadd [#allocation21], %s586
          %s589 = sshll.u32 [#allocation20], 4
          %s590 = int_to_ptr.vmem [resolvable:$true] %s589
          %592 = dma.hbm_to_vmem [thread:$0]  %s7, 16, %s590, [#allocation21]
        $region40: #{lm_backbone_forward.5} parent=11 // pred_fallthru
          _
        // Predicated region
        $region41: #{lm_backbone_forward.5} parent=11 // pred_check
          %p593 = pneg %p252
        $region42: #{lm_backbone_forward.5} parent=11 // pred_check_branch
          %595 = sbr.rel (%p593) target = $region44
        $region43: #{lm_backbone_forward.5} parent=11 // pred_region
          %s597 = ssub.s32 16, 16
          %598 = vsyncadd [#allocation21], %s597
          %s600 = sshll.u32 [#allocation22], 4
          %s601 = int_to_ptr.vmem [resolvable:$true] %s600
          %603 = dma.hbm_to_vmem [thread:$0]  %s8, 16, %s601, [#allocation21]
        $region44: #{lm_backbone_forward.5} parent=11 // pred_fallthru
          _
        // Predicated region
        $region45: #{lm_backbone_forward.5} parent=11 // pred_check
          %p604 = pneg %p273
        $region46: #{lm_backbone_forward.5} parent=11 // pred_check_branch
          %606 = sbr.rel (%p604) target = $region48
        $region47: #{lm_backbone_forward.5} parent=11 // pred_region
          %s608 = ssub.s32 128, 128
          %609 = vsyncadd [#allocation24], %s608
          %s611 = sshll.u32 [#allocation23], 4
          %s612 = int_to_ptr.vmem [resolvable:$true] %s611
          %614 = dma.hbm_to_vmem [thread:$0]  %s9, 128, %s612, [#allocation24]
        $region48: #{lm_backbone_forward.5} parent=11 // pred_fallthru
          _
        // Predicated region
        $region49: #{lm_backbone_forward.5} parent=11 // pred_check
          %p615 = pneg %p294
        $region50: #{lm_backbone_forward.5} parent=11 // pred_check_branch
          %617 = sbr.rel (%p615) target = $region52
        $region51: #{lm_backbone_forward.5} parent=11 // pred_region
          %s619 = ssub.s32 16, 16
          %620 = vsyncadd [#allocation24], %s619
          %s622 = sshll.u32 [#allocation25], 4
          %s623 = int_to_ptr.vmem [resolvable:$true] %s622
          %625 = dma.hbm_to_vmem [thread:$0]  %s10, 16, %s623, [#allocation24]
        $region52: #{lm_backbone_forward.5} parent=11 // pred_fallthru
          _
        // Predicated region
        $region53: #{lm_backbone_forward.5} parent=11 // pred_check
          %p626 = pneg %p315
        $region54: #{lm_backbone_forward.5} parent=11 // pred_check_branch
          %628 = sbr.rel (%p626) target = $region56
        $region55: #{lm_backbone_forward.5} parent=11 // pred_region
          %s630 = ssub.s32 512, 512
          %631 = vsyncadd [#allocation27], %s630
          %s632 = sshll.u32 [#allocation26], 4
          %s633 = int_to_ptr.vmem [resolvable:$true] %s632
          %638 = dma.hbm_to_vmem [thread:$0]  %s11, 512, %s633, [#allocation27], 64, 64, 4
        $region56: #{lm_backbone_forward.5} parent=11 // pred_fallthru
          _
        // Predicated region
        $region57: #{lm_backbone_forward.5} parent=11 // pred_check
          %p639 = pneg %p336
        $region58: #{lm_backbone_forward.5} parent=11 // pred_check_branch
          %641 = sbr.rel (%p639) target = $region60
        $region59: #{lm_backbone_forward.5} parent=11 // pred_region
          %s643 = ssub.s32 16, 16
          %644 = vsyncadd [#allocation27], %s643
          %s646 = sshll.u32 [#allocation28], 4
          %s647 = int_to_ptr.vmem [resolvable:$true] %s646
          %649 = dma.hbm_to_vmem [thread:$0]  %s12, 16, %s647, [#allocation27]
        $region60: #{lm_backbone_forward.5} parent=11 // pred_fallthru
          _
        // Predicated region
        $region61: #{lm_backbone_forward.5} parent=11 // pred_check
          %p650 = pneg %p357
        $region62: #{lm_backbone_forward.5} parent=11 // pred_check_branch
          %652 = sbr.rel (%p650) target = $region64
        $region63: #{lm_backbone_forward.5} parent=11 // pred_region
          %s654 = ssub.s32 16, 16
          %655 = vsyncadd [#allocation30], %s654
          %s657 = sshll.u32 [#allocation29], 4
          %s658 = int_to_ptr.vmem [resolvable:$true] %s657
          %660 = dma.hbm_to_vmem [thread:$0]  %s13, 16, %s658, [#allocation30]
        $region64: #{lm_backbone_forward.5} parent=11 // pred_fallthru
          _
        // Predicated region
        $region65: #{lm_backbone_forward.5} parent=11 // pred_check
          %p661 = pneg %p378
        $region66: #{lm_backbone_forward.5} parent=11 // pred_check_branch
          %663 = sbr.rel (%p661) target = $region68
        $region67: #{lm_backbone_forward.5} parent=11 // pred_region
          %s665 = ssub.s32 256, 256
          %666 = vsyncadd [#allocation30], %s665
          %s667 = sshll.u32 [#allocation31], 4
          %s668 = int_to_ptr.vmem [resolvable:$true] %s667
          %673 = dma.hbm_to_vmem [thread:$0]  %s14, 256, %s668, [#allocation30], 64, 64, 4
        $region68: #{lm_backbone_forward.5} parent=11 // pred_fallthru
          _
        // Predicated region
        $region69: #{lm_backbone_forward.5} parent=11 // pred_check
          %p674 = pneg %p399
        $region70: #{lm_backbone_forward.5} parent=11 // pred_check_branch
          %676 = sbr.rel (%p674) target = $region72
        $region71: #{lm_backbone_forward.5} parent=11 // pred_region
          %s678 = ssub.s32 16, 16
          %679 = vsyncadd [#allocation33], %s678
          %s681 = sshll.u32 [#allocation32], 4
          %s682 = int_to_ptr.vmem [resolvable:$true] %s681
          %684 = dma.hbm_to_vmem [thread:$0]  %s15, 16, %s682, [#allocation33]
        $region72: #{lm_backbone_forward.5} parent=11 // pred_fallthru
          _
        // Predicated region
        $region73: #{lm_backbone_forward.5} parent=11 // pred_check
          %p685 = pneg %p420
        $region74: #{lm_backbone_forward.5} parent=11 // pred_check_branch
          %687 = sbr.rel (%p685) target = $region76
        $region75: #{lm_backbone_forward.5} parent=11 // pred_region
          %s689 = ssub.s32 512, 512
          %690 = vsyncadd [#allocation33], %s689
          %s691 = sshll.u32 [#allocation34], 4
          %s692 = int_to_ptr.vmem [resolvable:$true] %s691
          %697 = dma.hbm_to_vmem [thread:$0]  %s16, 512, %s692, [#allocation33], 64, 64, 4
        $region76: #{lm_backbone_forward.5} parent=11 // pred_fallthru
          _
        // Predicated region
        $region77: #{lm_backbone_forward.5} parent=11 // pred_check
          %p698 = pneg %p441
        $region78: #{lm_backbone_forward.5} parent=11 // pred_check_branch
          %700 = sbr.rel (%p698) target = $region80
        $region79: #{lm_backbone_forward.5} parent=11 // pred_region
          %s702 = ssub.s32 16, 16
          %703 = vsyncadd [#allocation36], %s702
          %s705 = sshll.u32 [#allocation35], 4
          %s706 = int_to_ptr.vmem [resolvable:$true] %s705
          %708 = dma.hbm_to_vmem [thread:$0]  %s17, 16, %s706, [#allocation36]
        $region80: #{lm_backbone_forward.5} parent=11 // pred_fallthru
          _
      $region12: #{lm_backbone_forward.5} parent=5 // pred_fallthru
        _
      %p709 = scmp.lt.s32.totalorder %s44, 2
      // Predicated region
      $region81: #{lm_backbone_forward.5} parent=5 // pred_check
        %p710 = pneg %p709
      $region82: #{lm_backbone_forward.5} parent=5 // pred_check_branch
        %712 = sbr.rel (%p710) target = $region84
      $region83: #{lm_backbone_forward.5} parent=5 // pred_region
        // Predicated region
        $region85: #{lm_backbone_forward.5} parent=83 // pred_check
          %p713 = pneg %p78
        $region86: #{lm_backbone_forward.5} parent=83 // pred_check_branch
          %715 = sbr.rel (%p713) target = $region88
        $region87: #{lm_backbone_forward.5} parent=83 // pred_region
          %s716 = sand.u32 %s68, 1
          %s717 = scalar_lea.sflag [#allocation9], %s716
          %s718 = sand.u32 %s68, 1
          %s719 = smul.addr %s718, 8
          %s720 = scalar_lea.vmem [#allocation8], %s719
          %s722 = ssub.s32 128, 128
          %723 = vsyncadd %s717, %s722
          %s724 = sadd.s32 %s52, %s51
          %s725 = smul.addr %s724, 128
          %s726 = scalar_lea.hbm %s0, %s725
          %s728 = sshll.u32 %s720, 4
          %s729 = int_to_ptr.vmem [resolvable:$true] %s728
          %731 = dma.hbm_to_vmem [thread:$0]  %s726, 128, %s729, %s717
        $region88: #{lm_backbone_forward.5} parent=83 // pred_fallthru
          _
      $region84: #{lm_backbone_forward.5} parent=5 // pred_fallthru
        _
      %p732 = scmp.le.s32.totalorder 1, %s44
      %p733 = scmp.lt.s32.totalorder %s44, 3
      %p734 = pnand %p732, %p733
      %p735 = pneg %p734
      // Predicated region
      $region89: #{lm_backbone_forward.5} parent=5 // pred_check
        _
      $region90: #{lm_backbone_forward.5} parent=5 // pred_check_branch
        %737 = sbr.rel (%p734) target = $region92
      $region91: #{lm_backbone_forward.5} parent=5 // pred_region
        %s738 = ssub.s32 %s44, 1
        %s739 = sand.u32 %s71, 1
        %s740 = scalar_lea.sflag [#allocation9], %s739
        %s741 = sand.u32 %s71, 1
        %s742 = smul.addr %s741, 8
        %s743 = scalar_lea.vmem [#allocation8], %s742
        // Predicated region
        $region93: #{lm_backbone_forward.5} parent=91 // pred_check
          %p744 = pneg %p84
        $region94: #{lm_backbone_forward.5} parent=91 // pred_check_branch
          %746 = sbr.rel (%p744) target = $region96
        $region95: #{lm_backbone_forward.5} parent=91 // pred_region
          %747 = dma.done %s740, 128
        $region96: #{lm_backbone_forward.5} parent=91 // pred_fallthru
          _
        // Predicated region
        $region97: #{lm_backbone_forward.5} parent=91 // pred_check
          %p748 = pneg %p105
        $region98: #{lm_backbone_forward.5} parent=91 // pred_check_branch
          %750 = sbr.rel (%p748) target = $region100
        $region99: #{lm_backbone_forward.5} parent=91 // pred_region
          %751 = dma.done [#allocation12], 16
        $region100: #{lm_backbone_forward.5} parent=91 // pred_fallthru
          _
        // Predicated region
        $region101: #{lm_backbone_forward.5} parent=91 // pred_check
          %p752 = pneg %p126
        $region102: #{lm_backbone_forward.5} parent=91 // pred_check_branch
          %754 = sbr.rel (%p752) target = $region104
        $region103: #{lm_backbone_forward.5} parent=91 // pred_region
          %755 = dma.done [#allocation12], 16
        $region104: #{lm_backbone_forward.5} parent=91 // pred_fallthru
          _
        // Predicated region
        $region105: #{lm_backbone_forward.5} parent=91 // pred_check
          %p756 = pneg %p147
        $region106: #{lm_backbone_forward.5} parent=91 // pred_check_branch
          %758 = sbr.rel (%p756) target = $region108
        $region107: #{lm_backbone_forward.5} parent=91 // pred_region
          %759 = dma.done [#allocation15], 256
        $region108: #{lm_backbone_forward.5} parent=91 // pred_fallthru
          _
        // Predicated region
        $region109: #{lm_backbone_forward.5} parent=91 // pred_check
          %p760 = pneg %p168
        $region110: #{lm_backbone_forward.5} parent=91 // pred_check_branch
          %762 = sbr.rel (%p760) target = $region112
        $region111: #{lm_backbone_forward.5} parent=91 // pred_region
          %763 = dma.done [#allocation15], 64
        $region112: #{lm_backbone_forward.5} parent=91 // pred_fallthru
          _
        // Predicated region
        $region113: #{lm_backbone_forward.5} parent=91 // pred_check
          %p764 = pneg %p189
        $region114: #{lm_backbone_forward.5} parent=91 // pred_check_branch
          %766 = sbr.rel (%p764) target = $region116
        $region115: #{lm_backbone_forward.5} parent=91 // pred_region
          %767 = dma.done [#allocation18], 16
        $region116: #{lm_backbone_forward.5} parent=91 // pred_fallthru
          _
        // Predicated region
        $region117: #{lm_backbone_forward.5} parent=91 // pred_check
          %p768 = pneg %p210
        $region118: #{lm_backbone_forward.5} parent=91 // pred_check_branch
          %770 = sbr.rel (%p768) target = $region120
        $region119: #{lm_backbone_forward.5} parent=91 // pred_region
          %771 = dma.done [#allocation18], 512
        $region120: #{lm_backbone_forward.5} parent=91 // pred_fallthru
          _
        // Predicated region
        $region121: #{lm_backbone_forward.5} parent=91 // pred_check
          %p772 = pneg %p231
        $region122: #{lm_backbone_forward.5} parent=91 // pred_check_branch
          %774 = sbr.rel (%p772) target = $region124
        $region123: #{lm_backbone_forward.5} parent=91 // pred_region
          %775 = dma.done [#allocation21], 16
        $region124: #{lm_backbone_forward.5} parent=91 // pred_fallthru
          _
        // Predicated region
        $region125: #{lm_backbone_forward.5} parent=91 // pred_check
          %p776 = pneg %p252
        $region126: #{lm_backbone_forward.5} parent=91 // pred_check_branch
          %778 = sbr.rel (%p776) target = $region128
        $region127: #{lm_backbone_forward.5} parent=91 // pred_region
          %779 = dma.done [#allocation21], 16
        $region128: #{lm_backbone_forward.5} parent=91 // pred_fallthru
          _
        // Predicated region
        $region129: #{lm_backbone_forward.5} parent=91 // pred_check
          %p780 = pneg %p273
        $region130: #{lm_backbone_forward.5} parent=91 // pred_check_branch
          %782 = sbr.rel (%p780) target = $region132
        $region131: #{lm_backbone_forward.5} parent=91 // pred_region
          %783 = dma.done [#allocation24], 128
        $region132: #{lm_backbone_forward.5} parent=91 // pred_fallthru
          _
        // Predicated region
        $region133: #{lm_backbone_forward.5} parent=91 // pred_check
          %p784 = pneg %p294
        $region134: #{lm_backbone_forward.5} parent=91 // pred_check_branch
          %786 = sbr.rel (%p784) target = $region136
        $region135: #{lm_backbone_forward.5} parent=91 // pred_region
          %787 = dma.done [#allocation24], 16
        $region136: #{lm_backbone_forward.5} parent=91 // pred_fallthru
          _
        // Predicated region
        $region137: #{lm_backbone_forward.5} parent=91 // pred_check
          %p788 = pneg %p315
        $region138: #{lm_backbone_forward.5} parent=91 // pred_check_branch
          %790 = sbr.rel (%p788) target = $region140
        $region139: #{lm_backbone_forward.5} parent=91 // pred_region
          %791 = dma.done [#allocation27], 512
        $region140: #{lm_backbone_forward.5} parent=91 // pred_fallthru
          _
        // Predicated region
        $region141: #{lm_backbone_forward.5} parent=91 // pred_check
          %p792 = pneg %p336
        $region142: #{lm_backbone_forward.5} parent=91 // pred_check_branch
          %794 = sbr.rel (%p792) target = $region144
        $region143: #{lm_backbone_forward.5} parent=91 // pred_region
          %795 = dma.done [#allocation27], 16
        $region144: #{lm_backbone_forward.5} parent=91 // pred_fallthru
          _
        // Predicated region
        $region145: #{lm_backbone_forward.5} parent=91 // pred_check
          %p796 = pneg %p357
        $region146: #{lm_backbone_forward.5} parent=91 // pred_check_branch
          %798 = sbr.rel (%p796) target = $region148
        $region147: #{lm_backbone_forward.5} parent=91 // pred_region
          %799 = dma.done [#allocation30], 16
        $region148: #{lm_backbone_forward.5} parent=91 // pred_fallthru
          _
        // Predicated region
        $region149: #{lm_backbone_forward.5} parent=91 // pred_check
          %p800 = pneg %p378
        $region150: #{lm_backbone_forward.5} parent=91 // pred_check_branch
          %802 = sbr.rel (%p800) target = $region152
        $region151: #{lm_backbone_forward.5} parent=91 // pred_region
          %803 = dma.done [#allocation30], 256
        $region152: #{lm_backbone_forward.5} parent=91 // pred_fallthru
          _
        // Predicated region
        $region153: #{lm_backbone_forward.5} parent=91 // pred_check
          %p804 = pneg %p399
        $region154: #{lm_backbone_forward.5} parent=91 // pred_check_branch
          %806 = sbr.rel (%p804) target = $region156
        $region155: #{lm_backbone_forward.5} parent=91 // pred_region
          %807 = dma.done [#allocation33], 16
        $region156: #{lm_backbone_forward.5} parent=91 // pred_fallthru
          _
        // Predicated region
        $region157: #{lm_backbone_forward.5} parent=91 // pred_check
          %p808 = pneg %p420
        $region158: #{lm_backbone_forward.5} parent=91 // pred_check_branch
          %810 = sbr.rel (%p808) target = $region160
        $region159: #{lm_backbone_forward.5} parent=91 // pred_region
          %811 = dma.done [#allocation33], 512
        $region160: #{lm_backbone_forward.5} parent=91 // pred_fallthru
          _
        // Predicated region
        $region161: #{lm_backbone_forward.5} parent=91 // pred_check
          %p812 = pneg %p441
        $region162: #{lm_backbone_forward.5} parent=91 // pred_check_branch
          %814 = sbr.rel (%p812) target = $region164
        $region163: #{lm_backbone_forward.5} parent=91 // pred_region
          %815 = dma.done [#allocation36], 16
        $region164: #{lm_backbone_forward.5} parent=91 // pred_fallthru
          _
        %s816 = sand.u32 %s71, 1
        %s817 = scalar_lea.sflag [#allocation9], %s816
        %s818 = sand.u32 %s71, 1
        %s819 = smul.addr %s818, 8
        %s820 = scalar_lea.vmem [#allocation8], %s819
        %p821 = pneg %p84
        %p822 = pneg %p81
        %p823 = pneg %p105
        %p824 = pneg %p102
        %p825 = pneg %p126
        %p826 = pneg %p123
        %p827 = pneg %p147
        %p828 = pneg %p144
        %p829 = pneg %p168
        %p830 = pneg %p165
        %p831 = pneg %p189
        %p832 = pneg %p186
        %p833 = pneg %p210
        %p834 = pneg %p207
        %p835 = pneg %p231
        %p836 = pneg %p228
        %p837 = pneg %p252
        %p838 = pneg %p249
        %p839 = pneg %p273
        %p840 = pneg %p270
        %p841 = pneg %p294
        %p842 = pneg %p291
        %p843 = pneg %p315
        %p844 = pneg %p312
        %p845 = pneg %p336
        %p846 = pneg %p333
        %p847 = pneg %p357
        %p848 = pneg %p354
        %p849 = pneg %p378
        %p850 = pneg %p375
        %p851 = pneg %p399
        %p852 = pneg %p396
        %p853 = pneg %p420
        %p854 = pneg %p417
        %p855 = pneg %p441
        %p856 = pneg %p438
        %p857 = pneg %p469
        %p858 = pneg %p466
        %s859 = sand.u32 %s456, 1
        %s860 = scalar_lea.sflag [#allocation10], %s859
        %s861 = sand.u32 %s456, 1
        %s862 = smul.addr %s861, 8
        %s863 = scalar_lea.vmem [#allocation37], %s862
        %p864 = pneg %p497
        %p865 = pneg %p494
        %s866 = sand.u32 %s484, 1
        %s867 = scalar_lea.sflag [#allocation39], %s866
        %s868 = sand.u32 %s484, 1
        %s869 = smul.addr %s868, 8
        %s870 = scalar_lea.vmem [#allocation38], %s869
        %p872 = scmp.eq.s32.totalorder %s54, 0
        // Predicated region
        $region165: #{lm_backbone_forward.5} parent=91 // pred_check
          %p873 = pneg %p872
        $region166: #{lm_backbone_forward.5} parent=91 // pred_check_branch
          %875 = sbr.rel (%p873) target = $region168
        $region167: #{lm_backbone_forward.5} parent=91 // pred_region
          %vm876 = vcmask 523264
          %877 = vst.msk [vmem:[#allocation2] sm:$0xff] %vm876, 0.0
          %878 = vst.msk [vmem:[#allocation3] sm:$0xff] %vm876, 0.0
        $region168: #{lm_backbone_forward.5} parent=91 // pred_fallthru
          _
        %v879 = vld [vmem:[%s743] sm:$0xff]
        %v880 = vld [vmem:[#allocation11] sm:$0x1]
        %v881 = vld [vmem:[#allocation13] sm:$0x1]
        %vm882 = vcmask 261120
        %v883 = vsel %vm882, %v879, 0.0
        %884 = vadd.xlane.f32.xlu0 %v883
        %v885 = vpop.xlane.xlu0 %884
        %v886 = vrcp.pop 32.0
        %v887 = vmul.f32 %v885, %v886
        %v888 = vsub.f32 %v879, %v887
        %v889 = vmul.f32 %v888, %v888
        %v890 = vsel %vm882, %v889, 0.0
        %891 = vadd.xlane.f32.xlu0 %v890
        %v892 = vpop.xlane.xlu0 %891
        %v893 = vmul.f32 %v892, %v886
        %v894 = vadd.f32 %v893, 1e-05
        %v895 = vrsqrt.pop %v894
        %v896 = vmul.f32 %v888, %v895
        %v898 = vlaneseq
        %v899 = vshrl.u32 %v898, 7
        %v900 = vsub.s32 0, %v899
        %v901 = vrot.slane %v880, %v900
        %v903 = vmul.f32 %v896, %v901
        %v905 = vlaneseq
        %v906 = vshrl.u32 %v905, 7
        %v907 = vsub.s32 0, %v906
        %v908 = vrot.slane %v881, %v907
        %v910 = vadd.f32 %v903, %v908
        %v911 = vld [vmem:[#allocation14] sm:$0xf]
        %v912 = vld [vmem:[#allocation14 + $0x4] sm:$0xf]
        %v913 = vld [vmem:[#allocation14 + $0x8] sm:$0xf]
        %v914 = vld [vmem:[#allocation14 + $0xc] sm:$0xf]
        %v915 = vpack.c.bf16 %v910, %v910
        %v920 = vunpack.c.l.b16 %v911
        %v921 = vunpack.c.l.b16 %v912
        %v922 = vunpack.c.l.b16 %v913
        %v923 = vunpack.c.l.b16 %v914
        %v924 = vpack.c.b16 %v921, %v920
        %v925 = vpack.c.b16 %v923, %v922
        %v929 = vsel %vm882, %v915, 0
        %931 = vmatprep.subr.bf16.mxu0 0
        %932 = vmatpush1.bf16.msra.mxu0 %v924
        %933 = vmatprep.subr.bf16.mxu0 0
        %934 = vmatpush1.bf16.msra.mxu0 %v925
        %935 = vmatprep.subr.bf16.mxu0 0
        %936 = vmatpush1.bf16.msra.mxu0 0
        %937 = vmatprep.subr.bf16.mxu0 0
        %938 = vmatpush1.bf16.msra.mxu0 0
        %939 = vmatprep.subr.bf16.mxu0 0
        %940 = vmatpush1.bf16.msra.mxu0 0
        %941 = vmatprep.subr.bf16.mxu0 0
        %942 = vmatpush1.bf16.msra.mxu0 0
        %943 = vmatprep.subr.bf16.mxu0 0
        %944 = vmatpush1.bf16.msra.mxu0 0
        %945 = vmatprep.subr.bf16.mxu0 0
        %946 = vmatpush1.bf16.msra.mxu0 0
        %947 = vmatprep.subr.bf16.mxu0 0
        %948 = vmatpush1.bf16.msra.mxu0 0
        %949 = vmatprep.subr.bf16.mxu0 0
        %950 = vmatpush1.bf16.msra.mxu0 0
        %951 = vmatprep.subr.bf16.mxu0 0
        %952 = vmatpush1.bf16.msra.mxu0 0
        %953 = vmatprep.subr.bf16.mxu0 0
        %954 = vmatpush1.bf16.msra.mxu0 0
        %955 = vmatprep.subr.bf16.mxu0 0
        %956 = vmatpush1.bf16.msra.mxu0 0
        %957 = vmatprep.subr.bf16.mxu0 0
        %958 = vmatpush1.bf16.msra.mxu0 0
        %959 = vmatprep.subr.bf16.mxu0 0
        %960 = vmatpush1.bf16.msra.mxu0 0
        %961 = vmatprep.subr.bf16.mxu0 0
        %962 = vmatpush1.bf16.msra.mxu0 0
        %963 = vmatprep.mubr.bf16.mxu0 0
        %964 = vmatmul.mubr.bf16.gmra.mrb[0].mxu0 %v929
        %v965 = vpop.f32.mrb[0].mxu0
        %v966 = vadd.f32 0.0, %v965
        %v967 = vpop.f32.mrb[0].mxu0
        %v968 = vpop.f32.mrb[0].mxu0
        %v969 = vpop.f32.mrb[0].mxu0
        %970 = vdwg.mxu0
        %v971 = vld [vmem:[#allocation16] sm:$0xf]
        %v972 = vld [vmem:[#allocation2] sm:$0xff]
        %v973 = vld [vmem:[#allocation17] sm:$0x1]
        %v974 = vlaneseq
        %v975 = vshrl.u32 %v974, 7
        %v976 = vsub.s32 3, %v975
        %v977 = vrot.slane %v971, %v976
        %v978 = vmul.f32 %v977, %v966
        %v980 = vlaneseq
        %v981 = vshrl.u32 %v980, 7
        %v982 = vsub.s32 0, %v981
        %v983 = vrot.slane %v973, %v982
        %v985 = vadd.f32 %v983, %v978
        %v986 = vlaneseq
        %v987 = vshrl.u32 %v986, 7
        %v988 = vsub.s32 0, %v987
        %v989 = vrot.slane %v971, %v988
        %v990 = vmul.f32 %v989, %v972
        %v991 = vmul.f32 %v989, %v966
        %vm994 = vcmask 1042432
        %v995 = vrot.slane %v990, 5
        %v996 = vrot.slane %v991, 5
        %v997 = vsel %vm994, %v995, %v996
        %v999 = vadd.f32 %v985, %v997
        %v1000 = vlaneseq
        %v1001 = vshrl.u32 %v1000, 7
        %v1002 = vsub.s32 1, %v1001
        %v1003 = vrot.slane %v971, %v1002
        %v1004 = vmul.f32 %v1003, %v972
        %v1005 = vmul.f32 %v1003, %v966
        %vm1008 = vcmask 1041408
        %v1009 = vrot.slane %v1004, 6
        %v1010 = vrot.slane %v1005, 6
        %v1011 = vsel %vm1008, %v1009, %v1010
        %v1013 = vadd.f32 %v999, %v1011
        %v1014 = vlaneseq
        %v1015 = vshrl.u32 %v1014, 7
        %v1016 = vsub.s32 2, %v1015
        %v1017 = vrot.slane %v971, %v1016
        %v1018 = vmul.f32 %v1017, %v972
        %v1019 = vmul.f32 %v1017, %v966
        %vm1022 = vcmask 1040384
        %v1023 = vrot.slane %v1018, 7
        %v1024 = vrot.slane %v1019, 7
        %v1025 = vsel %vm1022, %v1023, %v1024
        %v1027 = vadd.f32 %v1013, %v1025
        %v1028 = vmul.f32 %v1027, 0.5
        %v1029 = vtanh.pop %v1028
        %v1030 = vadd.f32 %v1029, 1.0
        %v1031 = vmul.f32 %v1030, 0.5
        %v1032 = vmul.f32 %v1027, %v1031
        %v1033 = vld [vmem:[#allocation19] sm:$0xf]
        %v1034 = vld [vmem:[#allocation19 + $0x4] sm:$0xf]
        %v1035 = vld [vmem:[#allocation19 + $0x8] sm:$0xf]
        %v1036 = vld [vmem:[#allocation19 + $0xc] sm:$0xf]
        %v1037 = vld [vmem:[#allocation19 + $0x10] sm:$0xf]
        %v1038 = vld [vmem:[#allocation19 + $0x14] sm:$0xf]
        %v1039 = vld [vmem:[#allocation19 + $0x18] sm:$0xf]
        %v1040 = vld [vmem:[#allocation19 + $0x1c] sm:$0xf]
        %v1041 = vpack.c.bf16 %v1032, %v1032
        %v1050 = vunpack.c.l.b16 %v1033
        %v1051 = vunpack.c.l.b16 %v1034
        %v1052 = vunpack.c.l.b16 %v1035
        %v1053 = vunpack.c.l.b16 %v1036
        %v1054 = vunpack.c.l.b16 %v1037
        %v1055 = vunpack.c.l.b16 %v1038
        %v1056 = vunpack.c.l.b16 %v1039
        %v1057 = vunpack.c.l.b16 %v1040
        %v1058 = vpack.c.b16 %v1051, %v1050
        %v1059 = vpack.c.b16 %v1053, %v1052
        %v1060 = vpack.c.b16 %v1055, %v1054
        %v1061 = vpack.c.b16 %v1057, %v1056
        %vm1066 = vcmask 523264
        %v1068 = vsel %vm1066, %v1041, 0
        %1070 = vmatprep.subr.bf16.mxu0 0
        %1071 = vmatpush1.bf16.msra.mxu0 %v1058
        %1072 = vmatprep.subr.bf16.mxu0 0
        %1073 = vmatpush1.bf16.msra.mxu0 %v1059
        %1074 = vmatprep.subr.bf16.mxu0 0
        %1075 = vmatpush1.bf16.msra.mxu0 %v1060
        %1076 = vmatprep.subr.bf16.mxu0 0
        %1077 = vmatpush1.bf16.msra.mxu0 %v1061
        %1078 = vmatprep.subr.bf16.mxu0 0
        %1079 = vmatpush1.bf16.msra.mxu0 0
        %1080 = vmatprep.subr.bf16.mxu0 0
        %1081 = vmatpush1.bf16.msra.mxu0 0
        %1082 = vmatprep.subr.bf16.mxu0 0
        %1083 = vmatpush1.bf16.msra.mxu0 0
        %1084 = vmatprep.subr.bf16.mxu0 0
        %1085 = vmatpush1.bf16.msra.mxu0 0
        %1086 = vmatprep.subr.bf16.mxu0 0
        %1087 = vmatpush1.bf16.msra.mxu0 0
        %1088 = vmatprep.subr.bf16.mxu0 0
        %1089 = vmatpush1.bf16.msra.mxu0 0
        %1090 = vmatprep.subr.bf16.mxu0 0
        %1091 = vmatpush1.bf16.msra.mxu0 0
        %1092 = vmatprep.subr.bf16.mxu0 0
        %1093 = vmatpush1.bf16.msra.mxu0 0
        %1094 = vmatprep.subr.bf16.mxu0 0
        %1095 = vmatpush1.bf16.msra.mxu0 0
        %1096 = vmatprep.subr.bf16.mxu0 0
        %1097 = vmatpush1.bf16.msra.mxu0 0
        %1098 = vmatprep.subr.bf16.mxu0 0
        %1099 = vmatpush1.bf16.msra.mxu0 0
        %1100 = vmatprep.subr.bf16.mxu0 0
        %1101 = vmatpush1.bf16.msra.mxu0 0
        %1102 = vmatprep.mubr.bf16.mxu0 0
        %1103 = vmatmul.mubr.bf16.gmra.mrb[0].mxu0 %v1068
        %v1104 = vpop.f32.mrb[0].mxu0
        %v1105 = vadd.f32 0.0, %v1104
        %v1106 = vpop.f32.mrb[0].mxu0
        %v1107 = vpop.f32.mrb[0].mxu0
        %v1108 = vpop.f32.mrb[0].mxu0
        %1109 = vdwg.mxu0
        %v1110 = vld [vmem:[#allocation20] sm:$0x1]
        %v1111 = vpack.c.bf16 %v1105, %v1105
        %v1112 = vld [vmem:[#allocation22] sm:$0x1]
        %v1114 = vlaneseq
        %v1115 = vshrl.u32 %v1114, 7
        %v1116 = vsub.s32 0, %v1115
        %v1117 = vrot.slane %v1112, %v1116
        %vm1119 = vcmask 15360
        %v1121 = vsel %vm1119, %v1111, 0
        %v1124 = vsel %vm1022, %v1110, 0
        %1126 = vmatprep.subr.bf16.mxu0 0
        %1127 = vmatpush1.bf16.msra.mxu0 %v1124
        %1128 = vmatprep.subr.bf16.mxu0 0
        %1129 = vmatpush1.bf16.msra.mxu0 0
        %1130 = vmatprep.subr.bf16.mxu0 0
        %1131 = vmatpush1.bf16.msra.mxu0 0
        %1132 = vmatprep.subr.bf16.mxu0 0
        %1133 = vmatpush1.bf16.msra.mxu0 0
        %1134 = vmatprep.subr.bf16.mxu0 0
        %1135 = vmatpush1.bf16.msra.mxu0 0
        %1136 = vmatprep.subr.bf16.mxu0 0
        %1137 = vmatpush1.bf16.msra.mxu0 0
        %1138 = vmatprep.subr.bf16.mxu0 0
        %1139 = vmatpush1.bf16.msra.mxu0 0
        %1140 = vmatprep.subr.bf16.mxu0 0
        %1141 = vmatpush1.bf16.msra.mxu0 0
        %1142 = vmatprep.subr.bf16.mxu0 0
        %1143 = vmatpush1.bf16.msra.mxu0 0
        %1144 = vmatprep.subr.bf16.mxu0 0
        %1145 = vmatpush1.bf16.msra.mxu0 0
        %1146 = vmatprep.subr.bf16.mxu0 0
        %1147 = vmatpush1.bf16.msra.mxu0 0
        %1148 = vmatprep.subr.bf16.mxu0 0
        %1149 = vmatpush1.bf16.msra.mxu0 0
        %1150 = vmatprep.subr.bf16.mxu0 0
        %1151 = vmatpush1.bf16.msra.mxu0 0
        %1152 = vmatprep.subr.bf16.mxu0 0
        %1153 = vmatpush1.bf16.msra.mxu0 0
        %1154 = vmatprep.subr.bf16.mxu0 0
        %1155 = vmatpush1.bf16.msra.mxu0 0
        %1156 = vmatprep.subr.bf16.mxu0 0
        %1157 = vmatpush1.bf16.msra.mxu0 0
        %1158 = vmatprep.mubr.bf16.mxu0 0
        %1159 = vmatmul.mubr.bf16.gmra.mrb[0].mxu0 %v1121
        %v1160 = vpop.f32.mrb[0].mxu0
        %v1161 = vadd.f32 %v1117, %v1160
        %v1162 = vpop.f32.mrb[0].mxu0
        %v1163 = vpop.f32.mrb[0].mxu0
        %v1164 = vpop.f32.mrb[0].mxu0
        %1165 = vdwg.mxu0
        %v1166 = vmax.f32 %v1161, 0.0
        %v1167 = vand.u32 2147483647, %v1161
        %v1168 = vsub.f32 0.0, %v1167
        %v1169 = vmul.f32 %v1168, 1.442695
        %v1170 = vpow.pop %v1169
        %v1171 = vadd.f32 %v1170, 1.0
        %v1172 = vlog2.pop %v1171
        %v1173 = vmul.f32 %v1172, 0.6931472
        %v1174 = vadd.f32 %v1166, %v1173
        %v1175 = vmul.f32 %v1174, %v1032
        %v1176 = vld [vmem:[#allocation23] sm:$0x1]
        %v1177 = vlaneseq
        %v1178 = vshrl.u32 %v1177, 7
        %v1179 = vsub.s32 0, %v1178
        %v1180 = vrot.slane %v1176, %v1179
        %v1181 = vmul.f32 %v1174, %v1180
        %v1182 = vmul.f32 %v1181, 1.442695
        %v1183 = vpow.pop %v1182
        %v1185 = vcombine.high %v1183, %v1183
        %v1187 = vunpack.c.l.s4 1966171168
        %v1188 = vunpack.c.0.s8 %v1187
        %v1189 = vlaneseq
        %v1190 = vshrl.u32 %v1189, 7
        %v1191 = vsub.s32 %v1188, %v1190
        %v1192 = vrot.slane %v1183, %v1191
        %v1194 = vunpack.c.l.s4 1966171168
        %v1195 = vunpack.c.0.s8 %v1194
        %v1196 = vlaneseq
        %v1197 = vshrl.u32 %v1196, 7
        %v1198 = vsub.s32 %v1195, %v1197
        %v1199 = vrot.slane %v1185, %v1198
        %v1200 = vcombine.high %v1192, %v1192
        %v1201 = vcombine.high %v1199, %v1199
        %v1203 = vunpack.c.l.s4 1966171168
        %v1204 = vunpack.c.0.s8 %v1203
        %v1205 = vlaneseq
        %v1206 = vshrl.u32 %v1205, 7
        %v1207 = vsub.s32 %v1204, %v1206
        %v1208 = vrot.slane %v1192, %v1207
        %v1210 = vunpack.c.l.s4 1966171168
        %v1211 = vunpack.c.0.s8 %v1210
        %v1212 = vlaneseq
        %v1213 = vshrl.u32 %v1212, 7
        %v1214 = vsub.s32 %v1211, %v1213
        %v1215 = vrot.slane %v1199, %v1214
        %v1217 = vunpack.c.l.s4 1966171168
        %v1218 = vunpack.c.0.s8 %v1217
        %v1219 = vlaneseq
        %v1220 = vshrl.u32 %v1219, 7
        %v1221 = vsub.s32 %v1218, %v1220
        %v1222 = vrot.slane %v1200, %v1221
        %v1224 = vunpack.c.l.s4 1966171168
        %v1225 = vunpack.c.0.s8 %v1224
        %v1226 = vlaneseq
        %v1227 = vshrl.u32 %v1226, 7
        %v1228 = vsub.s32 %v1225, %v1227
        %v1229 = vrot.slane %v1201, %v1228
        %v1230 = vcombine.high %v1208, %v1208
        %v1231 = vcombine.high %v1215, %v1215
        %v1232 = vcombine.high %v1222, %v1222
        %v1233 = vcombine.high %v1229, %v1229
        %vm1242 = vcmask 516096
        %1243 = vst.msk [vmem:[#allocation4] sm:$0x1] %vm1242, %v1208
        %1244 = vst.msk [vmem:[#allocation4 + $0x8] sm:$0x1] %vm1242, %v1222
        %1245 = vst.msk [vmem:[#allocation4 + $0x10] sm:$0x1] %vm1242, %v1230
        %1246 = vst.msk [vmem:[#allocation4 + $0x18] sm:$0x1] %vm1242, %v1232
        %1247 = vst.msk [vmem:[#allocation4 + $0x20] sm:$0x1] %vm1242, %v1215
        %1248 = vst.msk [vmem:[#allocation4 + $0x28] sm:$0x1] %vm1242, %v1229
        %1249 = vst.msk [vmem:[#allocation4 + $0x30] sm:$0x1] %vm1242, %v1231
        %1250 = vst.msk [vmem:[#allocation4 + $0x38] sm:$0x1] %vm1242, %v1233
        %1252 = vset.pattern.permute.xlu0 2
        %1253 = vperm.xlu0 %1252, %v1105
        %v1254 = vpop.permute.xlu0 %1253
        %v1256 = vmul.f32 %v1175, %v1254
        %v1258 = vcombine.high %v1256, %v1256
        %v1260 = vunpack.c.l.s4 1966171168
        %v1261 = vunpack.c.0.s8 %v1260
        %v1262 = vlaneseq
        %v1263 = vshrl.u32 %v1262, 7
        %v1264 = vsub.s32 %v1261, %v1263
        %v1265 = vrot.slane %v1256, %v1264
        %v1267 = vunpack.c.l.s4 1966171168
        %v1268 = vunpack.c.0.s8 %v1267
        %v1269 = vlaneseq
        %v1270 = vshrl.u32 %v1269, 7
        %v1271 = vsub.s32 %v1268, %v1270
        %v1272 = vrot.slane %v1258, %v1271
        %v1273 = vcombine.high %v1265, %v1265
        %v1274 = vcombine.high %v1272, %v1272
        %v1276 = vunpack.c.l.s4 1966171168
        %v1277 = vunpack.c.0.s8 %v1276
        %v1278 = vlaneseq
        %v1279 = vshrl.u32 %v1278, 7
        %v1280 = vsub.s32 %v1277, %v1279
        %v1281 = vrot.slane %v1265, %v1280
        %v1283 = vunpack.c.l.s4 1966171168
        %v1284 = vunpack.c.0.s8 %v1283
        %v1285 = vlaneseq
        %v1286 = vshrl.u32 %v1285, 7
        %v1287 = vsub.s32 %v1284, %v1286
        %v1288 = vrot.slane %v1272, %v1287
        %v1290 = vunpack.c.l.s4 1966171168
        %v1291 = vunpack.c.0.s8 %v1290
        %v1292 = vlaneseq
        %v1293 = vshrl.u32 %v1292, 7
        %v1294 = vsub.s32 %v1291, %v1293
        %v1295 = vrot.slane %v1273, %v1294
        %v1297 = vunpack.c.l.s4 1966171168
        %v1298 = vunpack.c.0.s8 %v1297
        %v1299 = vlaneseq
        %v1300 = vshrl.u32 %v1299, 7
        %v1301 = vsub.s32 %v1298, %v1300
        %v1302 = vrot.slane %v1274, %v1301
        %v1303 = vcombine.high %v1281, %v1281
        %v1304 = vcombine.high %v1288, %v1288
        %v1305 = vcombine.high %v1295, %v1295
        %v1306 = vcombine.high %v1302, %v1302
        %1315 = vst.msk [vmem:[#allocation5] sm:$0x1] %vm1242, %v1281
        %1316 = vst.msk [vmem:[#allocation5 + $0x8] sm:$0x1] %vm1242, %v1295
        %1317 = vst.msk [vmem:[#allocation5 + $0x10] sm:$0x1] %vm1242, %v1303
        %1318 = vst.msk [vmem:[#allocation5 + $0x18] sm:$0x1] %vm1242, %v1305
        %1319 = vst.msk [vmem:[#allocation5 + $0x20] sm:$0x1] %vm1242, %v1288
        %1320 = vst.msk [vmem:[#allocation5 + $0x28] sm:$0x1] %vm1242, %v1302
        %1321 = vst.msk [vmem:[#allocation5 + $0x30] sm:$0x1] %vm1242, %v1304
        %1322 = vst.msk [vmem:[#allocation5 + $0x38] sm:$0x1] %vm1242, %v1306
        %v1323 = vcombine.high %v1105, %v1105
        %v1325 = vunpack.c.l.s4 1966171168
        %v1326 = vunpack.c.0.s8 %v1325
        %v1327 = vlaneseq
        %v1328 = vshrl.u32 %v1327, 7
        %v1329 = vsub.s32 %v1326, %v1328
        %v1330 = vrot.slane %v1105, %v1329
        %v1332 = vunpack.c.l.s4 1966171168
        %v1333 = vunpack.c.0.s8 %v1332
        %v1334 = vlaneseq
        %v1335 = vshrl.u32 %v1334, 7
        %v1336 = vsub.s32 %v1333, %v1335
        %v1337 = vrot.slane %v1323, %v1336
        %v1338 = vcombine.high %v1330, %v1330
        %v1339 = vcombine.high %v1337, %v1337
        %v1341 = vunpack.c.l.s4 1966171168
        %v1342 = vunpack.c.0.s8 %v1341
        %v1343 = vlaneseq
        %v1344 = vshrl.u32 %v1343, 7
        %v1345 = vsub.s32 %v1342, %v1344
        %v1346 = vrot.slane %v1330, %v1345
        %v1348 = vunpack.c.l.s4 1966171168
        %v1349 = vunpack.c.0.s8 %v1348
        %v1350 = vlaneseq
        %v1351 = vshrl.u32 %v1350, 7
        %v1352 = vsub.s32 %v1349, %v1351
        %v1353 = vrot.slane %v1337, %v1352
        %v1355 = vunpack.c.l.s4 1966171168
        %v1356 = vunpack.c.0.s8 %v1355
        %v1357 = vlaneseq
        %v1358 = vshrl.u32 %v1357, 7
        %v1359 = vsub.s32 %v1356, %v1358
        %v1360 = vrot.slane %v1338, %v1359
        %v1362 = vunpack.c.l.s4 1966171168
        %v1363 = vunpack.c.0.s8 %v1362
        %v1364 = vlaneseq
        %v1365 = vshrl.u32 %v1364, 7
        %v1366 = vsub.s32 %v1363, %v1365
        %v1367 = vrot.slane %v1339, %v1366
        %v1368 = vcombine.high %v1346, %v1346
        %v1369 = vcombine.high %v1353, %v1353
        %v1370 = vcombine.high %v1360, %v1360
        %v1371 = vcombine.high %v1367, %v1367
        %v1372 = vlaneseq
        %v1373 = vshrl.u32 %v1372, 7
        %v1374 = vsub.s32 0, %v1373
        %v1375 = vrot.slane %v1346, %v1374
        %v1376 = vlaneseq
        %v1377 = vshrl.u32 %v1376, 7
        %v1378 = vsub.s32 0, %v1377
        %v1379 = vrot.slane %v1360, %v1378
        %v1380 = vlaneseq
        %v1381 = vshrl.u32 %v1380, 7
        %v1382 = vsub.s32 0, %v1381
        %v1383 = vrot.slane %v1368, %v1382
        %v1384 = vlaneseq
        %v1385 = vshrl.u32 %v1384, 7
        %v1386 = vsub.s32 0, %v1385
        %v1387 = vrot.slane %v1370, %v1386
        %v1388 = vlaneseq
        %v1389 = vshrl.u32 %v1388, 7
        %v1390 = vsub.s32 0, %v1389
        %v1391 = vrot.slane %v1353, %v1390
        %v1392 = vlaneseq
        %v1393 = vshrl.u32 %v1392, 7
        %v1394 = vsub.s32 0, %v1393
        %v1395 = vrot.slane %v1367, %v1394
        %v1396 = vlaneseq
        %v1397 = vshrl.u32 %v1396, 7
        %v1398 = vsub.s32 0, %v1397
        %v1399 = vrot.slane %v1369, %v1398
        %v1400 = vlaneseq
        %v1401 = vshrl.u32 %v1400, 7
        %v1402 = vsub.s32 0, %v1401
        %v1403 = vrot.slane %v1371, %v1402
        %1404 = vrot.lane.b32.xlu0 %v1375, 118
        %v1405 = vpop.permute.xlu0 %1404
        %1406 = vrot.lane.b32.xlu0 %v1379, 118
        %v1407 = vpop.permute.xlu0 %1406
        %1408 = vrot.lane.b32.xlu0 %v1383, 118
        %v1409 = vpop.permute.xlu0 %1408
        %1410 = vrot.lane.b32.xlu0 %v1387, 118
        %v1411 = vpop.permute.xlu0 %1410
        %1412 = vrot.lane.b32.xlu0 %v1391, 118
        %v1413 = vpop.permute.xlu0 %1412
        %1414 = vrot.lane.b32.xlu0 %v1395, 118
        %v1415 = vpop.permute.xlu0 %1414
        %1416 = vrot.lane.b32.xlu0 %v1399, 118
        %v1417 = vpop.permute.xlu0 %1416
        %1418 = vrot.lane.b32.xlu0 %v1403, 118
        %v1419 = vpop.permute.xlu0 %1418
        %vm1428 = vcmask 0
        %1429 = vst.msk [vmem:[#allocation6] sm:$0x1] %vm1428, %v1405
        %1430 = vst.msk [vmem:[#allocation6 + $0x8] sm:$0x1] %vm1428, %v1407
        %1431 = vst.msk [vmem:[#allocation6 + $0x10] sm:$0x1] %vm1428, %v1409
        %1432 = vst.msk [vmem:[#allocation6 + $0x18] sm:$0x1] %vm1428, %v1411
        %1433 = vst.msk [vmem:[#allocation6 + $0x20] sm:$0x1] %vm1428, %v1413
        %1434 = vst.msk [vmem:[#allocation6 + $0x28] sm:$0x1] %vm1428, %v1415
        %1435 = vst.msk [vmem:[#allocation6 + $0x30] sm:$0x1] %vm1428, %v1417
        %1436 = vst.msk [vmem:[#allocation6 + $0x38] sm:$0x1] %vm1428, %v1419
        %v1437 = vld [vmem:[#allocation23 + $0x1] sm:$0x1]
        %v1438 = vlaneseq
        %v1439 = vshrl.u32 %v1438, 7
        %v1440 = vsub.s32 0, %v1439
        %v1441 = vrot.slane %v1437, %v1440
        %v1442 = vmul.f32 %v1174, %v1441
        %v1443 = vmul.f32 %v1442, 1.442695
        %v1444 = vpow.pop %v1443
        %v1446 = vcombine.high %v1444, %v1444
        %v1448 = vunpack.c.l.s4 1966171168
        %v1449 = vunpack.c.0.s8 %v1448
        %v1450 = vlaneseq
        %v1451 = vshrl.u32 %v1450, 7
        %v1452 = vsub.s32 %v1449, %v1451
        %v1453 = vrot.slane %v1444, %v1452
        %v1455 = vunpack.c.l.s4 1966171168
        %v1456 = vunpack.c.0.s8 %v1455
        %v1457 = vlaneseq
        %v1458 = vshrl.u32 %v1457, 7
        %v1459 = vsub.s32 %v1456, %v1458
        %v1460 = vrot.slane %v1446, %v1459
        %v1461 = vcombine.high %v1453, %v1453
        %v1462 = vcombine.high %v1460, %v1460
        %v1464 = vunpack.c.l.s4 1966171168
        %v1465 = vunpack.c.0.s8 %v1464
        %v1466 = vlaneseq
        %v1467 = vshrl.u32 %v1466, 7
        %v1468 = vsub.s32 %v1465, %v1467
        %v1469 = vrot.slane %v1453, %v1468
        %v1471 = vunpack.c.l.s4 1966171168
        %v1472 = vunpack.c.0.s8 %v1471
        %v1473 = vlaneseq
        %v1474 = vshrl.u32 %v1473, 7
        %v1475 = vsub.s32 %v1472, %v1474
        %v1476 = vrot.slane %v1460, %v1475
        %v1478 = vunpack.c.l.s4 1966171168
        %v1479 = vunpack.c.0.s8 %v1478
        %v1480 = vlaneseq
        %v1481 = vshrl.u32 %v1480, 7
        %v1482 = vsub.s32 %v1479, %v1481
        %v1483 = vrot.slane %v1461, %v1482
        %v1485 = vunpack.c.l.s4 1966171168
        %v1486 = vunpack.c.0.s8 %v1485
        %v1487 = vlaneseq
        %v1488 = vshrl.u32 %v1487, 7
        %v1489 = vsub.s32 %v1486, %v1488
        %v1490 = vrot.slane %v1462, %v1489
        %v1491 = vcombine.high %v1469, %v1469
        %v1492 = vcombine.high %v1476, %v1476
        %v1493 = vcombine.high %v1483, %v1483
        %v1494 = vcombine.high %v1490, %v1490
        %1503 = vst.msk [vmem:[#allocation4 + $0x1] sm:$0x1] %vm1242, %v1469
        %1504 = vst.msk [vmem:[#allocation4 + $0x9] sm:$0x1] %vm1242, %v1483
        %1505 = vst.msk [vmem:[#allocation4 + $0x11] sm:$0x1] %vm1242, %v1491
        %1506 = vst.msk [vmem:[#allocation4 + $0x19] sm:$0x1] %vm1242, %v1493
        %1507 = vst.msk [vmem:[#allocation4 + $0x21] sm:$0x1] %vm1242, %v1476
        %1508 = vst.msk [vmem:[#allocation4 + $0x29] sm:$0x1] %vm1242, %v1490
        %1509 = vst.msk [vmem:[#allocation4 + $0x31] sm:$0x1] %vm1242, %v1492
        %1510 = vst.msk [vmem:[#allocation4 + $0x39] sm:$0x1] %vm1242, %v1494
        %1511 = vset.pattern.permute.xlu0 3
        %1512 = vperm.xlu0 %1511, %v1105
        %v1513 = vpop.permute.xlu0 %1512
        %v1515 = vmul.f32 %v1175, %v1513
        %v1517 = vcombine.high %v1515, %v1515
        %v1519 = vunpack.c.l.s4 1966171168
        %v1520 = vunpack.c.0.s8 %v1519
        %v1521 = vlaneseq
        %v1522 = vshrl.u32 %v1521, 7
        %v1523 = vsub.s32 %v1520, %v1522
        %v1524 = vrot.slane %v1515, %v1523
        %v1526 = vunpack.c.l.s4 1966171168
        %v1527 = vunpack.c.0.s8 %v1526
        %v1528 = vlaneseq
        %v1529 = vshrl.u32 %v1528, 7
        %v1530 = vsub.s32 %v1527, %v1529
        %v1531 = vrot.slane %v1517, %v1530
        %v1532 = vcombine.high %v1524, %v1524
        %v1533 = vcombine.high %v1531, %v1531
        %v1535 = vunpack.c.l.s4 1966171168
        %v1536 = vunpack.c.0.s8 %v1535
        %v1537 = vlaneseq
        %v1538 = vshrl.u32 %v1537, 7
        %v1539 = vsub.s32 %v1536, %v1538
        %v1540 = vrot.slane %v1524, %v1539
        %v1542 = vunpack.c.l.s4 1966171168
        %v1543 = vunpack.c.0.s8 %v1542
        %v1544 = vlaneseq
        %v1545 = vshrl.u32 %v1544, 7
        %v1546 = vsub.s32 %v1543, %v1545
        %v1547 = vrot.slane %v1531, %v1546
        %v1549 = vunpack.c.l.s4 1966171168
        %v1550 = vunpack.c.0.s8 %v1549
        %v1551 = vlaneseq
        %v1552 = vshrl.u32 %v1551, 7
        %v1553 = vsub.s32 %v1550, %v1552
        %v1554 = vrot.slane %v1532, %v1553
        %v1556 = vunpack.c.l.s4 1966171168
        %v1557 = vunpack.c.0.s8 %v1556
        %v1558 = vlaneseq
        %v1559 = vshrl.u32 %v1558, 7
        %v1560 = vsub.s32 %v1557, %v1559
        %v1561 = vrot.slane %v1533, %v1560
        %v1562 = vcombine.high %v1540, %v1540
        %v1563 = vcombine.high %v1547, %v1547
        %v1564 = vcombine.high %v1554, %v1554
        %v1565 = vcombine.high %v1561, %v1561
        %1574 = vst.msk [vmem:[#allocation5 + $0x1] sm:$0x1] %vm1242, %v1540
        %1575 = vst.msk [vmem:[#allocation5 + $0x9] sm:$0x1] %vm1242, %v1554
        %1576 = vst.msk [vmem:[#allocation5 + $0x11] sm:$0x1] %vm1242, %v1562
        %1577 = vst.msk [vmem:[#allocation5 + $0x19] sm:$0x1] %vm1242, %v1564
        %1578 = vst.msk [vmem:[#allocation5 + $0x21] sm:$0x1] %vm1242, %v1547
        %1579 = vst.msk [vmem:[#allocation5 + $0x29] sm:$0x1] %vm1242, %v1561
        %1580 = vst.msk [vmem:[#allocation5 + $0x31] sm:$0x1] %vm1242, %v1563
        %1581 = vst.msk [vmem:[#allocation5 + $0x39] sm:$0x1] %vm1242, %v1565
        %1582 = vrot.lane.b32.xlu0 %v1375, 117
        %v1583 = vpop.permute.xlu0 %1582
        %1584 = vrot.lane.b32.xlu0 %v1379, 117
        %v1585 = vpop.permute.xlu0 %1584
        %1586 = vrot.lane.b32.xlu0 %v1383, 117
        %v1587 = vpop.permute.xlu0 %1586
        %1588 = vrot.lane.b32.xlu0 %v1387, 117
        %v1589 = vpop.permute.xlu0 %1588
        %1590 = vrot.lane.b32.xlu0 %v1391, 117
        %v1591 = vpop.permute.xlu0 %1590
        %1592 = vrot.lane.b32.xlu0 %v1395, 117
        %v1593 = vpop.permute.xlu0 %1592
        %1594 = vrot.lane.b32.xlu0 %v1399, 117
        %v1595 = vpop.permute.xlu0 %1594
        %1596 = vrot.lane.b32.xlu0 %v1403, 117
        %v1597 = vpop.permute.xlu0 %1596
        %1606 = vst.msk [vmem:[#allocation6 + $0x1] sm:$0x1] %vm1428, %v1583
        %1607 = vst.msk [vmem:[#allocation6 + $0x9] sm:$0x1] %vm1428, %v1585
        %1608 = vst.msk [vmem:[#allocation6 + $0x11] sm:$0x1] %vm1428, %v1587
        %1609 = vst.msk [vmem:[#allocation6 + $0x19] sm:$0x1] %vm1428, %v1589
        %1610 = vst.msk [vmem:[#allocation6 + $0x21] sm:$0x1] %vm1428, %v1591
        %1611 = vst.msk [vmem:[#allocation6 + $0x29] sm:$0x1] %vm1428, %v1593
        %1612 = vst.msk [vmem:[#allocation6 + $0x31] sm:$0x1] %vm1428, %v1595
        %1613 = vst.msk [vmem:[#allocation6 + $0x39] sm:$0x1] %vm1428, %v1597
        %v1614 = vld [vmem:[#allocation23 + $0x2] sm:$0x1]
        %v1615 = vlaneseq
        %v1616 = vshrl.u32 %v1615, 7
        %v1617 = vsub.s32 0, %v1616
        %v1618 = vrot.slane %v1614, %v1617
        %v1619 = vmul.f32 %v1174, %v1618
        %v1620 = vmul.f32 %v1619, 1.442695
        %v1621 = vpow.pop %v1620
        %v1623 = vcombine.high %v1621, %v1621
        %v1625 = vunpack.c.l.s4 1966171168
        %v1626 = vunpack.c.0.s8 %v1625
        %v1627 = vlaneseq
        %v1628 = vshrl.u32 %v1627, 7
        %v1629 = vsub.s32 %v1626, %v1628
        %v1630 = vrot.slane %v1621, %v1629
        %v1632 = vunpack.c.l.s4 1966171168
        %v1633 = vunpack.c.0.s8 %v1632
        %v1634 = vlaneseq
        %v1635 = vshrl.u32 %v1634, 7
        %v1636 = vsub.s32 %v1633, %v1635
        %v1637 = vrot.slane %v1623, %v1636
        %v1638 = vcombine.high %v1630, %v1630
        %v1639 = vcombine.high %v1637, %v1637
        %v1641 = vunpack.c.l.s4 1966171168
        %v1642 = vunpack.c.0.s8 %v1641
        %v1643 = vlaneseq
        %v1644 = vshrl.u32 %v1643, 7
        %v1645 = vsub.s32 %v1642, %v1644
        %v1646 = vrot.slane %v1630, %v1645
        %v1648 = vunpack.c.l.s4 1966171168
        %v1649 = vunpack.c.0.s8 %v1648
        %v1650 = vlaneseq
        %v1651 = vshrl.u32 %v1650, 7
        %v1652 = vsub.s32 %v1649, %v1651
        %v1653 = vrot.slane %v1637, %v1652
        %v1655 = vunpack.c.l.s4 1966171168
        %v1656 = vunpack.c.0.s8 %v1655
        %v1657 = vlaneseq
        %v1658 = vshrl.u32 %v1657, 7
        %v1659 = vsub.s32 %v1656, %v1658
        %v1660 = vrot.slane %v1638, %v1659
        %v1662 = vunpack.c.l.s4 1966171168
        %v1663 = vunpack.c.0.s8 %v1662
        %v1664 = vlaneseq
        %v1665 = vshrl.u32 %v1664, 7
        %v1666 = vsub.s32 %v1663, %v1665
        %v1667 = vrot.slane %v1639, %v1666
        %v1668 = vcombine.high %v1646, %v1646
        %v1669 = vcombine.high %v1653, %v1653
        %v1670 = vcombine.high %v1660, %v1660
        %v1671 = vcombine.high %v1667, %v1667
        %1680 = vst.msk [vmem:[#allocation4 + $0x2] sm:$0x1] %vm1242, %v1646
        %1681 = vst.msk [vmem:[#allocation4 + $0xa] sm:$0x1] %vm1242, %v1660
        %1682 = vst.msk [vmem:[#allocation4 + $0x12] sm:$0x1] %vm1242, %v1668
        %1683 = vst.msk [vmem:[#allocation4 + $0x1a] sm:$0x1] %vm1242, %v1670
        %1684 = vst.msk [vmem:[#allocation4 + $0x22] sm:$0x1] %vm1242, %v1653
        %1685 = vst.msk [vmem:[#allocation4 + $0x2a] sm:$0x1] %vm1242, %v1667
        %1686 = vst.msk [vmem:[#allocation4 + $0x32] sm:$0x1] %vm1242, %v1669
        %1687 = vst.msk [vmem:[#allocation4 + $0x3a] sm:$0x1] %vm1242, %v1671
        %1688 = vset.pattern.permute.xlu0 4
        %1689 = vperm.xlu0 %1688, %v1105
        %v1690 = vpop.permute.xlu0 %1689
        %v1692 = vmul.f32 %v1175, %v1690
        %v1694 = vcombine.high %v1692, %v1692
        %v1696 = vunpack.c.l.s4 1966171168
        %v1697 = vunpack.c.0.s8 %v1696
        %v1698 = vlaneseq
        %v1699 = vshrl.u32 %v1698, 7
        %v1700 = vsub.s32 %v1697, %v1699
        %v1701 = vrot.slane %v1692, %v1700
        %v1703 = vunpack.c.l.s4 1966171168
        %v1704 = vunpack.c.0.s8 %v1703
        %v1705 = vlaneseq
        %v1706 = vshrl.u32 %v1705, 7
        %v1707 = vsub.s32 %v1704, %v1706
        %v1708 = vrot.slane %v1694, %v1707
        %v1709 = vcombine.high %v1701, %v1701
        %v1710 = vcombine.high %v1708, %v1708
        %v1712 = vunpack.c.l.s4 1966171168
        %v1713 = vunpack.c.0.s8 %v1712
        %v1714 = vlaneseq
        %v1715 = vshrl.u32 %v1714, 7
        %v1716 = vsub.s32 %v1713, %v1715
        %v1717 = vrot.slane %v1701, %v1716
        %v1719 = vunpack.c.l.s4 1966171168
        %v1720 = vunpack.c.0.s8 %v1719
        %v1721 = vlaneseq
        %v1722 = vshrl.u32 %v1721, 7
        %v1723 = vsub.s32 %v1720, %v1722
        %v1724 = vrot.slane %v1708, %v1723
        %v1726 = vunpack.c.l.s4 1966171168
        %v1727 = vunpack.c.0.s8 %v1726
        %v1728 = vlaneseq
        %v1729 = vshrl.u32 %v1728, 7
        %v1730 = vsub.s32 %v1727, %v1729
        %v1731 = vrot.slane %v1709, %v1730
        %v1733 = vunpack.c.l.s4 1966171168
        %v1734 = vunpack.c.0.s8 %v1733
        %v1735 = vlaneseq
        %v1736 = vshrl.u32 %v1735, 7
        %v1737 = vsub.s32 %v1734, %v1736
        %v1738 = vrot.slane %v1710, %v1737
        %v1739 = vcombine.high %v1717, %v1717
        %v1740 = vcombine.high %v1724, %v1724
        %v1741 = vcombine.high %v1731, %v1731
        %v1742 = vcombine.high %v1738, %v1738
        %1751 = vst.msk [vmem:[#allocation5 + $0x2] sm:$0x1] %vm1242, %v1717
        %1752 = vst.msk [vmem:[#allocation5 + $0xa] sm:$0x1] %vm1242, %v1731
        %1753 = vst.msk [vmem:[#allocation5 + $0x12] sm:$0x1] %vm1242, %v1739
        %1754 = vst.msk [vmem:[#allocation5 + $0x1a] sm:$0x1] %vm1242, %v1741
        %1755 = vst.msk [vmem:[#allocation5 + $0x22] sm:$0x1] %vm1242, %v1724
        %1756 = vst.msk [vmem:[#allocation5 + $0x2a] sm:$0x1] %vm1242, %v1738
        %1757 = vst.msk [vmem:[#allocation5 + $0x32] sm:$0x1] %vm1242, %v1740
        %1758 = vst.msk [vmem:[#allocation5 + $0x3a] sm:$0x1] %vm1242, %v1742
        %1759 = vrot.lane.b32.xlu0 %v1375, 116
        %v1760 = vpop.permute.xlu0 %1759
        %1761 = vrot.lane.b32.xlu0 %v1379, 116
        %v1762 = vpop.permute.xlu0 %1761
        %1763 = vrot.lane.b32.xlu0 %v1383, 116
        %v1764 = vpop.permute.xlu0 %1763
        %1765 = vrot.lane.b32.xlu0 %v1387, 116
        %v1766 = vpop.permute.xlu0 %1765
        %1767 = vrot.lane.b32.xlu0 %v1391, 116
        %v1768 = vpop.permute.xlu0 %1767
        %1769 = vrot.lane.b32.xlu0 %v1395, 116
        %v1770 = vpop.permute.xlu0 %1769
        %1771 = vrot.lane.b32.xlu0 %v1399, 116
        %v1772 = vpop.permute.xlu0 %1771
        %1773 = vrot.lane.b32.xlu0 %v1403, 116
        %v1774 = vpop.permute.xlu0 %1773
        %1783 = vst.msk [vmem:[#allocation6 + $0x2] sm:$0x1] %vm1428, %v1760
        %1784 = vst.msk [vmem:[#allocation6 + $0xa] sm:$0x1] %vm1428, %v1762
        %1785 = vst.msk [vmem:[#allocation6 + $0x12] sm:$0x1] %vm1428, %v1764
        %1786 = vst.msk [vmem:[#allocation6 + $0x1a] sm:$0x1] %vm1428, %v1766
        %1787 = vst.msk [vmem:[#allocation6 + $0x22] sm:$0x1] %vm1428, %v1768
        %1788 = vst.msk [vmem:[#allocation6 + $0x2a] sm:$0x1] %vm1428, %v1770
        %1789 = vst.msk [vmem:[#allocation6 + $0x32] sm:$0x1] %vm1428, %v1772
        %1790 = vst.msk [vmem:[#allocation6 + $0x3a] sm:$0x1] %vm1428, %v1774
        %v1791 = vld [vmem:[#allocation23 + $0x3] sm:$0x1]
        %v1792 = vlaneseq
        %v1793 = vshrl.u32 %v1792, 7
        %v1794 = vsub.s32 0, %v1793
        %v1795 = vrot.slane %v1791, %v1794
        %v1796 = vmul.f32 %v1174, %v1795
        %v1797 = vmul.f32 %v1796, 1.442695
        %v1798 = vpow.pop %v1797
        %v1800 = vcombine.high %v1798, %v1798
        %v1802 = vunpack.c.l.s4 1966171168
        %v1803 = vunpack.c.0.s8 %v1802
        %v1804 = vlaneseq
        %v1805 = vshrl.u32 %v1804, 7
        %v1806 = vsub.s32 %v1803, %v1805
        %v1807 = vrot.slane %v1798, %v1806
        %v1809 = vunpack.c.l.s4 1966171168
        %v1810 = vunpack.c.0.s8 %v1809
        %v1811 = vlaneseq
        %v1812 = vshrl.u32 %v1811, 7
        %v1813 = vsub.s32 %v1810, %v1812
        %v1814 = vrot.slane %v1800, %v1813
        %v1815 = vcombine.high %v1807, %v1807
        %v1816 = vcombine.high %v1814, %v1814
        %v1818 = vunpack.c.l.s4 1966171168
        %v1819 = vunpack.c.0.s8 %v1818
        %v1820 = vlaneseq
        %v1821 = vshrl.u32 %v1820, 7
        %v1822 = vsub.s32 %v1819, %v1821
        %v1823 = vrot.slane %v1807, %v1822
        %v1825 = vunpack.c.l.s4 1966171168
        %v1826 = vunpack.c.0.s8 %v1825
        %v1827 = vlaneseq
        %v1828 = vshrl.u32 %v1827, 7
        %v1829 = vsub.s32 %v1826, %v1828
        %v1830 = vrot.slane %v1814, %v1829
        %v1832 = vunpack.c.l.s4 1966171168
        %v1833 = vunpack.c.0.s8 %v1832
        %v1834 = vlaneseq
        %v1835 = vshrl.u32 %v1834, 7
        %v1836 = vsub.s32 %v1833, %v1835
        %v1837 = vrot.slane %v1815, %v1836
        %v1839 = vunpack.c.l.s4 1966171168
        %v1840 = vunpack.c.0.s8 %v1839
        %v1841 = vlaneseq
        %v1842 = vshrl.u32 %v1841, 7
        %v1843 = vsub.s32 %v1840, %v1842
        %v1844 = vrot.slane %v1816, %v1843
        %v1845 = vcombine.high %v1823, %v1823
        %v1846 = vcombine.high %v1830, %v1830
        %v1847 = vcombine.high %v1837, %v1837
        %v1848 = vcombine.high %v1844, %v1844
        %1857 = vst.msk [vmem:[#allocation4 + $0x3] sm:$0x1] %vm1242, %v1823
        %1858 = vst.msk [vmem:[#allocation4 + $0xb] sm:$0x1] %vm1242, %v1837
        %1859 = vst.msk [vmem:[#allocation4 + $0x13] sm:$0x1] %vm1242, %v1845
        %1860 = vst.msk [vmem:[#allocation4 + $0x1b] sm:$0x1] %vm1242, %v1847
        %1861 = vst.msk [vmem:[#allocation4 + $0x23] sm:$0x1] %vm1242, %v1830
        %1862 = vst.msk [vmem:[#allocation4 + $0x2b] sm:$0x1] %vm1242, %v1844
        %1863 = vst.msk [vmem:[#allocation4 + $0x33] sm:$0x1] %vm1242, %v1846
        %1864 = vst.msk [vmem:[#allocation4 + $0x3b] sm:$0x1] %vm1242, %v1848
        %1865 = vset.pattern.permute.xlu0 5
        %1866 = vperm.xlu0 %1865, %v1105
        %v1867 = vpop.permute.xlu0 %1866
        %v1869 = vmul.f32 %v1175, %v1867
        %v1871 = vcombine.high %v1869, %v1869
        %v1873 = vunpack.c.l.s4 1966171168
        %v1874 = vunpack.c.0.s8 %v1873
        %v1875 = vlaneseq
        %v1876 = vshrl.u32 %v1875, 7
        %v1877 = vsub.s32 %v1874, %v1876
        %v1878 = vrot.slane %v1869, %v1877
        %v1880 = vunpack.c.l.s4 1966171168
        %v1881 = vunpack.c.0.s8 %v1880
        %v1882 = vlaneseq
        %v1883 = vshrl.u32 %v1882, 7
        %v1884 = vsub.s32 %v1881, %v1883
        %v1885 = vrot.slane %v1871, %v1884
        %v1886 = vcombine.high %v1878, %v1878
        %v1887 = vcombine.high %v1885, %v1885
        %v1889 = vunpack.c.l.s4 1966171168
        %v1890 = vunpack.c.0.s8 %v1889
        %v1891 = vlaneseq
        %v1892 = vshrl.u32 %v1891, 7
        %v1893 = vsub.s32 %v1890, %v1892
        %v1894 = vrot.slane %v1878, %v1893
        %v1896 = vunpack.c.l.s4 1966171168
        %v1897 = vunpack.c.0.s8 %v1896
        %v1898 = vlaneseq
        %v1899 = vshrl.u32 %v1898, 7
        %v1900 = vsub.s32 %v1897, %v1899
        %v1901 = vrot.slane %v1885, %v1900
        %v1903 = vunpack.c.l.s4 1966171168
        %v1904 = vunpack.c.0.s8 %v1903
        %v1905 = vlaneseq
        %v1906 = vshrl.u32 %v1905, 7
        %v1907 = vsub.s32 %v1904, %v1906
        %v1908 = vrot.slane %v1886, %v1907
        %v1910 = vunpack.c.l.s4 1966171168
        %v1911 = vunpack.c.0.s8 %v1910
        %v1912 = vlaneseq
        %v1913 = vshrl.u32 %v1912, 7
        %v1914 = vsub.s32 %v1911, %v1913
        %v1915 = vrot.slane %v1887, %v1914
        %v1916 = vcombine.high %v1894, %v1894
        %v1917 = vcombine.high %v1901, %v1901
        %v1918 = vcombine.high %v1908, %v1908
        %v1919 = vcombine.high %v1915, %v1915
        %1928 = vst.msk [vmem:[#allocation5 + $0x3] sm:$0x1] %vm1242, %v1894
        %1929 = vst.msk [vmem:[#allocation5 + $0xb] sm:$0x1] %vm1242, %v1908
        %1930 = vst.msk [vmem:[#allocation5 + $0x13] sm:$0x1] %vm1242, %v1916
        %1931 = vst.msk [vmem:[#allocation5 + $0x1b] sm:$0x1] %vm1242, %v1918
        %1932 = vst.msk [vmem:[#allocation5 + $0x23] sm:$0x1] %vm1242, %v1901
        %1933 = vst.msk [vmem:[#allocation5 + $0x2b] sm:$0x1] %vm1242, %v1915
        %1934 = vst.msk [vmem:[#allocation5 + $0x33] sm:$0x1] %vm1242, %v1917
        %1935 = vst.msk [vmem:[#allocation5 + $0x3b] sm:$0x1] %vm1242, %v1919
        %1936 = vrot.lane.b32.xlu0 %v1375, 115
        %v1937 = vpop.permute.xlu0 %1936
        %1938 = vrot.lane.b32.xlu0 %v1379, 115
        %v1939 = vpop.permute.xlu0 %1938
        %1940 = vrot.lane.b32.xlu0 %v1383, 115
        %v1941 = vpop.permute.xlu0 %1940
        %1942 = vrot.lane.b32.xlu0 %v1387, 115
        %v1943 = vpop.permute.xlu0 %1942
        %1944 = vrot.lane.b32.xlu0 %v1391, 115
        %v1945 = vpop.permute.xlu0 %1944
        %1946 = vrot.lane.b32.xlu0 %v1395, 115
        %v1947 = vpop.permute.xlu0 %1946
        %1948 = vrot.lane.b32.xlu0 %v1399, 115
        %v1949 = vpop.permute.xlu0 %1948
        %1950 = vrot.lane.b32.xlu0 %v1403, 115
        %v1951 = vpop.permute.xlu0 %1950
        %1960 = vst.msk [vmem:[#allocation6 + $0x3] sm:$0x1] %vm1428, %v1937
        %1961 = vst.msk [vmem:[#allocation6 + $0xb] sm:$0x1] %vm1428, %v1939
        %1962 = vst.msk [vmem:[#allocation6 + $0x13] sm:$0x1] %vm1428, %v1941
        %1963 = vst.msk [vmem:[#allocation6 + $0x1b] sm:$0x1] %vm1428, %v1943
        %1964 = vst.msk [vmem:[#allocation6 + $0x23] sm:$0x1] %vm1428, %v1945
        %1965 = vst.msk [vmem:[#allocation6 + $0x2b] sm:$0x1] %vm1428, %v1947
        %1966 = vst.msk [vmem:[#allocation6 + $0x33] sm:$0x1] %vm1428, %v1949
        %1967 = vst.msk [vmem:[#allocation6 + $0x3b] sm:$0x1] %vm1428, %v1951
        %v1968 = vld [vmem:[#allocation23 + $0x4] sm:$0x1]
        %v1969 = vlaneseq
        %v1970 = vshrl.u32 %v1969, 7
        %v1971 = vsub.s32 0, %v1970
        %v1972 = vrot.slane %v1968, %v1971
        %v1973 = vmul.f32 %v1174, %v1972
        %v1974 = vmul.f32 %v1973, 1.442695
        %v1975 = vpow.pop %v1974
        %v1977 = vcombine.high %v1975, %v1975
        %v1979 = vunpack.c.l.s4 1966171168
        %v1980 = vunpack.c.0.s8 %v1979
        %v1981 = vlaneseq
        %v1982 = vshrl.u32 %v1981, 7
        %v1983 = vsub.s32 %v1980, %v1982
        %v1984 = vrot.slane %v1975, %v1983
        %v1986 = vunpack.c.l.s4 1966171168
        %v1987 = vunpack.c.0.s8 %v1986
        %v1988 = vlaneseq
        %v1989 = vshrl.u32 %v1988, 7
        %v1990 = vsub.s32 %v1987, %v1989
        %v1991 = vrot.slane %v1977, %v1990
        %v1992 = vcombine.high %v1984, %v1984
        %v1993 = vcombine.high %v1991, %v1991
        %v1995 = vunpack.c.l.s4 1966171168
        %v1996 = vunpack.c.0.s8 %v1995
        %v1997 = vlaneseq
        %v1998 = vshrl.u32 %v1997, 7
        %v1999 = vsub.s32 %v1996, %v1998
        %v2000 = vrot.slane %v1984, %v1999
        %v2002 = vunpack.c.l.s4 1966171168
        %v2003 = vunpack.c.0.s8 %v2002
        %v2004 = vlaneseq
        %v2005 = vshrl.u32 %v2004, 7
        %v2006 = vsub.s32 %v2003, %v2005
        %v2007 = vrot.slane %v1991, %v2006
        %v2009 = vunpack.c.l.s4 1966171168
        %v2010 = vunpack.c.0.s8 %v2009
        %v2011 = vlaneseq
        %v2012 = vshrl.u32 %v2011, 7
        %v2013 = vsub.s32 %v2010, %v2012
        %v2014 = vrot.slane %v1992, %v2013
        %v2016 = vunpack.c.l.s4 1966171168
        %v2017 = vunpack.c.0.s8 %v2016
        %v2018 = vlaneseq
        %v2019 = vshrl.u32 %v2018, 7
        %v2020 = vsub.s32 %v2017, %v2019
        %v2021 = vrot.slane %v1993, %v2020
        %v2022 = vcombine.high %v2000, %v2000
        %v2023 = vcombine.high %v2007, %v2007
        %v2024 = vcombine.high %v2014, %v2014
        %v2025 = vcombine.high %v2021, %v2021
        %2034 = vst.msk [vmem:[#allocation4 + $0x4] sm:$0x1] %vm1242, %v2000
        %2035 = vst.msk [vmem:[#allocation4 + $0xc] sm:$0x1] %vm1242, %v2014
        %2036 = vst.msk [vmem:[#allocation4 + $0x14] sm:$0x1] %vm1242, %v2022
        %2037 = vst.msk [vmem:[#allocation4 + $0x1c] sm:$0x1] %vm1242, %v2024
        %2038 = vst.msk [vmem:[#allocation4 + $0x24] sm:$0x1] %vm1242, %v2007
        %2039 = vst.msk [vmem:[#allocation4 + $0x2c] sm:$0x1] %vm1242, %v2021
        %2040 = vst.msk [vmem:[#allocation4 + $0x34] sm:$0x1] %vm1242, %v2023
        %2041 = vst.msk [vmem:[#allocation4 + $0x3c] sm:$0x1] %vm1242, %v2025
        %2042 = vset.pattern.permute.xlu0 6
        %2043 = vperm.xlu0 %2042, %v1105
        %v2044 = vpop.permute.xlu0 %2043
        %v2046 = vmul.f32 %v1175, %v2044
        %v2048 = vcombine.high %v2046, %v2046
        %v2050 = vunpack.c.l.s4 1966171168
        %v2051 = vunpack.c.0.s8 %v2050
        %v2052 = vlaneseq
        %v2053 = vshrl.u32 %v2052, 7
        %v2054 = vsub.s32 %v2051, %v2053
        %v2055 = vrot.slane %v2046, %v2054
        %v2057 = vunpack.c.l.s4 1966171168
        %v2058 = vunpack.c.0.s8 %v2057
        %v2059 = vlaneseq
        %v2060 = vshrl.u32 %v2059, 7
        %v2061 = vsub.s32 %v2058, %v2060
        %v2062 = vrot.slane %v2048, %v2061
        %v2063 = vcombine.high %v2055, %v2055
        %v2064 = vcombine.high %v2062, %v2062
        %v2066 = vunpack.c.l.s4 1966171168
        %v2067 = vunpack.c.0.s8 %v2066
        %v2068 = vlaneseq
        %v2069 = vshrl.u32 %v2068, 7
        %v2070 = vsub.s32 %v2067, %v2069
        %v2071 = vrot.slane %v2055, %v2070
        %v2073 = vunpack.c.l.s4 1966171168
        %v2074 = vunpack.c.0.s8 %v2073
        %v2075 = vlaneseq
        %v2076 = vshrl.u32 %v2075, 7
        %v2077 = vsub.s32 %v2074, %v2076
        %v2078 = vrot.slane %v2062, %v2077
        %v2080 = vunpack.c.l.s4 1966171168
        %v2081 = vunpack.c.0.s8 %v2080
        %v2082 = vlaneseq
        %v2083 = vshrl.u32 %v2082, 7
        %v2084 = vsub.s32 %v2081, %v2083
        %v2085 = vrot.slane %v2063, %v2084
        %v2087 = vunpack.c.l.s4 1966171168
        %v2088 = vunpack.c.0.s8 %v2087
        %v2089 = vlaneseq
        %v2090 = vshrl.u32 %v2089, 7
        %v2091 = vsub.s32 %v2088, %v2090
        %v2092 = vrot.slane %v2064, %v2091
        %v2093 = vcombine.high %v2071, %v2071
        %v2094 = vcombine.high %v2078, %v2078
        %v2095 = vcombine.high %v2085, %v2085
        %v2096 = vcombine.high %v2092, %v2092
        %2105 = vst.msk [vmem:[#allocation5 + $0x4] sm:$0x1] %vm1242, %v2071
        %2106 = vst.msk [vmem:[#allocation5 + $0xc] sm:$0x1] %vm1242, %v2085
        %2107 = vst.msk [vmem:[#allocation5 + $0x14] sm:$0x1] %vm1242, %v2093
        %2108 = vst.msk [vmem:[#allocation5 + $0x1c] sm:$0x1] %vm1242, %v2095
        %2109 = vst.msk [vmem:[#allocation5 + $0x24] sm:$0x1] %vm1242, %v2078
        %2110 = vst.msk [vmem:[#allocation5 + $0x2c] sm:$0x1] %vm1242, %v2092
        %2111 = vst.msk [vmem:[#allocation5 + $0x34] sm:$0x1] %vm1242, %v2094
        %2112 = vst.msk [vmem:[#allocation5 + $0x3c] sm:$0x1] %vm1242, %v2096
        %2113 = vrot.lane.b32.xlu0 %v1375, 114
        %v2114 = vpop.permute.xlu0 %2113
        %2115 = vrot.lane.b32.xlu0 %v1379, 114
        %v2116 = vpop.permute.xlu0 %2115
        %2117 = vrot.lane.b32.xlu0 %v1383, 114
        %v2118 = vpop.permute.xlu0 %2117
        %2119 = vrot.lane.b32.xlu0 %v1387, 114
        %v2120 = vpop.permute.xlu0 %2119
        %2121 = vrot.lane.b32.xlu0 %v1391, 114
        %v2122 = vpop.permute.xlu0 %2121
        %2123 = vrot.lane.b32.xlu0 %v1395, 114
        %v2124 = vpop.permute.xlu0 %2123
        %2125 = vrot.lane.b32.xlu0 %v1399, 114
        %v2126 = vpop.permute.xlu0 %2125
        %2127 = vrot.lane.b32.xlu0 %v1403, 114
        %v2128 = vpop.permute.xlu0 %2127
        %2137 = vst.msk [vmem:[#allocation6 + $0x4] sm:$0x1] %vm1428, %v2114
        %2138 = vst.msk [vmem:[#allocation6 + $0xc] sm:$0x1] %vm1428, %v2116
        %2139 = vst.msk [vmem:[#allocation6 + $0x14] sm:$0x1] %vm1428, %v2118
        %2140 = vst.msk [vmem:[#allocation6 + $0x1c] sm:$0x1] %vm1428, %v2120
        %2141 = vst.msk [vmem:[#allocation6 + $0x24] sm:$0x1] %vm1428, %v2122
        %2142 = vst.msk [vmem:[#allocation6 + $0x2c] sm:$0x1] %vm1428, %v2124
        %2143 = vst.msk [vmem:[#allocation6 + $0x34] sm:$0x1] %vm1428, %v2126
        %2144 = vst.msk [vmem:[#allocation6 + $0x3c] sm:$0x1] %vm1428, %v2128
        %v2145 = vld [vmem:[#allocation23 + $0x5] sm:$0x1]
        %v2146 = vlaneseq
        %v2147 = vshrl.u32 %v2146, 7
        %v2148 = vsub.s32 0, %v2147
        %v2149 = vrot.slane %v2145, %v2148
        %v2150 = vmul.f32 %v1174, %v2149
        %v2151 = vmul.f32 %v2150, 1.442695
        %v2152 = vpow.pop %v2151
        %v2154 = vcombine.high %v2152, %v2152
        %v2156 = vunpack.c.l.s4 1966171168
        %v2157 = vunpack.c.0.s8 %v2156
        %v2158 = vlaneseq
        %v2159 = vshrl.u32 %v2158, 7
        %v2160 = vsub.s32 %v2157, %v2159
        %v2161 = vrot.slane %v2152, %v2160
        %v2163 = vunpack.c.l.s4 1966171168
        %v2164 = vunpack.c.0.s8 %v2163
        %v2165 = vlaneseq
        %v2166 = vshrl.u32 %v2165, 7
        %v2167 = vsub.s32 %v2164, %v2166
        %v2168 = vrot.slane %v2154, %v2167
        %v2169 = vcombine.high %v2161, %v2161
        %v2170 = vcombine.high %v2168, %v2168
        %v2172 = vunpack.c.l.s4 1966171168
        %v2173 = vunpack.c.0.s8 %v2172
        %v2174 = vlaneseq
        %v2175 = vshrl.u32 %v2174, 7
        %v2176 = vsub.s32 %v2173, %v2175
        %v2177 = vrot.slane %v2161, %v2176
        %v2179 = vunpack.c.l.s4 1966171168
        %v2180 = vunpack.c.0.s8 %v2179
        %v2181 = vlaneseq
        %v2182 = vshrl.u32 %v2181, 7
        %v2183 = vsub.s32 %v2180, %v2182
        %v2184 = vrot.slane %v2168, %v2183
        %v2186 = vunpack.c.l.s4 1966171168
        %v2187 = vunpack.c.0.s8 %v2186
        %v2188 = vlaneseq
        %v2189 = vshrl.u32 %v2188, 7
        %v2190 = vsub.s32 %v2187, %v2189
        %v2191 = vrot.slane %v2169, %v2190
        %v2193 = vunpack.c.l.s4 1966171168
        %v2194 = vunpack.c.0.s8 %v2193
        %v2195 = vlaneseq
        %v2196 = vshrl.u32 %v2195, 7
        %v2197 = vsub.s32 %v2194, %v2196
        %v2198 = vrot.slane %v2170, %v2197
        %v2199 = vcombine.high %v2177, %v2177
        %v2200 = vcombine.high %v2184, %v2184
        %v2201 = vcombine.high %v2191, %v2191
        %v2202 = vcombine.high %v2198, %v2198
        %2211 = vst.msk [vmem:[#allocation4 + $0x5] sm:$0x1] %vm1242, %v2177
        %2212 = vst.msk [vmem:[#allocation4 + $0xd] sm:$0x1] %vm1242, %v2191
        %2213 = vst.msk [vmem:[#allocation4 + $0x15] sm:$0x1] %vm1242, %v2199
        %2214 = vst.msk [vmem:[#allocation4 + $0x1d] sm:$0x1] %vm1242, %v2201
        %2215 = vst.msk [vmem:[#allocation4 + $0x25] sm:$0x1] %vm1242, %v2184
        %2216 = vst.msk [vmem:[#allocation4 + $0x2d] sm:$0x1] %vm1242, %v2198
        %2217 = vst.msk [vmem:[#allocation4 + $0x35] sm:$0x1] %vm1242, %v2200
        %2218 = vst.msk [vmem:[#allocation4 + $0x3d] sm:$0x1] %vm1242, %v2202
        %2219 = vset.pattern.permute.xlu0 7
        %2220 = vperm.xlu0 %2219, %v1105
        %v2221 = vpop.permute.xlu0 %2220
        %v2223 = vmul.f32 %v1175, %v2221
        %v2225 = vcombine.high %v2223, %v2223
        %v2227 = vunpack.c.l.s4 1966171168
        %v2228 = vunpack.c.0.s8 %v2227
        %v2229 = vlaneseq
        %v2230 = vshrl.u32 %v2229, 7
        %v2231 = vsub.s32 %v2228, %v2230
        %v2232 = vrot.slane %v2223, %v2231
        %v2234 = vunpack.c.l.s4 1966171168
        %v2235 = vunpack.c.0.s8 %v2234
        %v2236 = vlaneseq
        %v2237 = vshrl.u32 %v2236, 7
        %v2238 = vsub.s32 %v2235, %v2237
        %v2239 = vrot.slane %v2225, %v2238
        %v2240 = vcombine.high %v2232, %v2232
        %v2241 = vcombine.high %v2239, %v2239
        %v2243 = vunpack.c.l.s4 1966171168
        %v2244 = vunpack.c.0.s8 %v2243
        %v2245 = vlaneseq
        %v2246 = vshrl.u32 %v2245, 7
        %v2247 = vsub.s32 %v2244, %v2246
        %v2248 = vrot.slane %v2232, %v2247
        %v2250 = vunpack.c.l.s4 1966171168
        %v2251 = vunpack.c.0.s8 %v2250
        %v2252 = vlaneseq
        %v2253 = vshrl.u32 %v2252, 7
        %v2254 = vsub.s32 %v2251, %v2253
        %v2255 = vrot.slane %v2239, %v2254
        %v2257 = vunpack.c.l.s4 1966171168
        %v2258 = vunpack.c.0.s8 %v2257
        %v2259 = vlaneseq
        %v2260 = vshrl.u32 %v2259, 7
        %v2261 = vsub.s32 %v2258, %v2260
        %v2262 = vrot.slane %v2240, %v2261
        %v2264 = vunpack.c.l.s4 1966171168
        %v2265 = vunpack.c.0.s8 %v2264
        %v2266 = vlaneseq
        %v2267 = vshrl.u32 %v2266, 7
        %v2268 = vsub.s32 %v2265, %v2267
        %v2269 = vrot.slane %v2241, %v2268
        %v2270 = vcombine.high %v2248, %v2248
        %v2271 = vcombine.high %v2255, %v2255
        %v2272 = vcombine.high %v2262, %v2262
        %v2273 = vcombine.high %v2269, %v2269
        %2282 = vst.msk [vmem:[#allocation5 + $0x5] sm:$0x1] %vm1242, %v2248
        %2283 = vst.msk [vmem:[#allocation5 + $0xd] sm:$0x1] %vm1242, %v2262
        %2284 = vst.msk [vmem:[#allocation5 + $0x15] sm:$0x1] %vm1242, %v2270
        %2285 = vst.msk [vmem:[#allocation5 + $0x1d] sm:$0x1] %vm1242, %v2272
        %2286 = vst.msk [vmem:[#allocation5 + $0x25] sm:$0x1] %vm1242, %v2255
        %2287 = vst.msk [vmem:[#allocation5 + $0x2d] sm:$0x1] %vm1242, %v2269
        %2288 = vst.msk [vmem:[#allocation5 + $0x35] sm:$0x1] %vm1242, %v2271
        %2289 = vst.msk [vmem:[#allocation5 + $0x3d] sm:$0x1] %vm1242, %v2273
        %2290 = vrot.lane.b32.xlu0 %v1375, 113
        %v2291 = vpop.permute.xlu0 %2290
        %2292 = vrot.lane.b32.xlu0 %v1379, 113
        %v2293 = vpop.permute.xlu0 %2292
        %2294 = vrot.lane.b32.xlu0 %v1383, 113
        %v2295 = vpop.permute.xlu0 %2294
        %2296 = vrot.lane.b32.xlu0 %v1387, 113
        %v2297 = vpop.permute.xlu0 %2296
        %2298 = vrot.lane.b32.xlu0 %v1391, 113
        %v2299 = vpop.permute.xlu0 %2298
        %2300 = vrot.lane.b32.xlu0 %v1395, 113
        %v2301 = vpop.permute.xlu0 %2300
        %2302 = vrot.lane.b32.xlu0 %v1399, 113
        %v2303 = vpop.permute.xlu0 %2302
        %2304 = vrot.lane.b32.xlu0 %v1403, 113
        %v2305 = vpop.permute.xlu0 %2304
        %2314 = vst.msk [vmem:[#allocation6 + $0x5] sm:$0x1] %vm1428, %v2291
        %2315 = vst.msk [vmem:[#allocation6 + $0xd] sm:$0x1] %vm1428, %v2293
        %2316 = vst.msk [vmem:[#allocation6 + $0x15] sm:$0x1] %vm1428, %v2295
        %2317 = vst.msk [vmem:[#allocation6 + $0x1d] sm:$0x1] %vm1428, %v2297
        %2318 = vst.msk [vmem:[#allocation6 + $0x25] sm:$0x1] %vm1428, %v2299
        %2319 = vst.msk [vmem:[#allocation6 + $0x2d] sm:$0x1] %vm1428, %v2301
        %2320 = vst.msk [vmem:[#allocation6 + $0x35] sm:$0x1] %vm1428, %v2303
        %2321 = vst.msk [vmem:[#allocation6 + $0x3d] sm:$0x1] %vm1428, %v2305
        %v2322 = vld [vmem:[#allocation23 + $0x6] sm:$0x1]
        %v2323 = vlaneseq
        %v2324 = vshrl.u32 %v2323, 7
        %v2325 = vsub.s32 0, %v2324
        %v2326 = vrot.slane %v2322, %v2325
        %v2327 = vmul.f32 %v1174, %v2326
        %v2328 = vmul.f32 %v2327, 1.442695
        %v2329 = vpow.pop %v2328
        %v2331 = vcombine.high %v2329, %v2329
        %v2333 = vunpack.c.l.s4 1966171168
        %v2334 = vunpack.c.0.s8 %v2333
        %v2335 = vlaneseq
        %v2336 = vshrl.u32 %v2335, 7
        %v2337 = vsub.s32 %v2334, %v2336
        %v2338 = vrot.slane %v2329, %v2337
        %v2340 = vunpack.c.l.s4 1966171168
        %v2341 = vunpack.c.0.s8 %v2340
        %v2342 = vlaneseq
        %v2343 = vshrl.u32 %v2342, 7
        %v2344 = vsub.s32 %v2341, %v2343
        %v2345 = vrot.slane %v2331, %v2344
        %v2346 = vcombine.high %v2338, %v2338
        %v2347 = vcombine.high %v2345, %v2345
        %v2349 = vunpack.c.l.s4 1966171168
        %v2350 = vunpack.c.0.s8 %v2349
        %v2351 = vlaneseq
        %v2352 = vshrl.u32 %v2351, 7
        %v2353 = vsub.s32 %v2350, %v2352
        %v2354 = vrot.slane %v2338, %v2353
        %v2356 = vunpack.c.l.s4 1966171168
        %v2357 = vunpack.c.0.s8 %v2356
        %v2358 = vlaneseq
        %v2359 = vshrl.u32 %v2358, 7
        %v2360 = vsub.s32 %v2357, %v2359
        %v2361 = vrot.slane %v2345, %v2360
        %v2363 = vunpack.c.l.s4 1966171168
        %v2364 = vunpack.c.0.s8 %v2363
        %v2365 = vlaneseq
        %v2366 = vshrl.u32 %v2365, 7
        %v2367 = vsub.s32 %v2364, %v2366
        %v2368 = vrot.slane %v2346, %v2367
        %v2370 = vunpack.c.l.s4 1966171168
        %v2371 = vunpack.c.0.s8 %v2370
        %v2372 = vlaneseq
        %v2373 = vshrl.u32 %v2372, 7
        %v2374 = vsub.s32 %v2371, %v2373
        %v2375 = vrot.slane %v2347, %v2374
        %v2376 = vcombine.high %v2354, %v2354
        %v2377 = vcombine.high %v2361, %v2361
        %v2378 = vcombine.high %v2368, %v2368
        %v2379 = vcombine.high %v2375, %v2375
        %2388 = vst.msk [vmem:[#allocation4 + $0x6] sm:$0x1] %vm1242, %v2354
        %2389 = vst.msk [vmem:[#allocation4 + $0xe] sm:$0x1] %vm1242, %v2368
        %2390 = vst.msk [vmem:[#allocation4 + $0x16] sm:$0x1] %vm1242, %v2376
        %2391 = vst.msk [vmem:[#allocation4 + $0x1e] sm:$0x1] %vm1242, %v2378
        %2392 = vst.msk [vmem:[#allocation4 + $0x26] sm:$0x1] %vm1242, %v2361
        %2393 = vst.msk [vmem:[#allocation4 + $0x2e] sm:$0x1] %vm1242, %v2375
        %2394 = vst.msk [vmem:[#allocation4 + $0x36] sm:$0x1] %vm1242, %v2377
        %2395 = vst.msk [vmem:[#allocation4 + $0x3e] sm:$0x1] %vm1242, %v2379
        %2396 = vset.pattern.permute.xlu0 8
        %2397 = vperm.xlu0 %2396, %v1105
        %v2398 = vpop.permute.xlu0 %2397
        %v2400 = vmul.f32 %v1175, %v2398
        %v2402 = vcombine.high %v2400, %v2400
        %v2404 = vunpack.c.l.s4 1966171168
        %v2405 = vunpack.c.0.s8 %v2404
        %v2406 = vlaneseq
        %v2407 = vshrl.u32 %v2406, 7
        %v2408 = vsub.s32 %v2405, %v2407
        %v2409 = vrot.slane %v2400, %v2408
        %v2411 = vunpack.c.l.s4 1966171168
        %v2412 = vunpack.c.0.s8 %v2411
        %v2413 = vlaneseq
        %v2414 = vshrl.u32 %v2413, 7
        %v2415 = vsub.s32 %v2412, %v2414
        %v2416 = vrot.slane %v2402, %v2415
        %v2417 = vcombine.high %v2409, %v2409
        %v2418 = vcombine.high %v2416, %v2416
        %v2420 = vunpack.c.l.s4 1966171168
        %v2421 = vunpack.c.0.s8 %v2420
        %v2422 = vlaneseq
        %v2423 = vshrl.u32 %v2422, 7
        %v2424 = vsub.s32 %v2421, %v2423
        %v2425 = vrot.slane %v2409, %v2424
        %v2427 = vunpack.c.l.s4 1966171168
        %v2428 = vunpack.c.0.s8 %v2427
        %v2429 = vlaneseq
        %v2430 = vshrl.u32 %v2429, 7
        %v2431 = vsub.s32 %v2428, %v2430
        %v2432 = vrot.slane %v2416, %v2431
        %v2434 = vunpack.c.l.s4 1966171168
        %v2435 = vunpack.c.0.s8 %v2434
        %v2436 = vlaneseq
        %v2437 = vshrl.u32 %v2436, 7
        %v2438 = vsub.s32 %v2435, %v2437
        %v2439 = vrot.slane %v2417, %v2438
        %v2441 = vunpack.c.l.s4 1966171168
        %v2442 = vunpack.c.0.s8 %v2441
        %v2443 = vlaneseq
        %v2444 = vshrl.u32 %v2443, 7
        %v2445 = vsub.s32 %v2442, %v2444
        %v2446 = vrot.slane %v2418, %v2445
        %v2447 = vcombine.high %v2425, %v2425
        %v2448 = vcombine.high %v2432, %v2432
        %v2449 = vcombine.high %v2439, %v2439
        %v2450 = vcombine.high %v2446, %v2446
        %2459 = vst.msk [vmem:[#allocation5 + $0x6] sm:$0x1] %vm1242, %v2425
        %2460 = vst.msk [vmem:[#allocation5 + $0xe] sm:$0x1] %vm1242, %v2439
        %2461 = vst.msk [vmem:[#allocation5 + $0x16] sm:$0x1] %vm1242, %v2447
        %2462 = vst.msk [vmem:[#allocation5 + $0x1e] sm:$0x1] %vm1242, %v2449
        %2463 = vst.msk [vmem:[#allocation5 + $0x26] sm:$0x1] %vm1242, %v2432
        %2464 = vst.msk [vmem:[#allocation5 + $0x2e] sm:$0x1] %vm1242, %v2446
        %2465 = vst.msk [vmem:[#allocation5 + $0x36] sm:$0x1] %vm1242, %v2448
        %2466 = vst.msk [vmem:[#allocation5 + $0x3e] sm:$0x1] %vm1242, %v2450
        %2467 = vrot.lane.b32.xlu0 %v1375, 112
        %v2468 = vpop.permute.xlu0 %2467
        %2469 = vrot.lane.b32.xlu0 %v1379, 112
        %v2470 = vpop.permute.xlu0 %2469
        %2471 = vrot.lane.b32.xlu0 %v1383, 112
        %v2472 = vpop.permute.xlu0 %2471
        %2473 = vrot.lane.b32.xlu0 %v1387, 112
        %v2474 = vpop.permute.xlu0 %2473
        %2475 = vrot.lane.b32.xlu0 %v1391, 112
        %v2476 = vpop.permute.xlu0 %2475
        %2477 = vrot.lane.b32.xlu0 %v1395, 112
        %v2478 = vpop.permute.xlu0 %2477
        %2479 = vrot.lane.b32.xlu0 %v1399, 112
        %v2480 = vpop.permute.xlu0 %2479
        %2481 = vrot.lane.b32.xlu0 %v1403, 112
        %v2482 = vpop.permute.xlu0 %2481
        %2491 = vst.msk [vmem:[#allocation6 + $0x6] sm:$0x1] %vm1428, %v2468
        %2492 = vst.msk [vmem:[#allocation6 + $0xe] sm:$0x1] %vm1428, %v2470
        %2493 = vst.msk [vmem:[#allocation6 + $0x16] sm:$0x1] %vm1428, %v2472
        %2494 = vst.msk [vmem:[#allocation6 + $0x1e] sm:$0x1] %vm1428, %v2474
        %2495 = vst.msk [vmem:[#allocation6 + $0x26] sm:$0x1] %vm1428, %v2476
        %2496 = vst.msk [vmem:[#allocation6 + $0x2e] sm:$0x1] %vm1428, %v2478
        %2497 = vst.msk [vmem:[#allocation6 + $0x36] sm:$0x1] %vm1428, %v2480
        %2498 = vst.msk [vmem:[#allocation6 + $0x3e] sm:$0x1] %vm1428, %v2482
        %v2499 = vld [vmem:[#allocation23 + $0x7] sm:$0x1]
        %v2500 = vlaneseq
        %v2501 = vshrl.u32 %v2500, 7
        %v2502 = vsub.s32 0, %v2501
        %v2503 = vrot.slane %v2499, %v2502
        %v2504 = vmul.f32 %v1174, %v2503
        %v2505 = vmul.f32 %v2504, 1.442695
        %v2506 = vpow.pop %v2505
        %v2508 = vcombine.high %v2506, %v2506
        %v2510 = vunpack.c.l.s4 1966171168
        %v2511 = vunpack.c.0.s8 %v2510
        %v2512 = vlaneseq
        %v2513 = vshrl.u32 %v2512, 7
        %v2514 = vsub.s32 %v2511, %v2513
        %v2515 = vrot.slane %v2506, %v2514
        %v2517 = vunpack.c.l.s4 1966171168
        %v2518 = vunpack.c.0.s8 %v2517
        %v2519 = vlaneseq
        %v2520 = vshrl.u32 %v2519, 7
        %v2521 = vsub.s32 %v2518, %v2520
        %v2522 = vrot.slane %v2508, %v2521
        %v2523 = vcombine.high %v2515, %v2515
        %v2524 = vcombine.high %v2522, %v2522
        %v2526 = vunpack.c.l.s4 1966171168
        %v2527 = vunpack.c.0.s8 %v2526
        %v2528 = vlaneseq
        %v2529 = vshrl.u32 %v2528, 7
        %v2530 = vsub.s32 %v2527, %v2529
        %v2531 = vrot.slane %v2515, %v2530
        %v2533 = vunpack.c.l.s4 1966171168
        %v2534 = vunpack.c.0.s8 %v2533
        %v2535 = vlaneseq
        %v2536 = vshrl.u32 %v2535, 7
        %v2537 = vsub.s32 %v2534, %v2536
        %v2538 = vrot.slane %v2522, %v2537
        %v2540 = vunpack.c.l.s4 1966171168
        %v2541 = vunpack.c.0.s8 %v2540
        %v2542 = vlaneseq
        %v2543 = vshrl.u32 %v2542, 7
        %v2544 = vsub.s32 %v2541, %v2543
        %v2545 = vrot.slane %v2523, %v2544
        %v2547 = vunpack.c.l.s4 1966171168
        %v2548 = vunpack.c.0.s8 %v2547
        %v2549 = vlaneseq
        %v2550 = vshrl.u32 %v2549, 7
        %v2551 = vsub.s32 %v2548, %v2550
        %v2552 = vrot.slane %v2524, %v2551
        %v2553 = vcombine.high %v2531, %v2531
        %v2554 = vcombine.high %v2538, %v2538
        %v2555 = vcombine.high %v2545, %v2545
        %v2556 = vcombine.high %v2552, %v2552
        %2565 = vst.msk [vmem:[#allocation4 + $0x7] sm:$0x1] %vm1242, %v2531
        %2566 = vst.msk [vmem:[#allocation4 + $0xf] sm:$0x1] %vm1242, %v2545
        %2567 = vst.msk [vmem:[#allocation4 + $0x17] sm:$0x1] %vm1242, %v2553
        %2568 = vst.msk [vmem:[#allocation4 + $0x1f] sm:$0x1] %vm1242, %v2555
        %2569 = vst.msk [vmem:[#allocation4 + $0x27] sm:$0x1] %vm1242, %v2538
        %2570 = vst.msk [vmem:[#allocation4 + $0x2f] sm:$0x1] %vm1242, %v2552
        %2571 = vst.msk [vmem:[#allocation4 + $0x37] sm:$0x1] %vm1242, %v2554
        %2572 = vst.msk [vmem:[#allocation4 + $0x3f] sm:$0x1] %vm1242, %v2556
        %2573 = vset.pattern.permute.xlu0 9
        %2574 = vperm.xlu0 %2573, %v1105
        %v2575 = vpop.permute.xlu0 %2574
        %v2577 = vmul.f32 %v1175, %v2575
        %v2579 = vcombine.high %v2577, %v2577
        %v2581 = vunpack.c.l.s4 1966171168
        %v2582 = vunpack.c.0.s8 %v2581
        %v2583 = vlaneseq
        %v2584 = vshrl.u32 %v2583, 7
        %v2585 = vsub.s32 %v2582, %v2584
        %v2586 = vrot.slane %v2577, %v2585
        %v2588 = vunpack.c.l.s4 1966171168
        %v2589 = vunpack.c.0.s8 %v2588
        %v2590 = vlaneseq
        %v2591 = vshrl.u32 %v2590, 7
        %v2592 = vsub.s32 %v2589, %v2591
        %v2593 = vrot.slane %v2579, %v2592
        %v2594 = vcombine.high %v2586, %v2586
        %v2595 = vcombine.high %v2593, %v2593
        %v2597 = vunpack.c.l.s4 1966171168
        %v2598 = vunpack.c.0.s8 %v2597
        %v2599 = vlaneseq
        %v2600 = vshrl.u32 %v2599, 7
        %v2601 = vsub.s32 %v2598, %v2600
        %v2602 = vrot.slane %v2586, %v2601
        %v2604 = vunpack.c.l.s4 1966171168
        %v2605 = vunpack.c.0.s8 %v2604
        %v2606 = vlaneseq
        %v2607 = vshrl.u32 %v2606, 7
        %v2608 = vsub.s32 %v2605, %v2607
        %v2609 = vrot.slane %v2593, %v2608
        %v2611 = vunpack.c.l.s4 1966171168
        %v2612 = vunpack.c.0.s8 %v2611
        %v2613 = vlaneseq
        %v2614 = vshrl.u32 %v2613, 7
        %v2615 = vsub.s32 %v2612, %v2614
        %v2616 = vrot.slane %v2594, %v2615
        %v2618 = vunpack.c.l.s4 1966171168
        %v2619 = vunpack.c.0.s8 %v2618
        %v2620 = vlaneseq
        %v2621 = vshrl.u32 %v2620, 7
        %v2622 = vsub.s32 %v2619, %v2621
        %v2623 = vrot.slane %v2595, %v2622
        %v2624 = vcombine.high %v2602, %v2602
        %v2625 = vcombine.high %v2609, %v2609
        %v2626 = vcombine.high %v2616, %v2616
        %v2627 = vcombine.high %v2623, %v2623
        %2636 = vst.msk [vmem:[#allocation5 + $0x7] sm:$0x1] %vm1242, %v2602
        %2637 = vst.msk [vmem:[#allocation5 + $0xf] sm:$0x1] %vm1242, %v2616
        %2638 = vst.msk [vmem:[#allocation5 + $0x17] sm:$0x1] %vm1242, %v2624
        %2639 = vst.msk [vmem:[#allocation5 + $0x1f] sm:$0x1] %vm1242, %v2626
        %2640 = vst.msk [vmem:[#allocation5 + $0x27] sm:$0x1] %vm1242, %v2609
        %2641 = vst.msk [vmem:[#allocation5 + $0x2f] sm:$0x1] %vm1242, %v2623
        %2642 = vst.msk [vmem:[#allocation5 + $0x37] sm:$0x1] %vm1242, %v2625
        %2643 = vst.msk [vmem:[#allocation5 + $0x3f] sm:$0x1] %vm1242, %v2627
        %2644 = vrot.lane.b32.xlu0 %v1375, 111
        %v2645 = vpop.permute.xlu0 %2644
        %2646 = vrot.lane.b32.xlu0 %v1379, 111
        %v2647 = vpop.permute.xlu0 %2646
        %2648 = vrot.lane.b32.xlu0 %v1383, 111
        %v2649 = vpop.permute.xlu0 %2648
        %2650 = vrot.lane.b32.xlu0 %v1387, 111
        %v2651 = vpop.permute.xlu0 %2650
        %2652 = vrot.lane.b32.xlu0 %v1391, 111
        %v2653 = vpop.permute.xlu0 %2652
        %2654 = vrot.lane.b32.xlu0 %v1395, 111
        %v2655 = vpop.permute.xlu0 %2654
        %2656 = vrot.lane.b32.xlu0 %v1399, 111
        %v2657 = vpop.permute.xlu0 %2656
        %2658 = vrot.lane.b32.xlu0 %v1403, 111
        %v2659 = vpop.permute.xlu0 %2658
        %2668 = vst.msk [vmem:[#allocation6 + $0x7] sm:$0x1] %vm1428, %v2645
        %2669 = vst.msk [vmem:[#allocation6 + $0xf] sm:$0x1] %vm1428, %v2647
        %2670 = vst.msk [vmem:[#allocation6 + $0x17] sm:$0x1] %vm1428, %v2649
        %2671 = vst.msk [vmem:[#allocation6 + $0x1f] sm:$0x1] %vm1428, %v2651
        %2672 = vst.msk [vmem:[#allocation6 + $0x27] sm:$0x1] %vm1428, %v2653
        %2673 = vst.msk [vmem:[#allocation6 + $0x2f] sm:$0x1] %vm1428, %v2655
        %2674 = vst.msk [vmem:[#allocation6 + $0x37] sm:$0x1] %vm1428, %v2657
        %2675 = vst.msk [vmem:[#allocation6 + $0x3f] sm:$0x1] %vm1428, %v2659
        %v2676 = vld [vmem:[#allocation3] sm:$0xff]
        %s2677 = smul.u32 0, 8
        %s2678 = scalar_lea.vmem [#allocation4], %s2677
        %v2679 = vld [vmem:[%s2678] sm:$0xff]
        %v2680 = vmul.f32 %v2679, %v2676
        %s2681 = scalar_lea.vmem [#allocation5], %s2677
        %v2682 = vld [vmem:[%s2681] sm:$0xff]
        %v2683 = vadd.f32 %v2680, %v2682
        %s2684 = scalar_lea.vmem [#allocation6], %s2677
        %v2685 = vld [vmem:[%s2684] sm:$0xff]
        %2687 = vset.pattern.permute.xlu0 0
        %2688 = vperm.xlu0 %2687, %v2685
        %v2689 = vpop.permute.xlu0 %2688
        %v2691 = vmul.f32 %v2689, %v2683
        %v2692 = vsel %vm1066, %v2691, 0.0
        %v2693 = vrot.slane %v2692, 4
        %v2694 = vadd.f32 %v2692, %v2693
        %v2695 = vrot.slane %v2694, 2
        %v2696 = vadd.f32 %v2694, %v2695
        %v2697 = vrot.slane %v2696, 1
        %v2698 = vadd.f32 %v2696, %v2697
        %s2699 = sadd.s32 0, 1
        %s2700 = smul.u32 %s2699, 8
        %s2701 = scalar_lea.vmem [#allocation4], %s2700
        %v2702 = vld [vmem:[%s2701] sm:$0xff]
        %v2703 = vmul.f32 %v2702, %v2683
        %s2704 = scalar_lea.vmem [#allocation5], %s2700
        %v2705 = vld [vmem:[%s2704] sm:$0xff]
        %v2706 = vadd.f32 %v2703, %v2705
        %s2707 = scalar_lea.vmem [#allocation6], %s2700
        %v2708 = vld [vmem:[%s2707] sm:$0xff]
        %2710 = vset.pattern.permute.xlu0 0
        %2711 = vperm.xlu0 %2710, %v2708
        %v2712 = vpop.permute.xlu0 %2711
        %v2714 = vmul.f32 %v2712, %v2706
        %v2715 = vsel %vm1066, %v2714, 0.0
        %v2716 = vrot.slane %v2715, 4
        %v2717 = vadd.f32 %v2715, %v2716
        %v2718 = vrot.slane %v2717, 2
        %v2719 = vadd.f32 %v2717, %v2718
        %v2720 = vrot.slane %v2719, 1
        %v2721 = vadd.f32 %v2719, %v2720
        %s2722 = sadd.s32 0, 2
        %s2723 = smul.u32 %s2722, 8
        %s2724 = scalar_lea.vmem [#allocation4], %s2723
        %v2725 = vld [vmem:[%s2724] sm:$0xff]
        %v2726 = vmul.f32 %v2725, %v2706
        %s2727 = scalar_lea.vmem [#allocation5], %s2723
        %v2728 = vld [vmem:[%s2727] sm:$0xff]
        %v2729 = vadd.f32 %v2726, %v2728
        %s2730 = scalar_lea.vmem [#allocation6], %s2723
        %v2731 = vld [vmem:[%s2730] sm:$0xff]
        %2733 = vset.pattern.permute.xlu0 0
        %2734 = vperm.xlu0 %2733, %v2731
        %v2735 = vpop.permute.xlu0 %2734
        %v2737 = vmul.f32 %v2735, %v2729
        %v2738 = vsel %vm1066, %v2737, 0.0
        %v2739 = vrot.slane %v2738, 4
        %v2740 = vadd.f32 %v2738, %v2739
        %v2741 = vrot.slane %v2740, 2
        %v2742 = vadd.f32 %v2740, %v2741
        %v2743 = vrot.slane %v2742, 1
        %v2744 = vadd.f32 %v2742, %v2743
        %s2745 = sadd.s32 0, 3
        %s2746 = smul.u32 %s2745, 8
        %s2747 = scalar_lea.vmem [#allocation4], %s2746
        %v2748 = vld [vmem:[%s2747] sm:$0xff]
        %v2749 = vmul.f32 %v2748, %v2729
        %s2750 = scalar_lea.vmem [#allocation5], %s2746
        %v2751 = vld [vmem:[%s2750] sm:$0xff]
        %v2752 = vadd.f32 %v2749, %v2751
        %s2753 = scalar_lea.vmem [#allocation6], %s2746
        %v2754 = vld [vmem:[%s2753] sm:$0xff]
        %2756 = vset.pattern.permute.xlu0 0
        %2757 = vperm.xlu0 %2756, %v2754
        %v2758 = vpop.permute.xlu0 %2757
        %v2760 = vmul.f32 %v2758, %v2752
        %v2761 = vsel %vm1066, %v2760, 0.0
        %v2762 = vrot.slane %v2761, 4
        %v2763 = vadd.f32 %v2761, %v2762
        %v2764 = vrot.slane %v2763, 2
        %v2765 = vadd.f32 %v2763, %v2764
        %v2766 = vrot.slane %v2765, 1
        %v2767 = vadd.f32 %v2765, %v2766
        %s2768 = sadd.s32 0, 4
        %s2769 = smul.u32 %s2768, 8
        %s2770 = scalar_lea.vmem [#allocation4], %s2769
        %v2771 = vld [vmem:[%s2770] sm:$0xff]
        %v2772 = vmul.f32 %v2771, %v2752
        %s2773 = scalar_lea.vmem [#allocation5], %s2769
        %v2774 = vld [vmem:[%s2773] sm:$0xff]
        %v2775 = vadd.f32 %v2772, %v2774
        %s2776 = scalar_lea.vmem [#allocation6], %s2769
        %v2777 = vld [vmem:[%s2776] sm:$0xff]
        %2779 = vset.pattern.permute.xlu0 0
        %2780 = vperm.xlu0 %2779, %v2777
        %v2781 = vpop.permute.xlu0 %2780
        %v2783 = vmul.f32 %v2781, %v2775
        %v2784 = vsel %vm1066, %v2783, 0.0
        %v2785 = vrot.slane %v2784, 4
        %v2786 = vadd.f32 %v2784, %v2785
        %v2787 = vrot.slane %v2786, 2
        %v2788 = vadd.f32 %v2786, %v2787
        %v2789 = vrot.slane %v2788, 1
        %v2790 = vadd.f32 %v2788, %v2789
        %s2791 = sadd.s32 0, 5
        %s2792 = smul.u32 %s2791, 8
        %s2793 = scalar_lea.vmem [#allocation4], %s2792
        %v2794 = vld [vmem:[%s2793] sm:$0xff]
        %v2795 = vmul.f32 %v2794, %v2775
        %s2796 = scalar_lea.vmem [#allocation5], %s2792
        %v2797 = vld [vmem:[%s2796] sm:$0xff]
        %v2798 = vadd.f32 %v2795, %v2797
        %s2799 = scalar_lea.vmem [#allocation6], %s2792
        %v2800 = vld [vmem:[%s2799] sm:$0xff]
        %2802 = vset.pattern.permute.xlu0 0
        %2803 = vperm.xlu0 %2802, %v2800
        %v2804 = vpop.permute.xlu0 %2803
        %v2806 = vmul.f32 %v2804, %v2798
        %v2807 = vsel %vm1066, %v2806, 0.0
        %v2808 = vrot.slane %v2807, 4
        %v2809 = vadd.f32 %v2807, %v2808
        %v2810 = vrot.slane %v2809, 2
        %v2811 = vadd.f32 %v2809, %v2810
        %v2812 = vrot.slane %v2811, 1
        %v2813 = vadd.f32 %v2811, %v2812
        %s2814 = sadd.s32 0, 6
        %s2815 = smul.u32 %s2814, 8
        %s2816 = scalar_lea.vmem [#allocation4], %s2815
        %v2817 = vld [vmem:[%s2816] sm:$0xff]
        %v2818 = vmul.f32 %v2817, %v2798
        %s2819 = scalar_lea.vmem [#allocation5], %s2815
        %v2820 = vld [vmem:[%s2819] sm:$0xff]
        %v2821 = vadd.f32 %v2818, %v2820
        %s2822 = scalar_lea.vmem [#allocation6], %s2815
        %v2823 = vld [vmem:[%s2822] sm:$0xff]
        %2825 = vset.pattern.permute.xlu0 0
        %2826 = vperm.xlu0 %2825, %v2823
        %v2827 = vpop.permute.xlu0 %2826
        %v2829 = vmul.f32 %v2827, %v2821
        %v2830 = vsel %vm1066, %v2829, 0.0
        %v2831 = vrot.slane %v2830, 4
        %v2832 = vadd.f32 %v2830, %v2831
        %v2833 = vrot.slane %v2832, 2
        %v2834 = vadd.f32 %v2832, %v2833
        %v2835 = vrot.slane %v2834, 1
        %v2836 = vadd.f32 %v2834, %v2835
        %s2837 = sadd.s32 0, 7
        %s2838 = smul.u32 %s2837, 8
        %s2839 = scalar_lea.vmem [#allocation4], %s2838
        %v2840 = vld [vmem:[%s2839] sm:$0xff]
        %v2841 = vmul.f32 %v2840, %v2821
        %s2842 = scalar_lea.vmem [#allocation5], %s2838
        %v2843 = vld [vmem:[%s2842] sm:$0xff]
        %v2844 = vadd.f32 %v2841, %v2843
        %s2845 = scalar_lea.vmem [#allocation6], %s2838
        %v2846 = vld [vmem:[%s2845] sm:$0xff]
        %2848 = vset.pattern.permute.xlu0 0
        %2849 = vperm.xlu0 %2848, %v2846
        %v2850 = vpop.permute.xlu0 %2849
        %v2852 = vmul.f32 %v2850, %v2844
        %v2853 = vsel %vm1066, %v2852, 0.0
        %v2854 = vrot.slane %v2853, 4
        %v2855 = vadd.f32 %v2853, %v2854
        %v2856 = vrot.slane %v2855, 2
        %v2857 = vadd.f32 %v2855, %v2856
        %v2858 = vrot.slane %v2857, 1
        %v2859 = vadd.f32 %v2857, %v2858
        %v2860 = vsel %vm1022, %v2698, %v2721
        %v2861 = vsel %vm1008, %v2860, %v2744
        %v2862 = vsel %vm994, %v2861, %v2767
        %vm2863 = vcmask 1043456
        %v2864 = vsel %vm2863, %v2862, %v2790
        %vm2865 = vcmask 1044480
        %v2866 = vsel %vm2865, %v2864, %v2813
        %vm2867 = vcmask 1045504
        %v2868 = vsel %vm2867, %v2866, %v2836
        %vm2869 = vcmask 1046528
        %v2870 = vsel %vm2869, %v2868, %v2859
        %2871 = vst.msk [vmem:[#allocation7] sm:$0xff] %vm1066, %v2870
        %2872 = vst.msk [vmem:[#allocation3] sm:$0xff] %vm1066, %v2844
        %vm2873 = vcmask 523269
        %2874 = vst.msk [vmem:[#allocation2] sm:$0xe0] %vm2873, %v966
        %v2875 = vld [vmem:[#allocation7] sm:$0xff]
        %v2876 = vld [vmem:[#allocation25] sm:$0x1]
        %v2878 = vlaneseq
        %v2879 = vshrl.u32 %v2878, 7
        %v2880 = vsub.s32 0, %v2879
        %v2881 = vrot.slane %v2876, %v2880
        %v2883 = vmul.f32 %v2881, %v1032
        %v2884 = vadd.f32 %v2875, %v2883
        %v2885 = vmul.f32 %v966, 0.5
        %v2886 = vtanh.pop %v2885
        %v2887 = vadd.f32 %v2886, 1.0
        %v2888 = vmul.f32 %v2887, 0.5
        %v2889 = vmul.f32 %v966, %v2888
        %2891 = vrot.lane.b32.xlu0 %v2889, 64
        %v2892 = vpop.permute.xlu0 %2891
        %v2894 = vmul.f32 %v2884, %v2892
        %v2895 = vld [vmem:[#allocation26] sm:$0xf]
        %v2896 = vld [vmem:[#allocation26 + $0x4] sm:$0xf]
        %v2897 = vld [vmem:[#allocation26 + $0x8] sm:$0xf]
        %v2898 = vld [vmem:[#allocation26 + $0xc] sm:$0xf]
        %v2899 = vld [vmem:[#allocation26 + $0x10] sm:$0xf]
        %v2900 = vld [vmem:[#allocation26 + $0x14] sm:$0xf]
        %v2901 = vld [vmem:[#allocation26 + $0x18] sm:$0xf]
        %v2902 = vld [vmem:[#allocation26 + $0x1c] sm:$0xf]
        %v2903 = vpack.c.bf16 %v2894, %v2894
        %v2912 = vunpack.c.l.b16 %v2895
        %v2913 = vunpack.c.l.b16 %v2896
        %v2914 = vunpack.c.l.b16 %v2897
        %v2915 = vunpack.c.l.b16 %v2898
        %v2916 = vunpack.c.l.b16 %v2899
        %v2917 = vunpack.c.l.b16 %v2900
        %v2918 = vunpack.c.l.b16 %v2901
        %v2919 = vunpack.c.l.b16 %v2902
        %v2920 = vpack.c.b16 %v2913, %v2912
        %v2921 = vpack.c.b16 %v2915, %v2914
        %v2922 = vpack.c.b16 %v2917, %v2916
        %v2923 = vpack.c.b16 %v2919, %v2918
        %v2929 = vsel %vm1066, %v2903, 0
        %2931 = vmatprep.subr.bf16.mxu0 0
        %2932 = vmatpush1.bf16.msra.mxu0 %v2920
        %2933 = vmatprep.subr.bf16.mxu0 0
        %2934 = vmatpush1.bf16.msra.mxu0 %v2921
        %2935 = vmatprep.subr.bf16.mxu0 0
        %2936 = vmatpush1.bf16.msra.mxu0 %v2922
        %2937 = vmatprep.subr.bf16.mxu0 0
        %2938 = vmatpush1.bf16.msra.mxu0 %v2923
        %2939 = vmatprep.subr.bf16.mxu0 0
        %2940 = vmatpush1.bf16.msra.mxu0 0
        %2941 = vmatprep.subr.bf16.mxu0 0
        %2942 = vmatpush1.bf16.msra.mxu0 0
        %2943 = vmatprep.subr.bf16.mxu0 0
        %2944 = vmatpush1.bf16.msra.mxu0 0
        %2945 = vmatprep.subr.bf16.mxu0 0
        %2946 = vmatpush1.bf16.msra.mxu0 0
        %2947 = vmatprep.subr.bf16.mxu0 0
        %2948 = vmatpush1.bf16.msra.mxu0 0
        %2949 = vmatprep.subr.bf16.mxu0 0
        %2950 = vmatpush1.bf16.msra.mxu0 0
        %2951 = vmatprep.subr.bf16.mxu0 0
        %2952 = vmatpush1.bf16.msra.mxu0 0
        %2953 = vmatprep.subr.bf16.mxu0 0
        %2954 = vmatpush1.bf16.msra.mxu0 0
        %2955 = vmatprep.subr.bf16.mxu0 0
        %2956 = vmatpush1.bf16.msra.mxu0 0
        %2957 = vmatprep.subr.bf16.mxu0 0
        %2958 = vmatpush1.bf16.msra.mxu0 0
        %2959 = vmatprep.subr.bf16.mxu0 0
        %2960 = vmatpush1.bf16.msra.mxu0 0
        %2961 = vmatprep.subr.bf16.mxu0 0
        %2962 = vmatpush1.bf16.msra.mxu0 0
        %2963 = vmatprep.mubr.bf16.mxu0 0
        %2964 = vmatmul.mubr.bf16.gmra.mrb[0].mxu0 %v2929
        %v2965 = vpop.f32.mrb[0].mxu0
        %v2966 = vadd.f32 %v879, %v2965
        %v2967 = vpop.f32.mrb[0].mxu0
        %v2968 = vpop.f32.mrb[0].mxu0
        %v2969 = vpop.f32.mrb[0].mxu0
        %2970 = vdwg.mxu0
        %v2971 = vld [vmem:[#allocation28] sm:$0x1]
        %v2972 = vld [vmem:[#allocation29] sm:$0x1]
        %v2973 = vsel %vm882, %v2966, 0.0
        %2974 = vadd.xlane.f32.xlu0 %v2973
        %v2975 = vpop.xlane.xlu0 %2974
        %v2976 = vmul.f32 %v2975, %v886
        %v2977 = vsub.f32 %v2966, %v2976
        %v2978 = vmul.f32 %v2977, %v2977
        %v2979 = vsel %vm882, %v2978, 0.0
        %2980 = vadd.xlane.f32.xlu0 %v2979
        %v2981 = vpop.xlane.xlu0 %2980
        %v2982 = vmul.f32 %v2981, %v886
        %v2983 = vadd.f32 %v2982, 1e-05
        %v2984 = vrsqrt.pop %v2983
        %v2985 = vmul.f32 %v2977, %v2984
        %v2987 = vlaneseq
        %v2988 = vshrl.u32 %v2987, 7
        %v2989 = vsub.s32 0, %v2988
        %v2990 = vrot.slane %v2971, %v2989
        %v2992 = vmul.f32 %v2985, %v2990
        %v2994 = vlaneseq
        %v2995 = vshrl.u32 %v2994, 7
        %v2996 = vsub.s32 0, %v2995
        %v2997 = vrot.slane %v2972, %v2996
        %v2999 = vadd.f32 %v2992, %v2997
        %v3000 = vld [vmem:[#allocation31] sm:$0xf]
        %v3001 = vld [vmem:[#allocation31 + $0x4] sm:$0xf]
        %v3002 = vld [vmem:[#allocation31 + $0x8] sm:$0xf]
        %v3003 = vld [vmem:[#allocation31 + $0xc] sm:$0xf]
        %v3004 = vpack.c.bf16 %v2999, %v2999
        %v3005 = vld [vmem:[#allocation32] sm:$0x1]
        %v3007 = vlaneseq
        %v3008 = vshrl.u32 %v3007, 7
        %v3009 = vsub.s32 0, %v3008
        %v3010 = vrot.slane %v3005, %v3009
        %v3016 = vunpack.c.l.b16 %v3000
        %v3017 = vunpack.c.l.b16 %v3001
        %v3018 = vunpack.c.l.b16 %v3002
        %v3019 = vunpack.c.l.b16 %v3003
        %v3020 = vpack.c.b16 %v3017, %v3016
        %v3021 = vpack.c.b16 %v3019, %v3018
        %v3025 = vsel %vm882, %v3004, 0
        %3027 = vmatprep.subr.bf16.mxu0 0
        %3028 = vmatpush1.bf16.msra.mxu0 %v3020
        %3029 = vmatprep.subr.bf16.mxu0 0
        %3030 = vmatpush1.bf16.msra.mxu0 %v3021
        %3031 = vmatprep.subr.bf16.mxu0 0
        %3032 = vmatpush1.bf16.msra.mxu0 0
        %3033 = vmatprep.subr.bf16.mxu0 0
        %3034 = vmatpush1.bf16.msra.mxu0 0
        %3035 = vmatprep.subr.bf16.mxu0 0
        %3036 = vmatpush1.bf16.msra.mxu0 0
        %3037 = vmatprep.subr.bf16.mxu0 0
        %3038 = vmatpush1.bf16.msra.mxu0 0
        %3039 = vmatprep.subr.bf16.mxu0 0
        %3040 = vmatpush1.bf16.msra.mxu0 0
        %3041 = vmatprep.subr.bf16.mxu0 0
        %3042 = vmatpush1.bf16.msra.mxu0 0
        %3043 = vmatprep.subr.bf16.mxu0 0
        %3044 = vmatpush1.bf16.msra.mxu0 0
        %3045 = vmatprep.subr.bf16.mxu0 0
        %3046 = vmatpush1.bf16.msra.mxu0 0
        %3047 = vmatprep.subr.bf16.mxu0 0
        %3048 = vmatpush1.bf16.msra.mxu0 0
        %3049 = vmatprep.subr.bf16.mxu0 0
        %3050 = vmatpush1.bf16.msra.mxu0 0
        %3051 = vmatprep.subr.bf16.mxu0 0
        %3052 = vmatpush1.bf16.msra.mxu0 0
        %3053 = vmatprep.subr.bf16.mxu0 0
        %3054 = vmatpush1.bf16.msra.mxu0 0
        %3055 = vmatprep.subr.bf16.mxu0 0
        %3056 = vmatpush1.bf16.msra.mxu0 0
        %3057 = vmatprep.subr.bf16.mxu0 0
        %3058 = vmatpush1.bf16.msra.mxu0 0
        %3059 = vmatprep.mubr.bf16.mxu0 0
        %3060 = vmatmul.mubr.bf16.gmra.mrb[0].mxu0 %v3025
        %v3061 = vpop.f32.mrb[0].mxu0
        %v3062 = vadd.f32 %v3010, %v3061
        %v3063 = vpop.f32.mrb[0].mxu0
        %v3064 = vpop.f32.mrb[0].mxu0
        %v3065 = vpop.f32.mrb[0].mxu0
        %3066 = vdwg.mxu0
        %v3067 = vmul.f32 %v3062, 0.5
        %v3068 = vmul.f32 %v3062, 0.044715
        %v3069 = vmul.f32 %v3068, %v3062
        %v3070 = vmul.f32 %v3069, %v3062
        %v3071 = vadd.f32 %v3062, %v3070
        %v3072 = vmul.f32 %v3071, 0.7978846
        %v3073 = vtanh.pop %v3072
        %v3074 = vadd.f32 %v3073, 1.0
        %v3075 = vmul.f32 %v3067, %v3074
        %v3076 = vld [vmem:[#allocation34] sm:$0xf]
        %v3077 = vld [vmem:[#allocation34 + $0x4] sm:$0xf]
        %v3078 = vld [vmem:[#allocation34 + $0x8] sm:$0xf]
        %v3079 = vld [vmem:[#allocation34 + $0xc] sm:$0xf]
        %v3080 = vld [vmem:[#allocation34 + $0x10] sm:$0xf]
        %v3081 = vld [vmem:[#allocation34 + $0x14] sm:$0xf]
        %v3082 = vld [vmem:[#allocation34 + $0x18] sm:$0xf]
        %v3083 = vld [vmem:[#allocation34 + $0x1c] sm:$0xf]
        %v3084 = vpack.c.bf16 %v3075, %v3075
        %v3085 = vld [vmem:[#allocation35] sm:$0x1]
        %v3087 = vlaneseq
        %v3088 = vshrl.u32 %v3087, 7
        %v3089 = vsub.s32 0, %v3088
        %v3090 = vrot.slane %v3085, %v3089
        %v3100 = vunpack.c.l.b16 %v3076
        %v3101 = vunpack.c.l.b16 %v3077
        %v3102 = vunpack.c.l.b16 %v3078
        %v3103 = vunpack.c.l.b16 %v3079
        %v3104 = vunpack.c.l.b16 %v3080
        %v3105 = vunpack.c.l.b16 %v3081
        %v3106 = vunpack.c.l.b16 %v3082
        %v3107 = vunpack.c.l.b16 %v3083
        %v3108 = vpack.c.b16 %v3101, %v3100
        %v3109 = vpack.c.b16 %v3103, %v3102
        %v3110 = vpack.c.b16 %v3105, %v3104
        %v3111 = vpack.c.b16 %v3107, %v3106
        %v3117 = vsel %vm1066, %v3084, 0
        %3119 = vmatprep.subr.bf16.mxu0 0
        %3120 = vmatpush1.bf16.msra.mxu0 %v3108
        %3121 = vmatprep.subr.bf16.mxu0 0
        %3122 = vmatpush1.bf16.msra.mxu0 %v3109
        %3123 = vmatprep.subr.bf16.mxu0 0
        %3124 = vmatpush1.bf16.msra.mxu0 %v3110
        %3125 = vmatprep.subr.bf16.mxu0 0
        %3126 = vmatpush1.bf16.msra.mxu0 %v3111
        %3127 = vmatprep.subr.bf16.mxu0 0
        %3128 = vmatpush1.bf16.msra.mxu0 0
        %3129 = vmatprep.subr.bf16.mxu0 0
        %3130 = vmatpush1.bf16.msra.mxu0 0
        %3131 = vmatprep.subr.bf16.mxu0 0
        %3132 = vmatpush1.bf16.msra.mxu0 0
        %3133 = vmatprep.subr.bf16.mxu0 0
        %3134 = vmatpush1.bf16.msra.mxu0 0
        %3135 = vmatprep.subr.bf16.mxu0 0
        %3136 = vmatpush1.bf16.msra.mxu0 0
        %3137 = vmatprep.subr.bf16.mxu0 0
        %3138 = vmatpush1.bf16.msra.mxu0 0
        %3139 = vmatprep.subr.bf16.mxu0 0
        %3140 = vmatpush1.bf16.msra.mxu0 0
        %3141 = vmatprep.subr.bf16.mxu0 0
        %3142 = vmatpush1.bf16.msra.mxu0 0
        %3143 = vmatprep.subr.bf16.mxu0 0
        %3144 = vmatpush1.bf16.msra.mxu0 0
        %3145 = vmatprep.subr.bf16.mxu0 0
        %3146 = vmatpush1.bf16.msra.mxu0 0
        %3147 = vmatprep.subr.bf16.mxu0 0
        %3148 = vmatpush1.bf16.msra.mxu0 0
        %3149 = vmatprep.subr.bf16.mxu0 0
        %3150 = vmatpush1.bf16.msra.mxu0 0
        %3151 = vmatprep.mubr.bf16.mxu0 0
        %3152 = vmatmul.mubr.bf16.gmra.mrb[0].mxu0 %v3117
        %v3153 = vpop.f32.mrb[0].mxu0
        %v3154 = vadd.f32 %v3090, %v3153
        %v3155 = vpop.f32.mrb[0].mxu0
        %v3156 = vpop.f32.mrb[0].mxu0
        %v3157 = vpop.f32.mrb[0].mxu0
        %3158 = vdwg.mxu0
        %3159 = vst.msk [vmem:[%s863] sm:$0xff] %vm882, %v3154
        %3160 = vst.msk [vmem:[%s870] sm:$0xff] %vm882, %v2966
        %s3161 = sand.u32 %s456, 1
        %s3162 = scalar_lea.sflag [#allocation10], %s3161
        %s3163 = sand.u32 %s456, 1
        %s3164 = smul.addr %s3163, 8
        %s3165 = scalar_lea.vmem [#allocation37], %s3164
        %s3166 = sand.u32 %s484, 1
        %s3167 = scalar_lea.sflag [#allocation39], %s3166
        %s3168 = sand.u32 %s484, 1
        %s3169 = smul.addr %s3168, 8
        %s3170 = scalar_lea.vmem [#allocation38], %s3169
        // Predicated region
        $region169: #{lm_backbone_forward.5} parent=91 // pred_check
          %p3171 = pneg %p466
        $region170: #{lm_backbone_forward.5} parent=91 // pred_check_branch
          %3173 = sbr.rel (%p3171) target = $region172
        $region171: #{lm_backbone_forward.5} parent=91 // pred_region
          %s3175 = ssub.s32 128, 128
          %3176 = vsyncadd %s3162, %s3175
          %s3177 = sadd.s32 %s54, %s53
          %s3178 = smul.addr %s3177, 128
          %s3179 = scalar_lea.hbm %s18, %s3178
          %s3181 = sshll.u32 %s3165, 4
          %s3182 = int_to_ptr.vmem [resolvable:$true] %s3181
          %3184 = dma.vmem_to_hbm [thread:$0]  %s3182, 128, %s3179, %s3162
        $region172: #{lm_backbone_forward.5} parent=91 // pred_fallthru
          _
        // Predicated region
        $region173: #{lm_backbone_forward.5} parent=91 // pred_check
          %p3185 = pneg %p494
        $region174: #{lm_backbone_forward.5} parent=91 // pred_check_branch
          %3187 = sbr.rel (%p3185) target = $region176
        $region175: #{lm_backbone_forward.5} parent=91 // pred_region
          %s3189 = ssub.s32 128, 128
          %3190 = vsyncadd %s3167, %s3189
          %s3191 = sadd.s32 %s54, %s53
          %s3192 = smul.addr %s3191, 128
          %s3193 = scalar_lea.hbm %s19, %s3192
          %s3195 = sshll.u32 %s3170, 4
          %s3196 = int_to_ptr.vmem [resolvable:$true] %s3195
          %3198 = dma.vmem_to_hbm [thread:$0]  %s3196, 128, %s3193, %s3167
        $region176: #{lm_backbone_forward.5} parent=91 // pred_fallthru
          _
      $region92: #{lm_backbone_forward.5} parent=5 // pred_fallthru
        _
      %p3199 = scmp.le.s32.totalorder 2, %s44
      // Predicated region
      $region177: #{lm_backbone_forward.5} parent=5 // pred_check
        %p3200 = pneg %p3199
      $region178: #{lm_backbone_forward.5} parent=5 // pred_check_branch
        %3202 = sbr.rel (%p3200) target = $region180
      $region179: #{lm_backbone_forward.5} parent=5 // pred_region
        %s3203 = ssub.s32 %s44, 2
        // Predicated region
        $region181: #{lm_backbone_forward.5} parent=179 // pred_check
          %p3204 = pneg %p472
        $region182: #{lm_backbone_forward.5} parent=179 // pred_check_branch
          %3206 = sbr.rel (%p3204) target = $region184
        $region183: #{lm_backbone_forward.5} parent=179 // pred_region
          %s3207 = sand.u32 %s457, 1
          %s3208 = scalar_lea.sflag [#allocation10], %s3207
          %s3209 = sand.u32 %s457, 1
          %s3210 = smul.addr %s3209, 8
          %s3211 = scalar_lea.vmem [#allocation37], %s3210
          %3212 = dma.done %s3208, 128
        $region184: #{lm_backbone_forward.5} parent=179 // pred_fallthru
          _
        // Predicated region
        $region185: #{lm_backbone_forward.5} parent=179 // pred_check
          %p3213 = pneg %p500
        $region186: #{lm_backbone_forward.5} parent=179 // pred_check_branch
          %3215 = sbr.rel (%p3213) target = $region188
        $region187: #{lm_backbone_forward.5} parent=179 // pred_region
          %s3216 = sand.u32 %s485, 1
          %s3217 = scalar_lea.sflag [#allocation39], %s3216
          %s3218 = sand.u32 %s485, 1
          %s3219 = smul.addr %s3218, 8
          %s3220 = scalar_lea.vmem [#allocation38], %s3219
          %3221 = dma.done %s3217, 128
        $region188: #{lm_backbone_forward.5} parent=179 // pred_fallthru
          _
      $region180: #{lm_backbone_forward.5} parent=5 // pred_fallthru
        _
    $region6: #{lm_backbone_forward.5} parent=1 // loop_footer
      %s48 = sadd.s32 1, %s44
    $region7: #{lm_backbone_forward.5} parent=1 // loop_footer_branch
      %43 = sbr.rel target = $region3
    $region8: #{lm_backbone_forward.5} parent=1 // loop_exit
      _
    %3222 = vsyncpa [#allocation9], 1
    %s3223 = scalar_lea.sflag [#allocation9], 1
    %3224 = vsyncpa %s3223, 1
    %3225 = vsyncpa [#allocation12], 1
    %3226 = vsyncpa [#allocation15], 1
    %3227 = vsyncpa [#allocation18], 1
    %3228 = vsyncpa [#allocation21], 1
    %3229 = vsyncpa [#allocation24], 1
    %3230 = vsyncpa [#allocation27], 1
    %3231 = vsyncpa [#allocation30], 1
    %3232 = vsyncpa [#allocation33], 1
    %3233 = vsyncpa [#allocation36], 1
    %3234 = vsyncpa [#allocation10], 1
    %s3235 = scalar_lea.sflag [#allocation10], 1
    %3236 = vsyncpa %s3235, 1
    %3237 = vsyncpa [#allocation39], 1
    %s3238 = scalar_lea.sflag [#allocation39], 1
    %3239 = vsyncpa %s3238, 1

// kernel: lm_backbone_forward.6
$region0: #{lm_backbone_forward.6}
  #allocation0 [shape = 'u32[]', space=smem, size = 0x4, offset = 0x4, fixed_abs, tag = 'smem constant byte address 0x4 - core index']
  #allocation1 [shape = 'u32[144,128]{1,0:T(1,128)}', space=vmem, size = 0x12000, scoped, tag = 'internal scratch']
  #allocation2 [shape = 'f32[8,64]{1,0:T(8,128)}', space=vmem, size = 0x1000, scoped, tag = 'scratch operand']
  #allocation3 [shape = 'f32[8,64]{1,0:T(8,128)}', space=vmem, size = 0x1000, scoped, tag = 'scratch operand']
  #allocation4 [shape = 'f32[8,8,64]{2,1,0:T(8,128)}', space=vmem, size = 0x8000, scoped, tag = 'scratch operand']
  #allocation5 [shape = 'f32[8,8,64]{2,1,0:T(8,128)}', space=vmem, size = 0x8000, scoped, tag = 'scratch operand']
  #allocation6 [shape = 'f32[8,8,1]{2,1,0:T(8,128)}', space=vmem, size = 0x8000, scoped, tag = 'scratch operand']
  #allocation7 [shape = 'f32[8,64]{1,0:T(8,128)}', space=vmem, size = 0x1000, scoped, tag = 'scratch operand']
  %s0 = inlined_call_operand.hbm [shape: f32[2,8,32], index: 0, kind: input, shape index: {}, may-alias: {0,19}]
  %s1 = inlined_call_operand.hbm [shape: f32[2,8,32], index: 1, kind: input, shape index: {}, may-alias: {1,20}]
  %s2 = inlined_call_operand.hbm [shape: f32[1,32], index: 2, kind: input, shape index: {}]
  %s3 = inlined_call_operand.hbm [shape: f32[1,32], index: 3, kind: input, shape index: {}]
  %s4 = inlined_call_operand.hbm [shape: bf16[32,128], index: 4, kind: input, shape index: {}]
  %s5 = inlined_call_operand.hbm [shape: f32[4,64], index: 5, kind: input, shape index: {}]
  %s6 = inlined_call_operand.hbm [shape: f32[1,64], index: 6, kind: input, shape index: {}]
  %s7 = inlined_call_operand.hbm [shape: bf16[64,128], index: 7, kind: input, shape index: {}]
  %s8 = inlined_call_operand.hbm [shape: bf16[2,64], index: 8, kind: input, shape index: {}]
  %s9 = inlined_call_operand.hbm [shape: f32[1,64], index: 9, kind: input, shape index: {}]
  %s10 = inlined_call_operand.hbm [shape: f32[8,64], index: 10, kind: input, shape index: {}]
  %s11 = inlined_call_operand.hbm [shape: f32[1,64], index: 11, kind: input, shape index: {}]
  %s12 = inlined_call_operand.hbm [shape: bf16[64,32], index: 12, kind: input, shape index: {}]
  %s13 = inlined_call_operand.hbm [shape: f32[1,32], index: 13, kind: input, shape index: {}]
  %s14 = inlined_call_operand.hbm [shape: f32[1,32], index: 14, kind: input, shape index: {}]
  %s15 = inlined_call_operand.hbm [shape: bf16[32,64], index: 15, kind: input, shape index: {}]
  %s16 = inlined_call_operand.hbm [shape: f32[1,64], index: 16, kind: input, shape index: {}]
  %s17 = inlined_call_operand.hbm [shape: bf16[64,32], index: 17, kind: input, shape index: {}]
  %s18 = inlined_call_operand.hbm [shape: f32[1,32], index: 18, kind: input, shape index: {}]
  %s19 = inlined_call_operand.hbm [shape: f32[2,8,32], index: 19, kind: output, shape index: {0}, may-alias: {0,19}]
  %s20 = inlined_call_operand.hbm [shape: f32[2,8,32], index: 20, kind: output, shape index: {1}, may-alias: {1,20}]
  %21 = xla_tuple %s19, %s20
  %s22 = sld [smem:[#allocation0]]
  $region197: #{lm_backbone_forward.6} parent=0
    _
  %s24 = ssub.s32 1, %s22
  %s25 = scalar_select 0, %s24, %s22
  $region1: #{lm_backbone_forward.6} parent=0
    #allocation8 [shape = 'u8[8192]{0}', space=vmem, size = 0x2000, scoped, tag = 'input window, operand 0']
    #allocation9 [shape = 's32[2]{0}', space=sflag, size = 0x8, scoped, tag = 'scoped memory for lm_backbone_forward.6']
    #allocation10 [shape = 's32[2]{0}', space=sflag, size = 0x8, scoped, tag = 'scoped memory for lm_backbone_forward.6']
    #allocation11 [shape = 'u8[8192]{0}', space=vmem, size = 0x2000, scoped, tag = 'input window, operand 1']
    #allocation12 [shape = 's32[2]{0}', space=sflag, size = 0x8, scoped, tag = 'scoped memory for lm_backbone_forward.6']
    #allocation13 [shape = 'u8[512]{0}', space=vmem, size = 0x400, scoped, tag = 'input window, operand 2, single buffered']
    #allocation14 [shape = 'u8[512]{0}', space=vmem, size = 0x400, scoped, tag = 'input window, operand 3, single buffered']
    #allocation15 [shape = 's32[1]{0}', space=sflag, size = 0x4, scoped, tag = 'scoped memory for lm_backbone_forward.6']
    #allocation16 [shape = 'u8[8192]{0}', space=vmem, size = 0x2000, scoped, tag = 'input window, operand 4, single buffered']
    #allocation17 [shape = 'u8[2048]{0}', space=vmem, size = 0x800, scoped, tag = 'input window, operand 5, single buffered']
    #allocation18 [shape = 's32[1]{0}', space=sflag, size = 0x4, scoped, tag = 'scoped memory for lm_backbone_forward.6']
    #allocation19 [shape = 'u8[512]{0}', space=vmem, size = 0x400, scoped, tag = 'input window, operand 6, single buffered']
    #allocation20 [shape = 'u8[16384]{0}', space=vmem, size = 0x4000, scoped, tag = 'input window, operand 7, single buffered']
    #allocation21 [shape = 's32[1]{0}', space=sflag, size = 0x4, scoped, tag = 'scoped memory for lm_backbone_forward.6']
    #allocation22 [shape = 'u8[512]{0}', space=vmem, size = 0x400, scoped, tag = 'input window, operand 8, single buffered']
    #allocation23 [shape = 'u8[512]{0}', space=vmem, size = 0x400, scoped, tag = 'input window, operand 9, single buffered']
    #allocation24 [shape = 's32[1]{0}', space=sflag, size = 0x4, scoped, tag = 'scoped memory for lm_backbone_forward.6']
    #allocation25 [shape = 'u8[4096]{0}', space=vmem, size = 0x1000, scoped, tag = 'input window, operand 10, single buffered']
    #allocation26 [shape = 'u8[512]{0}', space=vmem, size = 0x400, scoped, tag = 'input window, operand 11, single buffered']
    #allocation27 [shape = 's32[1]{0}', space=sflag, size = 0x4, scoped, tag = 'scoped memory for lm_backbone_forward.6']
    #allocation28 [shape = 'u8[16384]{0}', space=vmem, size = 0x4000, scoped, tag = 'input window, operand 12, single buffered']
    #allocation29 [shape = 'u8[512]{0}', space=vmem, size = 0x400, scoped, tag = 'input window, operand 13, single buffered']
    #allocation30 [shape = 's32[1]{0}', space=sflag, size = 0x4, scoped, tag = 'scoped memory for lm_backbone_forward.6']
    #allocation31 [shape = 'u8[512]{0}', space=vmem, size = 0x400, scoped, tag = 'input window, operand 14, single buffered']
    #allocation32 [shape = 'u8[8192]{0}', space=vmem, size = 0x2000, scoped, tag = 'input window, operand 15, single buffered']
    #allocation33 [shape = 's32[1]{0}', space=sflag, size = 0x4, scoped, tag = 'scoped memory for lm_backbone_forward.6']
    #allocation34 [shape = 'u8[512]{0}', space=vmem, size = 0x400, scoped, tag = 'input window, operand 16, single buffered']
    #allocation35 [shape = 'u8[16384]{0}', space=vmem, size = 0x4000, scoped, tag = 'input window, operand 17, single buffered']
    #allocation36 [shape = 's32[1]{0}', space=sflag, size = 0x4, scoped, tag = 'scoped memory for lm_backbone_forward.6']
    #allocation37 [shape = 'u8[512]{0}', space=vmem, size = 0x400, scoped, tag = 'input window, operand 18, single buffered']
    #allocation38 [shape = 'u8[8192]{0}', space=vmem, size = 0x2000, scoped, tag = 'output window, operand 0']
    #allocation39 [shape = 'u8[8192]{0}', space=vmem, size = 0x2000, scoped, tag = 'output window, operand 1']
    #allocation40 [shape = 's32[2]{0}', space=sflag, size = 0x8, scoped, tag = 'scoped memory for lm_backbone_forward.6']
    %26 = vsyncpa [#allocation9], 0
    %s27 = scalar_lea.sflag [#allocation9], 1
    %28 = vsyncpa %s27, 0
    %29 = vsyncpa [#allocation12], 0
    %s30 = scalar_lea.sflag [#allocation12], 1
    %31 = vsyncpa %s30, 0
    %32 = vsyncpa [#allocation15], 0
    %33 = vsyncpa [#allocation18], 0
    %34 = vsyncpa [#allocation21], 0
    %35 = vsyncpa [#allocation24], 0
    %36 = vsyncpa [#allocation27], 0
    %37 = vsyncpa [#allocation30], 0
    %38 = vsyncpa [#allocation33], 0
    %39 = vsyncpa [#allocation36], 0
    %40 = vsyncpa [#allocation10], 0
    %s41 = scalar_lea.sflag [#allocation10], 1
    %42 = vsyncpa %s41, 0
    %43 = vsyncpa [#allocation40], 0
    %s44 = scalar_lea.sflag [#allocation40], 1
    %45 = vsyncpa %s44, 0
    loop: start=0, step=1, limit=4
    $region2: #{lm_backbone_forward.6} parent=1 // loop_pre_header
      _
    $region3: #{lm_backbone_forward.6} parent=1 // loop_header
      %s47 = sphi 0, %s51
      %p48 = scmp.ge.s32.totalorder %s47, 4
      %s54 = sphi 0, %s66
      %s55 = sphi 0, %s62
      %s56 = sphi 0, %s54
      %s57 = sphi 0, %s55
      %s58 = sphi 0, %s56
      %s59 = sphi 0, %s57
      %s71 = sphi 0, %s73
      %s74 = sphi 0, %s71
      %s75 = sphi 0, %s74
      %s91 = sphi 0, %s75
      %s99 = sphi 0, %s101
      %s102 = sphi 0, %s99
      %s103 = sphi 0, %s102
      %s119 = sphi 0, %s103
      %s123 = sphi 0, %s123
      %s125 = sphi 0, %s123
      %s126 = sphi 0, %s125
      %s140 = sphi 0, %s126
      %s144 = sphi 0, %s144
      %s146 = sphi 0, %s144
      %s147 = sphi 0, %s146
      %s161 = sphi 0, %s147
      %s165 = sphi 0, %s165
      %s167 = sphi 0, %s165
      %s168 = sphi 0, %s167
      %s182 = sphi 0, %s168
      %s186 = sphi 0, %s186
      %s188 = sphi 0, %s186
      %s189 = sphi 0, %s188
      %s203 = sphi 0, %s189
      %s207 = sphi 0, %s207
      %s209 = sphi 0, %s207
      %s210 = sphi 0, %s209
      %s224 = sphi 0, %s210
      %s228 = sphi 0, %s228
      %s230 = sphi 0, %s228
      %s231 = sphi 0, %s230
      %s245 = sphi 0, %s231
      %s249 = sphi 0, %s249
      %s251 = sphi 0, %s249
      %s252 = sphi 0, %s251
      %s266 = sphi 0, %s252
      %s270 = sphi 0, %s270
      %s272 = sphi 0, %s270
      %s273 = sphi 0, %s272
      %s287 = sphi 0, %s273
      %s291 = sphi 0, %s291
      %s293 = sphi 0, %s291
      %s294 = sphi 0, %s293
      %s308 = sphi 0, %s294
      %s312 = sphi 0, %s312
      %s314 = sphi 0, %s312
      %s315 = sphi 0, %s314
      %s329 = sphi 0, %s315
      %s333 = sphi 0, %s333
      %s335 = sphi 0, %s333
      %s336 = sphi 0, %s335
      %s350 = sphi 0, %s336
      %s354 = sphi 0, %s354
      %s356 = sphi 0, %s354
      %s357 = sphi 0, %s356
      %s371 = sphi 0, %s357
      %s375 = sphi 0, %s375
      %s377 = sphi 0, %s375
      %s378 = sphi 0, %s377
      %s392 = sphi 0, %s378
      %s396 = sphi 0, %s396
      %s398 = sphi 0, %s396
      %s399 = sphi 0, %s398
      %s413 = sphi 0, %s399
      %s417 = sphi 0, %s417
      %s419 = sphi 0, %s417
      %s420 = sphi 0, %s419
      %s434 = sphi 0, %s420
      %s438 = sphi 0, %s438
      %s440 = sphi 0, %s438
      %s441 = sphi 0, %s440
      %s455 = sphi 0, %s441
      %s459 = sphi 0, %s459
      %s461 = sphi 0, %s459
      %s462 = sphi 0, %s461
      %s476 = sphi 0, %s462
      %s484 = sphi 0, %s486
      %s487 = sphi 0, %s484
      %s488 = sphi 0, %s487
      %s504 = sphi 0, %s488
      %s512 = sphi 0, %s514
      %s515 = sphi 0, %s512
      %s516 = sphi 0, %s515
      %s532 = sphi 0, %s516
    $region4: #{lm_backbone_forward.6} parent=1 // loop_header_branch
      %50 = sbr.rel (%p48) target = $region8
    $region5: #{lm_backbone_forward.6} parent=1 // loop_body
      %s52 = ssub.s32 %s47, 1
      %s53 = ssub.s32 %s47, 2
      %s60 = sadd.s32 1, %s55
      %p61 = scmp.ge.s32.totalorder %s60, 1
      %s62 = scalar_select %p61, 0, %s60
      %s63 = sadd.s32 1, %s54
      %s64 = scalar_select %p61, %s63, %s54
      %p65 = scmp.ge.s32.totalorder %s64, 2
      %s66 = scalar_select %p65, 0, %s64
      %s67 = ssub.s32 %s54, %s66
      %s68 = ssub.s32 %s55, %s62
      %s69 = sor.u32 %s67, %s68
      %p70 = scmp.eq.s32.totalorder %s69, 0
      %s72 = sadd.s32 %s71, 1
      %s73 = scalar_select %p70, %s71, %s72
      %p76 = pneg %p70
      %p77 = scmp.eq.s32.totalorder %s47, 1
      %p78 = por %p76, %p77
      %p79 = scmp.ne.s32.totalorder %s71, %s74
      %p80 = scmp.eq.s32.totalorder %s47, 0
      %p81 = por %p79, %p80
      %p82 = scmp.ne.s32.totalorder %s71, %s74
      %p83 = scmp.eq.s32.totalorder %s52, 1
      %p84 = por %p82, %p83
      %p85 = scmp.ne.s32.totalorder %s74, %s75
      %p86 = scmp.eq.s32.totalorder %s52, 0
      %p87 = por %p85, %p86
      %p88 = scmp.ne.s32.totalorder %s74, %s75
      %p89 = scmp.eq.s32.totalorder %s53, 1
      %p90 = por %p88, %p89
      %p92 = scmp.ne.s32.totalorder %s75, %s91
      %p93 = scmp.eq.s32.totalorder %s53, 0
      %p94 = por %p92, %p93
      %s95 = ssub.s32 %s54, %s66
      %s96 = ssub.s32 %s55, %s62
      %s97 = sor.u32 %s95, %s96
      %p98 = scmp.eq.s32.totalorder %s97, 0
      %s100 = sadd.s32 %s99, 1
      %s101 = scalar_select %p98, %s99, %s100
      %p104 = pneg %p98
      %p105 = scmp.eq.s32.totalorder %s47, 1
      %p106 = por %p104, %p105
      %p107 = scmp.ne.s32.totalorder %s99, %s102
      %p108 = scmp.eq.s32.totalorder %s47, 0
      %p109 = por %p107, %p108
      %p110 = scmp.ne.s32.totalorder %s99, %s102
      %p111 = scmp.eq.s32.totalorder %s52, 1
      %p112 = por %p110, %p111
      %p113 = scmp.ne.s32.totalorder %s102, %s103
      %p114 = scmp.eq.s32.totalorder %s52, 0
      %p115 = por %p113, %p114
      %p116 = scmp.ne.s32.totalorder %s102, %s103
      %p117 = scmp.eq.s32.totalorder %s53, 1
      %p118 = por %p116, %p117
      %p120 = scmp.ne.s32.totalorder %s103, %s119
      %p121 = scmp.eq.s32.totalorder %s53, 0
      %p122 = por %p120, %p121
      %s124 = sadd.s32 %s123, 1
      %p127 = scmp.eq.s32.totalorder %s47, 1
      %p128 = scmp.ne.s32.totalorder %s123, %s125
      %p129 = scmp.eq.s32.totalorder %s47, 0
      %p130 = por %p128, %p129
      %p131 = scmp.ne.s32.totalorder %s123, %s125
      %p132 = scmp.eq.s32.totalorder %s52, 1
      %p133 = por %p131, %p132
      %p134 = scmp.ne.s32.totalorder %s125, %s126
      %p135 = scmp.eq.s32.totalorder %s52, 0
      %p136 = por %p134, %p135
      %p137 = scmp.ne.s32.totalorder %s125, %s126
      %p138 = scmp.eq.s32.totalorder %s53, 1
      %p139 = por %p137, %p138
      %p141 = scmp.ne.s32.totalorder %s126, %s140
      %p142 = scmp.eq.s32.totalorder %s53, 0
      %p143 = por %p141, %p142
      %s145 = sadd.s32 %s144, 1
      %p148 = scmp.eq.s32.totalorder %s47, 1
      %p149 = scmp.ne.s32.totalorder %s144, %s146
      %p150 = scmp.eq.s32.totalorder %s47, 0
      %p151 = por %p149, %p150
      %p152 = scmp.ne.s32.totalorder %s144, %s146
      %p153 = scmp.eq.s32.totalorder %s52, 1
      %p154 = por %p152, %p153
      %p155 = scmp.ne.s32.totalorder %s146, %s147
      %p156 = scmp.eq.s32.totalorder %s52, 0
      %p157 = por %p155, %p156
      %p158 = scmp.ne.s32.totalorder %s146, %s147
      %p159 = scmp.eq.s32.totalorder %s53, 1
      %p160 = por %p158, %p159
      %p162 = scmp.ne.s32.totalorder %s147, %s161
      %p163 = scmp.eq.s32.totalorder %s53, 0
      %p164 = por %p162, %p163
      %s166 = sadd.s32 %s165, 1
      %p169 = scmp.eq.s32.totalorder %s47, 1
      %p170 = scmp.ne.s32.totalorder %s165, %s167
      %p171 = scmp.eq.s32.totalorder %s47, 0
      %p172 = por %p170, %p171
      %p173 = scmp.ne.s32.totalorder %s165, %s167
      %p174 = scmp.eq.s32.totalorder %s52, 1
      %p175 = por %p173, %p174
      %p176 = scmp.ne.s32.totalorder %s167, %s168
      %p177 = scmp.eq.s32.totalorder %s52, 0
      %p178 = por %p176, %p177
      %p179 = scmp.ne.s32.totalorder %s167, %s168
      %p180 = scmp.eq.s32.totalorder %s53, 1
      %p181 = por %p179, %p180
      %p183 = scmp.ne.s32.totalorder %s168, %s182
      %p184 = scmp.eq.s32.totalorder %s53, 0
      %p185 = por %p183, %p184
      %s187 = sadd.s32 %s186, 1
      %p190 = scmp.eq.s32.totalorder %s47, 1
      %p191 = scmp.ne.s32.totalorder %s186, %s188
      %p192 = scmp.eq.s32.totalorder %s47, 0
      %p193 = por %p191, %p192
      %p194 = scmp.ne.s32.totalorder %s186, %s188
      %p195 = scmp.eq.s32.totalorder %s52, 1
      %p196 = por %p194, %p195
      %p197 = scmp.ne.s32.totalorder %s188, %s189
      %p198 = scmp.eq.s32.totalorder %s52, 0
      %p199 = por %p197, %p198
      %p200 = scmp.ne.s32.totalorder %s188, %s189
      %p201 = scmp.eq.s32.totalorder %s53, 1
      %p202 = por %p200, %p201
      %p204 = scmp.ne.s32.totalorder %s189, %s203
      %p205 = scmp.eq.s32.totalorder %s53, 0
      %p206 = por %p204, %p205
      %s208 = sadd.s32 %s207, 1
      %p211 = scmp.eq.s32.totalorder %s47, 1
      %p212 = scmp.ne.s32.totalorder %s207, %s209
      %p213 = scmp.eq.s32.totalorder %s47, 0
      %p214 = por %p212, %p213
      %p215 = scmp.ne.s32.totalorder %s207, %s209
      %p216 = scmp.eq.s32.totalorder %s52, 1
      %p217 = por %p215, %p216
      %p218 = scmp.ne.s32.totalorder %s209, %s210
      %p219 = scmp.eq.s32.totalorder %s52, 0
      %p220 = por %p218, %p219
      %p221 = scmp.ne.s32.totalorder %s209, %s210
      %p222 = scmp.eq.s32.totalorder %s53, 1
      %p223 = por %p221, %p222
      %p225 = scmp.ne.s32.totalorder %s210, %s224
      %p226 = scmp.eq.s32.totalorder %s53, 0
      %p227 = por %p225, %p226
      %s229 = sadd.s32 %s228, 1
      %p232 = scmp.eq.s32.totalorder %s47, 1
      %p233 = scmp.ne.s32.totalorder %s228, %s230
      %p234 = scmp.eq.s32.totalorder %s47, 0
      %p235 = por %p233, %p234
      %p236 = scmp.ne.s32.totalorder %s228, %s230
      %p237 = scmp.eq.s32.totalorder %s52, 1
      %p238 = por %p236, %p237
      %p239 = scmp.ne.s32.totalorder %s230, %s231
      %p240 = scmp.eq.s32.totalorder %s52, 0
      %p241 = por %p239, %p240
      %p242 = scmp.ne.s32.totalorder %s230, %s231
      %p243 = scmp.eq.s32.totalorder %s53, 1
      %p244 = por %p242, %p243
      %p246 = scmp.ne.s32.totalorder %s231, %s245
      %p247 = scmp.eq.s32.totalorder %s53, 0
      %p248 = por %p246, %p247
      %s250 = sadd.s32 %s249, 1
      %p253 = scmp.eq.s32.totalorder %s47, 1
      %p254 = scmp.ne.s32.totalorder %s249, %s251
      %p255 = scmp.eq.s32.totalorder %s47, 0
      %p256 = por %p254, %p255
      %p257 = scmp.ne.s32.totalorder %s249, %s251
      %p258 = scmp.eq.s32.totalorder %s52, 1
      %p259 = por %p257, %p258
      %p260 = scmp.ne.s32.totalorder %s251, %s252
      %p261 = scmp.eq.s32.totalorder %s52, 0
      %p262 = por %p260, %p261
      %p263 = scmp.ne.s32.totalorder %s251, %s252
      %p264 = scmp.eq.s32.totalorder %s53, 1
      %p265 = por %p263, %p264
      %p267 = scmp.ne.s32.totalorder %s252, %s266
      %p268 = scmp.eq.s32.totalorder %s53, 0
      %p269 = por %p267, %p268
      %s271 = sadd.s32 %s270, 1
      %p274 = scmp.eq.s32.totalorder %s47, 1
      %p275 = scmp.ne.s32.totalorder %s270, %s272
      %p276 = scmp.eq.s32.totalorder %s47, 0
      %p277 = por %p275, %p276
      %p278 = scmp.ne.s32.totalorder %s270, %s272
      %p279 = scmp.eq.s32.totalorder %s52, 1
      %p280 = por %p278, %p279
      %p281 = scmp.ne.s32.totalorder %s272, %s273
      %p282 = scmp.eq.s32.totalorder %s52, 0
      %p283 = por %p281, %p282
      %p284 = scmp.ne.s32.totalorder %s272, %s273
      %p285 = scmp.eq.s32.totalorder %s53, 1
      %p286 = por %p284, %p285
      %p288 = scmp.ne.s32.totalorder %s273, %s287
      %p289 = scmp.eq.s32.totalorder %s53, 0
      %p290 = por %p288, %p289
      %s292 = sadd.s32 %s291, 1
      %p295 = scmp.eq.s32.totalorder %s47, 1
      %p296 = scmp.ne.s32.totalorder %s291, %s293
      %p297 = scmp.eq.s32.totalorder %s47, 0
      %p298 = por %p296, %p297
      %p299 = scmp.ne.s32.totalorder %s291, %s293
      %p300 = scmp.eq.s32.totalorder %s52, 1
      %p301 = por %p299, %p300
      %p302 = scmp.ne.s32.totalorder %s293, %s294
      %p303 = scmp.eq.s32.totalorder %s52, 0
      %p304 = por %p302, %p303
      %p305 = scmp.ne.s32.totalorder %s293, %s294
      %p306 = scmp.eq.s32.totalorder %s53, 1
      %p307 = por %p305, %p306
      %p309 = scmp.ne.s32.totalorder %s294, %s308
      %p310 = scmp.eq.s32.totalorder %s53, 0
      %p311 = por %p309, %p310
      %s313 = sadd.s32 %s312, 1
      %p316 = scmp.eq.s32.totalorder %s47, 1
      %p317 = scmp.ne.s32.totalorder %s312, %s314
      %p318 = scmp.eq.s32.totalorder %s47, 0
      %p319 = por %p317, %p318
      %p320 = scmp.ne.s32.totalorder %s312, %s314
      %p321 = scmp.eq.s32.totalorder %s52, 1
      %p322 = por %p320, %p321
      %p323 = scmp.ne.s32.totalorder %s314, %s315
      %p324 = scmp.eq.s32.totalorder %s52, 0
      %p325 = por %p323, %p324
      %p326 = scmp.ne.s32.totalorder %s314, %s315
      %p327 = scmp.eq.s32.totalorder %s53, 1
      %p328 = por %p326, %p327
      %p330 = scmp.ne.s32.totalorder %s315, %s329
      %p331 = scmp.eq.s32.totalorder %s53, 0
      %p332 = por %p330, %p331
      %s334 = sadd.s32 %s333, 1
      %p337 = scmp.eq.s32.totalorder %s47, 1
      %p338 = scmp.ne.s32.totalorder %s333, %s335
      %p339 = scmp.eq.s32.totalorder %s47, 0
      %p340 = por %p338, %p339
      %p341 = scmp.ne.s32.totalorder %s333, %s335
      %p342 = scmp.eq.s32.totalorder %s52, 1
      %p343 = por %p341, %p342
      %p344 = scmp.ne.s32.totalorder %s335, %s336
      %p345 = scmp.eq.s32.totalorder %s52, 0
      %p346 = por %p344, %p345
      %p347 = scmp.ne.s32.totalorder %s335, %s336
      %p348 = scmp.eq.s32.totalorder %s53, 1
      %p349 = por %p347, %p348
      %p351 = scmp.ne.s32.totalorder %s336, %s350
      %p352 = scmp.eq.s32.totalorder %s53, 0
      %p353 = por %p351, %p352
      %s355 = sadd.s32 %s354, 1
      %p358 = scmp.eq.s32.totalorder %s47, 1
      %p359 = scmp.ne.s32.totalorder %s354, %s356
      %p360 = scmp.eq.s32.totalorder %s47, 0
      %p361 = por %p359, %p360
      %p362 = scmp.ne.s32.totalorder %s354, %s356
      %p363 = scmp.eq.s32.totalorder %s52, 1
      %p364 = por %p362, %p363
      %p365 = scmp.ne.s32.totalorder %s356, %s357
      %p366 = scmp.eq.s32.totalorder %s52, 0
      %p367 = por %p365, %p366
      %p368 = scmp.ne.s32.totalorder %s356, %s357
      %p369 = scmp.eq.s32.totalorder %s53, 1
      %p370 = por %p368, %p369
      %p372 = scmp.ne.s32.totalorder %s357, %s371
      %p373 = scmp.eq.s32.totalorder %s53, 0
      %p374 = por %p372, %p373
      %s376 = sadd.s32 %s375, 1
      %p379 = scmp.eq.s32.totalorder %s47, 1
      %p380 = scmp.ne.s32.totalorder %s375, %s377
      %p381 = scmp.eq.s32.totalorder %s47, 0
      %p382 = por %p380, %p381
      %p383 = scmp.ne.s32.totalorder %s375, %s377
      %p384 = scmp.eq.s32.totalorder %s52, 1
      %p385 = por %p383, %p384
      %p386 = scmp.ne.s32.totalorder %s377, %s378
      %p387 = scmp.eq.s32.totalorder %s52, 0
      %p388 = por %p386, %p387
      %p389 = scmp.ne.s32.totalorder %s377, %s378
      %p390 = scmp.eq.s32.totalorder %s53, 1
      %p391 = por %p389, %p390
      %p393 = scmp.ne.s32.totalorder %s378, %s392
      %p394 = scmp.eq.s32.totalorder %s53, 0
      %p395 = por %p393, %p394
      %s397 = sadd.s32 %s396, 1
      %p400 = scmp.eq.s32.totalorder %s47, 1
      %p401 = scmp.ne.s32.totalorder %s396, %s398
      %p402 = scmp.eq.s32.totalorder %s47, 0
      %p403 = por %p401, %p402
      %p404 = scmp.ne.s32.totalorder %s396, %s398
      %p405 = scmp.eq.s32.totalorder %s52, 1
      %p406 = por %p404, %p405
      %p407 = scmp.ne.s32.totalorder %s398, %s399
      %p408 = scmp.eq.s32.totalorder %s52, 0
      %p409 = por %p407, %p408
      %p410 = scmp.ne.s32.totalorder %s398, %s399
      %p411 = scmp.eq.s32.totalorder %s53, 1
      %p412 = por %p410, %p411
      %p414 = scmp.ne.s32.totalorder %s399, %s413
      %p415 = scmp.eq.s32.totalorder %s53, 0
      %p416 = por %p414, %p415
      %s418 = sadd.s32 %s417, 1
      %p421 = scmp.eq.s32.totalorder %s47, 1
      %p422 = scmp.ne.s32.totalorder %s417, %s419
      %p423 = scmp.eq.s32.totalorder %s47, 0
      %p424 = por %p422, %p423
      %p425 = scmp.ne.s32.totalorder %s417, %s419
      %p426 = scmp.eq.s32.totalorder %s52, 1
      %p427 = por %p425, %p426
      %p428 = scmp.ne.s32.totalorder %s419, %s420
      %p429 = scmp.eq.s32.totalorder %s52, 0
      %p430 = por %p428, %p429
      %p431 = scmp.ne.s32.totalorder %s419, %s420
      %p432 = scmp.eq.s32.totalorder %s53, 1
      %p433 = por %p431, %p432
      %p435 = scmp.ne.s32.totalorder %s420, %s434
      %p436 = scmp.eq.s32.totalorder %s53, 0
      %p437 = por %p435, %p436
      %s439 = sadd.s32 %s438, 1
      %p442 = scmp.eq.s32.totalorder %s47, 1
      %p443 = scmp.ne.s32.totalorder %s438, %s440
      %p444 = scmp.eq.s32.totalorder %s47, 0
      %p445 = por %p443, %p444
      %p446 = scmp.ne.s32.totalorder %s438, %s440
      %p447 = scmp.eq.s32.totalorder %s52, 1
      %p448 = por %p446, %p447
      %p449 = scmp.ne.s32.totalorder %s440, %s441
      %p450 = scmp.eq.s32.totalorder %s52, 0
      %p451 = por %p449, %p450
      %p452 = scmp.ne.s32.totalorder %s440, %s441
      %p453 = scmp.eq.s32.totalorder %s53, 1
      %p454 = por %p452, %p453
      %p456 = scmp.ne.s32.totalorder %s441, %s455
      %p457 = scmp.eq.s32.totalorder %s53, 0
      %p458 = por %p456, %p457
      %s460 = sadd.s32 %s459, 1
      %p463 = scmp.eq.s32.totalorder %s47, 1
      %p464 = scmp.ne.s32.totalorder %s459, %s461
      %p465 = scmp.eq.s32.totalorder %s47, 0
      %p466 = por %p464, %p465
      %p467 = scmp.ne.s32.totalorder %s459, %s461
      %p468 = scmp.eq.s32.totalorder %s52, 1
      %p469 = por %p467, %p468
      %p470 = scmp.ne.s32.totalorder %s461, %s462
      %p471 = scmp.eq.s32.totalorder %s52, 0
      %p472 = por %p470, %p471
      %p473 = scmp.ne.s32.totalorder %s461, %s462
      %p474 = scmp.eq.s32.totalorder %s53, 1
      %p475 = por %p473, %p474
      %p477 = scmp.ne.s32.totalorder %s462, %s476
      %p478 = scmp.eq.s32.totalorder %s53, 0
      %p479 = por %p477, %p478
      %s480 = ssub.s32 %s54, %s66
      %s481 = ssub.s32 %s55, %s62
      %s482 = sor.u32 %s480, %s481
      %p483 = scmp.eq.s32.totalorder %s482, 0
      %s485 = sadd.s32 %s484, 1
      %s486 = scalar_select %p483, %s484, %s485
      %p489 = pneg %p483
      %p490 = scmp.eq.s32.totalorder %s47, 1
      %p491 = por %p489, %p490
      %p492 = scmp.ne.s32.totalorder %s484, %s487
      %p493 = scmp.eq.s32.totalorder %s47, 0
      %p494 = por %p492, %p493
      %p495 = scmp.ne.s32.totalorder %s484, %s487
      %p496 = scmp.eq.s32.totalorder %s52, 1
      %p497 = por %p495, %p496
      %p498 = scmp.ne.s32.totalorder %s487, %s488
      %p499 = scmp.eq.s32.totalorder %s52, 0
      %p500 = por %p498, %p499
      %p501 = scmp.ne.s32.totalorder %s487, %s488
      %p502 = scmp.eq.s32.totalorder %s53, 1
      %p503 = por %p501, %p502
      %p505 = scmp.ne.s32.totalorder %s488, %s504
      %p506 = scmp.eq.s32.totalorder %s53, 0
      %p507 = por %p505, %p506
      %s508 = ssub.s32 %s54, %s66
      %s509 = ssub.s32 %s55, %s62
      %s510 = sor.u32 %s508, %s509
      %p511 = scmp.eq.s32.totalorder %s510, 0
      %s513 = sadd.s32 %s512, 1
      %s514 = scalar_select %p511, %s512, %s513
      %p517 = pneg %p511
      %p518 = scmp.eq.s32.totalorder %s47, 1
      %p519 = por %p517, %p518
      %p520 = scmp.ne.s32.totalorder %s512, %s515
      %p521 = scmp.eq.s32.totalorder %s47, 0
      %p522 = por %p520, %p521
      %p523 = scmp.ne.s32.totalorder %s512, %s515
      %p524 = scmp.eq.s32.totalorder %s52, 1
      %p525 = por %p523, %p524
      %p526 = scmp.ne.s32.totalorder %s515, %s516
      %p527 = scmp.eq.s32.totalorder %s52, 0
      %p528 = por %p526, %p527
      %p529 = scmp.ne.s32.totalorder %s515, %s516
      %p530 = scmp.eq.s32.totalorder %s53, 1
      %p531 = por %p529, %p530
      %p533 = scmp.ne.s32.totalorder %s516, %s532
      %p534 = scmp.eq.s32.totalorder %s53, 0
      %p535 = por %p533, %p534
      %p536 = scmp.le.s32.totalorder 1, %s47
      %p537 = scmp.lt.s32.totalorder %s47, 3
      %p538 = pnand %p536, %p537
      %p539 = pneg %p538
      // Predicated region
      $region9: #{lm_backbone_forward.6} parent=5 // pred_check
        _
      $region10: #{lm_backbone_forward.6} parent=5 // pred_check_branch
        %541 = sbr.rel (%p538) target = $region12
      $region11: #{lm_backbone_forward.6} parent=5 // pred_region
        %s542 = ssub.s32 %s47, 1
        // Predicated region
        $region13: #{lm_backbone_forward.6} parent=11 // pred_check
          %p543 = pneg %p136
        $region14: #{lm_backbone_forward.6} parent=11 // pred_check_branch
          %545 = sbr.rel (%p543) target = $region16
        $region15: #{lm_backbone_forward.6} parent=11 // pred_region
          %s547 = ssub.s32 16, 16
          %548 = vsyncadd [#allocation12], %s547
          %s550 = sshll.u32 [#allocation13], 4
          %s551 = int_to_ptr.vmem [resolvable:$true] %s550
          %553 = dma.hbm_to_vmem [thread:$0]  %s2, 16, %s551, [#allocation12]
        $region16: #{lm_backbone_forward.6} parent=11 // pred_fallthru
          _
        // Predicated region
        $region17: #{lm_backbone_forward.6} parent=11 // pred_check
          %p554 = pneg %p157
        $region18: #{lm_backbone_forward.6} parent=11 // pred_check_branch
          %556 = sbr.rel (%p554) target = $region20
        $region19: #{lm_backbone_forward.6} parent=11 // pred_region
          %s558 = ssub.s32 16, 16
          %559 = vsyncadd [#allocation15], %s558
          %s561 = sshll.u32 [#allocation14], 4
          %s562 = int_to_ptr.vmem [resolvable:$true] %s561
          %564 = dma.hbm_to_vmem [thread:$0]  %s3, 16, %s562, [#allocation15]
        $region20: #{lm_backbone_forward.6} parent=11 // pred_fallthru
          _
        // Predicated region
        $region21: #{lm_backbone_forward.6} parent=11 // pred_check
          %p565 = pneg %p178
        $region22: #{lm_backbone_forward.6} parent=11 // pred_check_branch
          %567 = sbr.rel (%p565) target = $region24
        $region23: #{lm_backbone_forward.6} parent=11 // pred_region
          %s569 = ssub.s32 256, 256
          %570 = vsyncadd [#allocation15], %s569
          %s571 = sshll.u32 [#allocation16], 4
          %s572 = int_to_ptr.vmem [resolvable:$true] %s571
          %577 = dma.hbm_to_vmem [thread:$0]  %s4, 256, %s572, [#allocation15], 64, 64, 4
        $region24: #{lm_backbone_forward.6} parent=11 // pred_fallthru
          _
        // Predicated region
        $region25: #{lm_backbone_forward.6} parent=11 // pred_check
          %p578 = pneg %p199
        $region26: #{lm_backbone_forward.6} parent=11 // pred_check_branch
          %580 = sbr.rel (%p578) target = $region28
        $region27: #{lm_backbone_forward.6} parent=11 // pred_region
          %s582 = ssub.s32 64, 64
          %583 = vsyncadd [#allocation18], %s582
          %s585 = sshll.u32 [#allocation17], 4
          %s586 = int_to_ptr.vmem [resolvable:$true] %s585
          %588 = dma.hbm_to_vmem [thread:$0]  %s5, 64, %s586, [#allocation18]
        $region28: #{lm_backbone_forward.6} parent=11 // pred_fallthru
          _
        // Predicated region
        $region29: #{lm_backbone_forward.6} parent=11 // pred_check
          %p589 = pneg %p220
        $region30: #{lm_backbone_forward.6} parent=11 // pred_check_branch
          %591 = sbr.rel (%p589) target = $region32
        $region31: #{lm_backbone_forward.6} parent=11 // pred_region
          %s593 = ssub.s32 16, 16
          %594 = vsyncadd [#allocation18], %s593
          %s596 = sshll.u32 [#allocation19], 4
          %s597 = int_to_ptr.vmem [resolvable:$true] %s596
          %599 = dma.hbm_to_vmem [thread:$0]  %s6, 16, %s597, [#allocation18]
        $region32: #{lm_backbone_forward.6} parent=11 // pred_fallthru
          _
        // Predicated region
        $region33: #{lm_backbone_forward.6} parent=11 // pred_check
          %p600 = pneg %p241
        $region34: #{lm_backbone_forward.6} parent=11 // pred_check_branch
          %602 = sbr.rel (%p600) target = $region36
        $region35: #{lm_backbone_forward.6} parent=11 // pred_region
          %s604 = ssub.s32 512, 512
          %605 = vsyncadd [#allocation21], %s604
          %s606 = sshll.u32 [#allocation20], 4
          %s607 = int_to_ptr.vmem [resolvable:$true] %s606
          %612 = dma.hbm_to_vmem [thread:$0]  %s7, 512, %s607, [#allocation21], 64, 64, 4
        $region36: #{lm_backbone_forward.6} parent=11 // pred_fallthru
          _
        // Predicated region
        $region37: #{lm_backbone_forward.6} parent=11 // pred_check
          %p613 = pneg %p262
        $region38: #{lm_backbone_forward.6} parent=11 // pred_check_branch
          %615 = sbr.rel (%p613) target = $region40
        $region39: #{lm_backbone_forward.6} parent=11 // pred_region
          %s617 = ssub.s32 16, 16
          %618 = vsyncadd [#allocation21], %s617
          %s620 = sshll.u32 [#allocation22], 4
          %s621 = int_to_ptr.vmem [resolvable:$true] %s620
          %623 = dma.hbm_to_vmem [thread:$0]  %s8, 16, %s621, [#allocation21]
        $region40: #{lm_backbone_forward.6} parent=11 // pred_fallthru
          _
        // Predicated region
        $region41: #{lm_backbone_forward.6} parent=11 // pred_check
          %p624 = pneg %p283
        $region42: #{lm_backbone_forward.6} parent=11 // pred_check_branch
          %626 = sbr.rel (%p624) target = $region44
        $region43: #{lm_backbone_forward.6} parent=11 // pred_region
          %s628 = ssub.s32 16, 16
          %629 = vsyncadd [#allocation24], %s628
          %s631 = sshll.u32 [#allocation23], 4
          %s632 = int_to_ptr.vmem [resolvable:$true] %s631
          %634 = dma.hbm_to_vmem [thread:$0]  %s9, 16, %s632, [#allocation24]
        $region44: #{lm_backbone_forward.6} parent=11 // pred_fallthru
          _
        // Predicated region
        $region45: #{lm_backbone_forward.6} parent=11 // pred_check
          %p635 = pneg %p304
        $region46: #{lm_backbone_forward.6} parent=11 // pred_check_branch
          %637 = sbr.rel (%p635) target = $region48
        $region47: #{lm_backbone_forward.6} parent=11 // pred_region
          %s639 = ssub.s32 128, 128
          %640 = vsyncadd [#allocation24], %s639
          %s642 = sshll.u32 [#allocation25], 4
          %s643 = int_to_ptr.vmem [resolvable:$true] %s642
          %645 = dma.hbm_to_vmem [thread:$0]  %s10, 128, %s643, [#allocation24]
        $region48: #{lm_backbone_forward.6} parent=11 // pred_fallthru
          _
        // Predicated region
        $region49: #{lm_backbone_forward.6} parent=11 // pred_check
          %p646 = pneg %p325
        $region50: #{lm_backbone_forward.6} parent=11 // pred_check_branch
          %648 = sbr.rel (%p646) target = $region52
        $region51: #{lm_backbone_forward.6} parent=11 // pred_region
          %s650 = ssub.s32 16, 16
          %651 = vsyncadd [#allocation27], %s650
          %s653 = sshll.u32 [#allocation26], 4
          %s654 = int_to_ptr.vmem [resolvable:$true] %s653
          %656 = dma.hbm_to_vmem [thread:$0]  %s11, 16, %s654, [#allocation27]
        $region52: #{lm_backbone_forward.6} parent=11 // pred_fallthru
          _
        // Predicated region
        $region53: #{lm_backbone_forward.6} parent=11 // pred_check
          %p657 = pneg %p346
        $region54: #{lm_backbone_forward.6} parent=11 // pred_check_branch
          %659 = sbr.rel (%p657) target = $region56
        $region55: #{lm_backbone_forward.6} parent=11 // pred_region
          %s661 = ssub.s32 512, 512
          %662 = vsyncadd [#allocation27], %s661
          %s663 = sshll.u32 [#allocation28], 4
          %s664 = int_to_ptr.vmem [resolvable:$true] %s663
          %669 = dma.hbm_to_vmem [thread:$0]  %s12, 512, %s664, [#allocation27], 64, 64, 4
        $region56: #{lm_backbone_forward.6} parent=11 // pred_fallthru
          _
        // Predicated region
        $region57: #{lm_backbone_forward.6} parent=11 // pred_check
          %p670 = pneg %p367
        $region58: #{lm_backbone_forward.6} parent=11 // pred_check_branch
          %672 = sbr.rel (%p670) target = $region60
        $region59: #{lm_backbone_forward.6} parent=11 // pred_region
          %s674 = ssub.s32 16, 16
          %675 = vsyncadd [#allocation30], %s674
          %s677 = sshll.u32 [#allocation29], 4
          %s678 = int_to_ptr.vmem [resolvable:$true] %s677
          %680 = dma.hbm_to_vmem [thread:$0]  %s13, 16, %s678, [#allocation30]
        $region60: #{lm_backbone_forward.6} parent=11 // pred_fallthru
          _
        // Predicated region
        $region61: #{lm_backbone_forward.6} parent=11 // pred_check
          %p681 = pneg %p388
        $region62: #{lm_backbone_forward.6} parent=11 // pred_check_branch
          %683 = sbr.rel (%p681) target = $region64
        $region63: #{lm_backbone_forward.6} parent=11 // pred_region
          %s685 = ssub.s32 16, 16
          %686 = vsyncadd [#allocation30], %s685
          %s688 = sshll.u32 [#allocation31], 4
          %s689 = int_to_ptr.vmem [resolvable:$true] %s688
          %691 = dma.hbm_to_vmem [thread:$0]  %s14, 16, %s689, [#allocation30]
        $region64: #{lm_backbone_forward.6} parent=11 // pred_fallthru
          _
        // Predicated region
        $region65: #{lm_backbone_forward.6} parent=11 // pred_check
          %p692 = pneg %p409
        $region66: #{lm_backbone_forward.6} parent=11 // pred_check_branch
          %694 = sbr.rel (%p692) target = $region68
        $region67: #{lm_backbone_forward.6} parent=11 // pred_region
          %s696 = ssub.s32 256, 256
          %697 = vsyncadd [#allocation33], %s696
          %s698 = sshll.u32 [#allocation32], 4
          %s699 = int_to_ptr.vmem [resolvable:$true] %s698
          %704 = dma.hbm_to_vmem [thread:$0]  %s15, 256, %s699, [#allocation33], 64, 64, 4
        $region68: #{lm_backbone_forward.6} parent=11 // pred_fallthru
          _
        // Predicated region
        $region69: #{lm_backbone_forward.6} parent=11 // pred_check
          %p705 = pneg %p430
        $region70: #{lm_backbone_forward.6} parent=11 // pred_check_branch
          %707 = sbr.rel (%p705) target = $region72
        $region71: #{lm_backbone_forward.6} parent=11 // pred_region
          %s709 = ssub.s32 16, 16
          %710 = vsyncadd [#allocation33], %s709
          %s712 = sshll.u32 [#allocation34], 4
          %s713 = int_to_ptr.vmem [resolvable:$true] %s712
          %715 = dma.hbm_to_vmem [thread:$0]  %s16, 16, %s713, [#allocation33]
        $region72: #{lm_backbone_forward.6} parent=11 // pred_fallthru
          _
        // Predicated region
        $region73: #{lm_backbone_forward.6} parent=11 // pred_check
          %p716 = pneg %p451
        $region74: #{lm_backbone_forward.6} parent=11 // pred_check_branch
          %718 = sbr.rel (%p716) target = $region76
        $region75: #{lm_backbone_forward.6} parent=11 // pred_region
          %s720 = ssub.s32 512, 512
          %721 = vsyncadd [#allocation36], %s720
          %s722 = sshll.u32 [#allocation35], 4
          %s723 = int_to_ptr.vmem [resolvable:$true] %s722
          %728 = dma.hbm_to_vmem [thread:$0]  %s17, 512, %s723, [#allocation36], 64, 64, 4
        $region76: #{lm_backbone_forward.6} parent=11 // pred_fallthru
          _
        // Predicated region
        $region77: #{lm_backbone_forward.6} parent=11 // pred_check
          %p729 = pneg %p472
        $region78: #{lm_backbone_forward.6} parent=11 // pred_check_branch
          %731 = sbr.rel (%p729) target = $region80
        $region79: #{lm_backbone_forward.6} parent=11 // pred_region
          %s733 = ssub.s32 16, 16
          %734 = vsyncadd [#allocation36], %s733
          %s736 = sshll.u32 [#allocation37], 4
          %s737 = int_to_ptr.vmem [resolvable:$true] %s736
          %739 = dma.hbm_to_vmem [thread:$0]  %s18, 16, %s737, [#allocation36]
        $region80: #{lm_backbone_forward.6} parent=11 // pred_fallthru
          _
      $region12: #{lm_backbone_forward.6} parent=5 // pred_fallthru
        _
      %p740 = scmp.lt.s32.totalorder %s47, 2
      // Predicated region
      $region81: #{lm_backbone_forward.6} parent=5 // pred_check
        %p741 = pneg %p740
      $region82: #{lm_backbone_forward.6} parent=5 // pred_check_branch
        %743 = sbr.rel (%p741) target = $region84
      $region83: #{lm_backbone_forward.6} parent=5 // pred_region
        // Predicated region
        $region85: #{lm_backbone_forward.6} parent=83 // pred_check
          %p744 = pneg %p81
        $region86: #{lm_backbone_forward.6} parent=83 // pred_check_branch
          %746 = sbr.rel (%p744) target = $region88
        $region87: #{lm_backbone_forward.6} parent=83 // pred_region
          %s747 = sand.u32 %s71, 1
          %s748 = scalar_lea.sflag [#allocation9], %s747
          %s749 = sand.u32 %s71, 1
          %s750 = smul.addr %s749, 8
          %s751 = scalar_lea.vmem [#allocation8], %s750
          %s753 = ssub.s32 128, 128
          %754 = vsyncadd %s748, %s753
          %s755 = sadd.s32 %s55, %s54
          %s756 = smul.addr %s755, 128
          %s757 = scalar_lea.hbm %s0, %s756
          %s759 = sshll.u32 %s751, 4
          %s760 = int_to_ptr.vmem [resolvable:$true] %s759
          %762 = dma.hbm_to_vmem [thread:$0]  %s757, 128, %s760, %s748
        $region88: #{lm_backbone_forward.6} parent=83 // pred_fallthru
          _
        // Predicated region
        $region89: #{lm_backbone_forward.6} parent=83 // pred_check
          %p763 = pneg %p109
        $region90: #{lm_backbone_forward.6} parent=83 // pred_check_branch
          %765 = sbr.rel (%p763) target = $region92
        $region91: #{lm_backbone_forward.6} parent=83 // pred_region
          %s766 = sand.u32 %s47, 1
          %s767 = scalar_lea.sflag [#allocation12], %s766
          %s768 = sand.u32 %s99, 1
          %s769 = smul.addr %s768, 8
          %s770 = scalar_lea.vmem [#allocation11], %s769
          %s772 = ssub.s32 128, 128
          %773 = vsyncadd %s767, %s772
          %s774 = sadd.s32 %s55, %s54
          %s775 = smul.addr %s774, 128
          %s776 = scalar_lea.hbm %s1, %s775
          %s778 = sshll.u32 %s770, 4
          %s779 = int_to_ptr.vmem [resolvable:$true] %s778
          %781 = dma.hbm_to_vmem [thread:$0]  %s776, 128, %s779, %s767
        $region92: #{lm_backbone_forward.6} parent=83 // pred_fallthru
          _
      $region84: #{lm_backbone_forward.6} parent=5 // pred_fallthru
        _
      %p782 = scmp.le.s32.totalorder 1, %s47
      %p783 = scmp.lt.s32.totalorder %s47, 3
      %p784 = pnand %p782, %p783
      %p785 = pneg %p784
      // Predicated region
      $region93: #{lm_backbone_forward.6} parent=5 // pred_check
        _
      $region94: #{lm_backbone_forward.6} parent=5 // pred_check_branch
        %787 = sbr.rel (%p784) target = $region96
      $region95: #{lm_backbone_forward.6} parent=5 // pred_region
        %s788 = ssub.s32 %s47, 1
        %s789 = sand.u32 %s74, 1
        %s790 = scalar_lea.sflag [#allocation9], %s789
        %s791 = sand.u32 %s74, 1
        %s792 = smul.addr %s791, 8
        %s793 = scalar_lea.vmem [#allocation8], %s792
        // Predicated region
        $region97: #{lm_backbone_forward.6} parent=95 // pred_check
          %p794 = pneg %p87
        $region98: #{lm_backbone_forward.6} parent=95 // pred_check_branch
          %796 = sbr.rel (%p794) target = $region100
        $region99: #{lm_backbone_forward.6} parent=95 // pred_region
          %797 = dma.done %s790, 128
        $region100: #{lm_backbone_forward.6} parent=95 // pred_fallthru
          _
        %s798 = sand.u32 %s52, 1
        %s799 = scalar_lea.sflag [#allocation12], %s798
        %s800 = sand.u32 %s102, 1
        %s801 = smul.addr %s800, 8
        %s802 = scalar_lea.vmem [#allocation11], %s801
        // Predicated region
        $region101: #{lm_backbone_forward.6} parent=95 // pred_check
          %p803 = pneg %p115
        $region102: #{lm_backbone_forward.6} parent=95 // pred_check_branch
          %805 = sbr.rel (%p803) target = $region104
        $region103: #{lm_backbone_forward.6} parent=95 // pred_region
          %806 = dma.done %s799, 128
        $region104: #{lm_backbone_forward.6} parent=95 // pred_fallthru
          _
        // Predicated region
        $region105: #{lm_backbone_forward.6} parent=95 // pred_check
          %p807 = pneg %p136
        $region106: #{lm_backbone_forward.6} parent=95 // pred_check_branch
          %809 = sbr.rel (%p807) target = $region108
        $region107: #{lm_backbone_forward.6} parent=95 // pred_region
          %810 = dma.done [#allocation12], 16
        $region108: #{lm_backbone_forward.6} parent=95 // pred_fallthru
          _
        // Predicated region
        $region109: #{lm_backbone_forward.6} parent=95 // pred_check
          %p811 = pneg %p157
        $region110: #{lm_backbone_forward.6} parent=95 // pred_check_branch
          %813 = sbr.rel (%p811) target = $region112
        $region111: #{lm_backbone_forward.6} parent=95 // pred_region
          %814 = dma.done [#allocation15], 16
        $region112: #{lm_backbone_forward.6} parent=95 // pred_fallthru
          _
        // Predicated region
        $region113: #{lm_backbone_forward.6} parent=95 // pred_check
          %p815 = pneg %p178
        $region114: #{lm_backbone_forward.6} parent=95 // pred_check_branch
          %817 = sbr.rel (%p815) target = $region116
        $region115: #{lm_backbone_forward.6} parent=95 // pred_region
          %818 = dma.done [#allocation15], 256
        $region116: #{lm_backbone_forward.6} parent=95 // pred_fallthru
          _
        // Predicated region
        $region117: #{lm_backbone_forward.6} parent=95 // pred_check
          %p819 = pneg %p199
        $region118: #{lm_backbone_forward.6} parent=95 // pred_check_branch
          %821 = sbr.rel (%p819) target = $region120
        $region119: #{lm_backbone_forward.6} parent=95 // pred_region
          %822 = dma.done [#allocation18], 64
        $region120: #{lm_backbone_forward.6} parent=95 // pred_fallthru
          _
        // Predicated region
        $region121: #{lm_backbone_forward.6} parent=95 // pred_check
          %p823 = pneg %p220
        $region122: #{lm_backbone_forward.6} parent=95 // pred_check_branch
          %825 = sbr.rel (%p823) target = $region124
        $region123: #{lm_backbone_forward.6} parent=95 // pred_region
          %826 = dma.done [#allocation18], 16
        $region124: #{lm_backbone_forward.6} parent=95 // pred_fallthru
          _
        // Predicated region
        $region125: #{lm_backbone_forward.6} parent=95 // pred_check
          %p827 = pneg %p241
        $region126: #{lm_backbone_forward.6} parent=95 // pred_check_branch
          %829 = sbr.rel (%p827) target = $region128
        $region127: #{lm_backbone_forward.6} parent=95 // pred_region
          %830 = dma.done [#allocation21], 512
        $region128: #{lm_backbone_forward.6} parent=95 // pred_fallthru
          _
        // Predicated region
        $region129: #{lm_backbone_forward.6} parent=95 // pred_check
          %p831 = pneg %p262
        $region130: #{lm_backbone_forward.6} parent=95 // pred_check_branch
          %833 = sbr.rel (%p831) target = $region132
        $region131: #{lm_backbone_forward.6} parent=95 // pred_region
          %834 = dma.done [#allocation21], 16
        $region132: #{lm_backbone_forward.6} parent=95 // pred_fallthru
          _
        // Predicated region
        $region133: #{lm_backbone_forward.6} parent=95 // pred_check
          %p835 = pneg %p283
        $region134: #{lm_backbone_forward.6} parent=95 // pred_check_branch
          %837 = sbr.rel (%p835) target = $region136
        $region135: #{lm_backbone_forward.6} parent=95 // pred_region
          %838 = dma.done [#allocation24], 16
        $region136: #{lm_backbone_forward.6} parent=95 // pred_fallthru
          _
        // Predicated region
        $region137: #{lm_backbone_forward.6} parent=95 // pred_check
          %p839 = pneg %p304
        $region138: #{lm_backbone_forward.6} parent=95 // pred_check_branch
          %841 = sbr.rel (%p839) target = $region140
        $region139: #{lm_backbone_forward.6} parent=95 // pred_region
          %842 = dma.done [#allocation24], 128
        $region140: #{lm_backbone_forward.6} parent=95 // pred_fallthru
          _
        // Predicated region
        $region141: #{lm_backbone_forward.6} parent=95 // pred_check
          %p843 = pneg %p325
        $region142: #{lm_backbone_forward.6} parent=95 // pred_check_branch
          %845 = sbr.rel (%p843) target = $region144
        $region143: #{lm_backbone_forward.6} parent=95 // pred_region
          %846 = dma.done [#allocation27], 16
        $region144: #{lm_backbone_forward.6} parent=95 // pred_fallthru
          _
        // Predicated region
        $region145: #{lm_backbone_forward.6} parent=95 // pred_check
          %p847 = pneg %p346
        $region146: #{lm_backbone_forward.6} parent=95 // pred_check_branch
          %849 = sbr.rel (%p847) target = $region148
        $region147: #{lm_backbone_forward.6} parent=95 // pred_region
          %850 = dma.done [#allocation27], 512
        $region148: #{lm_backbone_forward.6} parent=95 // pred_fallthru
          _
        // Predicated region
        $region149: #{lm_backbone_forward.6} parent=95 // pred_check
          %p851 = pneg %p367
        $region150: #{lm_backbone_forward.6} parent=95 // pred_check_branch
          %853 = sbr.rel (%p851) target = $region152
        $region151: #{lm_backbone_forward.6} parent=95 // pred_region
          %854 = dma.done [#allocation30], 16
        $region152: #{lm_backbone_forward.6} parent=95 // pred_fallthru
          _
        // Predicated region
        $region153: #{lm_backbone_forward.6} parent=95 // pred_check
          %p855 = pneg %p388
        $region154: #{lm_backbone_forward.6} parent=95 // pred_check_branch
          %857 = sbr.rel (%p855) target = $region156
        $region155: #{lm_backbone_forward.6} parent=95 // pred_region
          %858 = dma.done [#allocation30], 16
        $region156: #{lm_backbone_forward.6} parent=95 // pred_fallthru
          _
        // Predicated region
        $region157: #{lm_backbone_forward.6} parent=95 // pred_check
          %p859 = pneg %p409
        $region158: #{lm_backbone_forward.6} parent=95 // pred_check_branch
          %861 = sbr.rel (%p859) target = $region160
        $region159: #{lm_backbone_forward.6} parent=95 // pred_region
          %862 = dma.done [#allocation33], 256
        $region160: #{lm_backbone_forward.6} parent=95 // pred_fallthru
          _
        // Predicated region
        $region161: #{lm_backbone_forward.6} parent=95 // pred_check
          %p863 = pneg %p430
        $region162: #{lm_backbone_forward.6} parent=95 // pred_check_branch
          %865 = sbr.rel (%p863) target = $region164
        $region163: #{lm_backbone_forward.6} parent=95 // pred_region
          %866 = dma.done [#allocation33], 16
        $region164: #{lm_backbone_forward.6} parent=95 // pred_fallthru
          _
        // Predicated region
        $region165: #{lm_backbone_forward.6} parent=95 // pred_check
          %p867 = pneg %p451
        $region166: #{lm_backbone_forward.6} parent=95 // pred_check_branch
          %869 = sbr.rel (%p867) target = $region168
        $region167: #{lm_backbone_forward.6} parent=95 // pred_region
          %870 = dma.done [#allocation36], 512
        $region168: #{lm_backbone_forward.6} parent=95 // pred_fallthru
          _
        // Predicated region
        $region169: #{lm_backbone_forward.6} parent=95 // pred_check
          %p871 = pneg %p472
        $region170: #{lm_backbone_forward.6} parent=95 // pred_check_branch
          %873 = sbr.rel (%p871) target = $region172
        $region171: #{lm_backbone_forward.6} parent=95 // pred_region
          %874 = dma.done [#allocation36], 16
        $region172: #{lm_backbone_forward.6} parent=95 // pred_fallthru
          _
        %s875 = sand.u32 %s74, 1
        %s876 = scalar_lea.sflag [#allocation9], %s875
        %s877 = sand.u32 %s74, 1
        %s878 = smul.addr %s877, 8
        %s879 = scalar_lea.vmem [#allocation8], %s878
        %p880 = pneg %p87
        %p881 = pneg %p84
        %s882 = sand.u32 %s52, 1
        %s883 = scalar_lea.sflag [#allocation12], %s882
        %s884 = sand.u32 %s102, 1
        %s885 = smul.addr %s884, 8
        %s886 = scalar_lea.vmem [#allocation11], %s885
        %p887 = pneg %p115
        %p888 = pneg %p112
        %p889 = pneg %p136
        %p890 = pneg %p133
        %p891 = pneg %p157
        %p892 = pneg %p154
        %p893 = pneg %p178
        %p894 = pneg %p175
        %p895 = pneg %p199
        %p896 = pneg %p196
        %p897 = pneg %p220
        %p898 = pneg %p217
        %p899 = pneg %p241
        %p900 = pneg %p238
        %p901 = pneg %p262
        %p902 = pneg %p259
        %p903 = pneg %p283
        %p904 = pneg %p280
        %p905 = pneg %p304
        %p906 = pneg %p301
        %p907 = pneg %p325
        %p908 = pneg %p322
        %p909 = pneg %p346
        %p910 = pneg %p343
        %p911 = pneg %p367
        %p912 = pneg %p364
        %p913 = pneg %p388
        %p914 = pneg %p385
        %p915 = pneg %p409
        %p916 = pneg %p406
        %p917 = pneg %p430
        %p918 = pneg %p427
        %p919 = pneg %p451
        %p920 = pneg %p448
        %p921 = pneg %p472
        %p922 = pneg %p469
        %p923 = pneg %p500
        %p924 = pneg %p497
        %s925 = sand.u32 %s487, 1
        %s926 = scalar_lea.sflag [#allocation10], %s925
        %s927 = sand.u32 %s487, 1
        %s928 = smul.addr %s927, 8
        %s929 = scalar_lea.vmem [#allocation38], %s928
        %p930 = pneg %p528
        %p931 = pneg %p525
        %s932 = sand.u32 %s515, 1
        %s933 = scalar_lea.sflag [#allocation40], %s932
        %s934 = sand.u32 %s515, 1
        %s935 = smul.addr %s934, 8
        %s936 = scalar_lea.vmem [#allocation39], %s935
        %p938 = scmp.eq.s32.totalorder %s57, 0
        // Predicated region
        $region173: #{lm_backbone_forward.6} parent=95 // pred_check
          %p939 = pneg %p938
        $region174: #{lm_backbone_forward.6} parent=95 // pred_check_branch
          %941 = sbr.rel (%p939) target = $region176
        $region175: #{lm_backbone_forward.6} parent=95 // pred_region
          %vm942 = vcmask 523264
          %943 = vst.msk [vmem:[#allocation2] sm:$0xff] %vm942, 0.0
          %944 = vst.msk [vmem:[#allocation3] sm:$0xff] %vm942, 0.0
        $region176: #{lm_backbone_forward.6} parent=95 // pred_fallthru
          _
        %v945 = vld [vmem:[%s793] sm:$0xff]
        %v946 = vld [vmem:[%s802] sm:$0xff]
        %v947 = vadd.f32 %v945, %v946
        %v948 = vld [vmem:[#allocation13] sm:$0x1]
        %v949 = vld [vmem:[#allocation14] sm:$0x1]
        %vm950 = vcmask 261120
        %v951 = vsel %vm950, %v947, 0.0
        %952 = vadd.xlane.f32.xlu0 %v951
        %v953 = vpop.xlane.xlu0 %952
        %v954 = vrcp.pop 32.0
        %v955 = vmul.f32 %v953, %v954
        %v956 = vsub.f32 %v947, %v955
        %v957 = vmul.f32 %v956, %v956
        %v958 = vsel %vm950, %v957, 0.0
        %959 = vadd.xlane.f32.xlu0 %v958
        %v960 = vpop.xlane.xlu0 %959
        %v961 = vmul.f32 %v960, %v954
        %v962 = vadd.f32 %v961, 1e-05
        %v963 = vrsqrt.pop %v962
        %v964 = vmul.f32 %v956, %v963
        %v966 = vlaneseq
        %v967 = vshrl.u32 %v966, 7
        %v968 = vsub.s32 0, %v967
        %v969 = vrot.slane %v948, %v968
        %v971 = vmul.f32 %v964, %v969
        %v973 = vlaneseq
        %v974 = vshrl.u32 %v973, 7
        %v975 = vsub.s32 0, %v974
        %v976 = vrot.slane %v949, %v975
        %v978 = vadd.f32 %v971, %v976
        %v979 = vld [vmem:[#allocation16] sm:$0xf]
        %v980 = vld [vmem:[#allocation16 + $0x4] sm:$0xf]
        %v981 = vld [vmem:[#allocation16 + $0x8] sm:$0xf]
        %v982 = vld [vmem:[#allocation16 + $0xc] sm:$0xf]
        %v983 = vpack.c.bf16 %v978, %v978
        %v988 = vunpack.c.l.b16 %v979
        %v989 = vunpack.c.l.b16 %v980
        %v990 = vunpack.c.l.b16 %v981
        %v991 = vunpack.c.l.b16 %v982
        %v992 = vpack.c.b16 %v989, %v988
        %v993 = vpack.c.b16 %v991, %v990
        %v997 = vsel %vm950, %v983, 0
        %999 = vmatprep.subr.bf16.mxu0 0
        %1000 = vmatpush1.bf16.msra.mxu0 %v992
        %1001 = vmatprep.subr.bf16.mxu0 0
        %1002 = vmatpush1.bf16.msra.mxu0 %v993
        %1003 = vmatprep.subr.bf16.mxu0 0
        %1004 = vmatpush1.bf16.msra.mxu0 0
        %1005 = vmatprep.subr.bf16.mxu0 0
        %1006 = vmatpush1.bf16.msra.mxu0 0
        %1007 = vmatprep.subr.bf16.mxu0 0
        %1008 = vmatpush1.bf16.msra.mxu0 0
        %1009 = vmatprep.subr.bf16.mxu0 0
        %1010 = vmatpush1.bf16.msra.mxu0 0
        %1011 = vmatprep.subr.bf16.mxu0 0
        %1012 = vmatpush1.bf16.msra.mxu0 0
        %1013 = vmatprep.subr.bf16.mxu0 0
        %1014 = vmatpush1.bf16.msra.mxu0 0
        %1015 = vmatprep.subr.bf16.mxu0 0
        %1016 = vmatpush1.bf16.msra.mxu0 0
        %1017 = vmatprep.subr.bf16.mxu0 0
        %1018 = vmatpush1.bf16.msra.mxu0 0
        %1019 = vmatprep.subr.bf16.mxu0 0
        %1020 = vmatpush1.bf16.msra.mxu0 0
        %1021 = vmatprep.subr.bf16.mxu0 0
        %1022 = vmatpush1.bf16.msra.mxu0 0
        %1023 = vmatprep.subr.bf16.mxu0 0
        %1024 = vmatpush1.bf16.msra.mxu0 0
        %1025 = vmatprep.subr.bf16.mxu0 0
        %1026 = vmatpush1.bf16.msra.mxu0 0
        %1027 = vmatprep.subr.bf16.mxu0 0
        %1028 = vmatpush1.bf16.msra.mxu0 0
        %1029 = vmatprep.subr.bf16.mxu0 0
        %1030 = vmatpush1.bf16.msra.mxu0 0
        %1031 = vmatprep.mubr.bf16.mxu0 0
        %1032 = vmatmul.mubr.bf16.gmra.mrb[0].mxu0 %v997
        %v1033 = vpop.f32.mrb[0].mxu0
        %v1034 = vadd.f32 0.0, %v1033
        %v1035 = vpop.f32.mrb[0].mxu0
        %v1036 = vpop.f32.mrb[0].mxu0
        %v1037 = vpop.f32.mrb[0].mxu0
        %1038 = vdwg.mxu0
        %v1039 = vld [vmem:[#allocation17] sm:$0xf]
        %v1040 = vld [vmem:[#allocation2] sm:$0xff]
        %v1041 = vld [vmem:[#allocation19] sm:$0x1]
        %v1042 = vlaneseq
        %v1043 = vshrl.u32 %v1042, 7
        %v1044 = vsub.s32 3, %v1043
        %v1045 = vrot.slane %v1039, %v1044
        %v1046 = vmul.f32 %v1045, %v1034
        %v1048 = vlaneseq
        %v1049 = vshrl.u32 %v1048, 7
        %v1050 = vsub.s32 0, %v1049
        %v1051 = vrot.slane %v1041, %v1050
        %v1053 = vadd.f32 %v1051, %v1046
        %v1054 = vlaneseq
        %v1055 = vshrl.u32 %v1054, 7
        %v1056 = vsub.s32 0, %v1055
        %v1057 = vrot.slane %v1039, %v1056
        %v1058 = vmul.f32 %v1057, %v1040
        %v1059 = vmul.f32 %v1057, %v1034
        %vm1062 = vcmask 1042432
        %v1063 = vrot.slane %v1058, 5
        %v1064 = vrot.slane %v1059, 5
        %v1065 = vsel %vm1062, %v1063, %v1064
        %v1067 = vadd.f32 %v1053, %v1065
        %v1068 = vlaneseq
        %v1069 = vshrl.u32 %v1068, 7
        %v1070 = vsub.s32 1, %v1069
        %v1071 = vrot.slane %v1039, %v1070
        %v1072 = vmul.f32 %v1071, %v1040
        %v1073 = vmul.f32 %v1071, %v1034
        %vm1076 = vcmask 1041408
        %v1077 = vrot.slane %v1072, 6
        %v1078 = vrot.slane %v1073, 6
        %v1079 = vsel %vm1076, %v1077, %v1078
        %v1081 = vadd.f32 %v1067, %v1079
        %v1082 = vlaneseq
        %v1083 = vshrl.u32 %v1082, 7
        %v1084 = vsub.s32 2, %v1083
        %v1085 = vrot.slane %v1039, %v1084
        %v1086 = vmul.f32 %v1085, %v1040
        %v1087 = vmul.f32 %v1085, %v1034
        %vm1090 = vcmask 1040384
        %v1091 = vrot.slane %v1086, 7
        %v1092 = vrot.slane %v1087, 7
        %v1093 = vsel %vm1090, %v1091, %v1092
        %v1095 = vadd.f32 %v1081, %v1093
        %v1096 = vmul.f32 %v1095, 0.5
        %v1097 = vtanh.pop %v1096
        %v1098 = vadd.f32 %v1097, 1.0
        %v1099 = vmul.f32 %v1098, 0.5
        %v1100 = vmul.f32 %v1095, %v1099
        %v1101 = vld [vmem:[#allocation20] sm:$0xf]
        %v1102 = vld [vmem:[#allocation20 + $0x4] sm:$0xf]
        %v1103 = vld [vmem:[#allocation20 + $0x8] sm:$0xf]
        %v1104 = vld [vmem:[#allocation20 + $0xc] sm:$0xf]
        %v1105 = vld [vmem:[#allocation20 + $0x10] sm:$0xf]
        %v1106 = vld [vmem:[#allocation20 + $0x14] sm:$0xf]
        %v1107 = vld [vmem:[#allocation20 + $0x18] sm:$0xf]
        %v1108 = vld [vmem:[#allocation20 + $0x1c] sm:$0xf]
        %v1109 = vpack.c.bf16 %v1100, %v1100
        %v1118 = vunpack.c.l.b16 %v1101
        %v1119 = vunpack.c.l.b16 %v1102
        %v1120 = vunpack.c.l.b16 %v1103
        %v1121 = vunpack.c.l.b16 %v1104
        %v1122 = vunpack.c.l.b16 %v1105
        %v1123 = vunpack.c.l.b16 %v1106
        %v1124 = vunpack.c.l.b16 %v1107
        %v1125 = vunpack.c.l.b16 %v1108
        %v1126 = vpack.c.b16 %v1119, %v1118
        %v1127 = vpack.c.b16 %v1121, %v1120
        %v1128 = vpack.c.b16 %v1123, %v1122
        %v1129 = vpack.c.b16 %v1125, %v1124
        %vm1134 = vcmask 523264
        %v1136 = vsel %vm1134, %v1109, 0
        %1138 = vmatprep.subr.bf16.mxu0 0
        %1139 = vmatpush1.bf16.msra.mxu0 %v1126
        %1140 = vmatprep.subr.bf16.mxu0 0
        %1141 = vmatpush1.bf16.msra.mxu0 %v1127
        %1142 = vmatprep.subr.bf16.mxu0 0
        %1143 = vmatpush1.bf16.msra.mxu0 %v1128
        %1144 = vmatprep.subr.bf16.mxu0 0
        %1145 = vmatpush1.bf16.msra.mxu0 %v1129
        %1146 = vmatprep.subr.bf16.mxu0 0
        %1147 = vmatpush1.bf16.msra.mxu0 0
        %1148 = vmatprep.subr.bf16.mxu0 0
        %1149 = vmatpush1.bf16.msra.mxu0 0
        %1150 = vmatprep.subr.bf16.mxu0 0
        %1151 = vmatpush1.bf16.msra.mxu0 0
        %1152 = vmatprep.subr.bf16.mxu0 0
        %1153 = vmatpush1.bf16.msra.mxu0 0
        %1154 = vmatprep.subr.bf16.mxu0 0
        %1155 = vmatpush1.bf16.msra.mxu0 0
        %1156 = vmatprep.subr.bf16.mxu0 0
        %1157 = vmatpush1.bf16.msra.mxu0 0
        %1158 = vmatprep.subr.bf16.mxu0 0
        %1159 = vmatpush1.bf16.msra.mxu0 0
        %1160 = vmatprep.subr.bf16.mxu0 0
        %1161 = vmatpush1.bf16.msra.mxu0 0
        %1162 = vmatprep.subr.bf16.mxu0 0
        %1163 = vmatpush1.bf16.msra.mxu0 0
        %1164 = vmatprep.subr.bf16.mxu0 0
        %1165 = vmatpush1.bf16.msra.mxu0 0
        %1166 = vmatprep.subr.bf16.mxu0 0
        %1167 = vmatpush1.bf16.msra.mxu0 0
        %1168 = vmatprep.subr.bf16.mxu0 0
        %1169 = vmatpush1.bf16.msra.mxu0 0
        %1170 = vmatprep.mubr.bf16.mxu0 0
        %1171 = vmatmul.mubr.bf16.gmra.mrb[0].mxu0 %v1136
        %v1172 = vpop.f32.mrb[0].mxu0
        %v1173 = vadd.f32 0.0, %v1172
        %v1174 = vpop.f32.mrb[0].mxu0
        %v1175 = vpop.f32.mrb[0].mxu0
        %v1176 = vpop.f32.mrb[0].mxu0
        %1177 = vdwg.mxu0
        %v1178 = vld [vmem:[#allocation22] sm:$0x1]
        %v1179 = vpack.c.bf16 %v1173, %v1173
        %v1180 = vld [vmem:[#allocation23] sm:$0x1]
        %v1182 = vlaneseq
        %v1183 = vshrl.u32 %v1182, 7
        %v1184 = vsub.s32 0, %v1183
        %v1185 = vrot.slane %v1180, %v1184
        %vm1187 = vcmask 15360
        %v1189 = vsel %vm1187, %v1179, 0
        %v1192 = vsel %vm1090, %v1178, 0
        %1194 = vmatprep.subr.bf16.mxu0 0
        %1195 = vmatpush1.bf16.msra.mxu0 %v1192
        %1196 = vmatprep.subr.bf16.mxu0 0
        %1197 = vmatpush1.bf16.msra.mxu0 0
        %1198 = vmatprep.subr.bf16.mxu0 0
        %1199 = vmatpush1.bf16.msra.mxu0 0
        %1200 = vmatprep.subr.bf16.mxu0 0
        %1201 = vmatpush1.bf16.msra.mxu0 0
        %1202 = vmatprep.subr.bf16.mxu0 0
        %1203 = vmatpush1.bf16.msra.mxu0 0
        %1204 = vmatprep.subr.bf16.mxu0 0
        %1205 = vmatpush1.bf16.msra.mxu0 0
        %1206 = vmatprep.subr.bf16.mxu0 0
        %1207 = vmatpush1.bf16.msra.mxu0 0
        %1208 = vmatprep.subr.bf16.mxu0 0
        %1209 = vmatpush1.bf16.msra.mxu0 0
        %1210 = vmatprep.subr.bf16.mxu0 0
        %1211 = vmatpush1.bf16.msra.mxu0 0
        %1212 = vmatprep.subr.bf16.mxu0 0
        %1213 = vmatpush1.bf16.msra.mxu0 0
        %1214 = vmatprep.subr.bf16.mxu0 0
        %1215 = vmatpush1.bf16.msra.mxu0 0
        %1216 = vmatprep.subr.bf16.mxu0 0
        %1217 = vmatpush1.bf16.msra.mxu0 0
        %1218 = vmatprep.subr.bf16.mxu0 0
        %1219 = vmatpush1.bf16.msra.mxu0 0
        %1220 = vmatprep.subr.bf16.mxu0 0
        %1221 = vmatpush1.bf16.msra.mxu0 0
        %1222 = vmatprep.subr.bf16.mxu0 0
        %1223 = vmatpush1.bf16.msra.mxu0 0
        %1224 = vmatprep.subr.bf16.mxu0 0
        %1225 = vmatpush1.bf16.msra.mxu0 0
        %1226 = vmatprep.mubr.bf16.mxu0 0
        %1227 = vmatmul.mubr.bf16.gmra.mrb[0].mxu0 %v1189
        %v1228 = vpop.f32.mrb[0].mxu0
        %v1229 = vadd.f32 %v1185, %v1228
        %v1230 = vpop.f32.mrb[0].mxu0
        %v1231 = vpop.f32.mrb[0].mxu0
        %v1232 = vpop.f32.mrb[0].mxu0
        %1233 = vdwg.mxu0
        %v1234 = vmax.f32 %v1229, 0.0
        %v1235 = vand.u32 2147483647, %v1229
        %v1236 = vsub.f32 0.0, %v1235
        %v1237 = vmul.f32 %v1236, 1.442695
        %v1238 = vpow.pop %v1237
        %v1239 = vadd.f32 %v1238, 1.0
        %v1240 = vlog2.pop %v1239
        %v1241 = vmul.f32 %v1240, 0.6931472
        %v1242 = vadd.f32 %v1234, %v1241
        %v1243 = vmul.f32 %v1242, %v1100
        %v1244 = vld [vmem:[#allocation25] sm:$0x1]
        %v1245 = vlaneseq
        %v1246 = vshrl.u32 %v1245, 7
        %v1247 = vsub.s32 0, %v1246
        %v1248 = vrot.slane %v1244, %v1247
        %v1249 = vmul.f32 %v1242, %v1248
        %v1250 = vmul.f32 %v1249, 1.442695
        %v1251 = vpow.pop %v1250
        %v1253 = vcombine.high %v1251, %v1251
        %v1255 = vunpack.c.l.s4 1966171168
        %v1256 = vunpack.c.0.s8 %v1255
        %v1257 = vlaneseq
        %v1258 = vshrl.u32 %v1257, 7
        %v1259 = vsub.s32 %v1256, %v1258
        %v1260 = vrot.slane %v1251, %v1259
        %v1262 = vunpack.c.l.s4 1966171168
        %v1263 = vunpack.c.0.s8 %v1262
        %v1264 = vlaneseq
        %v1265 = vshrl.u32 %v1264, 7
        %v1266 = vsub.s32 %v1263, %v1265
        %v1267 = vrot.slane %v1253, %v1266
        %v1268 = vcombine.high %v1260, %v1260
        %v1269 = vcombine.high %v1267, %v1267
        %v1271 = vunpack.c.l.s4 1966171168
        %v1272 = vunpack.c.0.s8 %v1271
        %v1273 = vlaneseq
        %v1274 = vshrl.u32 %v1273, 7
        %v1275 = vsub.s32 %v1272, %v1274
        %v1276 = vrot.slane %v1260, %v1275
        %v1278 = vunpack.c.l.s4 1966171168
        %v1279 = vunpack.c.0.s8 %v1278
        %v1280 = vlaneseq
        %v1281 = vshrl.u32 %v1280, 7
        %v1282 = vsub.s32 %v1279, %v1281
        %v1283 = vrot.slane %v1267, %v1282
        %v1285 = vunpack.c.l.s4 1966171168
        %v1286 = vunpack.c.0.s8 %v1285
        %v1287 = vlaneseq
        %v1288 = vshrl.u32 %v1287, 7
        %v1289 = vsub.s32 %v1286, %v1288
        %v1290 = vrot.slane %v1268, %v1289
        %v1292 = vunpack.c.l.s4 1966171168
        %v1293 = vunpack.c.0.s8 %v1292
        %v1294 = vlaneseq
        %v1295 = vshrl.u32 %v1294, 7
        %v1296 = vsub.s32 %v1293, %v1295
        %v1297 = vrot.slane %v1269, %v1296
        %v1298 = vcombine.high %v1276, %v1276
        %v1299 = vcombine.high %v1283, %v1283
        %v1300 = vcombine.high %v1290, %v1290
        %v1301 = vcombine.high %v1297, %v1297
        %vm1310 = vcmask 516096
        %1311 = vst.msk [vmem:[#allocation4] sm:$0x1] %vm1310, %v1276
        %1312 = vst.msk [vmem:[#allocation4 + $0x8] sm:$0x1] %vm1310, %v1290
        %1313 = vst.msk [vmem:[#allocation4 + $0x10] sm:$0x1] %vm1310, %v1298
        %1314 = vst.msk [vmem:[#allocation4 + $0x18] sm:$0x1] %vm1310, %v1300
        %1315 = vst.msk [vmem:[#allocation4 + $0x20] sm:$0x1] %vm1310, %v1283
        %1316 = vst.msk [vmem:[#allocation4 + $0x28] sm:$0x1] %vm1310, %v1297
        %1317 = vst.msk [vmem:[#allocation4 + $0x30] sm:$0x1] %vm1310, %v1299
        %1318 = vst.msk [vmem:[#allocation4 + $0x38] sm:$0x1] %vm1310, %v1301
        %1320 = vset.pattern.permute.xlu0 2
        %1321 = vperm.xlu0 %1320, %v1173
        %v1322 = vpop.permute.xlu0 %1321
        %v1324 = vmul.f32 %v1243, %v1322
        %v1326 = vcombine.high %v1324, %v1324
        %v1328 = vunpack.c.l.s4 1966171168
        %v1329 = vunpack.c.0.s8 %v1328
        %v1330 = vlaneseq
        %v1331 = vshrl.u32 %v1330, 7
        %v1332 = vsub.s32 %v1329, %v1331
        %v1333 = vrot.slane %v1324, %v1332
        %v1335 = vunpack.c.l.s4 1966171168
        %v1336 = vunpack.c.0.s8 %v1335
        %v1337 = vlaneseq
        %v1338 = vshrl.u32 %v1337, 7
        %v1339 = vsub.s32 %v1336, %v1338
        %v1340 = vrot.slane %v1326, %v1339
        %v1341 = vcombine.high %v1333, %v1333
        %v1342 = vcombine.high %v1340, %v1340
        %v1344 = vunpack.c.l.s4 1966171168
        %v1345 = vunpack.c.0.s8 %v1344
        %v1346 = vlaneseq
        %v1347 = vshrl.u32 %v1346, 7
        %v1348 = vsub.s32 %v1345, %v1347
        %v1349 = vrot.slane %v1333, %v1348
        %v1351 = vunpack.c.l.s4 1966171168
        %v1352 = vunpack.c.0.s8 %v1351
        %v1353 = vlaneseq
        %v1354 = vshrl.u32 %v1353, 7
        %v1355 = vsub.s32 %v1352, %v1354
        %v1356 = vrot.slane %v1340, %v1355
        %v1358 = vunpack.c.l.s4 1966171168
        %v1359 = vunpack.c.0.s8 %v1358
        %v1360 = vlaneseq
        %v1361 = vshrl.u32 %v1360, 7
        %v1362 = vsub.s32 %v1359, %v1361
        %v1363 = vrot.slane %v1341, %v1362
        %v1365 = vunpack.c.l.s4 1966171168
        %v1366 = vunpack.c.0.s8 %v1365
        %v1367 = vlaneseq
        %v1368 = vshrl.u32 %v1367, 7
        %v1369 = vsub.s32 %v1366, %v1368
        %v1370 = vrot.slane %v1342, %v1369
        %v1371 = vcombine.high %v1349, %v1349
        %v1372 = vcombine.high %v1356, %v1356
        %v1373 = vcombine.high %v1363, %v1363
        %v1374 = vcombine.high %v1370, %v1370
        %1383 = vst.msk [vmem:[#allocation5] sm:$0x1] %vm1310, %v1349
        %1384 = vst.msk [vmem:[#allocation5 + $0x8] sm:$0x1] %vm1310, %v1363
        %1385 = vst.msk [vmem:[#allocation5 + $0x10] sm:$0x1] %vm1310, %v1371
        %1386 = vst.msk [vmem:[#allocation5 + $0x18] sm:$0x1] %vm1310, %v1373
        %1387 = vst.msk [vmem:[#allocation5 + $0x20] sm:$0x1] %vm1310, %v1356
        %1388 = vst.msk [vmem:[#allocation5 + $0x28] sm:$0x1] %vm1310, %v1370
        %1389 = vst.msk [vmem:[#allocation5 + $0x30] sm:$0x1] %vm1310, %v1372
        %1390 = vst.msk [vmem:[#allocation5 + $0x38] sm:$0x1] %vm1310, %v1374
        %v1391 = vcombine.high %v1173, %v1173
        %v1393 = vunpack.c.l.s4 1966171168
        %v1394 = vunpack.c.0.s8 %v1393
        %v1395 = vlaneseq
        %v1396 = vshrl.u32 %v1395, 7
        %v1397 = vsub.s32 %v1394, %v1396
        %v1398 = vrot.slane %v1173, %v1397
        %v1400 = vunpack.c.l.s4 1966171168
        %v1401 = vunpack.c.0.s8 %v1400
        %v1402 = vlaneseq
        %v1403 = vshrl.u32 %v1402, 7
        %v1404 = vsub.s32 %v1401, %v1403
        %v1405 = vrot.slane %v1391, %v1404
        %v1406 = vcombine.high %v1398, %v1398
        %v1407 = vcombine.high %v1405, %v1405
        %v1409 = vunpack.c.l.s4 1966171168
        %v1410 = vunpack.c.0.s8 %v1409
        %v1411 = vlaneseq
        %v1412 = vshrl.u32 %v1411, 7
        %v1413 = vsub.s32 %v1410, %v1412
        %v1414 = vrot.slane %v1398, %v1413
        %v1416 = vunpack.c.l.s4 1966171168
        %v1417 = vunpack.c.0.s8 %v1416
        %v1418 = vlaneseq
        %v1419 = vshrl.u32 %v1418, 7
        %v1420 = vsub.s32 %v1417, %v1419
        %v1421 = vrot.slane %v1405, %v1420
        %v1423 = vunpack.c.l.s4 1966171168
        %v1424 = vunpack.c.0.s8 %v1423
        %v1425 = vlaneseq
        %v1426 = vshrl.u32 %v1425, 7
        %v1427 = vsub.s32 %v1424, %v1426
        %v1428 = vrot.slane %v1406, %v1427
        %v1430 = vunpack.c.l.s4 1966171168
        %v1431 = vunpack.c.0.s8 %v1430
        %v1432 = vlaneseq
        %v1433 = vshrl.u32 %v1432, 7
        %v1434 = vsub.s32 %v1431, %v1433
        %v1435 = vrot.slane %v1407, %v1434
        %v1436 = vcombine.high %v1414, %v1414
        %v1437 = vcombine.high %v1421, %v1421
        %v1438 = vcombine.high %v1428, %v1428
        %v1439 = vcombine.high %v1435, %v1435
        %v1440 = vlaneseq
        %v1441 = vshrl.u32 %v1440, 7
        %v1442 = vsub.s32 0, %v1441
        %v1443 = vrot.slane %v1414, %v1442
        %v1444 = vlaneseq
        %v1445 = vshrl.u32 %v1444, 7
        %v1446 = vsub.s32 0, %v1445
        %v1447 = vrot.slane %v1428, %v1446
        %v1448 = vlaneseq
        %v1449 = vshrl.u32 %v1448, 7
        %v1450 = vsub.s32 0, %v1449
        %v1451 = vrot.slane %v1436, %v1450
        %v1452 = vlaneseq
        %v1453 = vshrl.u32 %v1452, 7
        %v1454 = vsub.s32 0, %v1453
        %v1455 = vrot.slane %v1438, %v1454
        %v1456 = vlaneseq
        %v1457 = vshrl.u32 %v1456, 7
        %v1458 = vsub.s32 0, %v1457
        %v1459 = vrot.slane %v1421, %v1458
        %v1460 = vlaneseq
        %v1461 = vshrl.u32 %v1460, 7
        %v1462 = vsub.s32 0, %v1461
        %v1463 = vrot.slane %v1435, %v1462
        %v1464 = vlaneseq
        %v1465 = vshrl.u32 %v1464, 7
        %v1466 = vsub.s32 0, %v1465
        %v1467 = vrot.slane %v1437, %v1466
        %v1468 = vlaneseq
        %v1469 = vshrl.u32 %v1468, 7
        %v1470 = vsub.s32 0, %v1469
        %v1471 = vrot.slane %v1439, %v1470
        %1472 = vrot.lane.b32.xlu0 %v1443, 118
        %v1473 = vpop.permute.xlu0 %1472
        %1474 = vrot.lane.b32.xlu0 %v1447, 118
        %v1475 = vpop.permute.xlu0 %1474
        %1476 = vrot.lane.b32.xlu0 %v1451, 118
        %v1477 = vpop.permute.xlu0 %1476
        %1478 = vrot.lane.b32.xlu0 %v1455, 118
        %v1479 = vpop.permute.xlu0 %1478
        %1480 = vrot.lane.b32.xlu0 %v1459, 118
        %v1481 = vpop.permute.xlu0 %1480
        %1482 = vrot.lane.b32.xlu0 %v1463, 118
        %v1483 = vpop.permute.xlu0 %1482
        %1484 = vrot.lane.b32.xlu0 %v1467, 118
        %v1485 = vpop.permute.xlu0 %1484
        %1486 = vrot.lane.b32.xlu0 %v1471, 118
        %v1487 = vpop.permute.xlu0 %1486
        %vm1496 = vcmask 0
        %1497 = vst.msk [vmem:[#allocation6] sm:$0x1] %vm1496, %v1473
        %1498 = vst.msk [vmem:[#allocation6 + $0x8] sm:$0x1] %vm1496, %v1475
        %1499 = vst.msk [vmem:[#allocation6 + $0x10] sm:$0x1] %vm1496, %v1477
        %1500 = vst.msk [vmem:[#allocation6 + $0x18] sm:$0x1] %vm1496, %v1479
        %1501 = vst.msk [vmem:[#allocation6 + $0x20] sm:$0x1] %vm1496, %v1481
        %1502 = vst.msk [vmem:[#allocation6 + $0x28] sm:$0x1] %vm1496, %v1483
        %1503 = vst.msk [vmem:[#allocation6 + $0x30] sm:$0x1] %vm1496, %v1485
        %1504 = vst.msk [vmem:[#allocation6 + $0x38] sm:$0x1] %vm1496, %v1487
        %v1505 = vld [vmem:[#allocation25 + $0x1] sm:$0x1]
        %v1506 = vlaneseq
        %v1507 = vshrl.u32 %v1506, 7
        %v1508 = vsub.s32 0, %v1507
        %v1509 = vrot.slane %v1505, %v1508
        %v1510 = vmul.f32 %v1242, %v1509
        %v1511 = vmul.f32 %v1510, 1.442695
        %v1512 = vpow.pop %v1511
        %v1514 = vcombine.high %v1512, %v1512
        %v1516 = vunpack.c.l.s4 1966171168
        %v1517 = vunpack.c.0.s8 %v1516
        %v1518 = vlaneseq
        %v1519 = vshrl.u32 %v1518, 7
        %v1520 = vsub.s32 %v1517, %v1519
        %v1521 = vrot.slane %v1512, %v1520
        %v1523 = vunpack.c.l.s4 1966171168
        %v1524 = vunpack.c.0.s8 %v1523
        %v1525 = vlaneseq
        %v1526 = vshrl.u32 %v1525, 7
        %v1527 = vsub.s32 %v1524, %v1526
        %v1528 = vrot.slane %v1514, %v1527
        %v1529 = vcombine.high %v1521, %v1521
        %v1530 = vcombine.high %v1528, %v1528
        %v1532 = vunpack.c.l.s4 1966171168
        %v1533 = vunpack.c.0.s8 %v1532
        %v1534 = vlaneseq
        %v1535 = vshrl.u32 %v1534, 7
        %v1536 = vsub.s32 %v1533, %v1535
        %v1537 = vrot.slane %v1521, %v1536
        %v1539 = vunpack.c.l.s4 1966171168
        %v1540 = vunpack.c.0.s8 %v1539
        %v1541 = vlaneseq
        %v1542 = vshrl.u32 %v1541, 7
        %v1543 = vsub.s32 %v1540, %v1542
        %v1544 = vrot.slane %v1528, %v1543
        %v1546 = vunpack.c.l.s4 1966171168
        %v1547 = vunpack.c.0.s8 %v1546
        %v1548 = vlaneseq
        %v1549 = vshrl.u32 %v1548, 7
        %v1550 = vsub.s32 %v1547, %v1549
        %v1551 = vrot.slane %v1529, %v1550
        %v1553 = vunpack.c.l.s4 1966171168
        %v1554 = vunpack.c.0.s8 %v1553
        %v1555 = vlaneseq
        %v1556 = vshrl.u32 %v1555, 7
        %v1557 = vsub.s32 %v1554, %v1556
        %v1558 = vrot.slane %v1530, %v1557
        %v1559 = vcombine.high %v1537, %v1537
        %v1560 = vcombine.high %v1544, %v1544
        %v1561 = vcombine.high %v1551, %v1551
        %v1562 = vcombine.high %v1558, %v1558
        %1571 = vst.msk [vmem:[#allocation4 + $0x1] sm:$0x1] %vm1310, %v1537
        %1572 = vst.msk [vmem:[#allocation4 + $0x9] sm:$0x1] %vm1310, %v1551
        %1573 = vst.msk [vmem:[#allocation4 + $0x11] sm:$0x1] %vm1310, %v1559
        %1574 = vst.msk [vmem:[#allocation4 + $0x19] sm:$0x1] %vm1310, %v1561
        %1575 = vst.msk [vmem:[#allocation4 + $0x21] sm:$0x1] %vm1310, %v1544
        %1576 = vst.msk [vmem:[#allocation4 + $0x29] sm:$0x1] %vm1310, %v1558
        %1577 = vst.msk [vmem:[#allocation4 + $0x31] sm:$0x1] %vm1310, %v1560
        %1578 = vst.msk [vmem:[#allocation4 + $0x39] sm:$0x1] %vm1310, %v1562
        %1579 = vset.pattern.permute.xlu0 3
        %1580 = vperm.xlu0 %1579, %v1173
        %v1581 = vpop.permute.xlu0 %1580
        %v1583 = vmul.f32 %v1243, %v1581
        %v1585 = vcombine.high %v1583, %v1583
        %v1587 = vunpack.c.l.s4 1966171168
        %v1588 = vunpack.c.0.s8 %v1587
        %v1589 = vlaneseq
        %v1590 = vshrl.u32 %v1589, 7
        %v1591 = vsub.s32 %v1588, %v1590
        %v1592 = vrot.slane %v1583, %v1591
        %v1594 = vunpack.c.l.s4 1966171168
        %v1595 = vunpack.c.0.s8 %v1594
        %v1596 = vlaneseq
        %v1597 = vshrl.u32 %v1596, 7
        %v1598 = vsub.s32 %v1595, %v1597
        %v1599 = vrot.slane %v1585, %v1598
        %v1600 = vcombine.high %v1592, %v1592
        %v1601 = vcombine.high %v1599, %v1599
        %v1603 = vunpack.c.l.s4 1966171168
        %v1604 = vunpack.c.0.s8 %v1603
        %v1605 = vlaneseq
        %v1606 = vshrl.u32 %v1605, 7
        %v1607 = vsub.s32 %v1604, %v1606
        %v1608 = vrot.slane %v1592, %v1607
        %v1610 = vunpack.c.l.s4 1966171168
        %v1611 = vunpack.c.0.s8 %v1610
        %v1612 = vlaneseq
        %v1613 = vshrl.u32 %v1612, 7
        %v1614 = vsub.s32 %v1611, %v1613
        %v1615 = vrot.slane %v1599, %v1614
        %v1617 = vunpack.c.l.s4 1966171168
        %v1618 = vunpack.c.0.s8 %v1617
        %v1619 = vlaneseq
        %v1620 = vshrl.u32 %v1619, 7
        %v1621 = vsub.s32 %v1618, %v1620
        %v1622 = vrot.slane %v1600, %v1621
        %v1624 = vunpack.c.l.s4 1966171168
        %v1625 = vunpack.c.0.s8 %v1624
        %v1626 = vlaneseq
        %v1627 = vshrl.u32 %v1626, 7
        %v1628 = vsub.s32 %v1625, %v1627
        %v1629 = vrot.slane %v1601, %v1628
        %v1630 = vcombine.high %v1608, %v1608
        %v1631 = vcombine.high %v1615, %v1615
        %v1632 = vcombine.high %v1622, %v1622
        %v1633 = vcombine.high %v1629, %v1629
        %1642 = vst.msk [vmem:[#allocation5 + $0x1] sm:$0x1] %vm1310, %v1608
        %1643 = vst.msk [vmem:[#allocation5 + $0x9] sm:$0x1] %vm1310, %v1622
        %1644 = vst.msk [vmem:[#allocation5 + $0x11] sm:$0x1] %vm1310, %v1630
        %1645 = vst.msk [vmem:[#allocation5 + $0x19] sm:$0x1] %vm1310, %v1632
        %1646 = vst.msk [vmem:[#allocation5 + $0x21] sm:$0x1] %vm1310, %v1615
        %1647 = vst.msk [vmem:[#allocation5 + $0x29] sm:$0x1] %vm1310, %v1629
        %1648 = vst.msk [vmem:[#allocation5 + $0x31] sm:$0x1] %vm1310, %v1631
        %1649 = vst.msk [vmem:[#allocation5 + $0x39] sm:$0x1] %vm1310, %v1633
        %1650 = vrot.lane.b32.xlu0 %v1443, 117
        %v1651 = vpop.permute.xlu0 %1650
        %1652 = vrot.lane.b32.xlu0 %v1447, 117
        %v1653 = vpop.permute.xlu0 %1652
        %1654 = vrot.lane.b32.xlu0 %v1451, 117
        %v1655 = vpop.permute.xlu0 %1654
        %1656 = vrot.lane.b32.xlu0 %v1455, 117
        %v1657 = vpop.permute.xlu0 %1656
        %1658 = vrot.lane.b32.xlu0 %v1459, 117
        %v1659 = vpop.permute.xlu0 %1658
        %1660 = vrot.lane.b32.xlu0 %v1463, 117
        %v1661 = vpop.permute.xlu0 %1660
        %1662 = vrot.lane.b32.xlu0 %v1467, 117
        %v1663 = vpop.permute.xlu0 %1662
        %1664 = vrot.lane.b32.xlu0 %v1471, 117
        %v1665 = vpop.permute.xlu0 %1664
        %1674 = vst.msk [vmem:[#allocation6 + $0x1] sm:$0x1] %vm1496, %v1651
        %1675 = vst.msk [vmem:[#allocation6 + $0x9] sm:$0x1] %vm1496, %v1653
        %1676 = vst.msk [vmem:[#allocation6 + $0x11] sm:$0x1] %vm1496, %v1655
        %1677 = vst.msk [vmem:[#allocation6 + $0x19] sm:$0x1] %vm1496, %v1657
        %1678 = vst.msk [vmem:[#allocation6 + $0x21] sm:$0x1] %vm1496, %v1659
        %1679 = vst.msk [vmem:[#allocation6 + $0x29] sm:$0x1] %vm1496, %v1661
        %1680 = vst.msk [vmem:[#allocation6 + $0x31] sm:$0x1] %vm1496, %v1663
        %1681 = vst.msk [vmem:[#allocation6 + $0x39] sm:$0x1] %vm1496, %v1665
        %v1682 = vld [vmem:[#allocation25 + $0x2] sm:$0x1]
        %v1683 = vlaneseq
        %v1684 = vshrl.u32 %v1683, 7
        %v1685 = vsub.s32 0, %v1684
        %v1686 = vrot.slane %v1682, %v1685
        %v1687 = vmul.f32 %v1242, %v1686
        %v1688 = vmul.f32 %v1687, 1.442695
        %v1689 = vpow.pop %v1688
        %v1691 = vcombine.high %v1689, %v1689
        %v1693 = vunpack.c.l.s4 1966171168
        %v1694 = vunpack.c.0.s8 %v1693
        %v1695 = vlaneseq
        %v1696 = vshrl.u32 %v1695, 7
        %v1697 = vsub.s32 %v1694, %v1696
        %v1698 = vrot.slane %v1689, %v1697
        %v1700 = vunpack.c.l.s4 1966171168
        %v1701 = vunpack.c.0.s8 %v1700
        %v1702 = vlaneseq
        %v1703 = vshrl.u32 %v1702, 7
        %v1704 = vsub.s32 %v1701, %v1703
        %v1705 = vrot.slane %v1691, %v1704
        %v1706 = vcombine.high %v1698, %v1698
        %v1707 = vcombine.high %v1705, %v1705
        %v1709 = vunpack.c.l.s4 1966171168
        %v1710 = vunpack.c.0.s8 %v1709
        %v1711 = vlaneseq
        %v1712 = vshrl.u32 %v1711, 7
        %v1713 = vsub.s32 %v1710, %v1712
        %v1714 = vrot.slane %v1698, %v1713
        %v1716 = vunpack.c.l.s4 1966171168
        %v1717 = vunpack.c.0.s8 %v1716
        %v1718 = vlaneseq
        %v1719 = vshrl.u32 %v1718, 7
        %v1720 = vsub.s32 %v1717, %v1719
        %v1721 = vrot.slane %v1705, %v1720
        %v1723 = vunpack.c.l.s4 1966171168
        %v1724 = vunpack.c.0.s8 %v1723
        %v1725 = vlaneseq
        %v1726 = vshrl.u32 %v1725, 7
        %v1727 = vsub.s32 %v1724, %v1726
        %v1728 = vrot.slane %v1706, %v1727
        %v1730 = vunpack.c.l.s4 1966171168
        %v1731 = vunpack.c.0.s8 %v1730
        %v1732 = vlaneseq
        %v1733 = vshrl.u32 %v1732, 7
        %v1734 = vsub.s32 %v1731, %v1733
        %v1735 = vrot.slane %v1707, %v1734
        %v1736 = vcombine.high %v1714, %v1714
        %v1737 = vcombine.high %v1721, %v1721
        %v1738 = vcombine.high %v1728, %v1728
        %v1739 = vcombine.high %v1735, %v1735
        %1748 = vst.msk [vmem:[#allocation4 + $0x2] sm:$0x1] %vm1310, %v1714
        %1749 = vst.msk [vmem:[#allocation4 + $0xa] sm:$0x1] %vm1310, %v1728
        %1750 = vst.msk [vmem:[#allocation4 + $0x12] sm:$0x1] %vm1310, %v1736
        %1751 = vst.msk [vmem:[#allocation4 + $0x1a] sm:$0x1] %vm1310, %v1738
        %1752 = vst.msk [vmem:[#allocation4 + $0x22] sm:$0x1] %vm1310, %v1721
        %1753 = vst.msk [vmem:[#allocation4 + $0x2a] sm:$0x1] %vm1310, %v1735
        %1754 = vst.msk [vmem:[#allocation4 + $0x32] sm:$0x1] %vm1310, %v1737
        %1755 = vst.msk [vmem:[#allocation4 + $0x3a] sm:$0x1] %vm1310, %v1739
        %1756 = vset.pattern.permute.xlu0 4
        %1757 = vperm.xlu0 %1756, %v1173
        %v1758 = vpop.permute.xlu0 %1757
        %v1760 = vmul.f32 %v1243, %v1758
        %v1762 = vcombine.high %v1760, %v1760
        %v1764 = vunpack.c.l.s4 1966171168
        %v1765 = vunpack.c.0.s8 %v1764
        %v1766 = vlaneseq
        %v1767 = vshrl.u32 %v1766, 7
        %v1768 = vsub.s32 %v1765, %v1767
        %v1769 = vrot.slane %v1760, %v1768
        %v1771 = vunpack.c.l.s4 1966171168
        %v1772 = vunpack.c.0.s8 %v1771
        %v1773 = vlaneseq
        %v1774 = vshrl.u32 %v1773, 7
        %v1775 = vsub.s32 %v1772, %v1774
        %v1776 = vrot.slane %v1762, %v1775
        %v1777 = vcombine.high %v1769, %v1769
        %v1778 = vcombine.high %v1776, %v1776
        %v1780 = vunpack.c.l.s4 1966171168
        %v1781 = vunpack.c.0.s8 %v1780
        %v1782 = vlaneseq
        %v1783 = vshrl.u32 %v1782, 7
        %v1784 = vsub.s32 %v1781, %v1783
        %v1785 = vrot.slane %v1769, %v1784
        %v1787 = vunpack.c.l.s4 1966171168
        %v1788 = vunpack.c.0.s8 %v1787
        %v1789 = vlaneseq
        %v1790 = vshrl.u32 %v1789, 7
        %v1791 = vsub.s32 %v1788, %v1790
        %v1792 = vrot.slane %v1776, %v1791
        %v1794 = vunpack.c.l.s4 1966171168
        %v1795 = vunpack.c.0.s8 %v1794
        %v1796 = vlaneseq
        %v1797 = vshrl.u32 %v1796, 7
        %v1798 = vsub.s32 %v1795, %v1797
        %v1799 = vrot.slane %v1777, %v1798
        %v1801 = vunpack.c.l.s4 1966171168
        %v1802 = vunpack.c.0.s8 %v1801
        %v1803 = vlaneseq
        %v1804 = vshrl.u32 %v1803, 7
        %v1805 = vsub.s32 %v1802, %v1804
        %v1806 = vrot.slane %v1778, %v1805
        %v1807 = vcombine.high %v1785, %v1785
        %v1808 = vcombine.high %v1792, %v1792
        %v1809 = vcombine.high %v1799, %v1799
        %v1810 = vcombine.high %v1806, %v1806
        %1819 = vst.msk [vmem:[#allocation5 + $0x2] sm:$0x1] %vm1310, %v1785
        %1820 = vst.msk [vmem:[#allocation5 + $0xa] sm:$0x1] %vm1310, %v1799
        %1821 = vst.msk [vmem:[#allocation5 + $0x12] sm:$0x1] %vm1310, %v1807
        %1822 = vst.msk [vmem:[#allocation5 + $0x1a] sm:$0x1] %vm1310, %v1809
        %1823 = vst.msk [vmem:[#allocation5 + $0x22] sm:$0x1] %vm1310, %v1792
        %1824 = vst.msk [vmem:[#allocation5 + $0x2a] sm:$0x1] %vm1310, %v1806
        %1825 = vst.msk [vmem:[#allocation5 + $0x32] sm:$0x1] %vm1310, %v1808
        %1826 = vst.msk [vmem:[#allocation5 + $0x3a] sm:$0x1] %vm1310, %v1810
        %1827 = vrot.lane.b32.xlu0 %v1443, 116
        %v1828 = vpop.permute.xlu0 %1827
        %1829 = vrot.lane.b32.xlu0 %v1447, 116
        %v1830 = vpop.permute.xlu0 %1829
        %1831 = vrot.lane.b32.xlu0 %v1451, 116
        %v1832 = vpop.permute.xlu0 %1831
        %1833 = vrot.lane.b32.xlu0 %v1455, 116
        %v1834 = vpop.permute.xlu0 %1833
        %1835 = vrot.lane.b32.xlu0 %v1459, 116
        %v1836 = vpop.permute.xlu0 %1835
        %1837 = vrot.lane.b32.xlu0 %v1463, 116
        %v1838 = vpop.permute.xlu0 %1837
        %1839 = vrot.lane.b32.xlu0 %v1467, 116
        %v1840 = vpop.permute.xlu0 %1839
        %1841 = vrot.lane.b32.xlu0 %v1471, 116
        %v1842 = vpop.permute.xlu0 %1841
        %1851 = vst.msk [vmem:[#allocation6 + $0x2] sm:$0x1] %vm1496, %v1828
        %1852 = vst.msk [vmem:[#allocation6 + $0xa] sm:$0x1] %vm1496, %v1830
        %1853 = vst.msk [vmem:[#allocation6 + $0x12] sm:$0x1] %vm1496, %v1832
        %1854 = vst.msk [vmem:[#allocation6 + $0x1a] sm:$0x1] %vm1496, %v1834
        %1855 = vst.msk [vmem:[#allocation6 + $0x22] sm:$0x1] %vm1496, %v1836
        %1856 = vst.msk [vmem:[#allocation6 + $0x2a] sm:$0x1] %vm1496, %v1838
        %1857 = vst.msk [vmem:[#allocation6 + $0x32] sm:$0x1] %vm1496, %v1840
        %1858 = vst.msk [vmem:[#allocation6 + $0x3a] sm:$0x1] %vm1496, %v1842
        %v1859 = vld [vmem:[#allocation25 + $0x3] sm:$0x1]
        %v1860 = vlaneseq
        %v1861 = vshrl.u32 %v1860, 7
        %v1862 = vsub.s32 0, %v1861
        %v1863 = vrot.slane %v1859, %v1862
        %v1864 = vmul.f32 %v1242, %v1863
        %v1865 = vmul.f32 %v1864, 1.442695
        %v1866 = vpow.pop %v1865
        %v1868 = vcombine.high %v1866, %v1866
        %v1870 = vunpack.c.l.s4 1966171168
        %v1871 = vunpack.c.0.s8 %v1870
        %v1872 = vlaneseq
        %v1873 = vshrl.u32 %v1872, 7
        %v1874 = vsub.s32 %v1871, %v1873
        %v1875 = vrot.slane %v1866, %v1874
        %v1877 = vunpack.c.l.s4 1966171168
        %v1878 = vunpack.c.0.s8 %v1877
        %v1879 = vlaneseq
        %v1880 = vshrl.u32 %v1879, 7
        %v1881 = vsub.s32 %v1878, %v1880
        %v1882 = vrot.slane %v1868, %v1881
        %v1883 = vcombine.high %v1875, %v1875
        %v1884 = vcombine.high %v1882, %v1882
        %v1886 = vunpack.c.l.s4 1966171168
        %v1887 = vunpack.c.0.s8 %v1886
        %v1888 = vlaneseq
        %v1889 = vshrl.u32 %v1888, 7
        %v1890 = vsub.s32 %v1887, %v1889
        %v1891 = vrot.slane %v1875, %v1890
        %v1893 = vunpack.c.l.s4 1966171168
        %v1894 = vunpack.c.0.s8 %v1893
        %v1895 = vlaneseq
        %v1896 = vshrl.u32 %v1895, 7
        %v1897 = vsub.s32 %v1894, %v1896
        %v1898 = vrot.slane %v1882, %v1897
        %v1900 = vunpack.c.l.s4 1966171168
        %v1901 = vunpack.c.0.s8 %v1900
        %v1902 = vlaneseq
        %v1903 = vshrl.u32 %v1902, 7
        %v1904 = vsub.s32 %v1901, %v1903
        %v1905 = vrot.slane %v1883, %v1904
        %v1907 = vunpack.c.l.s4 1966171168
        %v1908 = vunpack.c.0.s8 %v1907
        %v1909 = vlaneseq
        %v1910 = vshrl.u32 %v1909, 7
        %v1911 = vsub.s32 %v1908, %v1910
        %v1912 = vrot.slane %v1884, %v1911
        %v1913 = vcombine.high %v1891, %v1891
        %v1914 = vcombine.high %v1898, %v1898
        %v1915 = vcombine.high %v1905, %v1905
        %v1916 = vcombine.high %v1912, %v1912
        %1925 = vst.msk [vmem:[#allocation4 + $0x3] sm:$0x1] %vm1310, %v1891
        %1926 = vst.msk [vmem:[#allocation4 + $0xb] sm:$0x1] %vm1310, %v1905
        %1927 = vst.msk [vmem:[#allocation4 + $0x13] sm:$0x1] %vm1310, %v1913
        %1928 = vst.msk [vmem:[#allocation4 + $0x1b] sm:$0x1] %vm1310, %v1915
        %1929 = vst.msk [vmem:[#allocation4 + $0x23] sm:$0x1] %vm1310, %v1898
        %1930 = vst.msk [vmem:[#allocation4 + $0x2b] sm:$0x1] %vm1310, %v1912
        %1931 = vst.msk [vmem:[#allocation4 + $0x33] sm:$0x1] %vm1310, %v1914
        %1932 = vst.msk [vmem:[#allocation4 + $0x3b] sm:$0x1] %vm1310, %v1916
        %1933 = vset.pattern.permute.xlu0 5
        %1934 = vperm.xlu0 %1933, %v1173
        %v1935 = vpop.permute.xlu0 %1934
        %v1937 = vmul.f32 %v1243, %v1935
        %v1939 = vcombine.high %v1937, %v1937
        %v1941 = vunpack.c.l.s4 1966171168
        %v1942 = vunpack.c.0.s8 %v1941
        %v1943 = vlaneseq
        %v1944 = vshrl.u32 %v1943, 7
        %v1945 = vsub.s32 %v1942, %v1944
        %v1946 = vrot.slane %v1937, %v1945
        %v1948 = vunpack.c.l.s4 1966171168
        %v1949 = vunpack.c.0.s8 %v1948
        %v1950 = vlaneseq
        %v1951 = vshrl.u32 %v1950, 7
        %v1952 = vsub.s32 %v1949, %v1951
        %v1953 = vrot.slane %v1939, %v1952
        %v1954 = vcombine.high %v1946, %v1946
        %v1955 = vcombine.high %v1953, %v1953
        %v1957 = vunpack.c.l.s4 1966171168
        %v1958 = vunpack.c.0.s8 %v1957
        %v1959 = vlaneseq
        %v1960 = vshrl.u32 %v1959, 7
        %v1961 = vsub.s32 %v1958, %v1960
        %v1962 = vrot.slane %v1946, %v1961
        %v1964 = vunpack.c.l.s4 1966171168
        %v1965 = vunpack.c.0.s8 %v1964
        %v1966 = vlaneseq
        %v1967 = vshrl.u32 %v1966, 7
        %v1968 = vsub.s32 %v1965, %v1967
        %v1969 = vrot.slane %v1953, %v1968
        %v1971 = vunpack.c.l.s4 1966171168
        %v1972 = vunpack.c.0.s8 %v1971
        %v1973 = vlaneseq
        %v1974 = vshrl.u32 %v1973, 7
        %v1975 = vsub.s32 %v1972, %v1974
        %v1976 = vrot.slane %v1954, %v1975
        %v1978 = vunpack.c.l.s4 1966171168
        %v1979 = vunpack.c.0.s8 %v1978
        %v1980 = vlaneseq
        %v1981 = vshrl.u32 %v1980, 7
        %v1982 = vsub.s32 %v1979, %v1981
        %v1983 = vrot.slane %v1955, %v1982
        %v1984 = vcombine.high %v1962, %v1962
        %v1985 = vcombine.high %v1969, %v1969
        %v1986 = vcombine.high %v1976, %v1976
        %v1987 = vcombine.high %v1983, %v1983
        %1996 = vst.msk [vmem:[#allocation5 + $0x3] sm:$0x1] %vm1310, %v1962
        %1997 = vst.msk [vmem:[#allocation5 + $0xb] sm:$0x1] %vm1310, %v1976
        %1998 = vst.msk [vmem:[#allocation5 + $0x13] sm:$0x1] %vm1310, %v1984
        %1999 = vst.msk [vmem:[#allocation5 + $0x1b] sm:$0x1] %vm1310, %v1986
        %2000 = vst.msk [vmem:[#allocation5 + $0x23] sm:$0x1] %vm1310, %v1969
        %2001 = vst.msk [vmem:[#allocation5 + $0x2b] sm:$0x1] %vm1310, %v1983
        %2002 = vst.msk [vmem:[#allocation5 + $0x33] sm:$0x1] %vm1310, %v1985
        %2003 = vst.msk [vmem:[#allocation5 + $0x3b] sm:$0x1] %vm1310, %v1987
        %2004 = vrot.lane.b32.xlu0 %v1443, 115
        %v2005 = vpop.permute.xlu0 %2004
        %2006 = vrot.lane.b32.xlu0 %v1447, 115
        %v2007 = vpop.permute.xlu0 %2006
        %2008 = vrot.lane.b32.xlu0 %v1451, 115
        %v2009 = vpop.permute.xlu0 %2008
        %2010 = vrot.lane.b32.xlu0 %v1455, 115
        %v2011 = vpop.permute.xlu0 %2010
        %2012 = vrot.lane.b32.xlu0 %v1459, 115
        %v2013 = vpop.permute.xlu0 %2012
        %2014 = vrot.lane.b32.xlu0 %v1463, 115
        %v2015 = vpop.permute.xlu0 %2014
        %2016 = vrot.lane.b32.xlu0 %v1467, 115
        %v2017 = vpop.permute.xlu0 %2016
        %2018 = vrot.lane.b32.xlu0 %v1471, 115
        %v2019 = vpop.permute.xlu0 %2018
        %2028 = vst.msk [vmem:[#allocation6 + $0x3] sm:$0x1] %vm1496, %v2005
        %2029 = vst.msk [vmem:[#allocation6 + $0xb] sm:$0x1] %vm1496, %v2007
        %2030 = vst.msk [vmem:[#allocation6 + $0x13] sm:$0x1] %vm1496, %v2009
        %2031 = vst.msk [vmem:[#allocation6 + $0x1b] sm:$0x1] %vm1496, %v2011
        %2032 = vst.msk [vmem:[#allocation6 + $0x23] sm:$0x1] %vm1496, %v2013
        %2033 = vst.msk [vmem:[#allocation6 + $0x2b] sm:$0x1] %vm1496, %v2015
        %2034 = vst.msk [vmem:[#allocation6 + $0x33] sm:$0x1] %vm1496, %v2017
        %2035 = vst.msk [vmem:[#allocation6 + $0x3b] sm:$0x1] %vm1496, %v2019
        %v2036 = vld [vmem:[#allocation25 + $0x4] sm:$0x1]
        %v2037 = vlaneseq
        %v2038 = vshrl.u32 %v2037, 7
        %v2039 = vsub.s32 0, %v2038
        %v2040 = vrot.slane %v2036, %v2039
        %v2041 = vmul.f32 %v1242, %v2040
        %v2042 = vmul.f32 %v2041, 1.442695
        %v2043 = vpow.pop %v2042
        %v2045 = vcombine.high %v2043, %v2043
        %v2047 = vunpack.c.l.s4 1966171168
        %v2048 = vunpack.c.0.s8 %v2047
        %v2049 = vlaneseq
        %v2050 = vshrl.u32 %v2049, 7
        %v2051 = vsub.s32 %v2048, %v2050
        %v2052 = vrot.slane %v2043, %v2051
        %v2054 = vunpack.c.l.s4 1966171168
        %v2055 = vunpack.c.0.s8 %v2054
        %v2056 = vlaneseq
        %v2057 = vshrl.u32 %v2056, 7
        %v2058 = vsub.s32 %v2055, %v2057
        %v2059 = vrot.slane %v2045, %v2058
        %v2060 = vcombine.high %v2052, %v2052
        %v2061 = vcombine.high %v2059, %v2059
        %v2063 = vunpack.c.l.s4 1966171168
        %v2064 = vunpack.c.0.s8 %v2063
        %v2065 = vlaneseq
        %v2066 = vshrl.u32 %v2065, 7
        %v2067 = vsub.s32 %v2064, %v2066
        %v2068 = vrot.slane %v2052, %v2067
        %v2070 = vunpack.c.l.s4 1966171168
        %v2071 = vunpack.c.0.s8 %v2070
        %v2072 = vlaneseq
        %v2073 = vshrl.u32 %v2072, 7
        %v2074 = vsub.s32 %v2071, %v2073
        %v2075 = vrot.slane %v2059, %v2074
        %v2077 = vunpack.c.l.s4 1966171168
        %v2078 = vunpack.c.0.s8 %v2077
        %v2079 = vlaneseq
        %v2080 = vshrl.u32 %v2079, 7
        %v2081 = vsub.s32 %v2078, %v2080
        %v2082 = vrot.slane %v2060, %v2081
        %v2084 = vunpack.c.l.s4 1966171168
        %v2085 = vunpack.c.0.s8 %v2084
        %v2086 = vlaneseq
        %v2087 = vshrl.u32 %v2086, 7
        %v2088 = vsub.s32 %v2085, %v2087
        %v2089 = vrot.slane %v2061, %v2088
        %v2090 = vcombine.high %v2068, %v2068
        %v2091 = vcombine.high %v2075, %v2075
        %v2092 = vcombine.high %v2082, %v2082
        %v2093 = vcombine.high %v2089, %v2089
        %2102 = vst.msk [vmem:[#allocation4 + $0x4] sm:$0x1] %vm1310, %v2068
        %2103 = vst.msk [vmem:[#allocation4 + $0xc] sm:$0x1] %vm1310, %v2082
        %2104 = vst.msk [vmem:[#allocation4 + $0x14] sm:$0x1] %vm1310, %v2090
        %2105 = vst.msk [vmem:[#allocation4 + $0x1c] sm:$0x1] %vm1310, %v2092
        %2106 = vst.msk [vmem:[#allocation4 + $0x24] sm:$0x1] %vm1310, %v2075
        %2107 = vst.msk [vmem:[#allocation4 + $0x2c] sm:$0x1] %vm1310, %v2089
        %2108 = vst.msk [vmem:[#allocation4 + $0x34] sm:$0x1] %vm1310, %v2091
        %2109 = vst.msk [vmem:[#allocation4 + $0x3c] sm:$0x1] %vm1310, %v2093
        %2110 = vset.pattern.permute.xlu0 6
        %2111 = vperm.xlu0 %2110, %v1173
        %v2112 = vpop.permute.xlu0 %2111
        %v2114 = vmul.f32 %v1243, %v2112
        %v2116 = vcombine.high %v2114, %v2114
        %v2118 = vunpack.c.l.s4 1966171168
        %v2119 = vunpack.c.0.s8 %v2118
        %v2120 = vlaneseq
        %v2121 = vshrl.u32 %v2120, 7
        %v2122 = vsub.s32 %v2119, %v2121
        %v2123 = vrot.slane %v2114, %v2122
        %v2125 = vunpack.c.l.s4 1966171168
        %v2126 = vunpack.c.0.s8 %v2125
        %v2127 = vlaneseq
        %v2128 = vshrl.u32 %v2127, 7
        %v2129 = vsub.s32 %v2126, %v2128
        %v2130 = vrot.slane %v2116, %v2129
        %v2131 = vcombine.high %v2123, %v2123
        %v2132 = vcombine.high %v2130, %v2130
        %v2134 = vunpack.c.l.s4 1966171168
        %v2135 = vunpack.c.0.s8 %v2134
        %v2136 = vlaneseq
        %v2137 = vshrl.u32 %v2136, 7
        %v2138 = vsub.s32 %v2135, %v2137
        %v2139 = vrot.slane %v2123, %v2138
        %v2141 = vunpack.c.l.s4 1966171168
        %v2142 = vunpack.c.0.s8 %v2141
        %v2143 = vlaneseq
        %v2144 = vshrl.u32 %v2143, 7
        %v2145 = vsub.s32 %v2142, %v2144
        %v2146 = vrot.slane %v2130, %v2145
        %v2148 = vunpack.c.l.s4 1966171168
        %v2149 = vunpack.c.0.s8 %v2148
        %v2150 = vlaneseq
        %v2151 = vshrl.u32 %v2150, 7
        %v2152 = vsub.s32 %v2149, %v2151
        %v2153 = vrot.slane %v2131, %v2152
        %v2155 = vunpack.c.l.s4 1966171168
        %v2156 = vunpack.c.0.s8 %v2155
        %v2157 = vlaneseq
        %v2158 = vshrl.u32 %v2157, 7
        %v2159 = vsub.s32 %v2156, %v2158
        %v2160 = vrot.slane %v2132, %v2159
        %v2161 = vcombine.high %v2139, %v2139
        %v2162 = vcombine.high %v2146, %v2146
        %v2163 = vcombine.high %v2153, %v2153
        %v2164 = vcombine.high %v2160, %v2160
        %2173 = vst.msk [vmem:[#allocation5 + $0x4] sm:$0x1] %vm1310, %v2139
        %2174 = vst.msk [vmem:[#allocation5 + $0xc] sm:$0x1] %vm1310, %v2153
        %2175 = vst.msk [vmem:[#allocation5 + $0x14] sm:$0x1] %vm1310, %v2161
        %2176 = vst.msk [vmem:[#allocation5 + $0x1c] sm:$0x1] %vm1310, %v2163
        %2177 = vst.msk [vmem:[#allocation5 + $0x24] sm:$0x1] %vm1310, %v2146
        %2178 = vst.msk [vmem:[#allocation5 + $0x2c] sm:$0x1] %vm1310, %v2160
        %2179 = vst.msk [vmem:[#allocation5 + $0x34] sm:$0x1] %vm1310, %v2162
        %2180 = vst.msk [vmem:[#allocation5 + $0x3c] sm:$0x1] %vm1310, %v2164
        %2181 = vrot.lane.b32.xlu0 %v1443, 114
        %v2182 = vpop.permute.xlu0 %2181
        %2183 = vrot.lane.b32.xlu0 %v1447, 114
        %v2184 = vpop.permute.xlu0 %2183
        %2185 = vrot.lane.b32.xlu0 %v1451, 114
        %v2186 = vpop.permute.xlu0 %2185
        %2187 = vrot.lane.b32.xlu0 %v1455, 114
        %v2188 = vpop.permute.xlu0 %2187
        %2189 = vrot.lane.b32.xlu0 %v1459, 114
        %v2190 = vpop.permute.xlu0 %2189
        %2191 = vrot.lane.b32.xlu0 %v1463, 114
        %v2192 = vpop.permute.xlu0 %2191
        %2193 = vrot.lane.b32.xlu0 %v1467, 114
        %v2194 = vpop.permute.xlu0 %2193
        %2195 = vrot.lane.b32.xlu0 %v1471, 114
        %v2196 = vpop.permute.xlu0 %2195
        %2205 = vst.msk [vmem:[#allocation6 + $0x4] sm:$0x1] %vm1496, %v2182
        %2206 = vst.msk [vmem:[#allocation6 + $0xc] sm:$0x1] %vm1496, %v2184
        %2207 = vst.msk [vmem:[#allocation6 + $0x14] sm:$0x1] %vm1496, %v2186
        %2208 = vst.msk [vmem:[#allocation6 + $0x1c] sm:$0x1] %vm1496, %v2188
        %2209 = vst.msk [vmem:[#allocation6 + $0x24] sm:$0x1] %vm1496, %v2190
        %2210 = vst.msk [vmem:[#allocation6 + $0x2c] sm:$0x1] %vm1496, %v2192
        %2211 = vst.msk [vmem:[#allocation6 + $0x34] sm:$0x1] %vm1496, %v2194
        %2212 = vst.msk [vmem:[#allocation6 + $0x3c] sm:$0x1] %vm1496, %v2196
        %v2213 = vld [vmem:[#allocation25 + $0x5] sm:$0x1]
        %v2214 = vlaneseq
        %v2215 = vshrl.u32 %v2214, 7
        %v2216 = vsub.s32 0, %v2215
        %v2217 = vrot.slane %v2213, %v2216
        %v2218 = vmul.f32 %v1242, %v2217
        %v2219 = vmul.f32 %v2218, 1.442695
        %v2220 = vpow.pop %v2219
        %v2222 = vcombine.high %v2220, %v2220
        %v2224 = vunpack.c.l.s4 1966171168
        %v2225 = vunpack.c.0.s8 %v2224
        %v2226 = vlaneseq
        %v2227 = vshrl.u32 %v2226, 7
        %v2228 = vsub.s32 %v2225, %v2227
        %v2229 = vrot.slane %v2220, %v2228
        %v2231 = vunpack.c.l.s4 1966171168
        %v2232 = vunpack.c.0.s8 %v2231
        %v2233 = vlaneseq
        %v2234 = vshrl.u32 %v2233, 7
        %v2235 = vsub.s32 %v2232, %v2234
        %v2236 = vrot.slane %v2222, %v2235
        %v2237 = vcombine.high %v2229, %v2229
        %v2238 = vcombine.high %v2236, %v2236
        %v2240 = vunpack.c.l.s4 1966171168
        %v2241 = vunpack.c.0.s8 %v2240
        %v2242 = vlaneseq
        %v2243 = vshrl.u32 %v2242, 7
        %v2244 = vsub.s32 %v2241, %v2243
        %v2245 = vrot.slane %v2229, %v2244
        %v2247 = vunpack.c.l.s4 1966171168
        %v2248 = vunpack.c.0.s8 %v2247
        %v2249 = vlaneseq
        %v2250 = vshrl.u32 %v2249, 7
        %v2251 = vsub.s32 %v2248, %v2250
        %v2252 = vrot.slane %v2236, %v2251
        %v2254 = vunpack.c.l.s4 1966171168
        %v2255 = vunpack.c.0.s8 %v2254
        %v2256 = vlaneseq
        %v2257 = vshrl.u32 %v2256, 7
        %v2258 = vsub.s32 %v2255, %v2257
        %v2259 = vrot.slane %v2237, %v2258
        %v2261 = vunpack.c.l.s4 1966171168
        %v2262 = vunpack.c.0.s8 %v2261
        %v2263 = vlaneseq
        %v2264 = vshrl.u32 %v2263, 7
        %v2265 = vsub.s32 %v2262, %v2264
        %v2266 = vrot.slane %v2238, %v2265
        %v2267 = vcombine.high %v2245, %v2245
        %v2268 = vcombine.high %v2252, %v2252
        %v2269 = vcombine.high %v2259, %v2259
        %v2270 = vcombine.high %v2266, %v2266
        %2279 = vst.msk [vmem:[#allocation4 + $0x5] sm:$0x1] %vm1310, %v2245
        %2280 = vst.msk [vmem:[#allocation4 + $0xd] sm:$0x1] %vm1310, %v2259
        %2281 = vst.msk [vmem:[#allocation4 + $0x15] sm:$0x1] %vm1310, %v2267
        %2282 = vst.msk [vmem:[#allocation4 + $0x1d] sm:$0x1] %vm1310, %v2269
        %2283 = vst.msk [vmem:[#allocation4 + $0x25] sm:$0x1] %vm1310, %v2252
        %2284 = vst.msk [vmem:[#allocation4 + $0x2d] sm:$0x1] %vm1310, %v2266
        %2285 = vst.msk [vmem:[#allocation4 + $0x35] sm:$0x1] %vm1310, %v2268
        %2286 = vst.msk [vmem:[#allocation4 + $0x3d] sm:$0x1] %vm1310, %v2270
        %2287 = vset.pattern.permute.xlu0 7
        %2288 = vperm.xlu0 %2287, %v1173
        %v2289 = vpop.permute.xlu0 %2288
        %v2291 = vmul.f32 %v1243, %v2289
        %v2293 = vcombine.high %v2291, %v2291
        %v2295 = vunpack.c.l.s4 1966171168
        %v2296 = vunpack.c.0.s8 %v2295
        %v2297 = vlaneseq
        %v2298 = vshrl.u32 %v2297, 7
        %v2299 = vsub.s32 %v2296, %v2298
        %v2300 = vrot.slane %v2291, %v2299
        %v2302 = vunpack.c.l.s4 1966171168
        %v2303 = vunpack.c.0.s8 %v2302
        %v2304 = vlaneseq
        %v2305 = vshrl.u32 %v2304, 7
        %v2306 = vsub.s32 %v2303, %v2305
        %v2307 = vrot.slane %v2293, %v2306
        %v2308 = vcombine.high %v2300, %v2300
        %v2309 = vcombine.high %v2307, %v2307
        %v2311 = vunpack.c.l.s4 1966171168
        %v2312 = vunpack.c.0.s8 %v2311
        %v2313 = vlaneseq
        %v2314 = vshrl.u32 %v2313, 7
        %v2315 = vsub.s32 %v2312, %v2314
        %v2316 = vrot.slane %v2300, %v2315
        %v2318 = vunpack.c.l.s4 1966171168
        %v2319 = vunpack.c.0.s8 %v2318
        %v2320 = vlaneseq
        %v2321 = vshrl.u32 %v2320, 7
        %v2322 = vsub.s32 %v2319, %v2321
        %v2323 = vrot.slane %v2307, %v2322
        %v2325 = vunpack.c.l.s4 1966171168
        %v2326 = vunpack.c.0.s8 %v2325
        %v2327 = vlaneseq
        %v2328 = vshrl.u32 %v2327, 7
        %v2329 = vsub.s32 %v2326, %v2328
        %v2330 = vrot.slane %v2308, %v2329
        %v2332 = vunpack.c.l.s4 1966171168
        %v2333 = vunpack.c.0.s8 %v2332
        %v2334 = vlaneseq
        %v2335 = vshrl.u32 %v2334, 7
        %v2336 = vsub.s32 %v2333, %v2335
        %v2337 = vrot.slane %v2309, %v2336
        %v2338 = vcombine.high %v2316, %v2316
        %v2339 = vcombine.high %v2323, %v2323
        %v2340 = vcombine.high %v2330, %v2330
        %v2341 = vcombine.high %v2337, %v2337
        %2350 = vst.msk [vmem:[#allocation5 + $0x5] sm:$0x1] %vm1310, %v2316
        %2351 = vst.msk [vmem:[#allocation5 + $0xd] sm:$0x1] %vm1310, %v2330
        %2352 = vst.msk [vmem:[#allocation5 + $0x15] sm:$0x1] %vm1310, %v2338
        %2353 = vst.msk [vmem:[#allocation5 + $0x1d] sm:$0x1] %vm1310, %v2340
        %2354 = vst.msk [vmem:[#allocation5 + $0x25] sm:$0x1] %vm1310, %v2323
        %2355 = vst.msk [vmem:[#allocation5 + $0x2d] sm:$0x1] %vm1310, %v2337
        %2356 = vst.msk [vmem:[#allocation5 + $0x35] sm:$0x1] %vm1310, %v2339
        %2357 = vst.msk [vmem:[#allocation5 + $0x3d] sm:$0x1] %vm1310, %v2341
        %2358 = vrot.lane.b32.xlu0 %v1443, 113
        %v2359 = vpop.permute.xlu0 %2358
        %2360 = vrot.lane.b32.xlu0 %v1447, 113
        %v2361 = vpop.permute.xlu0 %2360
        %2362 = vrot.lane.b32.xlu0 %v1451, 113
        %v2363 = vpop.permute.xlu0 %2362
        %2364 = vrot.lane.b32.xlu0 %v1455, 113
        %v2365 = vpop.permute.xlu0 %2364
        %2366 = vrot.lane.b32.xlu0 %v1459, 113
        %v2367 = vpop.permute.xlu0 %2366
        %2368 = vrot.lane.b32.xlu0 %v1463, 113
        %v2369 = vpop.permute.xlu0 %2368
        %2370 = vrot.lane.b32.xlu0 %v1467, 113
        %v2371 = vpop.permute.xlu0 %2370
        %2372 = vrot.lane.b32.xlu0 %v1471, 113
        %v2373 = vpop.permute.xlu0 %2372
        %2382 = vst.msk [vmem:[#allocation6 + $0x5] sm:$0x1] %vm1496, %v2359
        %2383 = vst.msk [vmem:[#allocation6 + $0xd] sm:$0x1] %vm1496, %v2361
        %2384 = vst.msk [vmem:[#allocation6 + $0x15] sm:$0x1] %vm1496, %v2363
        %2385 = vst.msk [vmem:[#allocation6 + $0x1d] sm:$0x1] %vm1496, %v2365
        %2386 = vst.msk [vmem:[#allocation6 + $0x25] sm:$0x1] %vm1496, %v2367
        %2387 = vst.msk [vmem:[#allocation6 + $0x2d] sm:$0x1] %vm1496, %v2369
        %2388 = vst.msk [vmem:[#allocation6 + $0x35] sm:$0x1] %vm1496, %v2371
        %2389 = vst.msk [vmem:[#allocation6 + $0x3d] sm:$0x1] %vm1496, %v2373
        %v2390 = vld [vmem:[#allocation25 + $0x6] sm:$0x1]
        %v2391 = vlaneseq
        %v2392 = vshrl.u32 %v2391, 7
        %v2393 = vsub.s32 0, %v2392
        %v2394 = vrot.slane %v2390, %v2393
        %v2395 = vmul.f32 %v1242, %v2394
        %v2396 = vmul.f32 %v2395, 1.442695
        %v2397 = vpow.pop %v2396
        %v2399 = vcombine.high %v2397, %v2397
        %v2401 = vunpack.c.l.s4 1966171168
        %v2402 = vunpack.c.0.s8 %v2401
        %v2403 = vlaneseq
        %v2404 = vshrl.u32 %v2403, 7
        %v2405 = vsub.s32 %v2402, %v2404
        %v2406 = vrot.slane %v2397, %v2405
        %v2408 = vunpack.c.l.s4 1966171168
        %v2409 = vunpack.c.0.s8 %v2408
        %v2410 = vlaneseq
        %v2411 = vshrl.u32 %v2410, 7
        %v2412 = vsub.s32 %v2409, %v2411
        %v2413 = vrot.slane %v2399, %v2412
        %v2414 = vcombine.high %v2406, %v2406
        %v2415 = vcombine.high %v2413, %v2413
        %v2417 = vunpack.c.l.s4 1966171168
        %v2418 = vunpack.c.0.s8 %v2417
        %v2419 = vlaneseq
        %v2420 = vshrl.u32 %v2419, 7
        %v2421 = vsub.s32 %v2418, %v2420
        %v2422 = vrot.slane %v2406, %v2421
        %v2424 = vunpack.c.l.s4 1966171168
        %v2425 = vunpack.c.0.s8 %v2424
        %v2426 = vlaneseq
        %v2427 = vshrl.u32 %v2426, 7
        %v2428 = vsub.s32 %v2425, %v2427
        %v2429 = vrot.slane %v2413, %v2428
        %v2431 = vunpack.c.l.s4 1966171168
        %v2432 = vunpack.c.0.s8 %v2431
        %v2433 = vlaneseq
        %v2434 = vshrl.u32 %v2433, 7
        %v2435 = vsub.s32 %v2432, %v2434
        %v2436 = vrot.slane %v2414, %v2435
        %v2438 = vunpack.c.l.s4 1966171168
        %v2439 = vunpack.c.0.s8 %v2438
        %v2440 = vlaneseq
        %v2441 = vshrl.u32 %v2440, 7
        %v2442 = vsub.s32 %v2439, %v2441
        %v2443 = vrot.slane %v2415, %v2442
        %v2444 = vcombine.high %v2422, %v2422
        %v2445 = vcombine.high %v2429, %v2429
        %v2446 = vcombine.high %v2436, %v2436
        %v2447 = vcombine.high %v2443, %v2443
        %2456 = vst.msk [vmem:[#allocation4 + $0x6] sm:$0x1] %vm1310, %v2422
        %2457 = vst.msk [vmem:[#allocation4 + $0xe] sm:$0x1] %vm1310, %v2436
        %2458 = vst.msk [vmem:[#allocation4 + $0x16] sm:$0x1] %vm1310, %v2444
        %2459 = vst.msk [vmem:[#allocation4 + $0x1e] sm:$0x1] %vm1310, %v2446
        %2460 = vst.msk [vmem:[#allocation4 + $0x26] sm:$0x1] %vm1310, %v2429
        %2461 = vst.msk [vmem:[#allocation4 + $0x2e] sm:$0x1] %vm1310, %v2443
        %2462 = vst.msk [vmem:[#allocation4 + $0x36] sm:$0x1] %vm1310, %v2445
        %2463 = vst.msk [vmem:[#allocation4 + $0x3e] sm:$0x1] %vm1310, %v2447
        %2464 = vset.pattern.permute.xlu0 8
        %2465 = vperm.xlu0 %2464, %v1173
        %v2466 = vpop.permute.xlu0 %2465
        %v2468 = vmul.f32 %v1243, %v2466
        %v2470 = vcombine.high %v2468, %v2468
        %v2472 = vunpack.c.l.s4 1966171168
        %v2473 = vunpack.c.0.s8 %v2472
        %v2474 = vlaneseq
        %v2475 = vshrl.u32 %v2474, 7
        %v2476 = vsub.s32 %v2473, %v2475
        %v2477 = vrot.slane %v2468, %v2476
        %v2479 = vunpack.c.l.s4 1966171168
        %v2480 = vunpack.c.0.s8 %v2479
        %v2481 = vlaneseq
        %v2482 = vshrl.u32 %v2481, 7
        %v2483 = vsub.s32 %v2480, %v2482
        %v2484 = vrot.slane %v2470, %v2483
        %v2485 = vcombine.high %v2477, %v2477
        %v2486 = vcombine.high %v2484, %v2484
        %v2488 = vunpack.c.l.s4 1966171168
        %v2489 = vunpack.c.0.s8 %v2488
        %v2490 = vlaneseq
        %v2491 = vshrl.u32 %v2490, 7
        %v2492 = vsub.s32 %v2489, %v2491
        %v2493 = vrot.slane %v2477, %v2492
        %v2495 = vunpack.c.l.s4 1966171168
        %v2496 = vunpack.c.0.s8 %v2495
        %v2497 = vlaneseq
        %v2498 = vshrl.u32 %v2497, 7
        %v2499 = vsub.s32 %v2496, %v2498
        %v2500 = vrot.slane %v2484, %v2499
        %v2502 = vunpack.c.l.s4 1966171168
        %v2503 = vunpack.c.0.s8 %v2502
        %v2504 = vlaneseq
        %v2505 = vshrl.u32 %v2504, 7
        %v2506 = vsub.s32 %v2503, %v2505
        %v2507 = vrot.slane %v2485, %v2506
        %v2509 = vunpack.c.l.s4 1966171168
        %v2510 = vunpack.c.0.s8 %v2509
        %v2511 = vlaneseq
        %v2512 = vshrl.u32 %v2511, 7
        %v2513 = vsub.s32 %v2510, %v2512
        %v2514 = vrot.slane %v2486, %v2513
        %v2515 = vcombine.high %v2493, %v2493
        %v2516 = vcombine.high %v2500, %v2500
        %v2517 = vcombine.high %v2507, %v2507
        %v2518 = vcombine.high %v2514, %v2514
        %2527 = vst.msk [vmem:[#allocation5 + $0x6] sm:$0x1] %vm1310, %v2493
        %2528 = vst.msk [vmem:[#allocation5 + $0xe] sm:$0x1] %vm1310, %v2507
        %2529 = vst.msk [vmem:[#allocation5 + $0x16] sm:$0x1] %vm1310, %v2515
        %2530 = vst.msk [vmem:[#allocation5 + $0x1e] sm:$0x1] %vm1310, %v2517
        %2531 = vst.msk [vmem:[#allocation5 + $0x26] sm:$0x1] %vm1310, %v2500
        %2532 = vst.msk [vmem:[#allocation5 + $0x2e] sm:$0x1] %vm1310, %v2514
        %2533 = vst.msk [vmem:[#allocation5 + $0x36] sm:$0x1] %vm1310, %v2516
        %2534 = vst.msk [vmem:[#allocation5 + $0x3e] sm:$0x1] %vm1310, %v2518
        %2535 = vrot.lane.b32.xlu0 %v1443, 112
        %v2536 = vpop.permute.xlu0 %2535
        %2537 = vrot.lane.b32.xlu0 %v1447, 112
        %v2538 = vpop.permute.xlu0 %2537
        %2539 = vrot.lane.b32.xlu0 %v1451, 112
        %v2540 = vpop.permute.xlu0 %2539
        %2541 = vrot.lane.b32.xlu0 %v1455, 112
        %v2542 = vpop.permute.xlu0 %2541
        %2543 = vrot.lane.b32.xlu0 %v1459, 112
        %v2544 = vpop.permute.xlu0 %2543
        %2545 = vrot.lane.b32.xlu0 %v1463, 112
        %v2546 = vpop.permute.xlu0 %2545
        %2547 = vrot.lane.b32.xlu0 %v1467, 112
        %v2548 = vpop.permute.xlu0 %2547
        %2549 = vrot.lane.b32.xlu0 %v1471, 112
        %v2550 = vpop.permute.xlu0 %2549
        %2559 = vst.msk [vmem:[#allocation6 + $0x6] sm:$0x1] %vm1496, %v2536
        %2560 = vst.msk [vmem:[#allocation6 + $0xe] sm:$0x1] %vm1496, %v2538
        %2561 = vst.msk [vmem:[#allocation6 + $0x16] sm:$0x1] %vm1496, %v2540
        %2562 = vst.msk [vmem:[#allocation6 + $0x1e] sm:$0x1] %vm1496, %v2542
        %2563 = vst.msk [vmem:[#allocation6 + $0x26] sm:$0x1] %vm1496, %v2544
        %2564 = vst.msk [vmem:[#allocation6 + $0x2e] sm:$0x1] %vm1496, %v2546
        %2565 = vst.msk [vmem:[#allocation6 + $0x36] sm:$0x1] %vm1496, %v2548
        %2566 = vst.msk [vmem:[#allocation6 + $0x3e] sm:$0x1] %vm1496, %v2550
        %v2567 = vld [vmem:[#allocation25 + $0x7] sm:$0x1]
        %v2568 = vlaneseq
        %v2569 = vshrl.u32 %v2568, 7
        %v2570 = vsub.s32 0, %v2569
        %v2571 = vrot.slane %v2567, %v2570
        %v2572 = vmul.f32 %v1242, %v2571
        %v2573 = vmul.f32 %v2572, 1.442695
        %v2574 = vpow.pop %v2573
        %v2576 = vcombine.high %v2574, %v2574
        %v2578 = vunpack.c.l.s4 1966171168
        %v2579 = vunpack.c.0.s8 %v2578
        %v2580 = vlaneseq
        %v2581 = vshrl.u32 %v2580, 7
        %v2582 = vsub.s32 %v2579, %v2581
        %v2583 = vrot.slane %v2574, %v2582
        %v2585 = vunpack.c.l.s4 1966171168
        %v2586 = vunpack.c.0.s8 %v2585
        %v2587 = vlaneseq
        %v2588 = vshrl.u32 %v2587, 7
        %v2589 = vsub.s32 %v2586, %v2588
        %v2590 = vrot.slane %v2576, %v2589
        %v2591 = vcombine.high %v2583, %v2583
        %v2592 = vcombine.high %v2590, %v2590
        %v2594 = vunpack.c.l.s4 1966171168
        %v2595 = vunpack.c.0.s8 %v2594
        %v2596 = vlaneseq
        %v2597 = vshrl.u32 %v2596, 7
        %v2598 = vsub.s32 %v2595, %v2597
        %v2599 = vrot.slane %v2583, %v2598
        %v2601 = vunpack.c.l.s4 1966171168
        %v2602 = vunpack.c.0.s8 %v2601
        %v2603 = vlaneseq
        %v2604 = vshrl.u32 %v2603, 7
        %v2605 = vsub.s32 %v2602, %v2604
        %v2606 = vrot.slane %v2590, %v2605
        %v2608 = vunpack.c.l.s4 1966171168
        %v2609 = vunpack.c.0.s8 %v2608
        %v2610 = vlaneseq
        %v2611 = vshrl.u32 %v2610, 7
        %v2612 = vsub.s32 %v2609, %v2611
        %v2613 = vrot.slane %v2591, %v2612
        %v2615 = vunpack.c.l.s4 1966171168
        %v2616 = vunpack.c.0.s8 %v2615
        %v2617 = vlaneseq
        %v2618 = vshrl.u32 %v2617, 7
        %v2619 = vsub.s32 %v2616, %v2618
        %v2620 = vrot.slane %v2592, %v2619
        %v2621 = vcombine.high %v2599, %v2599
        %v2622 = vcombine.high %v2606, %v2606
        %v2623 = vcombine.high %v2613, %v2613
        %v2624 = vcombine.high %v2620, %v2620
        %2633 = vst.msk [vmem:[#allocation4 + $0x7] sm:$0x1] %vm1310, %v2599
        %2634 = vst.msk [vmem:[#allocation4 + $0xf] sm:$0x1] %vm1310, %v2613
        %2635 = vst.msk [vmem:[#allocation4 + $0x17] sm:$0x1] %vm1310, %v2621
        %2636 = vst.msk [vmem:[#allocation4 + $0x1f] sm:$0x1] %vm1310, %v2623
        %2637 = vst.msk [vmem:[#allocation4 + $0x27] sm:$0x1] %vm1310, %v2606
        %2638 = vst.msk [vmem:[#allocation4 + $0x2f] sm:$0x1] %vm1310, %v2620
        %2639 = vst.msk [vmem:[#allocation4 + $0x37] sm:$0x1] %vm1310, %v2622
        %2640 = vst.msk [vmem:[#allocation4 + $0x3f] sm:$0x1] %vm1310, %v2624
        %2641 = vset.pattern.permute.xlu0 9
        %2642 = vperm.xlu0 %2641, %v1173
        %v2643 = vpop.permute.xlu0 %2642
        %v2645 = vmul.f32 %v1243, %v2643
        %v2647 = vcombine.high %v2645, %v2645
        %v2649 = vunpack.c.l.s4 1966171168
        %v2650 = vunpack.c.0.s8 %v2649
        %v2651 = vlaneseq
        %v2652 = vshrl.u32 %v2651, 7
        %v2653 = vsub.s32 %v2650, %v2652
        %v2654 = vrot.slane %v2645, %v2653
        %v2656 = vunpack.c.l.s4 1966171168
        %v2657 = vunpack.c.0.s8 %v2656
        %v2658 = vlaneseq
        %v2659 = vshrl.u32 %v2658, 7
        %v2660 = vsub.s32 %v2657, %v2659
        %v2661 = vrot.slane %v2647, %v2660
        %v2662 = vcombine.high %v2654, %v2654
        %v2663 = vcombine.high %v2661, %v2661
        %v2665 = vunpack.c.l.s4 1966171168
        %v2666 = vunpack.c.0.s8 %v2665
        %v2667 = vlaneseq
        %v2668 = vshrl.u32 %v2667, 7
        %v2669 = vsub.s32 %v2666, %v2668
        %v2670 = vrot.slane %v2654, %v2669
        %v2672 = vunpack.c.l.s4 1966171168
        %v2673 = vunpack.c.0.s8 %v2672
        %v2674 = vlaneseq
        %v2675 = vshrl.u32 %v2674, 7
        %v2676 = vsub.s32 %v2673, %v2675
        %v2677 = vrot.slane %v2661, %v2676
        %v2679 = vunpack.c.l.s4 1966171168
        %v2680 = vunpack.c.0.s8 %v2679
        %v2681 = vlaneseq
        %v2682 = vshrl.u32 %v2681, 7
        %v2683 = vsub.s32 %v2680, %v2682
        %v2684 = vrot.slane %v2662, %v2683
        %v2686 = vunpack.c.l.s4 1966171168
        %v2687 = vunpack.c.0.s8 %v2686
        %v2688 = vlaneseq
        %v2689 = vshrl.u32 %v2688, 7
        %v2690 = vsub.s32 %v2687, %v2689
        %v2691 = vrot.slane %v2663, %v2690
        %v2692 = vcombine.high %v2670, %v2670
        %v2693 = vcombine.high %v2677, %v2677
        %v2694 = vcombine.high %v2684, %v2684
        %v2695 = vcombine.high %v2691, %v2691
        %2704 = vst.msk [vmem:[#allocation5 + $0x7] sm:$0x1] %vm1310, %v2670
        %2705 = vst.msk [vmem:[#allocation5 + $0xf] sm:$0x1] %vm1310, %v2684
        %2706 = vst.msk [vmem:[#allocation5 + $0x17] sm:$0x1] %vm1310, %v2692
        %2707 = vst.msk [vmem:[#allocation5 + $0x1f] sm:$0x1] %vm1310, %v2694
        %2708 = vst.msk [vmem:[#allocation5 + $0x27] sm:$0x1] %vm1310, %v2677
        %2709 = vst.msk [vmem:[#allocation5 + $0x2f] sm:$0x1] %vm1310, %v2691
        %2710 = vst.msk [vmem:[#allocation5 + $0x37] sm:$0x1] %vm1310, %v2693
        %2711 = vst.msk [vmem:[#allocation5 + $0x3f] sm:$0x1] %vm1310, %v2695
        %2712 = vrot.lane.b32.xlu0 %v1443, 111
        %v2713 = vpop.permute.xlu0 %2712
        %2714 = vrot.lane.b32.xlu0 %v1447, 111
        %v2715 = vpop.permute.xlu0 %2714
        %2716 = vrot.lane.b32.xlu0 %v1451, 111
        %v2717 = vpop.permute.xlu0 %2716
        %2718 = vrot.lane.b32.xlu0 %v1455, 111
        %v2719 = vpop.permute.xlu0 %2718
        %2720 = vrot.lane.b32.xlu0 %v1459, 111
        %v2721 = vpop.permute.xlu0 %2720
        %2722 = vrot.lane.b32.xlu0 %v1463, 111
        %v2723 = vpop.permute.xlu0 %2722
        %2724 = vrot.lane.b32.xlu0 %v1467, 111
        %v2725 = vpop.permute.xlu0 %2724
        %2726 = vrot.lane.b32.xlu0 %v1471, 111
        %v2727 = vpop.permute.xlu0 %2726
        %2736 = vst.msk [vmem:[#allocation6 + $0x7] sm:$0x1] %vm1496, %v2713
        %2737 = vst.msk [vmem:[#allocation6 + $0xf] sm:$0x1] %vm1496, %v2715
        %2738 = vst.msk [vmem:[#allocation6 + $0x17] sm:$0x1] %vm1496, %v2717
        %2739 = vst.msk [vmem:[#allocation6 + $0x1f] sm:$0x1] %vm1496, %v2719
        %2740 = vst.msk [vmem:[#allocation6 + $0x27] sm:$0x1] %vm1496, %v2721
        %2741 = vst.msk [vmem:[#allocation6 + $0x2f] sm:$0x1] %vm1496, %v2723
        %2742 = vst.msk [vmem:[#allocation6 + $0x37] sm:$0x1] %vm1496, %v2725
        %2743 = vst.msk [vmem:[#allocation6 + $0x3f] sm:$0x1] %vm1496, %v2727
        %v2744 = vld [vmem:[#allocation3] sm:$0xff]
        %s2745 = smul.u32 0, 8
        %s2746 = scalar_lea.vmem [#allocation4], %s2745
        %v2747 = vld [vmem:[%s2746] sm:$0xff]
        %v2748 = vmul.f32 %v2747, %v2744
        %s2749 = scalar_lea.vmem [#allocation5], %s2745
        %v2750 = vld [vmem:[%s2749] sm:$0xff]
        %v2751 = vadd.f32 %v2748, %v2750
        %s2752 = scalar_lea.vmem [#allocation6], %s2745
        %v2753 = vld [vmem:[%s2752] sm:$0xff]
        %2755 = vset.pattern.permute.xlu0 0
        %2756 = vperm.xlu0 %2755, %v2753
        %v2757 = vpop.permute.xlu0 %2756
        %v2759 = vmul.f32 %v2757, %v2751
        %v2760 = vsel %vm1134, %v2759, 0.0
        %v2761 = vrot.slane %v2760, 4
        %v2762 = vadd.f32 %v2760, %v2761
        %v2763 = vrot.slane %v2762, 2
        %v2764 = vadd.f32 %v2762, %v2763
        %v2765 = vrot.slane %v2764, 1
        %v2766 = vadd.f32 %v2764, %v2765
        %s2767 = sadd.s32 0, 1
        %s2768 = smul.u32 %s2767, 8
        %s2769 = scalar_lea.vmem [#allocation4], %s2768
        %v2770 = vld [vmem:[%s2769] sm:$0xff]
        %v2771 = vmul.f32 %v2770, %v2751
        %s2772 = scalar_lea.vmem [#allocation5], %s2768
        %v2773 = vld [vmem:[%s2772] sm:$0xff]
        %v2774 = vadd.f32 %v2771, %v2773
        %s2775 = scalar_lea.vmem [#allocation6], %s2768
        %v2776 = vld [vmem:[%s2775] sm:$0xff]
        %2778 = vset.pattern.permute.xlu0 0
        %2779 = vperm.xlu0 %2778, %v2776
        %v2780 = vpop.permute.xlu0 %2779
        %v2782 = vmul.f32 %v2780, %v2774
        %v2783 = vsel %vm1134, %v2782, 0.0
        %v2784 = vrot.slane %v2783, 4
        %v2785 = vadd.f32 %v2783, %v2784
        %v2786 = vrot.slane %v2785, 2
        %v2787 = vadd.f32 %v2785, %v2786
        %v2788 = vrot.slane %v2787, 1
        %v2789 = vadd.f32 %v2787, %v2788
        %s2790 = sadd.s32 0, 2
        %s2791 = smul.u32 %s2790, 8
        %s2792 = scalar_lea.vmem [#allocation4], %s2791
        %v2793 = vld [vmem:[%s2792] sm:$0xff]
        %v2794 = vmul.f32 %v2793, %v2774
        %s2795 = scalar_lea.vmem [#allocation5], %s2791
        %v2796 = vld [vmem:[%s2795] sm:$0xff]
        %v2797 = vadd.f32 %v2794, %v2796
        %s2798 = scalar_lea.vmem [#allocation6], %s2791
        %v2799 = vld [vmem:[%s2798] sm:$0xff]
        %2801 = vset.pattern.permute.xlu0 0
        %2802 = vperm.xlu0 %2801, %v2799
        %v2803 = vpop.permute.xlu0 %2802
        %v2805 = vmul.f32 %v2803, %v2797
        %v2806 = vsel %vm1134, %v2805, 0.0
        %v2807 = vrot.slane %v2806, 4
        %v2808 = vadd.f32 %v2806, %v2807
        %v2809 = vrot.slane %v2808, 2
        %v2810 = vadd.f32 %v2808, %v2809
        %v2811 = vrot.slane %v2810, 1
        %v2812 = vadd.f32 %v2810, %v2811
        %s2813 = sadd.s32 0, 3
        %s2814 = smul.u32 %s2813, 8
        %s2815 = scalar_lea.vmem [#allocation4], %s2814
        %v2816 = vld [vmem:[%s2815] sm:$0xff]
        %v2817 = vmul.f32 %v2816, %v2797
        %s2818 = scalar_lea.vmem [#allocation5], %s2814
        %v2819 = vld [vmem:[%s2818] sm:$0xff]
        %v2820 = vadd.f32 %v2817, %v2819
        %s2821 = scalar_lea.vmem [#allocation6], %s2814
        %v2822 = vld [vmem:[%s2821] sm:$0xff]
        %2824 = vset.pattern.permute.xlu0 0
        %2825 = vperm.xlu0 %2824, %v2822
        %v2826 = vpop.permute.xlu0 %2825
        %v2828 = vmul.f32 %v2826, %v2820
        %v2829 = vsel %vm1134, %v2828, 0.0
        %v2830 = vrot.slane %v2829, 4
        %v2831 = vadd.f32 %v2829, %v2830
        %v2832 = vrot.slane %v2831, 2
        %v2833 = vadd.f32 %v2831, %v2832
        %v2834 = vrot.slane %v2833, 1
        %v2835 = vadd.f32 %v2833, %v2834
        %s2836 = sadd.s32 0, 4
        %s2837 = smul.u32 %s2836, 8
        %s2838 = scalar_lea.vmem [#allocation4], %s2837
        %v2839 = vld [vmem:[%s2838] sm:$0xff]
        %v2840 = vmul.f32 %v2839, %v2820
        %s2841 = scalar_lea.vmem [#allocation5], %s2837
        %v2842 = vld [vmem:[%s2841] sm:$0xff]
        %v2843 = vadd.f32 %v2840, %v2842
        %s2844 = scalar_lea.vmem [#allocation6], %s2837
        %v2845 = vld [vmem:[%s2844] sm:$0xff]
        %2847 = vset.pattern.permute.xlu0 0
        %2848 = vperm.xlu0 %2847, %v2845
        %v2849 = vpop.permute.xlu0 %2848
        %v2851 = vmul.f32 %v2849, %v2843
        %v2852 = vsel %vm1134, %v2851, 0.0
        %v2853 = vrot.slane %v2852, 4
        %v2854 = vadd.f32 %v2852, %v2853
        %v2855 = vrot.slane %v2854, 2
        %v2856 = vadd.f32 %v2854, %v2855
        %v2857 = vrot.slane %v2856, 1
        %v2858 = vadd.f32 %v2856, %v2857
        %s2859 = sadd.s32 0, 5
        %s2860 = smul.u32 %s2859, 8
        %s2861 = scalar_lea.vmem [#allocation4], %s2860
        %v2862 = vld [vmem:[%s2861] sm:$0xff]
        %v2863 = vmul.f32 %v2862, %v2843
        %s2864 = scalar_lea.vmem [#allocation5], %s2860
        %v2865 = vld [vmem:[%s2864] sm:$0xff]
        %v2866 = vadd.f32 %v2863, %v2865
        %s2867 = scalar_lea.vmem [#allocation6], %s2860
        %v2868 = vld [vmem:[%s2867] sm:$0xff]
        %2870 = vset.pattern.permute.xlu0 0
        %2871 = vperm.xlu0 %2870, %v2868
        %v2872 = vpop.permute.xlu0 %2871
        %v2874 = vmul.f32 %v2872, %v2866
        %v2875 = vsel %vm1134, %v2874, 0.0
        %v2876 = vrot.slane %v2875, 4
        %v2877 = vadd.f32 %v2875, %v2876
        %v2878 = vrot.slane %v2877, 2
        %v2879 = vadd.f32 %v2877, %v2878
        %v2880 = vrot.slane %v2879, 1
        %v2881 = vadd.f32 %v2879, %v2880
        %s2882 = sadd.s32 0, 6
        %s2883 = smul.u32 %s2882, 8
        %s2884 = scalar_lea.vmem [#allocation4], %s2883
        %v2885 = vld [vmem:[%s2884] sm:$0xff]
        %v2886 = vmul.f32 %v2885, %v2866
        %s2887 = scalar_lea.vmem [#allocation5], %s2883
        %v2888 = vld [vmem:[%s2887] sm:$0xff]
        %v2889 = vadd.f32 %v2886, %v2888
        %s2890 = scalar_lea.vmem [#allocation6], %s2883
        %v2891 = vld [vmem:[%s2890] sm:$0xff]
        %2893 = vset.pattern.permute.xlu0 0
        %2894 = vperm.xlu0 %2893, %v2891
        %v2895 = vpop.permute.xlu0 %2894
        %v2897 = vmul.f32 %v2895, %v2889
        %v2898 = vsel %vm1134, %v2897, 0.0
        %v2899 = vrot.slane %v2898, 4
        %v2900 = vadd.f32 %v2898, %v2899
        %v2901 = vrot.slane %v2900, 2
        %v2902 = vadd.f32 %v2900, %v2901
        %v2903 = vrot.slane %v2902, 1
        %v2904 = vadd.f32 %v2902, %v2903
        %s2905 = sadd.s32 0, 7
        %s2906 = smul.u32 %s2905, 8
        %s2907 = scalar_lea.vmem [#allocation4], %s2906
        %v2908 = vld [vmem:[%s2907] sm:$0xff]
        %v2909 = vmul.f32 %v2908, %v2889
        %s2910 = scalar_lea.vmem [#allocation5], %s2906
        %v2911 = vld [vmem:[%s2910] sm:$0xff]
        %v2912 = vadd.f32 %v2909, %v2911
        %s2913 = scalar_lea.vmem [#allocation6], %s2906
        %v2914 = vld [vmem:[%s2913] sm:$0xff]
        %2916 = vset.pattern.permute.xlu0 0
        %2917 = vperm.xlu0 %2916, %v2914
        %v2918 = vpop.permute.xlu0 %2917
        %v2920 = vmul.f32 %v2918, %v2912
        %v2921 = vsel %vm1134, %v2920, 0.0
        %v2922 = vrot.slane %v2921, 4
        %v2923 = vadd.f32 %v2921, %v2922
        %v2924 = vrot.slane %v2923, 2
        %v2925 = vadd.f32 %v2923, %v2924
        %v2926 = vrot.slane %v2925, 1
        %v2927 = vadd.f32 %v2925, %v2926
        %v2928 = vsel %vm1090, %v2766, %v2789
        %v2929 = vsel %vm1076, %v2928, %v2812
        %v2930 = vsel %vm1062, %v2929, %v2835
        %vm2931 = vcmask 1043456
        %v2932 = vsel %vm2931, %v2930, %v2858
        %vm2933 = vcmask 1044480
        %v2934 = vsel %vm2933, %v2932, %v2881
        %vm2935 = vcmask 1045504
        %v2936 = vsel %vm2935, %v2934, %v2904
        %vm2937 = vcmask 1046528
        %v2938 = vsel %vm2937, %v2936, %v2927
        %2939 = vst.msk [vmem:[#allocation7] sm:$0xff] %vm1134, %v2938
        %2940 = vst.msk [vmem:[#allocation3] sm:$0xff] %vm1134, %v2912
        %vm2941 = vcmask 523269
        %2942 = vst.msk [vmem:[#allocation2] sm:$0xe0] %vm2941, %v1034
        %v2943 = vld [vmem:[#allocation7] sm:$0xff]
        %v2944 = vld [vmem:[#allocation26] sm:$0x1]
        %v2946 = vlaneseq
        %v2947 = vshrl.u32 %v2946, 7
        %v2948 = vsub.s32 0, %v2947
        %v2949 = vrot.slane %v2944, %v2948
        %v2951 = vmul.f32 %v2949, %v1100
        %v2952 = vadd.f32 %v2943, %v2951
        %v2953 = vmul.f32 %v1034, 0.5
        %v2954 = vtanh.pop %v2953
        %v2955 = vadd.f32 %v2954, 1.0
        %v2956 = vmul.f32 %v2955, 0.5
        %v2957 = vmul.f32 %v1034, %v2956
        %2959 = vrot.lane.b32.xlu0 %v2957, 64
        %v2960 = vpop.permute.xlu0 %2959
        %v2962 = vmul.f32 %v2952, %v2960
        %v2963 = vld [vmem:[#allocation28] sm:$0xf]
        %v2964 = vld [vmem:[#allocation28 + $0x4] sm:$0xf]
        %v2965 = vld [vmem:[#allocation28 + $0x8] sm:$0xf]
        %v2966 = vld [vmem:[#allocation28 + $0xc] sm:$0xf]
        %v2967 = vld [vmem:[#allocation28 + $0x10] sm:$0xf]
        %v2968 = vld [vmem:[#allocation28 + $0x14] sm:$0xf]
        %v2969 = vld [vmem:[#allocation28 + $0x18] sm:$0xf]
        %v2970 = vld [vmem:[#allocation28 + $0x1c] sm:$0xf]
        %v2971 = vpack.c.bf16 %v2962, %v2962
        %v2980 = vunpack.c.l.b16 %v2963
        %v2981 = vunpack.c.l.b16 %v2964
        %v2982 = vunpack.c.l.b16 %v2965
        %v2983 = vunpack.c.l.b16 %v2966
        %v2984 = vunpack.c.l.b16 %v2967
        %v2985 = vunpack.c.l.b16 %v2968
        %v2986 = vunpack.c.l.b16 %v2969
        %v2987 = vunpack.c.l.b16 %v2970
        %v2988 = vpack.c.b16 %v2981, %v2980
        %v2989 = vpack.c.b16 %v2983, %v2982
        %v2990 = vpack.c.b16 %v2985, %v2984
        %v2991 = vpack.c.b16 %v2987, %v2986
        %v2997 = vsel %vm1134, %v2971, 0
        %2999 = vmatprep.subr.bf16.mxu0 0
        %3000 = vmatpush1.bf16.msra.mxu0 %v2988
        %3001 = vmatprep.subr.bf16.mxu0 0
        %3002 = vmatpush1.bf16.msra.mxu0 %v2989
        %3003 = vmatprep.subr.bf16.mxu0 0
        %3004 = vmatpush1.bf16.msra.mxu0 %v2990
        %3005 = vmatprep.subr.bf16.mxu0 0
        %3006 = vmatpush1.bf16.msra.mxu0 %v2991
        %3007 = vmatprep.subr.bf16.mxu0 0
        %3008 = vmatpush1.bf16.msra.mxu0 0
        %3009 = vmatprep.subr.bf16.mxu0 0
        %3010 = vmatpush1.bf16.msra.mxu0 0
        %3011 = vmatprep.subr.bf16.mxu0 0
        %3012 = vmatpush1.bf16.msra.mxu0 0
        %3013 = vmatprep.subr.bf16.mxu0 0
        %3014 = vmatpush1.bf16.msra.mxu0 0
        %3015 = vmatprep.subr.bf16.mxu0 0
        %3016 = vmatpush1.bf16.msra.mxu0 0
        %3017 = vmatprep.subr.bf16.mxu0 0
        %3018 = vmatpush1.bf16.msra.mxu0 0
        %3019 = vmatprep.subr.bf16.mxu0 0
        %3020 = vmatpush1.bf16.msra.mxu0 0
        %3021 = vmatprep.subr.bf16.mxu0 0
        %3022 = vmatpush1.bf16.msra.mxu0 0
        %3023 = vmatprep.subr.bf16.mxu0 0
        %3024 = vmatpush1.bf16.msra.mxu0 0
        %3025 = vmatprep.subr.bf16.mxu0 0
        %3026 = vmatpush1.bf16.msra.mxu0 0
        %3027 = vmatprep.subr.bf16.mxu0 0
        %3028 = vmatpush1.bf16.msra.mxu0 0
        %3029 = vmatprep.subr.bf16.mxu0 0
        %3030 = vmatpush1.bf16.msra.mxu0 0
        %3031 = vmatprep.mubr.bf16.mxu0 0
        %3032 = vmatmul.mubr.bf16.gmra.mrb[0].mxu0 %v2997
        %v3033 = vpop.f32.mrb[0].mxu0
        %v3034 = vadd.f32 %v947, %v3033
        %v3035 = vpop.f32.mrb[0].mxu0
        %v3036 = vpop.f32.mrb[0].mxu0
        %v3037 = vpop.f32.mrb[0].mxu0
        %3038 = vdwg.mxu0
        %v3039 = vld [vmem:[#allocation29] sm:$0x1]
        %v3040 = vld [vmem:[#allocation31] sm:$0x1]
        %v3041 = vsel %vm950, %v3034, 0.0
        %3042 = vadd.xlane.f32.xlu0 %v3041
        %v3043 = vpop.xlane.xlu0 %3042
        %v3044 = vmul.f32 %v3043, %v954
        %v3045 = vsub.f32 %v3034, %v3044
        %v3046 = vmul.f32 %v3045, %v3045
        %v3047 = vsel %vm950, %v3046, 0.0
        %3048 = vadd.xlane.f32.xlu0 %v3047
        %v3049 = vpop.xlane.xlu0 %3048
        %v3050 = vmul.f32 %v3049, %v954
        %v3051 = vadd.f32 %v3050, 1e-05
        %v3052 = vrsqrt.pop %v3051
        %v3053 = vmul.f32 %v3045, %v3052
        %v3055 = vlaneseq
        %v3056 = vshrl.u32 %v3055, 7
        %v3057 = vsub.s32 0, %v3056
        %v3058 = vrot.slane %v3039, %v3057
        %v3060 = vmul.f32 %v3053, %v3058
        %v3062 = vlaneseq
        %v3063 = vshrl.u32 %v3062, 7
        %v3064 = vsub.s32 0, %v3063
        %v3065 = vrot.slane %v3040, %v3064
        %v3067 = vadd.f32 %v3060, %v3065
        %v3068 = vld [vmem:[#allocation32] sm:$0xf]
        %v3069 = vld [vmem:[#allocation32 + $0x4] sm:$0xf]
        %v3070 = vld [vmem:[#allocation32 + $0x8] sm:$0xf]
        %v3071 = vld [vmem:[#allocation32 + $0xc] sm:$0xf]
        %v3072 = vpack.c.bf16 %v3067, %v3067
        %v3073 = vld [vmem:[#allocation34] sm:$0x1]
        %v3075 = vlaneseq
        %v3076 = vshrl.u32 %v3075, 7
        %v3077 = vsub.s32 0, %v3076
        %v3078 = vrot.slane %v3073, %v3077
        %v3084 = vunpack.c.l.b16 %v3068
        %v3085 = vunpack.c.l.b16 %v3069
        %v3086 = vunpack.c.l.b16 %v3070
        %v3087 = vunpack.c.l.b16 %v3071
        %v3088 = vpack.c.b16 %v3085, %v3084
        %v3089 = vpack.c.b16 %v3087, %v3086
        %v3093 = vsel %vm950, %v3072, 0
        %3095 = vmatprep.subr.bf16.mxu0 0
        %3096 = vmatpush1.bf16.msra.mxu0 %v3088
        %3097 = vmatprep.subr.bf16.mxu0 0
        %3098 = vmatpush1.bf16.msra.mxu0 %v3089
        %3099 = vmatprep.subr.bf16.mxu0 0
        %3100 = vmatpush1.bf16.msra.mxu0 0
        %3101 = vmatprep.subr.bf16.mxu0 0
        %3102 = vmatpush1.bf16.msra.mxu0 0
        %3103 = vmatprep.subr.bf16.mxu0 0
        %3104 = vmatpush1.bf16.msra.mxu0 0
        %3105 = vmatprep.subr.bf16.mxu0 0
        %3106 = vmatpush1.bf16.msra.mxu0 0
        %3107 = vmatprep.subr.bf16.mxu0 0
        %3108 = vmatpush1.bf16.msra.mxu0 0
        %3109 = vmatprep.subr.bf16.mxu0 0
        %3110 = vmatpush1.bf16.msra.mxu0 0
        %3111 = vmatprep.subr.bf16.mxu0 0
        %3112 = vmatpush1.bf16.msra.mxu0 0
        %3113 = vmatprep.subr.bf16.mxu0 0
        %3114 = vmatpush1.bf16.msra.mxu0 0
        %3115 = vmatprep.subr.bf16.mxu0 0
        %3116 = vmatpush1.bf16.msra.mxu0 0
        %3117 = vmatprep.subr.bf16.mxu0 0
        %3118 = vmatpush1.bf16.msra.mxu0 0
        %3119 = vmatprep.subr.bf16.mxu0 0
        %3120 = vmatpush1.bf16.msra.mxu0 0
        %3121 = vmatprep.subr.bf16.mxu0 0
        %3122 = vmatpush1.bf16.msra.mxu0 0
        %3123 = vmatprep.subr.bf16.mxu0 0
        %3124 = vmatpush1.bf16.msra.mxu0 0
        %3125 = vmatprep.subr.bf16.mxu0 0
        %3126 = vmatpush1.bf16.msra.mxu0 0
        %3127 = vmatprep.mubr.bf16.mxu0 0
        %3128 = vmatmul.mubr.bf16.gmra.mrb[0].mxu0 %v3093
        %v3129 = vpop.f32.mrb[0].mxu0
        %v3130 = vadd.f32 %v3078, %v3129
        %v3131 = vpop.f32.mrb[0].mxu0
        %v3132 = vpop.f32.mrb[0].mxu0
        %v3133 = vpop.f32.mrb[0].mxu0
        %3134 = vdwg.mxu0
        %v3135 = vmul.f32 %v3130, 0.5
        %v3136 = vmul.f32 %v3130, 0.044715
        %v3137 = vmul.f32 %v3136, %v3130
        %v3138 = vmul.f32 %v3137, %v3130
        %v3139 = vadd.f32 %v3130, %v3138
        %v3140 = vmul.f32 %v3139, 0.7978846
        %v3141 = vtanh.pop %v3140
        %v3142 = vadd.f32 %v3141, 1.0
        %v3143 = vmul.f32 %v3135, %v3142
        %v3144 = vld [vmem:[#allocation35] sm:$0xf]
        %v3145 = vld [vmem:[#allocation35 + $0x4] sm:$0xf]
        %v3146 = vld [vmem:[#allocation35 + $0x8] sm:$0xf]
        %v3147 = vld [vmem:[#allocation35 + $0xc] sm:$0xf]
        %v3148 = vld [vmem:[#allocation35 + $0x10] sm:$0xf]
        %v3149 = vld [vmem:[#allocation35 + $0x14] sm:$0xf]
        %v3150 = vld [vmem:[#allocation35 + $0x18] sm:$0xf]
        %v3151 = vld [vmem:[#allocation35 + $0x1c] sm:$0xf]
        %v3152 = vpack.c.bf16 %v3143, %v3143
        %v3153 = vld [vmem:[#allocation37] sm:$0x1]
        %v3155 = vlaneseq
        %v3156 = vshrl.u32 %v3155, 7
        %v3157 = vsub.s32 0, %v3156
        %v3158 = vrot.slane %v3153, %v3157
        %v3168 = vunpack.c.l.b16 %v3144
        %v3169 = vunpack.c.l.b16 %v3145
        %v3170 = vunpack.c.l.b16 %v3146
        %v3171 = vunpack.c.l.b16 %v3147
        %v3172 = vunpack.c.l.b16 %v3148
        %v3173 = vunpack.c.l.b16 %v3149
        %v3174 = vunpack.c.l.b16 %v3150
        %v3175 = vunpack.c.l.b16 %v3151
        %v3176 = vpack.c.b16 %v3169, %v3168
        %v3177 = vpack.c.b16 %v3171, %v3170
        %v3178 = vpack.c.b16 %v3173, %v3172
        %v3179 = vpack.c.b16 %v3175, %v3174
        %v3185 = vsel %vm1134, %v3152, 0
        %3187 = vmatprep.subr.bf16.mxu0 0
        %3188 = vmatpush1.bf16.msra.mxu0 %v3176
        %3189 = vmatprep.subr.bf16.mxu0 0
        %3190 = vmatpush1.bf16.msra.mxu0 %v3177
        %3191 = vmatprep.subr.bf16.mxu0 0
        %3192 = vmatpush1.bf16.msra.mxu0 %v3178
        %3193 = vmatprep.subr.bf16.mxu0 0
        %3194 = vmatpush1.bf16.msra.mxu0 %v3179
        %3195 = vmatprep.subr.bf16.mxu0 0
        %3196 = vmatpush1.bf16.msra.mxu0 0
        %3197 = vmatprep.subr.bf16.mxu0 0
        %3198 = vmatpush1.bf16.msra.mxu0 0
        %3199 = vmatprep.subr.bf16.mxu0 0
        %3200 = vmatpush1.bf16.msra.mxu0 0
        %3201 = vmatprep.subr.bf16.mxu0 0
        %3202 = vmatpush1.bf16.msra.mxu0 0
        %3203 = vmatprep.subr.bf16.mxu0 0
        %3204 = vmatpush1.bf16.msra.mxu0 0
        %3205 = vmatprep.subr.bf16.mxu0 0
        %3206 = vmatpush1.bf16.msra.mxu0 0
        %3207 = vmatprep.subr.bf16.mxu0 0
        %3208 = vmatpush1.bf16.msra.mxu0 0
        %3209 = vmatprep.subr.bf16.mxu0 0
        %3210 = vmatpush1.bf16.msra.mxu0 0
        %3211 = vmatprep.subr.bf16.mxu0 0
        %3212 = vmatpush1.bf16.msra.mxu0 0
        %3213 = vmatprep.subr.bf16.mxu0 0
        %3214 = vmatpush1.bf16.msra.mxu0 0
        %3215 = vmatprep.subr.bf16.mxu0 0
        %3216 = vmatpush1.bf16.msra.mxu0 0
        %3217 = vmatprep.subr.bf16.mxu0 0
        %3218 = vmatpush1.bf16.msra.mxu0 0
        %3219 = vmatprep.mubr.bf16.mxu0 0
        %3220 = vmatmul.mubr.bf16.gmra.mrb[0].mxu0 %v3185
        %v3221 = vpop.f32.mrb[0].mxu0
        %v3222 = vadd.f32 %v3158, %v3221
        %v3223 = vpop.f32.mrb[0].mxu0
        %v3224 = vpop.f32.mrb[0].mxu0
        %v3225 = vpop.f32.mrb[0].mxu0
        %3226 = vdwg.mxu0
        %3227 = vst.msk [vmem:[%s929] sm:$0xff] %vm950, %v3222
        %3228 = vst.msk [vmem:[%s936] sm:$0xff] %vm950, %v3034
        %s3229 = sand.u32 %s487, 1
        %s3230 = scalar_lea.sflag [#allocation10], %s3229
        %s3231 = sand.u32 %s487, 1
        %s3232 = smul.addr %s3231, 8
        %s3233 = scalar_lea.vmem [#allocation38], %s3232
        %s3234 = sand.u32 %s515, 1
        %s3235 = scalar_lea.sflag [#allocation40], %s3234
        %s3236 = sand.u32 %s515, 1
        %s3237 = smul.addr %s3236, 8
        %s3238 = scalar_lea.vmem [#allocation39], %s3237
        // Predicated region
        $region177: #{lm_backbone_forward.6} parent=95 // pred_check
          %p3239 = pneg %p497
        $region178: #{lm_backbone_forward.6} parent=95 // pred_check_branch
          %3241 = sbr.rel (%p3239) target = $region180
        $region179: #{lm_backbone_forward.6} parent=95 // pred_region
          %s3243 = ssub.s32 128, 128
          %3244 = vsyncadd %s3230, %s3243
          %s3245 = sadd.s32 %s57, %s56
          %s3246 = smul.addr %s3245, 128
          %s3247 = scalar_lea.hbm %s19, %s3246
          %s3249 = sshll.u32 %s3233, 4
          %s3250 = int_to_ptr.vmem [resolvable:$true] %s3249
          %3252 = dma.vmem_to_hbm [thread:$0]  %s3250, 128, %s3247, %s3230
        $region180: #{lm_backbone_forward.6} parent=95 // pred_fallthru
          _
        // Predicated region
        $region181: #{lm_backbone_forward.6} parent=95 // pred_check
          %p3253 = pneg %p525
        $region182: #{lm_backbone_forward.6} parent=95 // pred_check_branch
          %3255 = sbr.rel (%p3253) target = $region184
        $region183: #{lm_backbone_forward.6} parent=95 // pred_region
          %s3257 = ssub.s32 128, 128
          %3258 = vsyncadd %s3235, %s3257
          %s3259 = sadd.s32 %s57, %s56
          %s3260 = smul.addr %s3259, 128
          %s3261 = scalar_lea.hbm %s20, %s3260
          %s3263 = sshll.u32 %s3238, 4
          %s3264 = int_to_ptr.vmem [resolvable:$true] %s3263
          %3266 = dma.vmem_to_hbm [thread:$0]  %s3264, 128, %s3261, %s3235
        $region184: #{lm_backbone_forward.6} parent=95 // pred_fallthru
          _
      $region96: #{lm_backbone_forward.6} parent=5 // pred_fallthru
        _
      %p3267 = scmp.le.s32.totalorder 2, %s47
      // Predicated region
      $region185: #{lm_backbone_forward.6} parent=5 // pred_check
        %p3268 = pneg %p3267
      $region186: #{lm_backbone_forward.6} parent=5 // pred_check_branch
        %3270 = sbr.rel (%p3268) target = $region188
      $region187: #{lm_backbone_forward.6} parent=5 // pred_region
        %s3271 = ssub.s32 %s47, 2
        // Predicated region
        $region189: #{lm_backbone_forward.6} parent=187 // pred_check
          %p3272 = pneg %p503
        $region190: #{lm_backbone_forward.6} parent=187 // pred_check_branch
          %3274 = sbr.rel (%p3272) target = $region192
        $region191: #{lm_backbone_forward.6} parent=187 // pred_region
          %s3275 = sand.u32 %s488, 1
          %s3276 = scalar_lea.sflag [#allocation10], %s3275
          %s3277 = sand.u32 %s488, 1
          %s3278 = smul.addr %s3277, 8
          %s3279 = scalar_lea.vmem [#allocation38], %s3278
          %3280 = dma.done %s3276, 128
        $region192: #{lm_backbone_forward.6} parent=187 // pred_fallthru
          _
        // Predicated region
        $region193: #{lm_backbone_forward.6} parent=187 // pred_check
          %p3281 = pneg %p531
        $region194: #{lm_backbone_forward.6} parent=187 // pred_check_branch
          %3283 = sbr.rel (%p3281) target = $region196
        $region195: #{lm_backbone_forward.6} parent=187 // pred_region
          %s3284 = sand.u32 %s516, 1
          %s3285 = scalar_lea.sflag [#allocation40], %s3284
          %s3286 = sand.u32 %s516, 1
          %s3287 = smul.addr %s3286, 8
          %s3288 = scalar_lea.vmem [#allocation39], %s3287
          %3289 = dma.done %s3285, 128
        $region196: #{lm_backbone_forward.6} parent=187 // pred_fallthru
          _
      $region188: #{lm_backbone_forward.6} parent=5 // pred_fallthru
        _
    $region6: #{lm_backbone_forward.6} parent=1 // loop_footer
      %s51 = sadd.s32 1, %s47
    $region7: #{lm_backbone_forward.6} parent=1 // loop_footer_branch
      %46 = sbr.rel target = $region3
    $region8: #{lm_backbone_forward.6} parent=1 // loop_exit
      _
    %3290 = vsyncpa [#allocation9], 1
    %s3291 = scalar_lea.sflag [#allocation9], 1
    %3292 = vsyncpa %s3291, 1
    %3293 = vsyncpa [#allocation12], 1
    %s3294 = scalar_lea.sflag [#allocation12], 1
    %3295 = vsyncpa %s3294, 1
    %3296 = vsyncpa [#allocation15], 1
    %3297 = vsyncpa [#allocation18], 1
    %3298 = vsyncpa [#allocation21], 1
    %3299 = vsyncpa [#allocation24], 1
    %3300 = vsyncpa [#allocation27], 1
    %3301 = vsyncpa [#allocation30], 1
    %3302 = vsyncpa [#allocation33], 1
    %3303 = vsyncpa [#allocation36], 1
    %3304 = vsyncpa [#allocation10], 1
    %s3305 = scalar_lea.sflag [#allocation10], 1
    %3306 = vsyncpa %s3305, 1
    %3307 = vsyncpa [#allocation40], 1
    %s3308 = scalar_lea.sflag [#allocation40], 1
    %3309 = vsyncpa %s3308, 1

</llo_original>
